<compile_context>
chip_gen: v7x
topology: tpu7x:2x2x1
jax: 0.10.0
libtpu: 0.0.40
codegen_flags: <defaults>
</compile_context>

<pallas_src>
import jax
import jax.numpy as jnp
from jax.experimental import pallas as pl
from jax.experimental.pallas import tpu as pltpu

_EPS = 1e-5
_XOFF = 16                      # tile-aligned sublane offset of the halo interior
_VMEM_LIMIT = 32 * 1024 * 1024  # explicit scoped-VMEM budget (usage ~3 MiB/step)


# --------------------------------------------------------------------------
# In-kernel building blocks (all operate on one image).
# --------------------------------------------------------------------------
def _conv1_strips(col_ref, w_ref, b_ref, rm_ref):
    """conv1 (3x3, Cin=1) from a pre-built im2col, +bias, ReLU, row-pair max.

    col_ref: (1, 1024, 16) bf16  im2col of the padded 32x32 input (K 9->16)
    w_ref:   (16, 32)      bf16
    b_ref:   (1, 32)       f32
    rm_ref:  (512, 32)     f32   rows ordered (y//2)*32 + x
    """
    def strip(s, carry):                      # 8 strips of 4 image rows each
        p0 = pl.multiple_of(s * 128, 128)
        acc = jnp.dot(col_ref[0, pl.ds(p0, 128), :], w_ref[...],
                      preferred_element_type=jnp.float32)      # (128, 32) f32
        acc = jnp.maximum(acc + b_ref[...], 0.0)
        a4 = acc.reshape(2, 2, 32, 32)        # (y_half, y_parity, x, c)
        rowmax = jnp.maximum(a4[:, 0], a4[:, 1]).reshape(64, 32)
        rm_ref[pl.ds(pl.multiple_of(s * 64, 64), 64), :] = rowmax
        return carry
    jax.lax.fori_loop(0, 8, strip, 0)


def _conv33_strips(xpad_ref, w_ref, b_ref, rm_ref, *, H, W, Cin, Cout,
                   ys, n_strips):
    """3x3 conv (+bias, ReLU) on a zero-haloed VMEM scratch, row-pair max.

    xpad_ref: (H+2, >=W+_XOFF+1, Cin) bf16; image interior lives at rows
              [1, H+1) and cols [_XOFF, _XOFF+W); everything else is zero.
    rm_ref:   (H//2 * W, Cout) f32, rows ordered (y//2)*W + x.
    """
    assert ys * n_strips == H and ys % 2 == 0
    rows = ys * W
    half = rows // 2

    def strip(s, carry):
        y0 = s * ys
        acc = jnp.zeros((rows, Cout), jnp.float32)
        for t in range(9):                                  # 9 shifted MXU matmuls
            ky, kx = divmod(t, 3)
            patch = xpad_ref[pl.ds(y0 + ky, ys), pl.ds(_XOFF - 1 + kx, W), :]
            acc = acc + jnp.dot(patch.reshape(rows, Cin), w_ref[t],
                                preferred_element_type=jnp.float32)
        acc = jnp.maximum(acc + b_ref[...], 0.0)
        a4 = acc.reshape(ys // 2, 2, W, Cout)               # (y_half, parity, x, c)
        rowmax = jnp.maximum(a4[:, 0], a4[:, 1]).reshape(half, Cout)
        rm_ref[pl.ds(pl.multiple_of(s * half, half), half), :] = rowmax
        return carry

    jax.lax.fori_loop(0, n_strips, strip, 0)


def _colpool_bn(rm_ref, scale_ref, shift_ref, n_out):
    """Column-pair max of the row-maxed map + eval-mode BN affine."""
    a = rm_ref[pl.ds(0, n_out, stride=2), :]
    b = rm_ref[pl.ds(1, n_out, stride=2), :]
    return jnp.maximum(a, b) * scale_ref[...] + shift_ref[...]   # (n_out, C) f32


# --------------------------------------------------------------------------
# Fused whole-network kernel (one grid step = one image).
# --------------------------------------------------------------------------
def _convnet_kernel(col_ref,
                    w1_ref, b1_ref, s1_ref, t1_ref,
                    w2_ref, b2_ref, s2_ref, t2_ref,
                    w3_ref, b3_ref, s3_ref, t3_ref,
                    fw1_ref, fb1_ref, fw2_ref, fb2_ref,
                    out_ref,
                    rm1_ref, xp2_ref, rm2_ref, xp3_ref, rm3_ref):
    # Zero-initialise the haloed scratches (their borders must be 0 per image).
    xp2_ref[...] = jnp.zeros(xp2_ref.shape, xp2_ref.dtype)
    xp3_ref[...] = jnp.zeros(xp3_ref.shape, xp3_ref.dtype)

    # ---- block 1: 32x32x1 -> conv(32) -> ReLU -> pool -> BN -> 16x16x32 ----
    _conv1_strips(col_ref, w1_ref, b1_ref, rm1_ref)
    y1 = _colpool_bn(rm1_ref, s1_ref, t1_ref, 256)                  # (256, 32)
    xp2_ref[1:17, _XOFF:_XOFF + 16, :] = (
        y1.reshape(16, 16, 32).astype(jnp.bfloat16))

    # ---- block 2: 16x16x32 -> conv(64) -> ReLU -> pool -> BN -> 8x8x64 -----
    _conv33_strips(xp2_ref, w2_ref, b2_ref, rm2_ref,
                   H=16, W=16, Cin=32, Cout=64, ys=8, n_strips=2)
    y2 = _colpool_bn(rm2_ref, s2_ref, t2_ref, 64)                   # (64, 64)
    xp3_ref[1:9, _XOFF:_XOFF + 8, :] = (
        y2.reshape(8, 8, 64).astype(jnp.bfloat16))

    # ---- block 3: 8x8x64 -> conv(128) -> ReLU -> pool -> BN -> 4x4x128 -----
    _conv33_strips(xp3_ref, w3_ref, b3_ref, rm3_ref,
                   H=8, W=8, Cin=64, Cout=128, ys=8, n_strips=1)
    x16 = _colpool_bn(rm3_ref, s3_ref, t3_ref, 16)                  # (16, 128)

    # ---- fc1 (+ReLU) + fc2 ---------------------------------------------------
    # fc1's 2048-wide contraction is done as 16 chunked (1,128)x(128,128) MXU
    # dots so the (16,128) feature tile never needs a cross-lane flatten.
    h = fb1_ref[...]                                                # (1, 128) f32
    for p in range(16):
        h = h + jnp.dot(x16[p:p + 1, :].astype(jnp.bfloat16), fw1_ref[p],
                        preferred_element_type=jnp.float32)
    h = jnp.maximum(h, 0.0)
    y = jnp.dot(h.astype(jnp.bfloat16), fw2_ref[...],
                preferred_element_type=jnp.float32) + fb2_ref[...]
    out_ref[0] = y.astype(out_ref.dtype)                            # (1, 128)


def _convnet_pallas(cols, p):
    """cols: (B, 1024, 16) bf16 im2col of the input. Returns (B, 1, 128) f32."""
    B = cols.shape[0]
    c2 = lambda i: (0, 0)
    c3 = lambda i: (0, 0, 0)
    in_specs = [
        pl.BlockSpec((1, 1024, 16), lambda i: (i, 0, 0)),   # im2col of image i
        pl.BlockSpec((16, 32), c2),                         # w1 (im2col form)
        pl.BlockSpec((1, 32), c2), pl.BlockSpec((1, 32), c2), pl.BlockSpec((1, 32), c2),
        pl.BlockSpec((9, 32, 64), c3),                      # w2
        pl.BlockSpec((1, 64), c2), pl.BlockSpec((1, 64), c2), pl.BlockSpec((1, 64), c2),
        pl.BlockSpec((9, 64, 128), c3),                     # w3
        pl.BlockSpec((1, 128), c2), pl.BlockSpec((1, 128), c2), pl.BlockSpec((1, 128), c2),
        pl.BlockSpec((16, 128, 128), c3),                   # fc1 (chunked)
        pl.BlockSpec((1, 128), c2),
        pl.BlockSpec((128, 128), c2),                       # fc2 (classes padded)
        pl.BlockSpec((1, 128), c2),
    ]
    return pl.pallas_call(
        _convnet_kernel,
        out_shape=jax.ShapeDtypeStruct((B, 1, 128), jnp.float32),
        grid_spec=pltpu.PrefetchScalarGridSpec(
            num_scalar_prefetch=0,
            grid=(B,),
            in_specs=in_specs,
            out_specs=pl.BlockSpec((1, 1, 128), lambda i: (i, 0, 0)),
            scratch_shapes=[
                pltpu.VMEM((512, 32), jnp.float32),       # rm1: row-maxed conv1
                pltpu.VMEM((18, 40, 32), jnp.bfloat16),   # xp2: haloed conv2 input
                pltpu.VMEM((128, 64), jnp.float32),       # rm2
                pltpu.VMEM((10, 32, 64), jnp.bfloat16),   # xp3: haloed conv3 input
                pltpu.VMEM((32, 128), jnp.float32),       # rm3
            ],
        ),
        compiler_params=pltpu.CompilerParams(
            dimension_semantics=("parallel",),
            vmem_limit_bytes=_VMEM_LIMIT,
        ),
    )(cols, p["w1"], p["b1"], p["bn1_scale"], p["bn1_shift"],
      p["w2"], p["b2"], p["bn2_scale"], p["bn2_shift"],
      p["w3"], p["b3"], p["bn3_scale"], p["bn3_shift"],
      p["fc1_w"], p["fc1_b"], p["fc2_w"], p["fc2_b"])


# --------------------------------------------------------------------------
# Forward pass:  x = bn(pool(relu(conv(x)))) x3 ; flatten ; relu(fc1) ; fc2
# --------------------------------------------------------------------------
def convnet_forward(x_nchw, p, *, num_classes=29):
    """x_nchw: (B, 1, 32, 32). Returns (B, num_classes) float32 logits."""
    assert x_nchw.shape[1:] == (1, 32, 32)
    B = x_nchw.shape[0]
    # Tiny first-layer im2col (layout prep for Cin==1; conv arithmetic stays
    # on the MXU inside the kernel). 36 KiB/image, fused by XLA.
    x = x_nchw[:, 0].astype(jnp.float32)
    xp = jnp.pad(x, ((0, 0), (1, 1), (1, 1)))
    cols = jnp.stack([xp[:, ky:ky + 32, kx:kx + 32].reshape(B, 1024)
                      for ky in range(3) for kx in range(3)], axis=-1)
    cols = jnp.pad(cols, ((0, 0), (0, 0), (0, 7))).astype(jnp.bfloat16)  # K 9->16

    out = _convnet_pallas(cols, p)           # (B, 1, 128) f32
    return out[:, 0, :num_classes]


# --------------------------------------------------------------------------
# Deterministic synthetic parameters (PyTorch layout) + kernel-form params.
# --------------------------------------------------------------------------
def init_reference_params(key, num_classes=29):
    it = iter(list(jax.random.split(key, 22)))

    def conv(cout, cin):
        w = jax.random.normal(next(it), (cout, cin, 3, 3), jnp.float32)
        w = w / jnp.sqrt(9.0 * cin)
        b = 0.01 * jax.random.normal(next(it), (cout,), jnp.float32)
        return w, b

    def bn(c):
        gamma = 1.0 + 0.1 * jax.random.normal(next(it), (c,), jnp.float32)
        beta = 0.1 * jax.random.normal(next(it), (c,), jnp.float32)
        mean = 0.1 * jax.random.normal(next(it), (c,), jnp.float32)
        var = jnp.abs(jax.random.normal(next(it), (c,), jnp.float32)) + 0.5
        return (gamma, beta, mean, var)

    def fc(cin, cout):
        w = jax.random.normal(next(it), (cout, cin), jnp.float32) / jnp.sqrt(float(cin))
        b = 0.01 * jax.random.normal(next(it), (cout,), jnp.float32)
        return w, b

    r = {}
    r["w1"], r["b1"] = conv(32, 1);    r["bn1"] = bn(32)
    r["w2"], r["b2"] = conv(64, 32);   r["bn2"] = bn(64)
    r["w3"], r["b3"] = conv(128, 64);  r["bn3"] = bn(128)
    r["fc1_w"], r["fc1_b"] = fc(128 * 4 * 4, 128)
    r["fc2_w"], r["fc2_b"] = fc(128, num_classes)
    return r


def make_kernel_params(r):
    """bf16, matmul-form parameters consumed by the fused kernel."""
    def bn_affine(stats, c):
        gamma, beta, mean, var = stats
        scale = gamma / jnp.sqrt(var + _EPS)
        shift = beta - mean * scale
        return (scale.reshape(1, c).astype(jnp.float32),
                shift.reshape(1, c).astype(jnp.float32))

    def conv_w(w_pt):                       # (Cout, Cin, 3, 3) -> (9, Cin, Cout)
        co, ci = w_pt.shape[0], w_pt.shape[1]
        return jnp.transpose(w_pt, (2, 3, 1, 0)).reshape(9, ci, co).astype(jnp.bfloat16)

    p = {}
    # conv1 in im2col form (K padded 9 -> 16 with zero rows).
    w1c = jnp.transpose(r["w1"][:, 0], (1, 2, 0)).reshape(9, 32)
    p["w1"] = jnp.pad(w1c, ((0, 7), (0, 0))).astype(jnp.bfloat16)
    p["b1"] = r["b1"].reshape(1, 32).astype(jnp.float32)
    p["bn1_scale"], p["bn1_shift"] = bn_affine(r["bn1"], 32)

    p["w2"] = conv_w(r["w2"])
    p["b2"] = r["b2"].reshape(1, 64).astype(jnp.float32)
    p["bn2_scale"], p["bn2_shift"] = bn_affine(r["bn2"], 64)

    p["w3"] = conv_w(r["w3"])
    p["b3"] = r["b3"].reshape(1, 128).astype(jnp.float32)
    p["bn3_scale"], p["bn3_shift"] = bn_affine(r["bn3"], 128)

    # fc1: permute rows (c, y, x) -> (y, x, c) so the kernel's (y*4+x, c)
    # feature tile feeds it directly; chunk as (16, 128, 128).
    wm = r["fc1_w"].T.reshape(128, 4, 4, 128).transpose(1, 2, 0, 3)
    p["fc1_w"] = wm.reshape(16, 128, 128).astype(jnp.bfloat16)
    p["fc1_b"] = r["fc1_b"].reshape(1, 128).astype(jnp.float32)

    # fc2: pad the class dim 29 -> 128 for a lane-dense output store.
    nc = r["fc2_w"].shape[0]
    p["fc2_w"] = jnp.pad(r["fc2_w"].T, ((0, 0), (0, 128 - nc))).astype(jnp.bfloat16)
    p["fc2_b"] = jnp.pad(r["fc2_b"], (0, 128 - nc)).reshape(1, 128).astype(jnp.float32)
    return p


# --------------------------------------------------------------------------
# Pure-JAX f32 reference (mirrors the PyTorch module) for a sanity check.
# --------------------------------------------------------------------------
def reference_forward(x, r):
    def block(x, w, b, stats):
        gamma, beta, mean, var = stats
        y = jax.lax.conv_general_dilated(
            x, w, window_strides=(1, 1), padding=((1, 1), (1, 1)),
            dimension_numbers=("NCHW", "OIHW", "NCHW"))
        y = jnp.maximum(y + b[None, :, None, None], 0.0)
        y = jax.lax.reduce_window(y, -jnp.inf, jax.lax.max,
                                  (1, 1, 2, 2), (1, 1, 2, 2), "VALID")
        scale = gamma / jnp.sqrt(var + _EPS)
        shift = beta - mean * scale
        return y * scale[None, :, None, None] + shift[None, :, None, None]

    x = block(x, r["w1"], r["b1"], r["bn1"])
    x = block(x, r["w2"], r["b2"], r["bn2"])
    x = block(x, r["w3"], r["b3"], r["bn3"])
    x = x.reshape(x.shape[0], -1)
    x = jnp.maximum(x @ r["fc1_w"].T + r["fc1_b"], 0.0)
    return x @ r["fc2_w"].T + r["fc2_b"]


if __name__ == "__main__":
    key = jax.random.PRNGKey(0)
    pkey, xkey = jax.random.split(key)
    ref_params = init_reference_params(pkey, num_classes=29)
    krn_params = make_kernel_params(ref_params)

    # Input consistent with fc1 = Linear(128*4*4, ...): 32x32 single-channel NCHW.
    x = jax.random.normal(xkey, (2, 1, 32, 32), jnp.float32)

    fwd = jax.jit(convnet_forward)
    logits = fwd(x, krn_params)
    jax.block_until_ready(logits)
    assert logits.shape == (2, 29) and logits.dtype == jnp.float32

    ref_logits = jax.jit(reference_forward)(x, ref_params)
    err = float(jnp.max(jnp.abs(logits - ref_logits)))
    ref_mag = float(jnp.max(jnp.abs(ref_logits)))
    assert err <= 0.05 * ref_mag + 0.05, \
        f"kernel/reference mismatch: err={err} ref_mag={ref_mag}"
    print("KERNEL_OK")
</pallas_src>

<mosaic_0001>
module attributes {stable_mosaic.version = 11 : i64} {
  func.func @_convnet_kernel(%arg0: i32, %arg1: memref<1x1024x16xbf16, #tpu.memory_space<vmem>>, %arg2: memref<16x32xbf16, #tpu.memory_space<vmem>>, %arg3: memref<1x32xf32, #tpu.memory_space<vmem>>, %arg4: memref<1x32xf32, #tpu.memory_space<vmem>>, %arg5: memref<1x32xf32, #tpu.memory_space<vmem>>, %arg6: memref<9x32x64xbf16, #tpu.memory_space<vmem>>, %arg7: memref<1x64xf32, #tpu.memory_space<vmem>>, %arg8: memref<1x64xf32, #tpu.memory_space<vmem>>, %arg9: memref<1x64xf32, #tpu.memory_space<vmem>>, %arg10: memref<9x64x128xbf16, #tpu.memory_space<vmem>>, %arg11: memref<1x128xf32, #tpu.memory_space<vmem>>, %arg12: memref<1x128xf32, #tpu.memory_space<vmem>>, %arg13: memref<1x128xf32, #tpu.memory_space<vmem>>, %arg14: memref<16x128x128xbf16, #tpu.memory_space<vmem>>, %arg15: memref<1x128xf32, #tpu.memory_space<vmem>>, %arg16: memref<128x128xbf16, #tpu.memory_space<vmem>>, %arg17: memref<1x128xf32, #tpu.memory_space<vmem>>, %arg18: memref<1x1x128xf32, #tpu.memory_space<vmem>>, %arg19: memref<512x32xf32, #tpu.memory_space<vmem>>, %arg20: memref<18x40x32xbf16, #tpu.memory_space<vmem>>, %arg21: memref<128x64xf32, #tpu.memory_space<vmem>>, %arg22: memref<10x32x64xbf16, #tpu.memory_space<vmem>>, %arg23: memref<32x128xf32, #tpu.memory_space<vmem>>) attributes {dimension_semantics = [#tpu.dimension_semantics<parallel>], iteration_bounds = array<i64: 2>, scalar_prefetch = 0 : i64, scratch_operands = 5 : i64, tpu.core_type = #tpu.core_type<tc>, window_params = [{transform_indices = @transform_0, window_bounds = array<i64: 1, 1024, 16>}, {pipeline_mode = #tpu.pipeline_mode<synchronous>, transform_indices = @transform_1, window_bounds = array<i64: 16, 32>}, {pipeline_mode = #tpu.pipeline_mode<synchronous>, transform_indices = @transform_2, window_bounds = array<i64: 1, 32>}, {pipeline_mode = #tpu.pipeline_mode<synchronous>, transform_indices = @transform_3, window_bounds = array<i64: 1, 32>}, {pipeline_mode = #tpu.pipeline_mode<synchronous>, transform_indices = @transform_4, window_bounds = array<i64: 1, 32>}, {pipeline_mode = #tpu.pipeline_mode<synchronous>, transform_indices = @transform_5, window_bounds = array<i64: 9, 32, 64>}, {pipeline_mode = #tpu.pipeline_mode<synchronous>, transform_indices = @transform_6, window_bounds = array<i64: 1, 64>}, {pipeline_mode = #tpu.pipeline_mode<synchronous>, transform_indices = @transform_7, window_bounds = array<i64: 1, 64>}, {pipeline_mode = #tpu.pipeline_mode<synchronous>, transform_indices = @transform_8, window_bounds = array<i64: 1, 64>}, {pipeline_mode = #tpu.pipeline_mode<synchronous>, transform_indices = @transform_9, window_bounds = array<i64: 9, 64, 128>}, {pipeline_mode = #tpu.pipeline_mode<synchronous>, transform_indices = @transform_10, window_bounds = array<i64: 1, 128>}, {pipeline_mode = #tpu.pipeline_mode<synchronous>, transform_indices = @transform_11, window_bounds = array<i64: 1, 128>}, {pipeline_mode = #tpu.pipeline_mode<synchronous>, transform_indices = @transform_12, window_bounds = array<i64: 1, 128>}, {pipeline_mode = #tpu.pipeline_mode<synchronous>, transform_indices = @transform_13, window_bounds = array<i64: 16, 128, 128>}, {pipeline_mode = #tpu.pipeline_mode<synchronous>, transform_indices = @transform_14, window_bounds = array<i64: 1, 128>}, {pipeline_mode = #tpu.pipeline_mode<synchronous>, transform_indices = @transform_15, window_bounds = array<i64: 128, 128>}, {pipeline_mode = #tpu.pipeline_mode<synchronous>, transform_indices = @transform_16, window_bounds = array<i64: 1, 128>}, {transform_indices = @transform_17, window_bounds = array<i64: 1, 1, 128>}]} {
    %cst = arith.constant 0.000000e+00 : bf16
    %0 = vector.broadcast %cst : bf16 to vector<18x40x32xbf16>
    %c0 = arith.constant 0 : index
    %c0_0 = arith.constant 0 : index
    %c0_1 = arith.constant 0 : index
    %1 = vector.load %arg20[%c0, %c0_0, %c0_1] : memref<18x40x32xbf16, #tpu.memory_space<vmem>>, vector<18x40x32xbf16>
    tpu.vector_store %arg20[%c0, %c0_0, %c0_1], %0 {strides = array<i32>} : memref<18x40x32xbf16, #tpu.memory_space<vmem>>, vector<18x40x32xbf16>,
    %cst_2 = arith.constant 0.000000e+00 : bf16
    %2 = vector.broadcast %cst_2 : bf16 to vector<10x32x64xbf16>
    %c0_3 = arith.constant 0 : index
    %c0_4 = arith.constant 0 : index
    %c0_5 = arith.constant 0 : index
    %3 = vector.load %arg22[%c0_3, %c0_4, %c0_5] : memref<10x32x64xbf16, #tpu.memory_space<vmem>>, vector<10x32x64xbf16>
    tpu.vector_store %arg22[%c0_3, %c0_4, %c0_5], %2 {strides = array<i32>} : memref<10x32x64xbf16, #tpu.memory_space<vmem>>, vector<10x32x64xbf16>,
    %c0_i32 = arith.constant 0 : i32
    %c8_i32 = arith.constant 8 : i32
    %4 = arith.addi %c0_i32, %c8_i32 : i32
    %c1_i32 = arith.constant 1 : i32
    scf.for %arg24 = %c0_i32 to %4 step %c1_i32  : i32 {
      %c128_i32 = arith.constant 128 : i32
      %236 = arith.muli %arg24, %c128_i32 : i32
      %237 = tpu.assume_multiple %236, 128 : i32
      %c0_169 = arith.constant 0 : index
      %238 = arith.index_cast %237 : i32 to index
      %c0_170 = arith.constant 0 : index
      %239 = vector.load %arg1[%c0_169, %238, %c0_170] : memref<1x1024x16xbf16, #tpu.memory_space<vmem>>, vector<1x128x16xbf16>
      %240 = vector.shape_cast %239 : vector<1x128x16xbf16> to vector<128x16xbf16>
      %c0_171 = arith.constant 0 : index
      %c0_172 = arith.constant 0 : index
      %241 = vector.load %arg2[%c0_171, %c0_172] : memref<16x32xbf16, #tpu.memory_space<vmem>>, vector<16x32xbf16>
      %cst_173 = arith.constant dense<0.000000e+00> : vector<128x32xf32>
      %242 = tpu.matmul %240, %241, %cst_173 {dimension_numbers = #tpu.dot_dimension_numbers<[1], [0], [0], [1], [0, 0, 1, 1], [], []>} : vector<128x16xbf16>, vector<16x32xbf16>, vector<128x32xf32> -> vector<128x32xf32>
      %c0_174 = arith.constant 0 : index
      %c0_175 = arith.constant 0 : index
      %243 = vector.load %arg3[%c0_174, %c0_175] : memref<1x32xf32, #tpu.memory_space<vmem>>, vector<1x32xf32>
      %244 = vector.broadcast %243 : vector<1x32xf32> to vector<128x32xf32>
      %245 = arith.addf %242, %244 : vector<128x32xf32>
      %cst_176 = arith.constant 0.000000e+00 : f32
      %246 = vector.broadcast %cst_176 : f32 to vector<128x32xf32>
      %247 = arith.maximumf %245, %246 : vector<128x32xf32>
      %248 = vector.shape_cast %247 : vector<128x32xf32> to vector<2x2x32x32xf32>
      %249 = vector.extract_strided_slice %248 {offsets = [0, 0, 0, 0], sizes = [2, 1, 32, 32], strides = [1, 1, 1, 1]} : vector<2x2x32x32xf32> to vector<2x1x32x32xf32>
      %250 = vector.shape_cast %249 : vector<2x1x32x32xf32> to vector<2x32x32xf32>
      %251 = vector.extract_strided_slice %248 {offsets = [0, 1, 0, 0], sizes = [2, 1, 32, 32], strides = [1, 1, 1, 1]} : vector<2x2x32x32xf32> to vector<2x1x32x32xf32>
      %252 = vector.shape_cast %251 : vector<2x1x32x32xf32> to vector<2x32x32xf32>
      %253 = arith.maximumf %250, %252 : vector<2x32x32xf32>
      %254 = vector.shape_cast %253 : vector<2x32x32xf32> to vector<64x32xf32>
      %c64_i32 = arith.constant 64 : i32
      %255 = arith.muli %arg24, %c64_i32 : i32
      %256 = tpu.assume_multiple %255, 64 : i32
      %257 = arith.index_cast %256 : i32 to index
      %c0_177 = arith.constant 0 : index
      %258 = vector.load %arg19[%257, %c0_177] : memref<512x32xf32, #tpu.memory_space<vmem>>, vector<64x32xf32>
      tpu.vector_store %arg19[%257, %c0_177], %254 {strides = array<i32>} : memref<512x32xf32, #tpu.memory_space<vmem>>, vector<64x32xf32>,
    }
    %c8_i32_6 = arith.constant 8 : i32
    %c0_7 = arith.constant 0 : index
    %c0_8 = arith.constant 0 : index
    %5 = tpu.strided_load %arg19[%c0_7, %c0_8] {strides = array<i32: 2, 1>} : memref<512x32xf32, #tpu.memory_space<vmem>>, vector<256x32xf32>
    %c1 = arith.constant 1 : index
    %c0_9 = arith.constant 0 : index
    %6 = tpu.strided_load %arg19[%c1, %c0_9] {strides = array<i32: 2, 1>} : memref<512x32xf32, #tpu.memory_space<vmem>>, vector<256x32xf32>
    %7 = arith.maximumf %5, %6 : vector<256x32xf32>
    %c0_10 = arith.constant 0 : index
    %c0_11 = arith.constant 0 : index
    %8 = vector.load %arg4[%c0_10, %c0_11] : memref<1x32xf32, #tpu.memory_space<vmem>>, vector<1x32xf32>
    %9 = vector.broadcast %8 : vector<1x32xf32> to vector<256x32xf32>
    %10 = arith.mulf %7, %9 : vector<256x32xf32>
    %c0_12 = arith.constant 0 : index
    %c0_13 = arith.constant 0 : index
    %11 = vector.load %arg5[%c0_12, %c0_13] : memref<1x32xf32, #tpu.memory_space<vmem>>, vector<1x32xf32>
    %12 = vector.broadcast %11 : vector<1x32xf32> to vector<256x32xf32>
    %13 = arith.addf %10, %12 : vector<256x32xf32>
    %14 = vector.shape_cast %13 : vector<256x32xf32> to vector<16x16x32xf32>
    %15 = arith.truncf %14 : vector<16x16x32xf32> to vector<16x16x32xbf16>
    %c1_14 = arith.constant 1 : index
    %c16 = arith.constant 16 : index
    %c0_15 = arith.constant 0 : index
    %16 = vector.load %arg20[%c1_14, %c16, %c0_15] : memref<18x40x32xbf16, #tpu.memory_space<vmem>>, vector<16x16x32xbf16>
    tpu.vector_store %arg20[%c1_14, %c16, %c0_15], %15 {strides = array<i32>} : memref<18x40x32xbf16, #tpu.memory_space<vmem>>, vector<16x16x32xbf16>,
    %c0_i32_16 = arith.constant 0 : i32
    %c2_i32 = arith.constant 2 : i32
    %17 = arith.addi %c0_i32_16, %c2_i32 : i32
    %c1_i32_17 = arith.constant 1 : i32
    scf.for %arg24 = %c0_i32_16 to %17 step %c1_i32_17  : i32 {
      %c8_i32_169 = arith.constant 8 : i32
      %236 = arith.muli %arg24, %c8_i32_169 : i32
      %cst_170 = arith.constant 0.000000e+00 : f32
      %237 = vector.broadcast %cst_170 : f32 to vector<128x64xf32>
      %c0_i32_171 = arith.constant 0 : i32
      %238 = arith.addi %236, %c0_i32_171 : i32
      %239 = arith.index_cast %238 : i32 to index
      %c15_172 = arith.constant 15 : index
      %c0_173 = arith.constant 0 : index
      %240 = vector.load %arg20[%239, %c15_172, %c0_173] : memref<18x40x32xbf16, #tpu.memory_space<vmem>>, vector<8x16x32xbf16>
      %241 = vector.shape_cast %240 : vector<8x16x32xbf16> to vector<128x32xbf16>
      %c0_174 = arith.constant 0 : index
      %c0_175 = arith.constant 0 : index
      %c0_176 = arith.constant 0 : index
      %242 = vector.load %arg6[%c0_174, %c0_175, %c0_176] : memref<9x32x64xbf16, #tpu.memory_space<vmem>>, vector<1x32x64xbf16>
      %243 = vector.shape_cast %242 : vector<1x32x64xbf16> to vector<32x64xbf16>
      %cst_177 = arith.constant dense<0.000000e+00> : vector<128x64xf32>
      %244 = tpu.matmul %241, %243, %cst_177 {dimension_numbers = #tpu.dot_dimension_numbers<[1], [0], [0], [1], [0, 0, 1, 1], [], []>} : vector<128x32xbf16>, vector<32x64xbf16>, vector<128x64xf32> -> vector<128x64xf32>
      %245 = arith.addf %237, %244 : vector<128x64xf32>
      %c0_i32_178 = arith.constant 0 : i32
      %246 = arith.addi %236, %c0_i32_178 : i32
      %247 = arith.index_cast %246 : i32 to index
      %c16_179 = arith.constant 16 : index
      %c0_180 = arith.constant 0 : index
      %248 = vector.load %arg20[%247, %c16_179, %c0_180] : memref<18x40x32xbf16, #tpu.memory_space<vmem>>, vector<8x16x32xbf16>
      %249 = vector.shape_cast %248 : vector<8x16x32xbf16> to vector<128x32xbf16>
      %c1_181 = arith.constant 1 : index
      %c0_182 = arith.constant 0 : index
      %c0_183 = arith.constant 0 : index
      %250 = vector.load %arg6[%c1_181, %c0_182, %c0_183] : memref<9x32x64xbf16, #tpu.memory_space<vmem>>, vector<1x32x64xbf16>
      %251 = vector.shape_cast %250 : vector<1x32x64xbf16> to vector<32x64xbf16>
      %cst_184 = arith.constant dense<0.000000e+00> : vector<128x64xf32>
      %252 = tpu.matmul %249, %251, %cst_184 {dimension_numbers = #tpu.dot_dimension_numbers<[1], [0], [0], [1], [0, 0, 1, 1], [], []>} : vector<128x32xbf16>, vector<32x64xbf16>, vector<128x64xf32> -> vector<128x64xf32>
      %253 = arith.addf %245, %252 : vector<128x64xf32>
      %c0_i32_185 = arith.constant 0 : i32
      %254 = arith.addi %236, %c0_i32_185 : i32
      %255 = arith.index_cast %254 : i32 to index
      %c17_186 = arith.constant 17 : index
      %c0_187 = arith.constant 0 : index
      %256 = vector.load %arg20[%255, %c17_186, %c0_187] : memref<18x40x32xbf16, #tpu.memory_space<vmem>>, vector<8x16x32xbf16>
      %257 = vector.shape_cast %256 : vector<8x16x32xbf16> to vector<128x32xbf16>
      %c2_188 = arith.constant 2 : index
      %c0_189 = arith.constant 0 : index
      %c0_190 = arith.constant 0 : index
      %258 = vector.load %arg6[%c2_188, %c0_189, %c0_190] : memref<9x32x64xbf16, #tpu.memory_space<vmem>>, vector<1x32x64xbf16>
      %259 = vector.shape_cast %258 : vector<1x32x64xbf16> to vector<32x64xbf16>
      %cst_191 = arith.constant dense<0.000000e+00> : vector<128x64xf32>
      %260 = tpu.matmul %257, %259, %cst_191 {dimension_numbers = #tpu.dot_dimension_numbers<[1], [0], [0], [1], [0, 0, 1, 1], [], []>} : vector<128x32xbf16>, vector<32x64xbf16>, vector<128x64xf32> -> vector<128x64xf32>
      %261 = arith.addf %253, %260 : vector<128x64xf32>
      %c1_i32_192 = arith.constant 1 : i32
      %262 = arith.addi %236, %c1_i32_192 : i32
      %263 = arith.index_cast %262 : i32 to index
      %c15_193 = arith.constant 15 : index
      %c0_194 = arith.constant 0 : index
      %264 = vector.load %arg20[%263, %c15_193, %c0_194] : memref<18x40x32xbf16, #tpu.memory_space<vmem>>, vector<8x16x32xbf16>
      %265 = vector.shape_cast %264 : vector<8x16x32xbf16> to vector<128x32xbf16>
      %c3_195 = arith.constant 3 : index
      %c0_196 = arith.constant 0 : index
      %c0_197 = arith.constant 0 : index
      %266 = vector.load %arg6[%c3_195, %c0_196, %c0_197] : memref<9x32x64xbf16, #tpu.memory_space<vmem>>, vector<1x32x64xbf16>
      %267 = vector.shape_cast %266 : vector<1x32x64xbf16> to vector<32x64xbf16>
      %cst_198 = arith.constant dense<0.000000e+00> : vector<128x64xf32>
      %268 = tpu.matmul %265, %267, %cst_198 {dimension_numbers = #tpu.dot_dimension_numbers<[1], [0], [0], [1], [0, 0, 1, 1], [], []>} : vector<128x32xbf16>, vector<32x64xbf16>, vector<128x64xf32> -> vector<128x64xf32>
      %269 = arith.addf %261, %268 : vector<128x64xf32>
      %c1_i32_199 = arith.constant 1 : i32
      %270 = arith.addi %236, %c1_i32_199 : i32
      %271 = arith.index_cast %270 : i32 to index
      %c16_200 = arith.constant 16 : index
      %c0_201 = arith.constant 0 : index
      %272 = vector.load %arg20[%271, %c16_200, %c0_201] : memref<18x40x32xbf16, #tpu.memory_space<vmem>>, vector<8x16x32xbf16>
      %273 = vector.shape_cast %272 : vector<8x16x32xbf16> to vector<128x32xbf16>
      %c4_202 = arith.constant 4 : index
      %c0_203 = arith.constant 0 : index
      %c0_204 = arith.constant 0 : index
      %274 = vector.load %arg6[%c4_202, %c0_203, %c0_204] : memref<9x32x64xbf16, #tpu.memory_space<vmem>>, vector<1x32x64xbf16>
      %275 = vector.shape_cast %274 : vector<1x32x64xbf16> to vector<32x64xbf16>
      %cst_205 = arith.constant dense<0.000000e+00> : vector<128x64xf32>
      %276 = tpu.matmul %273, %275, %cst_205 {dimension_numbers = #tpu.dot_dimension_numbers<[1], [0], [0], [1], [0, 0, 1, 1], [], []>} : vector<128x32xbf16>, vector<32x64xbf16>, vector<128x64xf32> -> vector<128x64xf32>
      %277 = arith.addf %269, %276 : vector<128x64xf32>
      %c1_i32_206 = arith.constant 1 : i32
      %278 = arith.addi %236, %c1_i32_206 : i32
      %279 = arith.index_cast %278 : i32 to index
      %c17_207 = arith.constant 17 : index
      %c0_208 = arith.constant 0 : index
      %280 = vector.load %arg20[%279, %c17_207, %c0_208] : memref<18x40x32xbf16, #tpu.memory_space<vmem>>, vector<8x16x32xbf16>
      %281 = vector.shape_cast %280 : vector<8x16x32xbf16> to vector<128x32xbf16>
      %c5_209 = arith.constant 5 : index
      %c0_210 = arith.constant 0 : index
      %c0_211 = arith.constant 0 : index
      %282 = vector.load %arg6[%c5_209, %c0_210, %c0_211] : memref<9x32x64xbf16, #tpu.memory_space<vmem>>, vector<1x32x64xbf16>
      %283 = vector.shape_cast %282 : vector<1x32x64xbf16> to vector<32x64xbf16>
      %cst_212 = arith.constant dense<0.000000e+00> : vector<128x64xf32>
      %284 = tpu.matmul %281, %283, %cst_212 {dimension_numbers = #tpu.dot_dimension_numbers<[1], [0], [0], [1], [0, 0, 1, 1], [], []>} : vector<128x32xbf16>, vector<32x64xbf16>, vector<128x64xf32> -> vector<128x64xf32>
      %285 = arith.addf %277, %284 : vector<128x64xf32>
      %c2_i32_213 = arith.constant 2 : i32
      %286 = arith.addi %236, %c2_i32_213 : i32
      %287 = arith.index_cast %286 : i32 to index
      %c15_214 = arith.constant 15 : index
      %c0_215 = arith.constant 0 : index
      %288 = vector.load %arg20[%287, %c15_214, %c0_215] : memref<18x40x32xbf16, #tpu.memory_space<vmem>>, vector<8x16x32xbf16>
      %289 = vector.shape_cast %288 : vector<8x16x32xbf16> to vector<128x32xbf16>
      %c6_216 = arith.constant 6 : index
      %c0_217 = arith.constant 0 : index
      %c0_218 = arith.constant 0 : index
      %290 = vector.load %arg6[%c6_216, %c0_217, %c0_218] : memref<9x32x64xbf16, #tpu.memory_space<vmem>>, vector<1x32x64xbf16>
      %291 = vector.shape_cast %290 : vector<1x32x64xbf16> to vector<32x64xbf16>
      %cst_219 = arith.constant dense<0.000000e+00> : vector<128x64xf32>
      %292 = tpu.matmul %289, %291, %cst_219 {dimension_numbers = #tpu.dot_dimension_numbers<[1], [0], [0], [1], [0, 0, 1, 1], [], []>} : vector<128x32xbf16>, vector<32x64xbf16>, vector<128x64xf32> -> vector<128x64xf32>
      %293 = arith.addf %285, %292 : vector<128x64xf32>
      %c2_i32_220 = arith.constant 2 : i32
      %294 = arith.addi %236, %c2_i32_220 : i32
      %295 = arith.index_cast %294 : i32 to index
      %c16_221 = arith.constant 16 : index
      %c0_222 = arith.constant 0 : index
      %296 = vector.load %arg20[%295, %c16_221, %c0_222] : memref<18x40x32xbf16, #tpu.memory_space<vmem>>, vector<8x16x32xbf16>
      %297 = vector.shape_cast %296 : vector<8x16x32xbf16> to vector<128x32xbf16>
      %c7_223 = arith.constant 7 : index
      %c0_224 = arith.constant 0 : index
      %c0_225 = arith.constant 0 : index
      %298 = vector.load %arg6[%c7_223, %c0_224, %c0_225] : memref<9x32x64xbf16, #tpu.memory_space<vmem>>, vector<1x32x64xbf16>
      %299 = vector.shape_cast %298 : vector<1x32x64xbf16> to vector<32x64xbf16>
      %cst_226 = arith.constant dense<0.000000e+00> : vector<128x64xf32>
      %300 = tpu.matmul %297, %299, %cst_226 {dimension_numbers = #tpu.dot_dimension_numbers<[1], [0], [0], [1], [0, 0, 1, 1], [], []>} : vector<128x32xbf16>, vector<32x64xbf16>, vector<128x64xf32> -> vector<128x64xf32>
      %301 = arith.addf %293, %300 : vector<128x64xf32>
      %c2_i32_227 = arith.constant 2 : i32
      %302 = arith.addi %236, %c2_i32_227 : i32
      %303 = arith.index_cast %302 : i32 to index
      %c17_228 = arith.constant 17 : index
      %c0_229 = arith.constant 0 : index
      %304 = vector.load %arg20[%303, %c17_228, %c0_229] : memref<18x40x32xbf16, #tpu.memory_space<vmem>>, vector<8x16x32xbf16>
      %305 = vector.shape_cast %304 : vector<8x16x32xbf16> to vector<128x32xbf16>
      %c8_230 = arith.constant 8 : index
      %c0_231 = arith.constant 0 : index
      %c0_232 = arith.constant 0 : index
      %306 = vector.load %arg6[%c8_230, %c0_231, %c0_232] : memref<9x32x64xbf16, #tpu.memory_space<vmem>>, vector<1x32x64xbf16>
      %307 = vector.shape_cast %306 : vector<1x32x64xbf16> to vector<32x64xbf16>
      %cst_233 = arith.constant dense<0.000000e+00> : vector<128x64xf32>
      %308 = tpu.matmul %305, %307, %cst_233 {dimension_numbers = #tpu.dot_dimension_numbers<[1], [0], [0], [1], [0, 0, 1, 1], [], []>} : vector<128x32xbf16>, vector<32x64xbf16>, vector<128x64xf32> -> vector<128x64xf32>
      %309 = arith.addf %301, %308 : vector<128x64xf32>
      %c0_234 = arith.constant 0 : index
      %c0_235 = arith.constant 0 : index
      %310 = vector.load %arg7[%c0_234, %c0_235] : memref<1x64xf32, #tpu.memory_space<vmem>>, vector<1x64xf32>
      %311 = vector.broadcast %310 : vector<1x64xf32> to vector<128x64xf32>
      %312 = arith.addf %309, %311 : vector<128x64xf32>
      %cst_236 = arith.constant 0.000000e+00 : f32
      %313 = vector.broadcast %cst_236 : f32 to vector<128x64xf32>
      %314 = arith.maximumf %312, %313 : vector<128x64xf32>
      %315 = vector.shape_cast %314 : vector<128x64xf32> to vector<4x2x16x64xf32>
      %316 = vector.extract_strided_slice %315 {offsets = [0, 0, 0, 0], sizes = [4, 1, 16, 64], strides = [1, 1, 1, 1]} : vector<4x2x16x64xf32> to vector<4x1x16x64xf32>
      %317 = vector.shape_cast %316 : vector<4x1x16x64xf32> to vector<4x16x64xf32>
      %318 = vector.extract_strided_slice %315 {offsets = [0, 1, 0, 0], sizes = [4, 1, 16, 64], strides = [1, 1, 1, 1]} : vector<4x2x16x64xf32> to vector<4x1x16x64xf32>
      %319 = vector.shape_cast %318 : vector<4x1x16x64xf32> to vector<4x16x64xf32>
      %320 = arith.maximumf %317, %319 : vector<4x16x64xf32>
      %321 = vector.shape_cast %320 : vector<4x16x64xf32> to vector<64x64xf32>
      %c64_i32 = arith.constant 64 : i32
      %322 = arith.muli %arg24, %c64_i32 : i32
      %323 = tpu.assume_multiple %322, 64 : i32
      %324 = arith.index_cast %323 : i32 to index
      %c0_237 = arith.constant 0 : index
      %325 = vector.load %arg21[%324, %c0_237] : memref<128x64xf32, #tpu.memory_space<vmem>>, vector<64x64xf32>
      tpu.vector_store %arg21[%324, %c0_237], %321 {strides = array<i32>} : memref<128x64xf32, #tpu.memory_space<vmem>>, vector<64x64xf32>,
    }
    %c2_i32_18 = arith.constant 2 : i32
    %c0_19 = arith.constant 0 : index
    %c0_20 = arith.constant 0 : index
    %18 = tpu.strided_load %arg21[%c0_19, %c0_20] {strides = array<i32: 2, 1>} : memref<128x64xf32, #tpu.memory_space<vmem>>, vector<64x64xf32>
    %c1_21 = arith.constant 1 : index
    %c0_22 = arith.constant 0 : index
    %19 = tpu.strided_load %arg21[%c1_21, %c0_22] {strides = array<i32: 2, 1>} : memref<128x64xf32, #tpu.memory_space<vmem>>, vector<64x64xf32>
    %20 = arith.maximumf %18, %19 : vector<64x64xf32>
    %c0_23 = arith.constant 0 : index
    %c0_24 = arith.constant 0 : index
    %21 = vector.load %arg8[%c0_23, %c0_24] : memref<1x64xf32, #tpu.memory_space<vmem>>, vector<1x64xf32>
    %22 = vector.broadcast %21 : vector<1x64xf32> to vector<64x64xf32>
    %23 = arith.mulf %20, %22 : vector<64x64xf32>
    %c0_25 = arith.constant 0 : index
    %c0_26 = arith.constant 0 : index
    %24 = vector.load %arg9[%c0_25, %c0_26] : memref<1x64xf32, #tpu.memory_space<vmem>>, vector<1x64xf32>
    %25 = vector.broadcast %24 : vector<1x64xf32> to vector<64x64xf32>
    %26 = arith.addf %23, %25 : vector<64x64xf32>
    %27 = vector.shape_cast %26 : vector<64x64xf32> to vector<8x8x64xf32>
    %28 = arith.truncf %27 : vector<8x8x64xf32> to vector<8x8x64xbf16>
    %c1_27 = arith.constant 1 : index
    %c16_28 = arith.constant 16 : index
    %c0_29 = arith.constant 0 : index
    %29 = vector.load %arg22[%c1_27, %c16_28, %c0_29] : memref<10x32x64xbf16, #tpu.memory_space<vmem>>, vector<8x8x64xbf16>
    tpu.vector_store %arg22[%c1_27, %c16_28, %c0_29], %28 {strides = array<i32>} : memref<10x32x64xbf16, #tpu.memory_space<vmem>>, vector<8x8x64xbf16>,
    %c0_i32_30 = arith.constant 0 : i32
    %c8_i32_31 = arith.constant 8 : i32
    %30 = arith.muli %c0_i32_30, %c8_i32_31 : i32
    %cst_32 = arith.constant 0.000000e+00 : f32
    %31 = vector.broadcast %cst_32 : f32 to vector<64x128xf32>
    %c0_i32_33 = arith.constant 0 : i32
    %32 = arith.addi %30, %c0_i32_33 : i32
    %33 = arith.index_cast %32 : i32 to index
    %c15 = arith.constant 15 : index
    %c0_34 = arith.constant 0 : index
    %34 = vector.load %arg22[%33, %c15, %c0_34] : memref<10x32x64xbf16, #tpu.memory_space<vmem>>, vector<8x8x64xbf16>
    %35 = vector.shape_cast %34 : vector<8x8x64xbf16> to vector<64x64xbf16>
    %c0_35 = arith.constant 0 : index
    %c0_36 = arith.constant 0 : index
    %c0_37 = arith.constant 0 : index
    %36 = vector.load %arg10[%c0_35, %c0_36, %c0_37] : memref<9x64x128xbf16, #tpu.memory_space<vmem>>, vector<1x64x128xbf16>
    %37 = vector.shape_cast %36 : vector<1x64x128xbf16> to vector<64x128xbf16>
    %cst_38 = arith.constant dense<0.000000e+00> : vector<64x128xf32>
    %38 = tpu.matmul %35, %37, %cst_38 {dimension_numbers = #tpu.dot_dimension_numbers<[1], [0], [0], [1], [0, 0, 1, 1], [], []>} : vector<64x64xbf16>, vector<64x128xbf16>, vector<64x128xf32> -> vector<64x128xf32>
    %39 = arith.addf %31, %38 : vector<64x128xf32>
    %c0_i32_39 = arith.constant 0 : i32
    %40 = arith.addi %30, %c0_i32_39 : i32
    %41 = arith.index_cast %40 : i32 to index
    %c16_40 = arith.constant 16 : index
    %c0_41 = arith.constant 0 : index
    %42 = vector.load %arg22[%41, %c16_40, %c0_41] : memref<10x32x64xbf16, #tpu.memory_space<vmem>>, vector<8x8x64xbf16>
    %43 = vector.shape_cast %42 : vector<8x8x64xbf16> to vector<64x64xbf16>
    %c1_42 = arith.constant 1 : index
    %c0_43 = arith.constant 0 : index
    %c0_44 = arith.constant 0 : index
    %44 = vector.load %arg10[%c1_42, %c0_43, %c0_44] : memref<9x64x128xbf16, #tpu.memory_space<vmem>>, vector<1x64x128xbf16>
    %45 = vector.shape_cast %44 : vector<1x64x128xbf16> to vector<64x128xbf16>
    %cst_45 = arith.constant dense<0.000000e+00> : vector<64x128xf32>
    %46 = tpu.matmul %43, %45, %cst_45 {dimension_numbers = #tpu.dot_dimension_numbers<[1], [0], [0], [1], [0, 0, 1, 1], [], []>} : vector<64x64xbf16>, vector<64x128xbf16>, vector<64x128xf32> -> vector<64x128xf32>
    %47 = arith.addf %39, %46 : vector<64x128xf32>
    %c0_i32_46 = arith.constant 0 : i32
    %48 = arith.addi %30, %c0_i32_46 : i32
    %49 = arith.index_cast %48 : i32 to index
    %c17 = arith.constant 17 : index
    %c0_47 = arith.constant 0 : index
    %50 = vector.load %arg22[%49, %c17, %c0_47] : memref<10x32x64xbf16, #tpu.memory_space<vmem>>, vector<8x8x64xbf16>
    %51 = vector.shape_cast %50 : vector<8x8x64xbf16> to vector<64x64xbf16>
    %c2 = arith.constant 2 : index
    %c0_48 = arith.constant 0 : index
    %c0_49 = arith.constant 0 : index
    %52 = vector.load %arg10[%c2, %c0_48, %c0_49] : memref<9x64x128xbf16, #tpu.memory_space<vmem>>, vector<1x64x128xbf16>
    %53 = vector.shape_cast %52 : vector<1x64x128xbf16> to vector<64x128xbf16>
    %cst_50 = arith.constant dense<0.000000e+00> : vector<64x128xf32>
    %54 = tpu.matmul %51, %53, %cst_50 {dimension_numbers = #tpu.dot_dimension_numbers<[1], [0], [0], [1], [0, 0, 1, 1], [], []>} : vector<64x64xbf16>, vector<64x128xbf16>, vector<64x128xf32> -> vector<64x128xf32>
    %55 = arith.addf %47, %54 : vector<64x128xf32>
    %c1_i32_51 = arith.constant 1 : i32
    %56 = arith.addi %30, %c1_i32_51 : i32
    %57 = arith.index_cast %56 : i32 to index
    %c15_52 = arith.constant 15 : index
    %c0_53 = arith.constant 0 : index
    %58 = vector.load %arg22[%57, %c15_52, %c0_53] : memref<10x32x64xbf16, #tpu.memory_space<vmem>>, vector<8x8x64xbf16>
    %59 = vector.shape_cast %58 : vector<8x8x64xbf16> to vector<64x64xbf16>
    %c3 = arith.constant 3 : index
    %c0_54 = arith.constant 0 : index
    %c0_55 = arith.constant 0 : index
    %60 = vector.load %arg10[%c3, %c0_54, %c0_55] : memref<9x64x128xbf16, #tpu.memory_space<vmem>>, vector<1x64x128xbf16>
    %61 = vector.shape_cast %60 : vector<1x64x128xbf16> to vector<64x128xbf16>
    %cst_56 = arith.constant dense<0.000000e+00> : vector<64x128xf32>
    %62 = tpu.matmul %59, %61, %cst_56 {dimension_numbers = #tpu.dot_dimension_numbers<[1], [0], [0], [1], [0, 0, 1, 1], [], []>} : vector<64x64xbf16>, vector<64x128xbf16>, vector<64x128xf32> -> vector<64x128xf32>
    %63 = arith.addf %55, %62 : vector<64x128xf32>
    %c1_i32_57 = arith.constant 1 : i32
    %64 = arith.addi %30, %c1_i32_57 : i32
    %65 = arith.index_cast %64 : i32 to index
    %c16_58 = arith.constant 16 : index
    %c0_59 = arith.constant 0 : index
    %66 = vector.load %arg22[%65, %c16_58, %c0_59] : memref<10x32x64xbf16, #tpu.memory_space<vmem>>, vector<8x8x64xbf16>
    %67 = vector.shape_cast %66 : vector<8x8x64xbf16> to vector<64x64xbf16>
    %c4 = arith.constant 4 : index
    %c0_60 = arith.constant 0 : index
    %c0_61 = arith.constant 0 : index
    %68 = vector.load %arg10[%c4, %c0_60, %c0_61] : memref<9x64x128xbf16, #tpu.memory_space<vmem>>, vector<1x64x128xbf16>
    %69 = vector.shape_cast %68 : vector<1x64x128xbf16> to vector<64x128xbf16>
    %cst_62 = arith.constant dense<0.000000e+00> : vector<64x128xf32>
    %70 = tpu.matmul %67, %69, %cst_62 {dimension_numbers = #tpu.dot_dimension_numbers<[1], [0], [0], [1], [0, 0, 1, 1], [], []>} : vector<64x64xbf16>, vector<64x128xbf16>, vector<64x128xf32> -> vector<64x128xf32>
    %71 = arith.addf %63, %70 : vector<64x128xf32>
    %c1_i32_63 = arith.constant 1 : i32
    %72 = arith.addi %30, %c1_i32_63 : i32
    %73 = arith.index_cast %72 : i32 to index
    %c17_64 = arith.constant 17 : index
    %c0_65 = arith.constant 0 : index
    %74 = vector.load %arg22[%73, %c17_64, %c0_65] : memref<10x32x64xbf16, #tpu.memory_space<vmem>>, vector<8x8x64xbf16>
    %75 = vector.shape_cast %74 : vector<8x8x64xbf16> to vector<64x64xbf16>
    %c5 = arith.constant 5 : index
    %c0_66 = arith.constant 0 : index
    %c0_67 = arith.constant 0 : index
    %76 = vector.load %arg10[%c5, %c0_66, %c0_67] : memref<9x64x128xbf16, #tpu.memory_space<vmem>>, vector<1x64x128xbf16>
    %77 = vector.shape_cast %76 : vector<1x64x128xbf16> to vector<64x128xbf16>
    %cst_68 = arith.constant dense<0.000000e+00> : vector<64x128xf32>
    %78 = tpu.matmul %75, %77, %cst_68 {dimension_numbers = #tpu.dot_dimension_numbers<[1], [0], [0], [1], [0, 0, 1, 1], [], []>} : vector<64x64xbf16>, vector<64x128xbf16>, vector<64x128xf32> -> vector<64x128xf32>
    %79 = arith.addf %71, %78 : vector<64x128xf32>
    %c2_i32_69 = arith.constant 2 : i32
    %80 = arith.addi %30, %c2_i32_69 : i32
    %81 = arith.index_cast %80 : i32 to index
    %c15_70 = arith.constant 15 : index
    %c0_71 = arith.constant 0 : index
    %82 = vector.load %arg22[%81, %c15_70, %c0_71] : memref<10x32x64xbf16, #tpu.memory_space<vmem>>, vector<8x8x64xbf16>
    %83 = vector.shape_cast %82 : vector<8x8x64xbf16> to vector<64x64xbf16>
    %c6 = arith.constant 6 : index
    %c0_72 = arith.constant 0 : index
    %c0_73 = arith.constant 0 : index
    %84 = vector.load %arg10[%c6, %c0_72, %c0_73] : memref<9x64x128xbf16, #tpu.memory_space<vmem>>, vector<1x64x128xbf16>
    %85 = vector.shape_cast %84 : vector<1x64x128xbf16> to vector<64x128xbf16>
    %cst_74 = arith.constant dense<0.000000e+00> : vector<64x128xf32>
    %86 = tpu.matmul %83, %85, %cst_74 {dimension_numbers = #tpu.dot_dimension_numbers<[1], [0], [0], [1], [0, 0, 1, 1], [], []>} : vector<64x64xbf16>, vector<64x128xbf16>, vector<64x128xf32> -> vector<64x128xf32>
    %87 = arith.addf %79, %86 : vector<64x128xf32>
    %c2_i32_75 = arith.constant 2 : i32
    %88 = arith.addi %30, %c2_i32_75 : i32
    %89 = arith.index_cast %88 : i32 to index
    %c16_76 = arith.constant 16 : index
    %c0_77 = arith.constant 0 : index
    %90 = vector.load %arg22[%89, %c16_76, %c0_77] : memref<10x32x64xbf16, #tpu.memory_space<vmem>>, vector<8x8x64xbf16>
    %91 = vector.shape_cast %90 : vector<8x8x64xbf16> to vector<64x64xbf16>
    %c7 = arith.constant 7 : index
    %c0_78 = arith.constant 0 : index
    %c0_79 = arith.constant 0 : index
    %92 = vector.load %arg10[%c7, %c0_78, %c0_79] : memref<9x64x128xbf16, #tpu.memory_space<vmem>>, vector<1x64x128xbf16>
    %93 = vector.shape_cast %92 : vector<1x64x128xbf16> to vector<64x128xbf16>
    %cst_80 = arith.constant dense<0.000000e+00> : vector<64x128xf32>
    %94 = tpu.matmul %91, %93, %cst_80 {dimension_numbers = #tpu.dot_dimension_numbers<[1], [0], [0], [1], [0, 0, 1, 1], [], []>} : vector<64x64xbf16>, vector<64x128xbf16>, vector<64x128xf32> -> vector<64x128xf32>
    %95 = arith.addf %87, %94 : vector<64x128xf32>
    %c2_i32_81 = arith.constant 2 : i32
    %96 = arith.addi %30, %c2_i32_81 : i32
    %97 = arith.index_cast %96 : i32 to index
    %c17_82 = arith.constant 17 : index
    %c0_83 = arith.constant 0 : index
    %98 = vector.load %arg22[%97, %c17_82, %c0_83] : memref<10x32x64xbf16, #tpu.memory_space<vmem>>, vector<8x8x64xbf16>
    %99 = vector.shape_cast %98 : vector<8x8x64xbf16> to vector<64x64xbf16>
    %c8 = arith.constant 8 : index
    %c0_84 = arith.constant 0 : index
    %c0_85 = arith.constant 0 : index
    %100 = vector.load %arg10[%c8, %c0_84, %c0_85] : memref<9x64x128xbf16, #tpu.memory_space<vmem>>, vector<1x64x128xbf16>
    %101 = vector.shape_cast %100 : vector<1x64x128xbf16> to vector<64x128xbf16>
    %cst_86 = arith.constant dense<0.000000e+00> : vector<64x128xf32>
    %102 = tpu.matmul %99, %101, %cst_86 {dimension_numbers = #tpu.dot_dimension_numbers<[1], [0], [0], [1], [0, 0, 1, 1], [], []>} : vector<64x64xbf16>, vector<64x128xbf16>, vector<64x128xf32> -> vector<64x128xf32>
    %103 = arith.addf %95, %102 : vector<64x128xf32>
    %c0_87 = arith.constant 0 : index
    %c0_88 = arith.constant 0 : index
    %104 = vector.load %arg11[%c0_87, %c0_88] : memref<1x128xf32, #tpu.memory_space<vmem>>, vector<1x128xf32>
    %105 = vector.broadcast %104 : vector<1x128xf32> to vector<64x128xf32>
    %106 = arith.addf %103, %105 : vector<64x128xf32>
    %cst_89 = arith.constant 0.000000e+00 : f32
    %107 = vector.broadcast %cst_89 : f32 to vector<64x128xf32>
    %108 = arith.maximumf %106, %107 : vector<64x128xf32>
    %109 = vector.shape_cast %108 : vector<64x128xf32> to vector<4x2x8x128xf32>
    %110 = vector.extract_strided_slice %109 {offsets = [0, 0, 0, 0], sizes = [4, 1, 8, 128], strides = [1, 1, 1, 1]} : vector<4x2x8x128xf32> to vector<4x1x8x128xf32>
    %111 = vector.shape_cast %110 : vector<4x1x8x128xf32> to vector<4x8x128xf32>
    %112 = vector.extract_strided_slice %109 {offsets = [0, 1, 0, 0], sizes = [4, 1, 8, 128], strides = [1, 1, 1, 1]} : vector<4x2x8x128xf32> to vector<4x1x8x128xf32>
    %113 = vector.shape_cast %112 : vector<4x1x8x128xf32> to vector<4x8x128xf32>
    %114 = arith.maximumf %111, %113 : vector<4x8x128xf32>
    %115 = vector.shape_cast %114 : vector<4x8x128xf32> to vector<32x128xf32>
    %c32_i32 = arith.constant 32 : i32
    %116 = arith.muli %c0_i32_30, %c32_i32 : i32
    %117 = tpu.assume_multiple %116, 32 : i32
    %118 = arith.index_cast %117 : i32 to index
    %c0_90 = arith.constant 0 : index
    %119 = vector.load %arg23[%118, %c0_90] : memref<32x128xf32, #tpu.memory_space<vmem>>, vector<32x128xf32>
    tpu.vector_store %arg23[%118, %c0_90], %115 {strides = array<i32>} : memref<32x128xf32, #tpu.memory_space<vmem>>, vector<32x128xf32>,
    %c1_i32_91 = arith.constant 1 : i32
    %c0_92 = arith.constant 0 : index
    %c0_93 = arith.constant 0 : index
    %120 = tpu.strided_load %arg23[%c0_92, %c0_93] {strides = array<i32: 2, 1>} : memref<32x128xf32, #tpu.memory_space<vmem>>, vector<16x128xf32>
    %c1_94 = arith.constant 1 : index
    %c0_95 = arith.constant 0 : index
    %121 = tpu.strided_load %arg23[%c1_94, %c0_95] {strides = array<i32: 2, 1>} : memref<32x128xf32, #tpu.memory_space<vmem>>, vector<16x128xf32>
    %122 = arith.maximumf %120, %121 : vector<16x128xf32>
    %c0_96 = arith.constant 0 : index
    %c0_97 = arith.constant 0 : index
    %123 = vector.load %arg12[%c0_96, %c0_97] : memref<1x128xf32, #tpu.memory_space<vmem>>, vector<1x128xf32>
    %124 = vector.broadcast %123 : vector<1x128xf32> to vector<16x128xf32>
    %125 = arith.mulf %122, %124 : vector<16x128xf32>
    %c0_98 = arith.constant 0 : index
    %c0_99 = arith.constant 0 : index
    %126 = vector.load %arg13[%c0_98, %c0_99] : memref<1x128xf32, #tpu.memory_space<vmem>>, vector<1x128xf32>
    %127 = vector.broadcast %126 : vector<1x128xf32> to vector<16x128xf32>
    %128 = arith.addf %125, %127 : vector<16x128xf32>
    %c0_100 = arith.constant 0 : index
    %c0_101 = arith.constant 0 : index
    %129 = vector.load %arg15[%c0_100, %c0_101] : memref<1x128xf32, #tpu.memory_space<vmem>>, vector<1x128xf32>
    %130 = vector.extract_strided_slice %128 {offsets = [0, 0], sizes = [1, 128], strides = [1, 1]} : vector<16x128xf32> to vector<1x128xf32>
    %131 = arith.truncf %130 : vector<1x128xf32> to vector<1x128xbf16>
    %c0_102 = arith.constant 0 : index
    %c0_103 = arith.constant 0 : index
    %c0_104 = arith.constant 0 : index
    %132 = vector.load %arg14[%c0_102, %c0_103, %c0_104] : memref<16x128x128xbf16, #tpu.memory_space<vmem>>, vector<1x128x128xbf16>
    %133 = vector.shape_cast %132 : vector<1x128x128xbf16> to vector<128x128xbf16>
    %cst_105 = arith.constant dense<0.000000e+00> : vector<1x128xf32>
    %134 = tpu.matmul %131, %133, %cst_105 {dimension_numbers = #tpu.dot_dimension_numbers<[1], [0], [0], [1], [0, 0, 1, 1], [], []>} : vector<1x128xbf16>, vector<128x128xbf16>, vector<1x128xf32> -> vector<1x128xf32>
    %135 = arith.addf %129, %134 : vector<1x128xf32>
    %136 = vector.extract_strided_slice %128 {offsets = [1, 0], sizes = [1, 128], strides = [1, 1]} : vector<16x128xf32> to vector<1x128xf32>
    %137 = arith.truncf %136 : vector<1x128xf32> to vector<1x128xbf16>
    %c1_106 = arith.constant 1 : index
    %c0_107 = arith.constant 0 : index
    %c0_108 = arith.constant 0 : index
    %138 = vector.load %arg14[%c1_106, %c0_107, %c0_108] : memref<16x128x128xbf16, #tpu.memory_space<vmem>>, vector<1x128x128xbf16>
    %139 = vector.shape_cast %138 : vector<1x128x128xbf16> to vector<128x128xbf16>
    %cst_109 = arith.constant dense<0.000000e+00> : vector<1x128xf32>
    %140 = tpu.matmul %137, %139, %cst_109 {dimension_numbers = #tpu.dot_dimension_numbers<[1], [0], [0], [1], [0, 0, 1, 1], [], []>} : vector<1x128xbf16>, vector<128x128xbf16>, vector<1x128xf32> -> vector<1x128xf32>
    %141 = arith.addf %135, %140 : vector<1x128xf32>
    %142 = vector.extract_strided_slice %128 {offsets = [2, 0], sizes = [1, 128], strides = [1, 1]} : vector<16x128xf32> to vector<1x128xf32>
    %143 = arith.truncf %142 : vector<1x128xf32> to vector<1x128xbf16>
    %c2_110 = arith.constant 2 : index
    %c0_111 = arith.constant 0 : index
    %c0_112 = arith.constant 0 : index
    %144 = vector.load %arg14[%c2_110, %c0_111, %c0_112] : memref<16x128x128xbf16, #tpu.memory_space<vmem>>, vector<1x128x128xbf16>
    %145 = vector.shape_cast %144 : vector<1x128x128xbf16> to vector<128x128xbf16>
    %cst_113 = arith.constant dense<0.000000e+00> : vector<1x128xf32>
    %146 = tpu.matmul %143, %145, %cst_113 {dimension_numbers = #tpu.dot_dimension_numbers<[1], [0], [0], [1], [0, 0, 1, 1], [], []>} : vector<1x128xbf16>, vector<128x128xbf16>, vector<1x128xf32> -> vector<1x128xf32>
    %147 = arith.addf %141, %146 : vector<1x128xf32>
    %148 = vector.extract_strided_slice %128 {offsets = [3, 0], sizes = [1, 128], strides = [1, 1]} : vector<16x128xf32> to vector<1x128xf32>
    %149 = arith.truncf %148 : vector<1x128xf32> to vector<1x128xbf16>
    %c3_114 = arith.constant 3 : index
    %c0_115 = arith.constant 0 : index
    %c0_116 = arith.constant 0 : index
    %150 = vector.load %arg14[%c3_114, %c0_115, %c0_116] : memref<16x128x128xbf16, #tpu.memory_space<vmem>>, vector<1x128x128xbf16>
    %151 = vector.shape_cast %150 : vector<1x128x128xbf16> to vector<128x128xbf16>
    %cst_117 = arith.constant dense<0.000000e+00> : vector<1x128xf32>
    %152 = tpu.matmul %149, %151, %cst_117 {dimension_numbers = #tpu.dot_dimension_numbers<[1], [0], [0], [1], [0, 0, 1, 1], [], []>} : vector<1x128xbf16>, vector<128x128xbf16>, vector<1x128xf32> -> vector<1x128xf32>
    %153 = arith.addf %147, %152 : vector<1x128xf32>
    %154 = vector.extract_strided_slice %128 {offsets = [4, 0], sizes = [1, 128], strides = [1, 1]} : vector<16x128xf32> to vector<1x128xf32>
    %155 = arith.truncf %154 : vector<1x128xf32> to vector<1x128xbf16>
    %c4_118 = arith.constant 4 : index
    %c0_119 = arith.constant 0 : index
    %c0_120 = arith.constant 0 : index
    %156 = vector.load %arg14[%c4_118, %c0_119, %c0_120] : memref<16x128x128xbf16, #tpu.memory_space<vmem>>, vector<1x128x128xbf16>
    %157 = vector.shape_cast %156 : vector<1x128x128xbf16> to vector<128x128xbf16>
    %cst_121 = arith.constant dense<0.000000e+00> : vector<1x128xf32>
    %158 = tpu.matmul %155, %157, %cst_121 {dimension_numbers = #tpu.dot_dimension_numbers<[1], [0], [0], [1], [0, 0, 1, 1], [], []>} : vector<1x128xbf16>, vector<128x128xbf16>, vector<1x128xf32> -> vector<1x128xf32>
    %159 = arith.addf %153, %158 : vector<1x128xf32>
    %160 = vector.extract_strided_slice %128 {offsets = [5, 0], sizes = [1, 128], strides = [1, 1]} : vector<16x128xf32> to vector<1x128xf32>
    %161 = arith.truncf %160 : vector<1x128xf32> to vector<1x128xbf16>
    %c5_122 = arith.constant 5 : index
    %c0_123 = arith.constant 0 : index
    %c0_124 = arith.constant 0 : index
    %162 = vector.load %arg14[%c5_122, %c0_123, %c0_124] : memref<16x128x128xbf16, #tpu.memory_space<vmem>>, vector<1x128x128xbf16>
    %163 = vector.shape_cast %162 : vector<1x128x128xbf16> to vector<128x128xbf16>
    %cst_125 = arith.constant dense<0.000000e+00> : vector<1x128xf32>
    %164 = tpu.matmul %161, %163, %cst_125 {dimension_numbers = #tpu.dot_dimension_numbers<[1], [0], [0], [1], [0, 0, 1, 1], [], []>} : vector<1x128xbf16>, vector<128x128xbf16>, vector<1x128xf32> -> vector<1x128xf32>
    %165 = arith.addf %159, %164 : vector<1x128xf32>
    %166 = vector.extract_strided_slice %128 {offsets = [6, 0], sizes = [1, 128], strides = [1, 1]} : vector<16x128xf32> to vector<1x128xf32>
    %167 = arith.truncf %166 : vector<1x128xf32> to vector<1x128xbf16>
    %c6_126 = arith.constant 6 : index
    %c0_127 = arith.constant 0 : index
    %c0_128 = arith.constant 0 : index
    %168 = vector.load %arg14[%c6_126, %c0_127, %c0_128] : memref<16x128x128xbf16, #tpu.memory_space<vmem>>, vector<1x128x128xbf16>
    %169 = vector.shape_cast %168 : vector<1x128x128xbf16> to vector<128x128xbf16>
    %cst_129 = arith.constant dense<0.000000e+00> : vector<1x128xf32>
    %170 = tpu.matmul %167, %169, %cst_129 {dimension_numbers = #tpu.dot_dimension_numbers<[1], [0], [0], [1], [0, 0, 1, 1], [], []>} : vector<1x128xbf16>, vector<128x128xbf16>, vector<1x128xf32> -> vector<1x128xf32>
    %171 = arith.addf %165, %170 : vector<1x128xf32>
    %172 = vector.extract_strided_slice %128 {offsets = [7, 0], sizes = [1, 128], strides = [1, 1]} : vector<16x128xf32> to vector<1x128xf32>
    %173 = arith.truncf %172 : vector<1x128xf32> to vector<1x128xbf16>
    %c7_130 = arith.constant 7 : index
    %c0_131 = arith.constant 0 : index
    %c0_132 = arith.constant 0 : index
    %174 = vector.load %arg14[%c7_130, %c0_131, %c0_132] : memref<16x128x128xbf16, #tpu.memory_space<vmem>>, vector<1x128x128xbf16>
    %175 = vector.shape_cast %174 : vector<1x128x128xbf16> to vector<128x128xbf16>
    %cst_133 = arith.constant dense<0.000000e+00> : vector<1x128xf32>
    %176 = tpu.matmul %173, %175, %cst_133 {dimension_numbers = #tpu.dot_dimension_numbers<[1], [0], [0], [1], [0, 0, 1, 1], [], []>} : vector<1x128xbf16>, vector<128x128xbf16>, vector<1x128xf32> -> vector<1x128xf32>
    %177 = arith.addf %171, %176 : vector<1x128xf32>
    %178 = vector.extract_strided_slice %128 {offsets = [8, 0], sizes = [1, 128], strides = [1, 1]} : vector<16x128xf32> to vector<1x128xf32>
    %179 = arith.truncf %178 : vector<1x128xf32> to vector<1x128xbf16>
    %c8_134 = arith.constant 8 : index
    %c0_135 = arith.constant 0 : index
    %c0_136 = arith.constant 0 : index
    %180 = vector.load %arg14[%c8_134, %c0_135, %c0_136] : memref<16x128x128xbf16, #tpu.memory_space<vmem>>, vector<1x128x128xbf16>
    %181 = vector.shape_cast %180 : vector<1x128x128xbf16> to vector<128x128xbf16>
    %cst_137 = arith.constant dense<0.000000e+00> : vector<1x128xf32>
    %182 = tpu.matmul %179, %181, %cst_137 {dimension_numbers = #tpu.dot_dimension_numbers<[1], [0], [0], [1], [0, 0, 1, 1], [], []>} : vector<1x128xbf16>, vector<128x128xbf16>, vector<1x128xf32> -> vector<1x128xf32>
    %183 = arith.addf %177, %182 : vector<1x128xf32>
    %184 = vector.extract_strided_slice %128 {offsets = [9, 0], sizes = [1, 128], strides = [1, 1]} : vector<16x128xf32> to vector<1x128xf32>
    %185 = arith.truncf %184 : vector<1x128xf32> to vector<1x128xbf16>
    %c9 = arith.constant 9 : index
    %c0_138 = arith.constant 0 : index
    %c0_139 = arith.constant 0 : index
    %186 = vector.load %arg14[%c9, %c0_138, %c0_139] : memref<16x128x128xbf16, #tpu.memory_space<vmem>>, vector<1x128x128xbf16>
    %187 = vector.shape_cast %186 : vector<1x128x128xbf16> to vector<128x128xbf16>
    %cst_140 = arith.constant dense<0.000000e+00> : vector<1x128xf32>
    %188 = tpu.matmul %185, %187, %cst_140 {dimension_numbers = #tpu.dot_dimension_numbers<[1], [0], [0], [1], [0, 0, 1, 1], [], []>} : vector<1x128xbf16>, vector<128x128xbf16>, vector<1x128xf32> -> vector<1x128xf32>
    %189 = arith.addf %183, %188 : vector<1x128xf32>
    %190 = vector.extract_strided_slice %128 {offsets = [10, 0], sizes = [1, 128], strides = [1, 1]} : vector<16x128xf32> to vector<1x128xf32>
    %191 = arith.truncf %190 : vector<1x128xf32> to vector<1x128xbf16>
    %c10 = arith.constant 10 : index
    %c0_141 = arith.constant 0 : index
    %c0_142 = arith.constant 0 : index
    %192 = vector.load %arg14[%c10, %c0_141, %c0_142] : memref<16x128x128xbf16, #tpu.memory_space<vmem>>, vector<1x128x128xbf16>
    %193 = vector.shape_cast %192 : vector<1x128x128xbf16> to vector<128x128xbf16>
    %cst_143 = arith.constant dense<0.000000e+00> : vector<1x128xf32>
    %194 = tpu.matmul %191, %193, %cst_143 {dimension_numbers = #tpu.dot_dimension_numbers<[1], [0], [0], [1], [0, 0, 1, 1], [], []>} : vector<1x128xbf16>, vector<128x128xbf16>, vector<1x128xf32> -> vector<1x128xf32>
    %195 = arith.addf %189, %194 : vector<1x128xf32>
    %196 = vector.extract_strided_slice %128 {offsets = [11, 0], sizes = [1, 128], strides = [1, 1]} : vector<16x128xf32> to vector<1x128xf32>
    %197 = arith.truncf %196 : vector<1x128xf32> to vector<1x128xbf16>
    %c11 = arith.constant 11 : index
    %c0_144 = arith.constant 0 : index
    %c0_145 = arith.constant 0 : index
    %198 = vector.load %arg14[%c11, %c0_144, %c0_145] : memref<16x128x128xbf16, #tpu.memory_space<vmem>>, vector<1x128x128xbf16>
    %199 = vector.shape_cast %198 : vector<1x128x128xbf16> to vector<128x128xbf16>
    %cst_146 = arith.constant dense<0.000000e+00> : vector<1x128xf32>
    %200 = tpu.matmul %197, %199, %cst_146 {dimension_numbers = #tpu.dot_dimension_numbers<[1], [0], [0], [1], [0, 0, 1, 1], [], []>} : vector<1x128xbf16>, vector<128x128xbf16>, vector<1x128xf32> -> vector<1x128xf32>
    %201 = arith.addf %195, %200 : vector<1x128xf32>
    %202 = vector.extract_strided_slice %128 {offsets = [12, 0], sizes = [1, 128], strides = [1, 1]} : vector<16x128xf32> to vector<1x128xf32>
    %203 = arith.truncf %202 : vector<1x128xf32> to vector<1x128xbf16>
    %c12 = arith.constant 12 : index
    %c0_147 = arith.constant 0 : index
    %c0_148 = arith.constant 0 : index
    %204 = vector.load %arg14[%c12, %c0_147, %c0_148] : memref<16x128x128xbf16, #tpu.memory_space<vmem>>, vector<1x128x128xbf16>
    %205 = vector.shape_cast %204 : vector<1x128x128xbf16> to vector<128x128xbf16>
    %cst_149 = arith.constant dense<0.000000e+00> : vector<1x128xf32>
    %206 = tpu.matmul %203, %205, %cst_149 {dimension_numbers = #tpu.dot_dimension_numbers<[1], [0], [0], [1], [0, 0, 1, 1], [], []>} : vector<1x128xbf16>, vector<128x128xbf16>, vector<1x128xf32> -> vector<1x128xf32>
    %207 = arith.addf %201, %206 : vector<1x128xf32>
    %208 = vector.extract_strided_slice %128 {offsets = [13, 0], sizes = [1, 128], strides = [1, 1]} : vector<16x128xf32> to vector<1x128xf32>
    %209 = arith.truncf %208 : vector<1x128xf32> to vector<1x128xbf16>
    %c13 = arith.constant 13 : index
    %c0_150 = arith.constant 0 : index
    %c0_151 = arith.constant 0 : index
    %210 = vector.load %arg14[%c13, %c0_150, %c0_151] : memref<16x128x128xbf16, #tpu.memory_space<vmem>>, vector<1x128x128xbf16>
    %211 = vector.shape_cast %210 : vector<1x128x128xbf16> to vector<128x128xbf16>
    %cst_152 = arith.constant dense<0.000000e+00> : vector<1x128xf32>
    %212 = tpu.matmul %209, %211, %cst_152 {dimension_numbers = #tpu.dot_dimension_numbers<[1], [0], [0], [1], [0, 0, 1, 1], [], []>} : vector<1x128xbf16>, vector<128x128xbf16>, vector<1x128xf32> -> vector<1x128xf32>
    %213 = arith.addf %207, %212 : vector<1x128xf32>
    %214 = vector.extract_strided_slice %128 {offsets = [14, 0], sizes = [1, 128], strides = [1, 1]} : vector<16x128xf32> to vector<1x128xf32>
    %215 = arith.truncf %214 : vector<1x128xf32> to vector<1x128xbf16>
    %c14 = arith.constant 14 : index
    %c0_153 = arith.constant 0 : index
    %c0_154 = arith.constant 0 : index
    %216 = vector.load %arg14[%c14, %c0_153, %c0_154] : memref<16x128x128xbf16, #tpu.memory_space<vmem>>, vector<1x128x128xbf16>
    %217 = vector.shape_cast %216 : vector<1x128x128xbf16> to vector<128x128xbf16>
    %cst_155 = arith.constant dense<0.000000e+00> : vector<1x128xf32>
    %218 = tpu.matmul %215, %217, %cst_155 {dimension_numbers = #tpu.dot_dimension_numbers<[1], [0], [0], [1], [0, 0, 1, 1], [], []>} : vector<1x128xbf16>, vector<128x128xbf16>, vector<1x128xf32> -> vector<1x128xf32>
    %219 = arith.addf %213, %218 : vector<1x128xf32>
    %220 = vector.extract_strided_slice %128 {offsets = [15, 0], sizes = [1, 128], strides = [1, 1]} : vector<16x128xf32> to vector<1x128xf32>
    %221 = arith.truncf %220 : vector<1x128xf32> to vector<1x128xbf16>
    %c15_156 = arith.constant 15 : index
    %c0_157 = arith.constant 0 : index
    %c0_158 = arith.constant 0 : index
    %222 = vector.load %arg14[%c15_156, %c0_157, %c0_158] : memref<16x128x128xbf16, #tpu.memory_space<vmem>>, vector<1x128x128xbf16>
    %223 = vector.shape_cast %222 : vector<1x128x128xbf16> to vector<128x128xbf16>
    %cst_159 = arith.constant dense<0.000000e+00> : vector<1x128xf32>
    %224 = tpu.matmul %221, %223, %cst_159 {dimension_numbers = #tpu.dot_dimension_numbers<[1], [0], [0], [1], [0, 0, 1, 1], [], []>} : vector<1x128xbf16>, vector<128x128xbf16>, vector<1x128xf32> -> vector<1x128xf32>
    %225 = arith.addf %219, %224 : vector<1x128xf32>
    %cst_160 = arith.constant 0.000000e+00 : f32
    %226 = vector.broadcast %cst_160 : f32 to vector<1x128xf32>
    %227 = arith.maximumf %225, %226 : vector<1x128xf32>
    %228 = arith.truncf %227 : vector<1x128xf32> to vector<1x128xbf16>
    %c0_161 = arith.constant 0 : index
    %c0_162 = arith.constant 0 : index
    %229 = vector.load %arg16[%c0_161, %c0_162] : memref<128x128xbf16, #tpu.memory_space<vmem>>, vector<128x128xbf16>
    %cst_163 = arith.constant dense<0.000000e+00> : vector<1x128xf32>
    %230 = tpu.matmul %228, %229, %cst_163 {dimension_numbers = #tpu.dot_dimension_numbers<[1], [0], [0], [1], [0, 0, 1, 1], [], []>} : vector<1x128xbf16>, vector<128x128xbf16>, vector<1x128xf32> -> vector<1x128xf32>
    %c0_164 = arith.constant 0 : index
    %c0_165 = arith.constant 0 : index
    %231 = vector.load %arg17[%c0_164, %c0_165] : memref<1x128xf32, #tpu.memory_space<vmem>>, vector<1x128xf32>
    %232 = arith.addf %230, %231 : vector<1x128xf32>
    %c0_166 = arith.constant 0 : index
    %c0_167 = arith.constant 0 : index
    %c0_168 = arith.constant 0 : index
    %233 = vector.load %arg18[%c0_166, %c0_167, %c0_168] : memref<1x1x128xf32, #tpu.memory_space<vmem>>, vector<1x1x128xf32>
    %234 = vector.shape_cast %233 : vector<1x1x128xf32> to vector<1x128xf32>
    %235 = vector.shape_cast %232 : vector<1x128xf32> to vector<1x1x128xf32>
    tpu.vector_store %arg18[%c0_166, %c0_167, %c0_168], %235 {strides = array<i32>} : memref<1x1x128xf32, #tpu.memory_space<vmem>>, vector<1x1x128xf32>,
    return
  }
  func.func @transform_0(%arg0: i32) -> (i32, i32, i32) {
    %c0_i32 = arith.constant 0 : i32
    %c0_i32_0 = arith.constant 0 : i32
    %c0_i32_1 = arith.constant 0 : i32
    return %arg0, %c0_i32, %c0_i32_0 : i32, i32, i32
  }
  func.func @transform_1(%arg0: i32) -> (i32, i32) {
    %c0_i32 = arith.constant 0 : i32
    %c0_i32_0 = arith.constant 0 : i32
    %c0_i32_1 = arith.constant 0 : i32
    return %c0_i32, %c0_i32_0 : i32, i32
  }
  func.func @transform_2(%arg0: i32) -> (i32, i32) {
    %c0_i32 = arith.constant 0 : i32
    %c0_i32_0 = arith.constant 0 : i32
    %c0_i32_1 = arith.constant 0 : i32
    return %c0_i32, %c0_i32_0 : i32, i32
  }
  func.func @transform_3(%arg0: i32) -> (i32, i32) {
    %c0_i32 = arith.constant 0 : i32
    %c0_i32_0 = arith.constant 0 : i32
    %c0_i32_1 = arith.constant 0 : i32
    return %c0_i32, %c0_i32_0 : i32, i32
  }
  func.func @transform_4(%arg0: i32) -> (i32, i32) {
    %c0_i32 = arith.constant 0 : i32
    %c0_i32_0 = arith.constant 0 : i32
    %c0_i32_1 = arith.constant 0 : i32
    return %c0_i32, %c0_i32_0 : i32, i32
  }
  func.func @transform_5(%arg0: i32) -> (i32, i32, i32) {
    %c0_i32 = arith.constant 0 : i32
    %c0_i32_0 = arith.constant 0 : i32
    %c0_i32_1 = arith.constant 0 : i32
    %c0_i32_2 = arith.constant 0 : i32
    return %c0_i32, %c0_i32_0, %c0_i32_1 : i32, i32, i32
  }
  func.func @transform_6(%arg0: i32) -> (i32, i32) {
    %c0_i32 = arith.constant 0 : i32
    %c0_i32_0 = arith.constant 0 : i32
    %c0_i32_1 = arith.constant 0 : i32
    return %c0_i32, %c0_i32_0 : i32, i32
  }
  func.func @transform_7(%arg0: i32) -> (i32, i32) {
    %c0_i32 = arith.constant 0 : i32
    %c0_i32_0 = arith.constant 0 : i32
    %c0_i32_1 = arith.constant 0 : i32
    return %c0_i32, %c0_i32_0 : i32, i32
  }
  func.func @transform_8(%arg0: i32) -> (i32, i32) {
    %c0_i32 = arith.constant 0 : i32
    %c0_i32_0 = arith.constant 0 : i32
    %c0_i32_1 = arith.constant 0 : i32
    return %c0_i32, %c0_i32_0 : i32, i32
  }
  func.func @transform_9(%arg0: i32) -> (i32, i32, i32) {
    %c0_i32 = arith.constant 0 : i32
    %c0_i32_0 = arith.constant 0 : i32
    %c0_i32_1 = arith.constant 0 : i32
    %c0_i32_2 = arith.constant 0 : i32
    return %c0_i32, %c0_i32_0, %c0_i32_1 : i32, i32, i32
  }
  func.func @transform_10(%arg0: i32) -> (i32, i32) {
    %c0_i32 = arith.constant 0 : i32
    %c0_i32_0 = arith.constant 0 : i32
    %c0_i32_1 = arith.constant 0 : i32
    return %c0_i32, %c0_i32_0 : i32, i32
  }
  func.func @transform_11(%arg0: i32) -> (i32, i32) {
    %c0_i32 = arith.constant 0 : i32
    %c0_i32_0 = arith.constant 0 : i32
    %c0_i32_1 = arith.constant 0 : i32
    return %c0_i32, %c0_i32_0 : i32, i32
  }
  func.func @transform_12(%arg0: i32) -> (i32, i32) {
    %c0_i32 = arith.constant 0 : i32
    %c0_i32_0 = arith.constant 0 : i32
    %c0_i32_1 = arith.constant 0 : i32
    return %c0_i32, %c0_i32_0 : i32, i32
  }
  func.func @transform_13(%arg0: i32) -> (i32, i32, i32) {
    %c0_i32 = arith.constant 0 : i32
    %c0_i32_0 = arith.constant 0 : i32
    %c0_i32_1 = arith.constant 0 : i32
    %c0_i32_2 = arith.constant 0 : i32
    return %c0_i32, %c0_i32_0, %c0_i32_1 : i32, i32, i32
  }
  func.func @transform_14(%arg0: i32) -> (i32, i32) {
    %c0_i32 = arith.constant 0 : i32
    %c0_i32_0 = arith.constant 0 : i32
    %c0_i32_1 = arith.constant 0 : i32
    return %c0_i32, %c0_i32_0 : i32, i32
  }
  func.func @transform_15(%arg0: i32) -> (i32, i32) {
    %c0_i32 = arith.constant 0 : i32
    %c0_i32_0 = arith.constant 0 : i32
    %c0_i32_1 = arith.constant 0 : i32
    return %c0_i32, %c0_i32_0 : i32, i32
  }
  func.func @transform_16(%arg0: i32) -> (i32, i32) {
    %c0_i32 = arith.constant 0 : i32
    %c0_i32_0 = arith.constant 0 : i32
    %c0_i32_1 = arith.constant 0 : i32
    return %c0_i32, %c0_i32_0 : i32, i32
  }
  func.func @transform_17(%arg0: i32) -> (i32, i32, i32) {
    %c0_i32 = arith.constant 0 : i32
    %c0_i32_0 = arith.constant 0 : i32
    %c0_i32_1 = arith.constant 0 : i32
    return %arg0, %c0_i32, %c0_i32_0 : i32, i32, i32
  }
}

</mosaic_0001>

<llo_original>
// kernel: convnet_forward.1
$region0: #{convnet_forward.1}
  #allocation0 [shape = 'u32[]', space=smem, size = 0x4, offset = 0x4, fixed_abs, tag = 'smem constant byte address 0x4 - core index']
  #allocation1 [shape = 'u32[144,128]{1,0:T(1,128)}', space=vmem, size = 0x12000, scoped, tag = 'internal scratch']
  #allocation2 [shape = 'f32[512,32]{1,0:T(8,128)}', space=vmem, size = 0x40000, scoped, tag = 'scratch operand']
  #allocation3 [shape = 'bf16[18,40,32]{2,1,0:T(8,128)(2,1)}', space=vmem, size = 0x2d000, scoped, tag = 'scratch operand']
  #allocation4 [shape = 'f32[128,64]{1,0:T(8,128)}', space=vmem, size = 0x10000, scoped, tag = 'scratch operand']
  #allocation5 [shape = 'bf16[10,32,64]{2,1,0:T(16,128)(2,1)}', space=vmem, size = 0x14000, scoped, tag = 'scratch operand']
  #allocation6 [shape = 'f32[32,128]{1,0:T(8,128)}', space=vmem, size = 0x4000, scoped, tag = 'scratch operand']
  %s0 = inlined_call_operand.vmem [shape: bf16[2,1024,16], index: 0, kind: input, shape index: {}]
  %s1 = inlined_call_operand.vmem [shape: bf16[16,32], index: 1, kind: input, shape index: {}]
  %s2 = inlined_call_operand.vmem [shape: f32[1,32], index: 2, kind: input, shape index: {}]
  %s3 = inlined_call_operand.vmem [shape: f32[1,32], index: 3, kind: input, shape index: {}]
  %s4 = inlined_call_operand.vmem [shape: f32[1,32], index: 4, kind: input, shape index: {}]
  %s5 = inlined_call_operand.vmem [shape: bf16[9,32,64], index: 5, kind: input, shape index: {}]
  %s6 = inlined_call_operand.vmem [shape: f32[1,64], index: 6, kind: input, shape index: {}]
  %s7 = inlined_call_operand.vmem [shape: f32[1,64], index: 7, kind: input, shape index: {}]
  %s8 = inlined_call_operand.vmem [shape: f32[1,64], index: 8, kind: input, shape index: {}]
  %s9 = inlined_call_operand.vmem [shape: bf16[9,64,128], index: 9, kind: input, shape index: {}]
  %s10 = inlined_call_operand.vmem [shape: f32[1,128], index: 10, kind: input, shape index: {}]
  %s11 = inlined_call_operand.vmem [shape: f32[1,128], index: 11, kind: input, shape index: {}]
  %s12 = inlined_call_operand.vmem [shape: f32[1,128], index: 12, kind: input, shape index: {}]
  %s13 = inlined_call_operand.vmem [shape: bf16[16,128,128], index: 13, kind: input, shape index: {}]
  %s14 = inlined_call_operand.vmem [shape: f32[1,128], index: 14, kind: input, shape index: {}]
  %s15 = inlined_call_operand.vmem [shape: bf16[128,128], index: 15, kind: input, shape index: {}]
  %s16 = inlined_call_operand.vmem [shape: f32[1,128], index: 16, kind: input, shape index: {}]
  %s17 = inlined_call_operand.hbm [shape: f32[2,1,128], index: 17, kind: output, shape index: {}]
  %s18 = sld [smem:[#allocation0]]
  $region115: #{convnet_forward.1} parent=0
    _
  %s20 = ssub.s32 1, %s18
  %s21 = scalar_select 0, %s20, %s18
  $region1: #{convnet_forward.1} parent=0
    #allocation7 [shape = 'u8[1024]{0}', space=vmem, size = 0x400, scoped, tag = 'output window, operand 0']
    #allocation8 [shape = 's32[2]{0}', space=sflag, size = 0x8, scoped, tag = 'scoped memory for convnet_forward.1']
    %22 = vsyncpa [#allocation8], 0
    %s23 = scalar_lea.sflag [#allocation8], 1
    %24 = vsyncpa %s23, 0
    loop: start=0, step=1, limit=4
    $region2: #{convnet_forward.1} parent=1 // loop_pre_header
      _
    $region3: #{convnet_forward.1} parent=1 // loop_header
      %s26 = sphi 0, %s30
      %p27 = scmp.ge.s32.totalorder %s26, 4
      %s36 = sphi 0, %s38
      %s39 = sphi 0, %s36
      %s40 = sphi 0, %s39
      %s56 = sphi 0, %s40
      %s60 = sphi 0, %s60
      %s62 = sphi 0, %s60
      %s63 = sphi 0, %s62
      %s77 = sphi 0, %s63
      %s81 = sphi 0, %s81
      %s83 = sphi 0, %s81
      %s84 = sphi 0, %s83
      %s98 = sphi 0, %s84
      %s102 = sphi 0, %s102
      %s104 = sphi 0, %s102
      %s105 = sphi 0, %s104
      %s119 = sphi 0, %s105
      %s123 = sphi 0, %s123
      %s125 = sphi 0, %s123
      %s126 = sphi 0, %s125
      %s140 = sphi 0, %s126
      %s144 = sphi 0, %s144
      %s146 = sphi 0, %s144
      %s147 = sphi 0, %s146
      %s161 = sphi 0, %s147
      %s165 = sphi 0, %s165
      %s167 = sphi 0, %s165
      %s168 = sphi 0, %s167
      %s182 = sphi 0, %s168
      %s186 = sphi 0, %s186
      %s188 = sphi 0, %s186
      %s189 = sphi 0, %s188
      %s203 = sphi 0, %s189
      %s207 = sphi 0, %s207
      %s209 = sphi 0, %s207
      %s210 = sphi 0, %s209
      %s224 = sphi 0, %s210
      %s228 = sphi 0, %s228
      %s230 = sphi 0, %s228
      %s231 = sphi 0, %s230
      %s245 = sphi 0, %s231
      %s249 = sphi 0, %s249
      %s251 = sphi 0, %s249
      %s252 = sphi 0, %s251
      %s266 = sphi 0, %s252
      %s270 = sphi 0, %s270
      %s272 = sphi 0, %s270
      %s273 = sphi 0, %s272
      %s287 = sphi 0, %s273
      %s291 = sphi 0, %s291
      %s293 = sphi 0, %s291
      %s294 = sphi 0, %s293
      %s308 = sphi 0, %s294
      %s312 = sphi 0, %s312
      %s314 = sphi 0, %s312
      %s315 = sphi 0, %s314
      %s329 = sphi 0, %s315
      %s333 = sphi 0, %s333
      %s335 = sphi 0, %s333
      %s336 = sphi 0, %s335
      %s350 = sphi 0, %s336
      %s354 = sphi 0, %s354
      %s356 = sphi 0, %s354
      %s357 = sphi 0, %s356
      %s371 = sphi 0, %s357
      %s375 = sphi 0, %s375
      %s377 = sphi 0, %s375
      %s378 = sphi 0, %s377
      %s392 = sphi 0, %s378
      %s398 = sphi 0, %s400
      %s401 = sphi 0, %s398
      %s402 = sphi 0, %s401
      %s418 = sphi 0, %s402
    $region4: #{convnet_forward.1} parent=1 // loop_header_branch
      %29 = sbr.rel (%p27) target = $region8
    $region5: #{convnet_forward.1} parent=1 // loop_body
      %s31 = ssub.s32 %s26, 1
      %s32 = ssub.s32 %s26, 2
      %s33 = sadd.s32 %s26, 1
      %s34 = ssub.s32 %s26, %s33
      %p35 = scmp.eq.s32.totalorder %s34, 0
      %s37 = sadd.s32 %s36, 1
      %s38 = scalar_select %p35, %s36, %s37
      %p41 = pneg %p35
      %p42 = scmp.eq.s32.totalorder %s26, 1
      %p43 = por %p41, %p42
      %p44 = scmp.ne.s32.totalorder %s36, %s39
      %p45 = scmp.eq.s32.totalorder %s26, 0
      %p46 = por %p44, %p45
      %p47 = scmp.ne.s32.totalorder %s36, %s39
      %p48 = scmp.eq.s32.totalorder %s31, 1
      %p49 = por %p47, %p48
      %p50 = scmp.ne.s32.totalorder %s39, %s40
      %p51 = scmp.eq.s32.totalorder %s31, 0
      %p52 = por %p50, %p51
      %p53 = scmp.ne.s32.totalorder %s39, %s40
      %p54 = scmp.eq.s32.totalorder %s32, 1
      %p55 = por %p53, %p54
      %p57 = scmp.ne.s32.totalorder %s40, %s56
      %p58 = scmp.eq.s32.totalorder %s32, 0
      %p59 = por %p57, %p58
      %s61 = sadd.s32 %s60, 1
      %p64 = scmp.eq.s32.totalorder %s26, 1
      %p65 = scmp.ne.s32.totalorder %s60, %s62
      %p66 = scmp.eq.s32.totalorder %s26, 0
      %p67 = por %p65, %p66
      %p68 = scmp.ne.s32.totalorder %s60, %s62
      %p69 = scmp.eq.s32.totalorder %s31, 1
      %p70 = por %p68, %p69
      %p71 = scmp.ne.s32.totalorder %s62, %s63
      %p72 = scmp.eq.s32.totalorder %s31, 0
      %p73 = por %p71, %p72
      %p74 = scmp.ne.s32.totalorder %s62, %s63
      %p75 = scmp.eq.s32.totalorder %s32, 1
      %p76 = por %p74, %p75
      %p78 = scmp.ne.s32.totalorder %s63, %s77
      %p79 = scmp.eq.s32.totalorder %s32, 0
      %p80 = por %p78, %p79
      %s82 = sadd.s32 %s81, 1
      %p85 = scmp.eq.s32.totalorder %s26, 1
      %p86 = scmp.ne.s32.totalorder %s81, %s83
      %p87 = scmp.eq.s32.totalorder %s26, 0
      %p88 = por %p86, %p87
      %p89 = scmp.ne.s32.totalorder %s81, %s83
      %p90 = scmp.eq.s32.totalorder %s31, 1
      %p91 = por %p89, %p90
      %p92 = scmp.ne.s32.totalorder %s83, %s84
      %p93 = scmp.eq.s32.totalorder %s31, 0
      %p94 = por %p92, %p93
      %p95 = scmp.ne.s32.totalorder %s83, %s84
      %p96 = scmp.eq.s32.totalorder %s32, 1
      %p97 = por %p95, %p96
      %p99 = scmp.ne.s32.totalorder %s84, %s98
      %p100 = scmp.eq.s32.totalorder %s32, 0
      %p101 = por %p99, %p100
      %s103 = sadd.s32 %s102, 1
      %p106 = scmp.eq.s32.totalorder %s26, 1
      %p107 = scmp.ne.s32.totalorder %s102, %s104
      %p108 = scmp.eq.s32.totalorder %s26, 0
      %p109 = por %p107, %p108
      %p110 = scmp.ne.s32.totalorder %s102, %s104
      %p111 = scmp.eq.s32.totalorder %s31, 1
      %p112 = por %p110, %p111
      %p113 = scmp.ne.s32.totalorder %s104, %s105
      %p114 = scmp.eq.s32.totalorder %s31, 0
      %p115 = por %p113, %p114
      %p116 = scmp.ne.s32.totalorder %s104, %s105
      %p117 = scmp.eq.s32.totalorder %s32, 1
      %p118 = por %p116, %p117
      %p120 = scmp.ne.s32.totalorder %s105, %s119
      %p121 = scmp.eq.s32.totalorder %s32, 0
      %p122 = por %p120, %p121
      %s124 = sadd.s32 %s123, 1
      %p127 = scmp.eq.s32.totalorder %s26, 1
      %p128 = scmp.ne.s32.totalorder %s123, %s125
      %p129 = scmp.eq.s32.totalorder %s26, 0
      %p130 = por %p128, %p129
      %p131 = scmp.ne.s32.totalorder %s123, %s125
      %p132 = scmp.eq.s32.totalorder %s31, 1
      %p133 = por %p131, %p132
      %p134 = scmp.ne.s32.totalorder %s125, %s126
      %p135 = scmp.eq.s32.totalorder %s31, 0
      %p136 = por %p134, %p135
      %p137 = scmp.ne.s32.totalorder %s125, %s126
      %p138 = scmp.eq.s32.totalorder %s32, 1
      %p139 = por %p137, %p138
      %p141 = scmp.ne.s32.totalorder %s126, %s140
      %p142 = scmp.eq.s32.totalorder %s32, 0
      %p143 = por %p141, %p142
      %s145 = sadd.s32 %s144, 1
      %p148 = scmp.eq.s32.totalorder %s26, 1
      %p149 = scmp.ne.s32.totalorder %s144, %s146
      %p150 = scmp.eq.s32.totalorder %s26, 0
      %p151 = por %p149, %p150
      %p152 = scmp.ne.s32.totalorder %s144, %s146
      %p153 = scmp.eq.s32.totalorder %s31, 1
      %p154 = por %p152, %p153
      %p155 = scmp.ne.s32.totalorder %s146, %s147
      %p156 = scmp.eq.s32.totalorder %s31, 0
      %p157 = por %p155, %p156
      %p158 = scmp.ne.s32.totalorder %s146, %s147
      %p159 = scmp.eq.s32.totalorder %s32, 1
      %p160 = por %p158, %p159
      %p162 = scmp.ne.s32.totalorder %s147, %s161
      %p163 = scmp.eq.s32.totalorder %s32, 0
      %p164 = por %p162, %p163
      %s166 = sadd.s32 %s165, 1
      %p169 = scmp.eq.s32.totalorder %s26, 1
      %p170 = scmp.ne.s32.totalorder %s165, %s167
      %p171 = scmp.eq.s32.totalorder %s26, 0
      %p172 = por %p170, %p171
      %p173 = scmp.ne.s32.totalorder %s165, %s167
      %p174 = scmp.eq.s32.totalorder %s31, 1
      %p175 = por %p173, %p174
      %p176 = scmp.ne.s32.totalorder %s167, %s168
      %p177 = scmp.eq.s32.totalorder %s31, 0
      %p178 = por %p176, %p177
      %p179 = scmp.ne.s32.totalorder %s167, %s168
      %p180 = scmp.eq.s32.totalorder %s32, 1
      %p181 = por %p179, %p180
      %p183 = scmp.ne.s32.totalorder %s168, %s182
      %p184 = scmp.eq.s32.totalorder %s32, 0
      %p185 = por %p183, %p184
      %s187 = sadd.s32 %s186, 1
      %p190 = scmp.eq.s32.totalorder %s26, 1
      %p191 = scmp.ne.s32.totalorder %s186, %s188
      %p192 = scmp.eq.s32.totalorder %s26, 0
      %p193 = por %p191, %p192
      %p194 = scmp.ne.s32.totalorder %s186, %s188
      %p195 = scmp.eq.s32.totalorder %s31, 1
      %p196 = por %p194, %p195
      %p197 = scmp.ne.s32.totalorder %s188, %s189
      %p198 = scmp.eq.s32.totalorder %s31, 0
      %p199 = por %p197, %p198
      %p200 = scmp.ne.s32.totalorder %s188, %s189
      %p201 = scmp.eq.s32.totalorder %s32, 1
      %p202 = por %p200, %p201
      %p204 = scmp.ne.s32.totalorder %s189, %s203
      %p205 = scmp.eq.s32.totalorder %s32, 0
      %p206 = por %p204, %p205
      %s208 = sadd.s32 %s207, 1
      %p211 = scmp.eq.s32.totalorder %s26, 1
      %p212 = scmp.ne.s32.totalorder %s207, %s209
      %p213 = scmp.eq.s32.totalorder %s26, 0
      %p214 = por %p212, %p213
      %p215 = scmp.ne.s32.totalorder %s207, %s209
      %p216 = scmp.eq.s32.totalorder %s31, 1
      %p217 = por %p215, %p216
      %p218 = scmp.ne.s32.totalorder %s209, %s210
      %p219 = scmp.eq.s32.totalorder %s31, 0
      %p220 = por %p218, %p219
      %p221 = scmp.ne.s32.totalorder %s209, %s210
      %p222 = scmp.eq.s32.totalorder %s32, 1
      %p223 = por %p221, %p222
      %p225 = scmp.ne.s32.totalorder %s210, %s224
      %p226 = scmp.eq.s32.totalorder %s32, 0
      %p227 = por %p225, %p226
      %s229 = sadd.s32 %s228, 1
      %p232 = scmp.eq.s32.totalorder %s26, 1
      %p233 = scmp.ne.s32.totalorder %s228, %s230
      %p234 = scmp.eq.s32.totalorder %s26, 0
      %p235 = por %p233, %p234
      %p236 = scmp.ne.s32.totalorder %s228, %s230
      %p237 = scmp.eq.s32.totalorder %s31, 1
      %p238 = por %p236, %p237
      %p239 = scmp.ne.s32.totalorder %s230, %s231
      %p240 = scmp.eq.s32.totalorder %s31, 0
      %p241 = por %p239, %p240
      %p242 = scmp.ne.s32.totalorder %s230, %s231
      %p243 = scmp.eq.s32.totalorder %s32, 1
      %p244 = por %p242, %p243
      %p246 = scmp.ne.s32.totalorder %s231, %s245
      %p247 = scmp.eq.s32.totalorder %s32, 0
      %p248 = por %p246, %p247
      %s250 = sadd.s32 %s249, 1
      %p253 = scmp.eq.s32.totalorder %s26, 1
      %p254 = scmp.ne.s32.totalorder %s249, %s251
      %p255 = scmp.eq.s32.totalorder %s26, 0
      %p256 = por %p254, %p255
      %p257 = scmp.ne.s32.totalorder %s249, %s251
      %p258 = scmp.eq.s32.totalorder %s31, 1
      %p259 = por %p257, %p258
      %p260 = scmp.ne.s32.totalorder %s251, %s252
      %p261 = scmp.eq.s32.totalorder %s31, 0
      %p262 = por %p260, %p261
      %p263 = scmp.ne.s32.totalorder %s251, %s252
      %p264 = scmp.eq.s32.totalorder %s32, 1
      %p265 = por %p263, %p264
      %p267 = scmp.ne.s32.totalorder %s252, %s266
      %p268 = scmp.eq.s32.totalorder %s32, 0
      %p269 = por %p267, %p268
      %s271 = sadd.s32 %s270, 1
      %p274 = scmp.eq.s32.totalorder %s26, 1
      %p275 = scmp.ne.s32.totalorder %s270, %s272
      %p276 = scmp.eq.s32.totalorder %s26, 0
      %p277 = por %p275, %p276
      %p278 = scmp.ne.s32.totalorder %s270, %s272
      %p279 = scmp.eq.s32.totalorder %s31, 1
      %p280 = por %p278, %p279
      %p281 = scmp.ne.s32.totalorder %s272, %s273
      %p282 = scmp.eq.s32.totalorder %s31, 0
      %p283 = por %p281, %p282
      %p284 = scmp.ne.s32.totalorder %s272, %s273
      %p285 = scmp.eq.s32.totalorder %s32, 1
      %p286 = por %p284, %p285
      %p288 = scmp.ne.s32.totalorder %s273, %s287
      %p289 = scmp.eq.s32.totalorder %s32, 0
      %p290 = por %p288, %p289
      %s292 = sadd.s32 %s291, 1
      %p295 = scmp.eq.s32.totalorder %s26, 1
      %p296 = scmp.ne.s32.totalorder %s291, %s293
      %p297 = scmp.eq.s32.totalorder %s26, 0
      %p298 = por %p296, %p297
      %p299 = scmp.ne.s32.totalorder %s291, %s293
      %p300 = scmp.eq.s32.totalorder %s31, 1
      %p301 = por %p299, %p300
      %p302 = scmp.ne.s32.totalorder %s293, %s294
      %p303 = scmp.eq.s32.totalorder %s31, 0
      %p304 = por %p302, %p303
      %p305 = scmp.ne.s32.totalorder %s293, %s294
      %p306 = scmp.eq.s32.totalorder %s32, 1
      %p307 = por %p305, %p306
      %p309 = scmp.ne.s32.totalorder %s294, %s308
      %p310 = scmp.eq.s32.totalorder %s32, 0
      %p311 = por %p309, %p310
      %s313 = sadd.s32 %s312, 1
      %p316 = scmp.eq.s32.totalorder %s26, 1
      %p317 = scmp.ne.s32.totalorder %s312, %s314
      %p318 = scmp.eq.s32.totalorder %s26, 0
      %p319 = por %p317, %p318
      %p320 = scmp.ne.s32.totalorder %s312, %s314
      %p321 = scmp.eq.s32.totalorder %s31, 1
      %p322 = por %p320, %p321
      %p323 = scmp.ne.s32.totalorder %s314, %s315
      %p324 = scmp.eq.s32.totalorder %s31, 0
      %p325 = por %p323, %p324
      %p326 = scmp.ne.s32.totalorder %s314, %s315
      %p327 = scmp.eq.s32.totalorder %s32, 1
      %p328 = por %p326, %p327
      %p330 = scmp.ne.s32.totalorder %s315, %s329
      %p331 = scmp.eq.s32.totalorder %s32, 0
      %p332 = por %p330, %p331
      %s334 = sadd.s32 %s333, 1
      %p337 = scmp.eq.s32.totalorder %s26, 1
      %p338 = scmp.ne.s32.totalorder %s333, %s335
      %p339 = scmp.eq.s32.totalorder %s26, 0
      %p340 = por %p338, %p339
      %p341 = scmp.ne.s32.totalorder %s333, %s335
      %p342 = scmp.eq.s32.totalorder %s31, 1
      %p343 = por %p341, %p342
      %p344 = scmp.ne.s32.totalorder %s335, %s336
      %p345 = scmp.eq.s32.totalorder %s31, 0
      %p346 = por %p344, %p345
      %p347 = scmp.ne.s32.totalorder %s335, %s336
      %p348 = scmp.eq.s32.totalorder %s32, 1
      %p349 = por %p347, %p348
      %p351 = scmp.ne.s32.totalorder %s336, %s350
      %p352 = scmp.eq.s32.totalorder %s32, 0
      %p353 = por %p351, %p352
      %s355 = sadd.s32 %s354, 1
      %p358 = scmp.eq.s32.totalorder %s26, 1
      %p359 = scmp.ne.s32.totalorder %s354, %s356
      %p360 = scmp.eq.s32.totalorder %s26, 0
      %p361 = por %p359, %p360
      %p362 = scmp.ne.s32.totalorder %s354, %s356
      %p363 = scmp.eq.s32.totalorder %s31, 1
      %p364 = por %p362, %p363
      %p365 = scmp.ne.s32.totalorder %s356, %s357
      %p366 = scmp.eq.s32.totalorder %s31, 0
      %p367 = por %p365, %p366
      %p368 = scmp.ne.s32.totalorder %s356, %s357
      %p369 = scmp.eq.s32.totalorder %s32, 1
      %p370 = por %p368, %p369
      %p372 = scmp.ne.s32.totalorder %s357, %s371
      %p373 = scmp.eq.s32.totalorder %s32, 0
      %p374 = por %p372, %p373
      %s376 = sadd.s32 %s375, 1
      %p379 = scmp.eq.s32.totalorder %s26, 1
      %p380 = scmp.ne.s32.totalorder %s375, %s377
      %p381 = scmp.eq.s32.totalorder %s26, 0
      %p382 = por %p380, %p381
      %p383 = scmp.ne.s32.totalorder %s375, %s377
      %p384 = scmp.eq.s32.totalorder %s31, 1
      %p385 = por %p383, %p384
      %p386 = scmp.ne.s32.totalorder %s377, %s378
      %p387 = scmp.eq.s32.totalorder %s31, 0
      %p388 = por %p386, %p387
      %p389 = scmp.ne.s32.totalorder %s377, %s378
      %p390 = scmp.eq.s32.totalorder %s32, 1
      %p391 = por %p389, %p390
      %p393 = scmp.ne.s32.totalorder %s378, %s392
      %p394 = scmp.eq.s32.totalorder %s32, 0
      %p395 = por %p393, %p394
      %s396 = ssub.s32 %s26, %s33
      %p397 = scmp.eq.s32.totalorder %s396, 0
      %s399 = sadd.s32 %s398, 1
      %s400 = scalar_select %p397, %s398, %s399
      %p403 = pneg %p397
      %p404 = scmp.eq.s32.totalorder %s26, 1
      %p405 = por %p403, %p404
      %p406 = scmp.ne.s32.totalorder %s398, %s401
      %p407 = scmp.eq.s32.totalorder %s26, 0
      %p408 = por %p406, %p407
      %p409 = scmp.ne.s32.totalorder %s398, %s401
      %p410 = scmp.eq.s32.totalorder %s31, 1
      %p411 = por %p409, %p410
      %p412 = scmp.ne.s32.totalorder %s401, %s402
      %p413 = scmp.eq.s32.totalorder %s31, 0
      %p414 = por %p412, %p413
      %p415 = scmp.ne.s32.totalorder %s401, %s402
      %p416 = scmp.eq.s32.totalorder %s32, 1
      %p417 = por %p415, %p416
      %p419 = scmp.ne.s32.totalorder %s402, %s418
      %p420 = scmp.eq.s32.totalorder %s32, 0
      %p421 = por %p419, %p420
      %p422 = scmp.le.s32.totalorder 1, %s26
      %p423 = scmp.lt.s32.totalorder %s26, 3
      %p424 = pnand %p422, %p423
      %p425 = pneg %p424
      // Predicated region
      $region9: #{convnet_forward.1} parent=5 // pred_check
        _
      $region10: #{convnet_forward.1} parent=5 // pred_check_branch
        %427 = sbr.rel (%p424) target = $region12
      $region11: #{convnet_forward.1} parent=5 // pred_region
        %s428 = ssub.s32 %s26, 1
        // Predicated region
        $region13: #{convnet_forward.1} parent=11 // pred_check
          %p429 = pneg %p73
        $region14: #{convnet_forward.1} parent=11 // pred_check_branch
          %431 = sbr.rel (%p429) target = $region16
        $region15: #{convnet_forward.1} parent=11 // pred_region
          _
        $region16: #{convnet_forward.1} parent=11 // pred_fallthru
          _
        // Predicated region
        $region17: #{convnet_forward.1} parent=11 // pred_check
          %p432 = pneg %p94
        $region18: #{convnet_forward.1} parent=11 // pred_check_branch
          %434 = sbr.rel (%p432) target = $region20
        $region19: #{convnet_forward.1} parent=11 // pred_region
          _
        $region20: #{convnet_forward.1} parent=11 // pred_fallthru
          _
        // Predicated region
        $region21: #{convnet_forward.1} parent=11 // pred_check
          %p435 = pneg %p115
        $region22: #{convnet_forward.1} parent=11 // pred_check_branch
          %437 = sbr.rel (%p435) target = $region24
        $region23: #{convnet_forward.1} parent=11 // pred_region
          _
        $region24: #{convnet_forward.1} parent=11 // pred_fallthru
          _
        // Predicated region
        $region25: #{convnet_forward.1} parent=11 // pred_check
          %p438 = pneg %p136
        $region26: #{convnet_forward.1} parent=11 // pred_check_branch
          %440 = sbr.rel (%p438) target = $region28
        $region27: #{convnet_forward.1} parent=11 // pred_region
          _
        $region28: #{convnet_forward.1} parent=11 // pred_fallthru
          _
        // Predicated region
        $region29: #{convnet_forward.1} parent=11 // pred_check
          %p441 = pneg %p157
        $region30: #{convnet_forward.1} parent=11 // pred_check_branch
          %443 = sbr.rel (%p441) target = $region32
        $region31: #{convnet_forward.1} parent=11 // pred_region
          _
        $region32: #{convnet_forward.1} parent=11 // pred_fallthru
          _
        // Predicated region
        $region33: #{convnet_forward.1} parent=11 // pred_check
          %p444 = pneg %p178
        $region34: #{convnet_forward.1} parent=11 // pred_check_branch
          %446 = sbr.rel (%p444) target = $region36
        $region35: #{convnet_forward.1} parent=11 // pred_region
          _
        $region36: #{convnet_forward.1} parent=11 // pred_fallthru
          _
        // Predicated region
        $region37: #{convnet_forward.1} parent=11 // pred_check
          %p447 = pneg %p199
        $region38: #{convnet_forward.1} parent=11 // pred_check_branch
          %449 = sbr.rel (%p447) target = $region40
        $region39: #{convnet_forward.1} parent=11 // pred_region
          _
        $region40: #{convnet_forward.1} parent=11 // pred_fallthru
          _
        // Predicated region
        $region41: #{convnet_forward.1} parent=11 // pred_check
          %p450 = pneg %p220
        $region42: #{convnet_forward.1} parent=11 // pred_check_branch
          %452 = sbr.rel (%p450) target = $region44
        $region43: #{convnet_forward.1} parent=11 // pred_region
          _
        $region44: #{convnet_forward.1} parent=11 // pred_fallthru
          _
        // Predicated region
        $region45: #{convnet_forward.1} parent=11 // pred_check
          %p453 = pneg %p241
        $region46: #{convnet_forward.1} parent=11 // pred_check_branch
          %455 = sbr.rel (%p453) target = $region48
        $region47: #{convnet_forward.1} parent=11 // pred_region
          _
        $region48: #{convnet_forward.1} parent=11 // pred_fallthru
          _
        // Predicated region
        $region49: #{convnet_forward.1} parent=11 // pred_check
          %p456 = pneg %p262
        $region50: #{convnet_forward.1} parent=11 // pred_check_branch
          %458 = sbr.rel (%p456) target = $region52
        $region51: #{convnet_forward.1} parent=11 // pred_region
          _
        $region52: #{convnet_forward.1} parent=11 // pred_fallthru
          _
        // Predicated region
        $region53: #{convnet_forward.1} parent=11 // pred_check
          %p459 = pneg %p283
        $region54: #{convnet_forward.1} parent=11 // pred_check_branch
          %461 = sbr.rel (%p459) target = $region56
        $region55: #{convnet_forward.1} parent=11 // pred_region
          _
        $region56: #{convnet_forward.1} parent=11 // pred_fallthru
          _
        // Predicated region
        $region57: #{convnet_forward.1} parent=11 // pred_check
          %p462 = pneg %p304
        $region58: #{convnet_forward.1} parent=11 // pred_check_branch
          %464 = sbr.rel (%p462) target = $region60
        $region59: #{convnet_forward.1} parent=11 // pred_region
          _
        $region60: #{convnet_forward.1} parent=11 // pred_fallthru
          _
        // Predicated region
        $region61: #{convnet_forward.1} parent=11 // pred_check
          %p465 = pneg %p325
        $region62: #{convnet_forward.1} parent=11 // pred_check_branch
          %467 = sbr.rel (%p465) target = $region64
        $region63: #{convnet_forward.1} parent=11 // pred_region
          _
        $region64: #{convnet_forward.1} parent=11 // pred_fallthru
          _
        // Predicated region
        $region65: #{convnet_forward.1} parent=11 // pred_check
          %p468 = pneg %p346
        $region66: #{convnet_forward.1} parent=11 // pred_check_branch
          %470 = sbr.rel (%p468) target = $region68
        $region67: #{convnet_forward.1} parent=11 // pred_region
          _
        $region68: #{convnet_forward.1} parent=11 // pred_fallthru
          _
        // Predicated region
        $region69: #{convnet_forward.1} parent=11 // pred_check
          %p471 = pneg %p367
        $region70: #{convnet_forward.1} parent=11 // pred_check_branch
          %473 = sbr.rel (%p471) target = $region72
        $region71: #{convnet_forward.1} parent=11 // pred_region
          _
        $region72: #{convnet_forward.1} parent=11 // pred_fallthru
          _
        // Predicated region
        $region73: #{convnet_forward.1} parent=11 // pred_check
          %p474 = pneg %p388
        $region74: #{convnet_forward.1} parent=11 // pred_check_branch
          %476 = sbr.rel (%p474) target = $region76
        $region75: #{convnet_forward.1} parent=11 // pred_region
          _
        $region76: #{convnet_forward.1} parent=11 // pred_fallthru
          _
      $region12: #{convnet_forward.1} parent=5 // pred_fallthru
        _
      %p477 = scmp.lt.s32.totalorder %s26, 2
      // Predicated region
      $region77: #{convnet_forward.1} parent=5 // pred_check
        %p478 = pneg %p477
      $region78: #{convnet_forward.1} parent=5 // pred_check_branch
        %480 = sbr.rel (%p478) target = $region80
      $region79: #{convnet_forward.1} parent=5 // pred_region
        // Predicated region
        $region81: #{convnet_forward.1} parent=79 // pred_check
          %p481 = pneg %p46
        $region82: #{convnet_forward.1} parent=79 // pred_check_branch
          %483 = sbr.rel (%p481) target = $region84
        $region83: #{convnet_forward.1} parent=79 // pred_region
          %p484 = scmp.lt.s32.totalorder %s26, 1
          %s485 = scalar_select %p484, %s26, 1
          %s486 = smul.addr %s485, 128
          %s487 = smul.addr %s486, 4
          %s488 = scalar_lea.vmem %s0, %s487
        $region84: #{convnet_forward.1} parent=79 // pred_fallthru
          _
      $region80: #{convnet_forward.1} parent=5 // pred_fallthru
        _
      %p489 = scmp.le.s32.totalorder 1, %s26
      %p490 = scmp.lt.s32.totalorder %s26, 3
      %p491 = pnand %p489, %p490
      %p492 = pneg %p491
      // Predicated region
      $region85: #{convnet_forward.1} parent=5 // pred_check
        _
      $region86: #{convnet_forward.1} parent=5 // pred_check_branch
        %494 = sbr.rel (%p491) target = $region88
      $region87: #{convnet_forward.1} parent=5 // pred_region
        %s495 = ssub.s32 %s26, 1
        %p496 = scmp.lt.s32.totalorder %s31, 1
        %s497 = scalar_select %p496, %s31, 1
        %s498 = smul.addr %s497, 128
        %s499 = smul.addr %s498, 4
        %s500 = scalar_lea.vmem %s0, %s499
        %p501 = pneg %p52
        %p502 = pneg %p49
        %p503 = pneg %p73
        %p504 = pneg %p70
        %p505 = pneg %p94
        %p506 = pneg %p91
        %p507 = pneg %p115
        %p508 = pneg %p112
        %p509 = pneg %p136
        %p510 = pneg %p133
        %p511 = pneg %p157
        %p512 = pneg %p154
        %p513 = pneg %p178
        %p514 = pneg %p175
        %p515 = pneg %p199
        %p516 = pneg %p196
        %p517 = pneg %p220
        %p518 = pneg %p217
        %p519 = pneg %p241
        %p520 = pneg %p238
        %p521 = pneg %p262
        %p522 = pneg %p259
        %p523 = pneg %p283
        %p524 = pneg %p280
        %p525 = pneg %p304
        %p526 = pneg %p301
        %p527 = pneg %p325
        %p528 = pneg %p322
        %p529 = pneg %p346
        %p530 = pneg %p343
        %p531 = pneg %p367
        %p532 = pneg %p364
        %p533 = pneg %p388
        %p534 = pneg %p385
        %p535 = pneg %p414
        %p536 = pneg %p411
        %s537 = sand.u32 %s401, 1
        %s538 = scalar_lea.sflag [#allocation8], %s537
        %s539 = sand.u32 %s401, 1
        %s540 = scalar_lea.vmem [#allocation7], %s539
        %p541 = scmp.lt.s32.totalorder %s31, 1
        %s542 = scalar_select %p541, %s31, 1
        %s543 = smul.addr %s542, 128
        %s544 = smul.addr %s543, 4
        %s545 = scalar_lea.vmem %s0, %s544
        %vm547 = vcmask 257024
        %548 = vst.msk [vmem:[#allocation3] sm:$0xf] %vm547, 0
        %549 = vst.msk [vmem:[#allocation3 + $0x4] sm:$0xf] %vm547, 0
        %550 = vst.msk [vmem:[#allocation3 + $0x8] sm:$0xf] %vm547, 0
        %551 = vst.msk [vmem:[#allocation3 + $0xc] sm:$0xf] %vm547, 0
        %552 = vst.msk [vmem:[#allocation3 + $0x10] sm:$0xf] %vm547, 0
        %553 = vst.msk [vmem:[#allocation3 + $0x14] sm:$0xf] %vm547, 0
        %554 = vst.msk [vmem:[#allocation3 + $0x18] sm:$0xf] %vm547, 0
        %555 = vst.msk [vmem:[#allocation3 + $0x1c] sm:$0xf] %vm547, 0
        %556 = vst.msk [vmem:[#allocation3 + $0x20] sm:$0xf] %vm547, 0
        %557 = vst.msk [vmem:[#allocation3 + $0x24] sm:$0xf] %vm547, 0
        %558 = vst.msk [vmem:[#allocation3 + $0x28] sm:$0xf] %vm547, 0
        %559 = vst.msk [vmem:[#allocation3 + $0x2c] sm:$0xf] %vm547, 0
        %560 = vst.msk [vmem:[#allocation3 + $0x30] sm:$0xf] %vm547, 0
        %561 = vst.msk [vmem:[#allocation3 + $0x34] sm:$0xf] %vm547, 0
        %562 = vst.msk [vmem:[#allocation3 + $0x38] sm:$0xf] %vm547, 0
        %563 = vst.msk [vmem:[#allocation3 + $0x3c] sm:$0xf] %vm547, 0
        %564 = vst.msk [vmem:[#allocation3 + $0x40] sm:$0xf] %vm547, 0
        %565 = vst.msk [vmem:[#allocation3 + $0x44] sm:$0xf] %vm547, 0
        %566 = vst.msk [vmem:[#allocation3 + $0x48] sm:$0xf] %vm547, 0
        %567 = vst.msk [vmem:[#allocation3 + $0x4c] sm:$0xf] %vm547, 0
        %568 = vst.msk [vmem:[#allocation3 + $0x50] sm:$0xf] %vm547, 0
        %569 = vst.msk [vmem:[#allocation3 + $0x54] sm:$0xf] %vm547, 0
        %570 = vst.msk [vmem:[#allocation3 + $0x58] sm:$0xf] %vm547, 0
        %571 = vst.msk [vmem:[#allocation3 + $0x5c] sm:$0xf] %vm547, 0
        %572 = vst.msk [vmem:[#allocation3 + $0x60] sm:$0xf] %vm547, 0
        %573 = vst.msk [vmem:[#allocation3 + $0x64] sm:$0xf] %vm547, 0
        %574 = vst.msk [vmem:[#allocation3 + $0x68] sm:$0xf] %vm547, 0
        %575 = vst.msk [vmem:[#allocation3 + $0x6c] sm:$0xf] %vm547, 0
        %576 = vst.msk [vmem:[#allocation3 + $0x70] sm:$0xf] %vm547, 0
        %577 = vst.msk [vmem:[#allocation3 + $0x74] sm:$0xf] %vm547, 0
        %578 = vst.msk [vmem:[#allocation3 + $0x78] sm:$0xf] %vm547, 0
        %579 = vst.msk [vmem:[#allocation3 + $0x7c] sm:$0xf] %vm547, 0
        %580 = vst.msk [vmem:[#allocation3 + $0x80] sm:$0xf] %vm547, 0
        %581 = vst.msk [vmem:[#allocation3 + $0x84] sm:$0xf] %vm547, 0
        %582 = vst.msk [vmem:[#allocation3 + $0x88] sm:$0xf] %vm547, 0
        %583 = vst.msk [vmem:[#allocation3 + $0x8c] sm:$0xf] %vm547, 0
        %584 = vst.msk [vmem:[#allocation3 + $0x90] sm:$0xf] %vm547, 0
        %585 = vst.msk [vmem:[#allocation3 + $0x94] sm:$0xf] %vm547, 0
        %586 = vst.msk [vmem:[#allocation3 + $0x98] sm:$0xf] %vm547, 0
        %587 = vst.msk [vmem:[#allocation3 + $0x9c] sm:$0xf] %vm547, 0
        %588 = vst.msk [vmem:[#allocation3 + $0xa0] sm:$0xf] %vm547, 0
        %589 = vst.msk [vmem:[#allocation3 + $0xa4] sm:$0xf] %vm547, 0
        %590 = vst.msk [vmem:[#allocation3 + $0xa8] sm:$0xf] %vm547, 0
        %591 = vst.msk [vmem:[#allocation3 + $0xac] sm:$0xf] %vm547, 0
        %592 = vst.msk [vmem:[#allocation3 + $0xb0] sm:$0xf] %vm547, 0
        %593 = vst.msk [vmem:[#allocation3 + $0xb4] sm:$0xf] %vm547, 0
        %594 = vst.msk [vmem:[#allocation3 + $0xb8] sm:$0xf] %vm547, 0
        %595 = vst.msk [vmem:[#allocation3 + $0xbc] sm:$0xf] %vm547, 0
        %596 = vst.msk [vmem:[#allocation3 + $0xc0] sm:$0xf] %vm547, 0
        %597 = vst.msk [vmem:[#allocation3 + $0xc4] sm:$0xf] %vm547, 0
        %598 = vst.msk [vmem:[#allocation3 + $0xc8] sm:$0xf] %vm547, 0
        %599 = vst.msk [vmem:[#allocation3 + $0xcc] sm:$0xf] %vm547, 0
        %600 = vst.msk [vmem:[#allocation3 + $0xd0] sm:$0xf] %vm547, 0
        %601 = vst.msk [vmem:[#allocation3 + $0xd4] sm:$0xf] %vm547, 0
        %602 = vst.msk [vmem:[#allocation3 + $0xd8] sm:$0xf] %vm547, 0
        %603 = vst.msk [vmem:[#allocation3 + $0xdc] sm:$0xf] %vm547, 0
        %604 = vst.msk [vmem:[#allocation3 + $0xe0] sm:$0xf] %vm547, 0
        %605 = vst.msk [vmem:[#allocation3 + $0xe4] sm:$0xf] %vm547, 0
        %606 = vst.msk [vmem:[#allocation3 + $0xe8] sm:$0xf] %vm547, 0
        %607 = vst.msk [vmem:[#allocation3 + $0xec] sm:$0xf] %vm547, 0
        %608 = vst.msk [vmem:[#allocation3 + $0xf0] sm:$0xf] %vm547, 0
        %609 = vst.msk [vmem:[#allocation3 + $0xf4] sm:$0xf] %vm547, 0
        %610 = vst.msk [vmem:[#allocation3 + $0xf8] sm:$0xf] %vm547, 0
        %611 = vst.msk [vmem:[#allocation3 + $0xfc] sm:$0xf] %vm547, 0
        %612 = vst.msk [vmem:[#allocation3 + $0x100] sm:$0xf] %vm547, 0
        %613 = vst.msk [vmem:[#allocation3 + $0x104] sm:$0xf] %vm547, 0
        %614 = vst.msk [vmem:[#allocation3 + $0x108] sm:$0xf] %vm547, 0
        %615 = vst.msk [vmem:[#allocation3 + $0x10c] sm:$0xf] %vm547, 0
        %616 = vst.msk [vmem:[#allocation3 + $0x110] sm:$0xf] %vm547, 0
        %617 = vst.msk [vmem:[#allocation3 + $0x114] sm:$0xf] %vm547, 0
        %618 = vst.msk [vmem:[#allocation3 + $0x118] sm:$0xf] %vm547, 0
        %619 = vst.msk [vmem:[#allocation3 + $0x11c] sm:$0xf] %vm547, 0
        %620 = vst.msk [vmem:[#allocation3 + $0x120] sm:$0xf] %vm547, 0
        %621 = vst.msk [vmem:[#allocation3 + $0x124] sm:$0xf] %vm547, 0
        %622 = vst.msk [vmem:[#allocation3 + $0x128] sm:$0xf] %vm547, 0
        %623 = vst.msk [vmem:[#allocation3 + $0x12c] sm:$0xf] %vm547, 0
        %624 = vst.msk [vmem:[#allocation3 + $0x130] sm:$0xf] %vm547, 0
        %625 = vst.msk [vmem:[#allocation3 + $0x134] sm:$0xf] %vm547, 0
        %626 = vst.msk [vmem:[#allocation3 + $0x138] sm:$0xf] %vm547, 0
        %627 = vst.msk [vmem:[#allocation3 + $0x13c] sm:$0xf] %vm547, 0
        %628 = vst.msk [vmem:[#allocation3 + $0x140] sm:$0xf] %vm547, 0
        %629 = vst.msk [vmem:[#allocation3 + $0x144] sm:$0xf] %vm547, 0
        %630 = vst.msk [vmem:[#allocation3 + $0x148] sm:$0xf] %vm547, 0
        %631 = vst.msk [vmem:[#allocation3 + $0x14c] sm:$0xf] %vm547, 0
        %632 = vst.msk [vmem:[#allocation3 + $0x150] sm:$0xf] %vm547, 0
        %633 = vst.msk [vmem:[#allocation3 + $0x154] sm:$0xf] %vm547, 0
        %634 = vst.msk [vmem:[#allocation3 + $0x158] sm:$0xf] %vm547, 0
        %635 = vst.msk [vmem:[#allocation3 + $0x15c] sm:$0xf] %vm547, 0
        %636 = vst.msk [vmem:[#allocation3 + $0x160] sm:$0xf] %vm547, 0
        %637 = vst.msk [vmem:[#allocation3 + $0x164] sm:$0xf] %vm547, 0
        %vm638 = vcmask 523264
        %639 = vst.msk [vmem:[#allocation5] sm:$0xff] %vm638, 0
        %640 = vst.msk [vmem:[#allocation5 + $0x8] sm:$0xff] %vm638, 0
        %641 = vst.msk [vmem:[#allocation5 + $0x10] sm:$0xff] %vm638, 0
        %642 = vst.msk [vmem:[#allocation5 + $0x18] sm:$0xff] %vm638, 0
        %643 = vst.msk [vmem:[#allocation5 + $0x20] sm:$0xff] %vm638, 0
        %644 = vst.msk [vmem:[#allocation5 + $0x28] sm:$0xff] %vm638, 0
        %645 = vst.msk [vmem:[#allocation5 + $0x30] sm:$0xff] %vm638, 0
        %646 = vst.msk [vmem:[#allocation5 + $0x38] sm:$0xff] %vm638, 0
        %647 = vst.msk [vmem:[#allocation5 + $0x40] sm:$0xff] %vm638, 0
        %648 = vst.msk [vmem:[#allocation5 + $0x48] sm:$0xff] %vm638, 0
        %649 = vst.msk [vmem:[#allocation5 + $0x50] sm:$0xff] %vm638, 0
        %650 = vst.msk [vmem:[#allocation5 + $0x58] sm:$0xff] %vm638, 0
        %651 = vst.msk [vmem:[#allocation5 + $0x60] sm:$0xff] %vm638, 0
        %652 = vst.msk [vmem:[#allocation5 + $0x68] sm:$0xff] %vm638, 0
        %653 = vst.msk [vmem:[#allocation5 + $0x70] sm:$0xff] %vm638, 0
        %654 = vst.msk [vmem:[#allocation5 + $0x78] sm:$0xff] %vm638, 0
        %655 = vst.msk [vmem:[#allocation5 + $0x80] sm:$0xff] %vm638, 0
        %656 = vst.msk [vmem:[#allocation5 + $0x88] sm:$0xff] %vm638, 0
        %657 = vst.msk [vmem:[#allocation5 + $0x90] sm:$0xff] %vm638, 0
        %658 = vst.msk [vmem:[#allocation5 + $0x98] sm:$0xff] %vm638, 0
        loop: start=0, step=1, limit=8
        $region89: #{convnet_forward.1} parent=87 // loop_pre_header
          _
        $region90: #{convnet_forward.1} parent=87 // loop_header
          %s660 = sphi 0, %s664
          %p661 = scmp.ge.s32.totalorder %s660, 8
        $region91: #{convnet_forward.1} parent=87 // loop_header_branch
          %663 = sbr.rel (%p661) target = $region95
        $region92: #{convnet_forward.1} parent=87 // loop_body
          %s665 = smul.u32 %s660, 128
          %s666 = sshra.s32 %s665, 3
          %s667 = sand.u32 %s665, 7
          %s668 = smul.addr %s666, 4
          %s669 = scalar_lea.vmem %s545, %s668
          %v670 = vld [vmem:[%s669] sm:$0xf]
          %v671 = vld [vmem:[%s669 + $0x4] sm:$0xf]
          %v672 = vld [vmem:[%s669 + $0x8] sm:$0xf]
          %v673 = vld [vmem:[%s669 + $0xc] sm:$0xf]
          %v674 = vld [vmem:[%s669 + $0x10] sm:$0xf]
          %v675 = vld [vmem:[%s669 + $0x14] sm:$0xf]
          %v676 = vld [vmem:[%s669 + $0x18] sm:$0xf]
          %v677 = vld [vmem:[%s669 + $0x1c] sm:$0xf]
          %v678 = vld [vmem:[%s669 + $0x20] sm:$0xf]
          %v679 = vld [vmem:[%s669 + $0x24] sm:$0xf]
          %v680 = vld [vmem:[%s669 + $0x28] sm:$0xf]
          %v681 = vld [vmem:[%s669 + $0x2c] sm:$0xf]
          %v682 = vld [vmem:[%s669 + $0x30] sm:$0xf]
          %v683 = vld [vmem:[%s669 + $0x34] sm:$0xf]
          %v684 = vld [vmem:[%s669 + $0x38] sm:$0xf]
          %v685 = vld [vmem:[%s669 + $0x3c] sm:$0xf]
          %v686 = vld [vmem:[%s1] sm:$0xf]
          %v687 = vld [vmem:[%s1 + $0x4] sm:$0xf]
          %v688 = vld [vmem:[%s2] sm:$0x1]
          %v690 = vlaneseq
          %v691 = vshrl.u32 %v690, 7
          %v692 = vsub.s32 0, %v691
          %v693 = vrot.slane %v688, %v692
          %v711 = vunpack.c.l.b16 %v670
          %v712 = vunpack.c.l.b16 %v671
          %v713 = vunpack.c.l.b16 %v672
          %v714 = vunpack.c.l.b16 %v673
          %v715 = vunpack.c.l.b16 %v674
          %v716 = vunpack.c.l.b16 %v675
          %v717 = vunpack.c.l.b16 %v676
          %v718 = vunpack.c.l.b16 %v677
          %v719 = vunpack.c.l.b16 %v678
          %v720 = vunpack.c.l.b16 %v679
          %v721 = vunpack.c.l.b16 %v680
          %v722 = vunpack.c.l.b16 %v681
          %v723 = vunpack.c.l.b16 %v682
          %v724 = vunpack.c.l.b16 %v683
          %v725 = vunpack.c.l.b16 %v684
          %v726 = vunpack.c.l.b16 %v685
          %v727 = vpack.c.b16 %v712, %v711
          %v728 = vpack.c.b16 %v714, %v713
          %v729 = vpack.c.b16 %v716, %v715
          %v730 = vpack.c.b16 %v718, %v717
          %v731 = vpack.c.b16 %v720, %v719
          %v732 = vpack.c.b16 %v722, %v721
          %v733 = vpack.c.b16 %v724, %v723
          %v734 = vpack.c.b16 %v726, %v725
          %v737 = vunpack.c.l.b16 %v686
          %v738 = vunpack.c.l.b16 %v687
          %v739 = vpack.c.b16 %v738, %v737
          %vm741 = vcmask 130048
          %v743 = vsel %vm741, %v727, 0
          %v746 = vsel %vm741, %v728, 0
          %v749 = vsel %vm741, %v729, 0
          %v752 = vsel %vm741, %v730, 0
          %v755 = vsel %vm741, %v731, 0
          %v758 = vsel %vm741, %v732, 0
          %v761 = vsel %vm741, %v733, 0
          %v764 = vsel %vm741, %v734, 0
          %766 = vmatprep.subr.bf16.mxu0 0
          %767 = vmatpush1.bf16.msra.mxu0 %v739
          %768 = vmatprep.subr.bf16.mxu0 0
          %769 = vmatpush1.bf16.msra.mxu0 0
          %770 = vmatprep.subr.bf16.mxu0 0
          %771 = vmatpush1.bf16.msra.mxu0 0
          %772 = vmatprep.subr.bf16.mxu0 0
          %773 = vmatpush1.bf16.msra.mxu0 0
          %774 = vmatprep.subr.bf16.mxu0 0
          %775 = vmatpush1.bf16.msra.mxu0 0
          %776 = vmatprep.subr.bf16.mxu0 0
          %777 = vmatpush1.bf16.msra.mxu0 0
          %778 = vmatprep.subr.bf16.mxu0 0
          %779 = vmatpush1.bf16.msra.mxu0 0
          %780 = vmatprep.subr.bf16.mxu0 0
          %781 = vmatpush1.bf16.msra.mxu0 0
          %782 = vmatprep.subr.bf16.mxu0 0
          %783 = vmatpush1.bf16.msra.mxu0 0
          %784 = vmatprep.subr.bf16.mxu0 0
          %785 = vmatpush1.bf16.msra.mxu0 0
          %786 = vmatprep.subr.bf16.mxu0 0
          %787 = vmatpush1.bf16.msra.mxu0 0
          %788 = vmatprep.subr.bf16.mxu0 0
          %789 = vmatpush1.bf16.msra.mxu0 0
          %790 = vmatprep.subr.bf16.mxu0 0
          %791 = vmatpush1.bf16.msra.mxu0 0
          %792 = vmatprep.subr.bf16.mxu0 0
          %793 = vmatpush1.bf16.msra.mxu0 0
          %794 = vmatprep.subr.bf16.mxu0 0
          %795 = vmatpush1.bf16.msra.mxu0 0
          %796 = vmatprep.subr.bf16.mxu0 0
          %797 = vmatpush1.bf16.msra.mxu0 0
          %798 = vmatprep.mubr.bf16.mxu0 0
          %799 = vmatmul.mubr.bf16.gmra.mrb[0].mxu0 %v743
          %v800 = vpop.f32.mrb[0].mxu0
          %v801 = vadd.f32 %v693, %v800
          %v802 = vpop.f32.mrb[0].mxu0
          %v803 = vpop.f32.mrb[0].mxu0
          %v804 = vadd.f32 %v693, %v803
          %v805 = vpop.f32.mrb[0].mxu0
          %806 = vmatprep.mubr.bf16.mxu0 0
          %807 = vmatmul.mubr.bf16.gmra.mrb[0].mxu0 %v746
          %v808 = vpop.f32.mrb[0].mxu0
          %v809 = vadd.f32 %v693, %v808
          %v810 = vpop.f32.mrb[0].mxu0
          %v811 = vpop.f32.mrb[0].mxu0
          %v812 = vadd.f32 %v693, %v811
          %v813 = vpop.f32.mrb[0].mxu0
          %814 = vmatprep.mubr.bf16.mxu0 0
          %815 = vmatmul.mubr.bf16.gmra.mrb[0].mxu0 %v749
          %v816 = vpop.f32.mrb[0].mxu0
          %v817 = vadd.f32 %v693, %v816
          %v818 = vpop.f32.mrb[0].mxu0
          %v819 = vpop.f32.mrb[0].mxu0
          %v820 = vadd.f32 %v693, %v819
          %v821 = vpop.f32.mrb[0].mxu0
          %822 = vmatprep.mubr.bf16.mxu0 0
          %823 = vmatmul.mubr.bf16.gmra.mrb[0].mxu0 %v752
          %v824 = vpop.f32.mrb[0].mxu0
          %v825 = vadd.f32 %v693, %v824
          %v826 = vpop.f32.mrb[0].mxu0
          %v827 = vpop.f32.mrb[0].mxu0
          %v828 = vadd.f32 %v693, %v827
          %v829 = vpop.f32.mrb[0].mxu0
          %830 = vmatprep.mubr.bf16.mxu0 0
          %831 = vmatmul.mubr.bf16.gmra.mrb[0].mxu0 %v755
          %v832 = vpop.f32.mrb[0].mxu0
          %v833 = vadd.f32 %v693, %v832
          %v834 = vpop.f32.mrb[0].mxu0
          %v835 = vpop.f32.mrb[0].mxu0
          %v836 = vadd.f32 %v693, %v835
          %v837 = vpop.f32.mrb[0].mxu0
          %838 = vmatprep.mubr.bf16.mxu0 0
          %839 = vmatmul.mubr.bf16.gmra.mrb[0].mxu0 %v758
          %v840 = vpop.f32.mrb[0].mxu0
          %v841 = vadd.f32 %v693, %v840
          %v842 = vpop.f32.mrb[0].mxu0
          %v843 = vpop.f32.mrb[0].mxu0
          %v844 = vadd.f32 %v693, %v843
          %v845 = vpop.f32.mrb[0].mxu0
          %846 = vmatprep.mubr.bf16.mxu0 0
          %847 = vmatmul.mubr.bf16.gmra.mrb[0].mxu0 %v761
          %v848 = vpop.f32.mrb[0].mxu0
          %v849 = vadd.f32 %v693, %v848
          %v850 = vpop.f32.mrb[0].mxu0
          %v851 = vpop.f32.mrb[0].mxu0
          %v852 = vadd.f32 %v693, %v851
          %v853 = vpop.f32.mrb[0].mxu0
          %854 = vmatprep.mubr.bf16.mxu0 0
          %855 = vmatmul.mubr.bf16.gmra.mrb[0].mxu0 %v764
          %v856 = vpop.f32.mrb[0].mxu0
          %v857 = vadd.f32 %v693, %v856
          %v858 = vpop.f32.mrb[0].mxu0
          %v859 = vpop.f32.mrb[0].mxu0
          %v860 = vadd.f32 %v693, %v859
          %v861 = vpop.f32.mrb[0].mxu0
          %862 = vdwg.mxu0
          %v863 = vmax.f32 %v801, 0.0
          %v864 = vmax.f32 %v804, 0.0
          %v865 = vmax.f32 %v809, 0.0
          %v866 = vmax.f32 %v812, 0.0
          %v867 = vmax.f32 %v817, 0.0
          %v868 = vmax.f32 %v820, 0.0
          %v869 = vmax.f32 %v825, 0.0
          %v870 = vmax.f32 %v828, 0.0
          %v871 = vmax.f32 %v833, 0.0
          %v872 = vmax.f32 %v836, 0.0
          %v873 = vmax.f32 %v841, 0.0
          %v874 = vmax.f32 %v844, 0.0
          %v875 = vmax.f32 %v849, 0.0
          %v876 = vmax.f32 %v852, 0.0
          %v877 = vmax.f32 %v857, 0.0
          %v878 = vmax.f32 %v860, 0.0
          %v879 = vmax.f32 %v863, %v867
          %v880 = vmax.f32 %v864, %v868
          %v881 = vmax.f32 %v865, %v869
          %v882 = vmax.f32 %v866, %v870
          %v883 = vmax.f32 %v871, %v875
          %v884 = vmax.f32 %v872, %v876
          %v885 = vmax.f32 %v873, %v877
          %v886 = vmax.f32 %v874, %v878
          %s887 = smul.u32 %s660, 64
          %s888 = scalar_lea.vmem [#allocation2], %s887
          %vm889 = vcmask 261120
          %890 = vst.msk [vmem:[%s888] sm:$0xff] %vm889, %v879
          %891 = vst.msk [vmem:[%s888 + $0x8] sm:$0xff] %vm889, %v880
          %892 = vst.msk [vmem:[%s888 + $0x10] sm:$0xff] %vm889, %v881
          %893 = vst.msk [vmem:[%s888 + $0x18] sm:$0xff] %vm889, %v882
          %894 = vst.msk [vmem:[%s888 + $0x20] sm:$0xff] %vm889, %v883
          %895 = vst.msk [vmem:[%s888 + $0x28] sm:$0xff] %vm889, %v884
          %896 = vst.msk [vmem:[%s888 + $0x30] sm:$0xff] %vm889, %v885
          %897 = vst.msk [vmem:[%s888 + $0x38] sm:$0xff] %vm889, %v886
        $region93: #{convnet_forward.1} parent=87 // loop_footer
          %s664 = sadd.s32 1, %s660
        $region94: #{convnet_forward.1} parent=87 // loop_footer_branch
          %659 = sbr.rel target = $region90
        $region95: #{convnet_forward.1} parent=87 // loop_exit
          _
        %v898 = vld [vmem:[#allocation2] ss:$2 sm:$0xff]
        %s899 = scalar_lea.vmem [#allocation2], 16
        %v900 = vld [vmem:[%s899] ss:$2 sm:$0xff]
        %s901 = scalar_lea.vmem [#allocation2], 32
        %v902 = vld [vmem:[%s901] ss:$2 sm:$0xff]
        %s903 = scalar_lea.vmem [#allocation2], 48
        %v904 = vld [vmem:[%s903] ss:$2 sm:$0xff]
        %s905 = scalar_lea.vmem [#allocation2], 64
        %v906 = vld [vmem:[%s905] ss:$2 sm:$0xff]
        %s907 = scalar_lea.vmem [#allocation2], 80
        %v908 = vld [vmem:[%s907] ss:$2 sm:$0xff]
        %s909 = scalar_lea.vmem [#allocation2], 96
        %v910 = vld [vmem:[%s909] ss:$2 sm:$0xff]
        %s911 = scalar_lea.vmem [#allocation2], 112
        %v912 = vld [vmem:[%s911] ss:$2 sm:$0xff]
        %s913 = scalar_lea.vmem [#allocation2], 128
        %v914 = vld [vmem:[%s913] ss:$2 sm:$0xff]
        %s915 = scalar_lea.vmem [#allocation2], 144
        %v916 = vld [vmem:[%s915] ss:$2 sm:$0xff]
        %s917 = scalar_lea.vmem [#allocation2], 160
        %v918 = vld [vmem:[%s917] ss:$2 sm:$0xff]
        %s919 = scalar_lea.vmem [#allocation2], 176
        %v920 = vld [vmem:[%s919] ss:$2 sm:$0xff]
        %s921 = scalar_lea.vmem [#allocation2], 192
        %v922 = vld [vmem:[%s921] ss:$2 sm:$0xff]
        %s923 = scalar_lea.vmem [#allocation2], 208
        %v924 = vld [vmem:[%s923] ss:$2 sm:$0xff]
        %s925 = scalar_lea.vmem [#allocation2], 224
        %v926 = vld [vmem:[%s925] ss:$2 sm:$0xff]
        %s927 = scalar_lea.vmem [#allocation2], 240
        %v928 = vld [vmem:[%s927] ss:$2 sm:$0xff]
        %s929 = scalar_lea.vmem [#allocation2], 256
        %v930 = vld [vmem:[%s929] ss:$2 sm:$0xff]
        %s931 = scalar_lea.vmem [#allocation2], 272
        %v932 = vld [vmem:[%s931] ss:$2 sm:$0xff]
        %s933 = scalar_lea.vmem [#allocation2], 288
        %v934 = vld [vmem:[%s933] ss:$2 sm:$0xff]
        %s935 = scalar_lea.vmem [#allocation2], 304
        %v936 = vld [vmem:[%s935] ss:$2 sm:$0xff]
        %s937 = scalar_lea.vmem [#allocation2], 320
        %v938 = vld [vmem:[%s937] ss:$2 sm:$0xff]
        %s939 = scalar_lea.vmem [#allocation2], 336
        %v940 = vld [vmem:[%s939] ss:$2 sm:$0xff]
        %s941 = scalar_lea.vmem [#allocation2], 352
        %v942 = vld [vmem:[%s941] ss:$2 sm:$0xff]
        %s943 = scalar_lea.vmem [#allocation2], 368
        %v944 = vld [vmem:[%s943] ss:$2 sm:$0xff]
        %s945 = scalar_lea.vmem [#allocation2], 384
        %v946 = vld [vmem:[%s945] ss:$2 sm:$0xff]
        %s947 = scalar_lea.vmem [#allocation2], 400
        %v948 = vld [vmem:[%s947] ss:$2 sm:$0xff]
        %s949 = scalar_lea.vmem [#allocation2], 416
        %v950 = vld [vmem:[%s949] ss:$2 sm:$0xff]
        %s951 = scalar_lea.vmem [#allocation2], 432
        %v952 = vld [vmem:[%s951] ss:$2 sm:$0xff]
        %s953 = scalar_lea.vmem [#allocation2], 448
        %v954 = vld [vmem:[%s953] ss:$2 sm:$0xff]
        %s955 = scalar_lea.vmem [#allocation2], 464
        %v956 = vld [vmem:[%s955] ss:$2 sm:$0xff]
        %s957 = scalar_lea.vmem [#allocation2], 480
        %v958 = vld [vmem:[%s957] ss:$2 sm:$0xff]
        %s959 = scalar_lea.vmem [#allocation2], 496
        %v960 = vld [vmem:[%s959] ss:$2 sm:$0xff]
        %s961 = scalar_lea.vmem [#allocation2], 1
        %v962 = vld [vmem:[%s961] ss:$2 sm:$0xff]
        %s963 = scalar_lea.vmem [#allocation2], 17
        %v964 = vld [vmem:[%s963] ss:$2 sm:$0xff]
        %s965 = scalar_lea.vmem [#allocation2], 33
        %v966 = vld [vmem:[%s965] ss:$2 sm:$0xff]
        %s967 = scalar_lea.vmem [#allocation2], 49
        %v968 = vld [vmem:[%s967] ss:$2 sm:$0xff]
        %s969 = scalar_lea.vmem [#allocation2], 65
        %v970 = vld [vmem:[%s969] ss:$2 sm:$0xff]
        %s971 = scalar_lea.vmem [#allocation2], 81
        %v972 = vld [vmem:[%s971] ss:$2 sm:$0xff]
        %s973 = scalar_lea.vmem [#allocation2], 97
        %v974 = vld [vmem:[%s973] ss:$2 sm:$0xff]
        %s975 = scalar_lea.vmem [#allocation2], 113
        %v976 = vld [vmem:[%s975] ss:$2 sm:$0xff]
        %s977 = scalar_lea.vmem [#allocation2], 129
        %v978 = vld [vmem:[%s977] ss:$2 sm:$0xff]
        %s979 = scalar_lea.vmem [#allocation2], 145
        %v980 = vld [vmem:[%s979] ss:$2 sm:$0xff]
        %s981 = scalar_lea.vmem [#allocation2], 161
        %v982 = vld [vmem:[%s981] ss:$2 sm:$0xff]
        %s983 = scalar_lea.vmem [#allocation2], 177
        %v984 = vld [vmem:[%s983] ss:$2 sm:$0xff]
        %s985 = scalar_lea.vmem [#allocation2], 193
        %v986 = vld [vmem:[%s985] ss:$2 sm:$0xff]
        %s987 = scalar_lea.vmem [#allocation2], 209
        %v988 = vld [vmem:[%s987] ss:$2 sm:$0xff]
        %s989 = scalar_lea.vmem [#allocation2], 225
        %v990 = vld [vmem:[%s989] ss:$2 sm:$0xff]
        %s991 = scalar_lea.vmem [#allocation2], 241
        %v992 = vld [vmem:[%s991] ss:$2 sm:$0xff]
        %s993 = scalar_lea.vmem [#allocation2], 257
        %v994 = vld [vmem:[%s993] ss:$2 sm:$0xff]
        %s995 = scalar_lea.vmem [#allocation2], 273
        %v996 = vld [vmem:[%s995] ss:$2 sm:$0xff]
        %s997 = scalar_lea.vmem [#allocation2], 289
        %v998 = vld [vmem:[%s997] ss:$2 sm:$0xff]
        %s999 = scalar_lea.vmem [#allocation2], 305
        %v1000 = vld [vmem:[%s999] ss:$2 sm:$0xff]
        %s1001 = scalar_lea.vmem [#allocation2], 321
        %v1002 = vld [vmem:[%s1001] ss:$2 sm:$0xff]
        %s1003 = scalar_lea.vmem [#allocation2], 337
        %v1004 = vld [vmem:[%s1003] ss:$2 sm:$0xff]
        %s1005 = scalar_lea.vmem [#allocation2], 353
        %v1006 = vld [vmem:[%s1005] ss:$2 sm:$0xff]
        %s1007 = scalar_lea.vmem [#allocation2], 369
        %v1008 = vld [vmem:[%s1007] ss:$2 sm:$0xff]
        %s1009 = scalar_lea.vmem [#allocation2], 385
        %v1010 = vld [vmem:[%s1009] ss:$2 sm:$0xff]
        %s1011 = scalar_lea.vmem [#allocation2], 401
        %v1012 = vld [vmem:[%s1011] ss:$2 sm:$0xff]
        %s1013 = scalar_lea.vmem [#allocation2], 417
        %v1014 = vld [vmem:[%s1013] ss:$2 sm:$0xff]
        %s1015 = scalar_lea.vmem [#allocation2], 433
        %v1016 = vld [vmem:[%s1015] ss:$2 sm:$0xff]
        %s1017 = scalar_lea.vmem [#allocation2], 449
        %v1018 = vld [vmem:[%s1017] ss:$2 sm:$0xff]
        %s1019 = scalar_lea.vmem [#allocation2], 465
        %v1020 = vld [vmem:[%s1019] ss:$2 sm:$0xff]
        %s1021 = scalar_lea.vmem [#allocation2], 481
        %v1022 = vld [vmem:[%s1021] ss:$2 sm:$0xff]
        %s1023 = scalar_lea.vmem [#allocation2], 497
        %v1024 = vld [vmem:[%s1023] ss:$2 sm:$0xff]
        %v1025 = vmax.f32 %v898, %v962
        %v1026 = vmax.f32 %v900, %v964
        %v1027 = vmax.f32 %v902, %v966
        %v1028 = vmax.f32 %v904, %v968
        %v1029 = vmax.f32 %v906, %v970
        %v1030 = vmax.f32 %v908, %v972
        %v1031 = vmax.f32 %v910, %v974
        %v1032 = vmax.f32 %v912, %v976
        %v1033 = vmax.f32 %v914, %v978
        %v1034 = vmax.f32 %v916, %v980
        %v1035 = vmax.f32 %v918, %v982
        %v1036 = vmax.f32 %v920, %v984
        %v1037 = vmax.f32 %v922, %v986
        %v1038 = vmax.f32 %v924, %v988
        %v1039 = vmax.f32 %v926, %v990
        %v1040 = vmax.f32 %v928, %v992
        %v1041 = vmax.f32 %v930, %v994
        %v1042 = vmax.f32 %v932, %v996
        %v1043 = vmax.f32 %v934, %v998
        %v1044 = vmax.f32 %v936, %v1000
        %v1045 = vmax.f32 %v938, %v1002
        %v1046 = vmax.f32 %v940, %v1004
        %v1047 = vmax.f32 %v942, %v1006
        %v1048 = vmax.f32 %v944, %v1008
        %v1049 = vmax.f32 %v946, %v1010
        %v1050 = vmax.f32 %v948, %v1012
        %v1051 = vmax.f32 %v950, %v1014
        %v1052 = vmax.f32 %v952, %v1016
        %v1053 = vmax.f32 %v954, %v1018
        %v1054 = vmax.f32 %v956, %v1020
        %v1055 = vmax.f32 %v958, %v1022
        %v1056 = vmax.f32 %v960, %v1024
        %v1057 = vld [vmem:[%s3] sm:$0x1]
        %v1059 = vlaneseq
        %v1060 = vshrl.u32 %v1059, 7
        %v1061 = vsub.s32 0, %v1060
        %v1062 = vrot.slane %v1057, %v1061
        %v1064 = vmul.f32 %v1025, %v1062
        %v1065 = vmul.f32 %v1026, %v1062
        %v1066 = vmul.f32 %v1027, %v1062
        %v1067 = vmul.f32 %v1028, %v1062
        %v1068 = vmul.f32 %v1029, %v1062
        %v1069 = vmul.f32 %v1030, %v1062
        %v1070 = vmul.f32 %v1031, %v1062
        %v1071 = vmul.f32 %v1032, %v1062
        %v1072 = vmul.f32 %v1033, %v1062
        %v1073 = vmul.f32 %v1034, %v1062
        %v1074 = vmul.f32 %v1035, %v1062
        %v1075 = vmul.f32 %v1036, %v1062
        %v1076 = vmul.f32 %v1037, %v1062
        %v1077 = vmul.f32 %v1038, %v1062
        %v1078 = vmul.f32 %v1039, %v1062
        %v1079 = vmul.f32 %v1040, %v1062
        %v1080 = vmul.f32 %v1041, %v1062
        %v1081 = vmul.f32 %v1042, %v1062
        %v1082 = vmul.f32 %v1043, %v1062
        %v1083 = vmul.f32 %v1044, %v1062
        %v1084 = vmul.f32 %v1045, %v1062
        %v1085 = vmul.f32 %v1046, %v1062
        %v1086 = vmul.f32 %v1047, %v1062
        %v1087 = vmul.f32 %v1048, %v1062
        %v1088 = vmul.f32 %v1049, %v1062
        %v1089 = vmul.f32 %v1050, %v1062
        %v1090 = vmul.f32 %v1051, %v1062
        %v1091 = vmul.f32 %v1052, %v1062
        %v1092 = vmul.f32 %v1053, %v1062
        %v1093 = vmul.f32 %v1054, %v1062
        %v1094 = vmul.f32 %v1055, %v1062
        %v1095 = vmul.f32 %v1056, %v1062
        %v1096 = vld [vmem:[%s4] sm:$0x1]
        %v1098 = vlaneseq
        %v1099 = vshrl.u32 %v1098, 7
        %v1100 = vsub.s32 0, %v1099
        %v1101 = vrot.slane %v1096, %v1100
        %v1103 = vadd.f32 %v1064, %v1101
        %v1104 = vadd.f32 %v1065, %v1101
        %v1105 = vadd.f32 %v1066, %v1101
        %v1106 = vadd.f32 %v1067, %v1101
        %v1107 = vadd.f32 %v1068, %v1101
        %v1108 = vadd.f32 %v1069, %v1101
        %v1109 = vadd.f32 %v1070, %v1101
        %v1110 = vadd.f32 %v1071, %v1101
        %v1111 = vadd.f32 %v1072, %v1101
        %v1112 = vadd.f32 %v1073, %v1101
        %v1113 = vadd.f32 %v1074, %v1101
        %v1114 = vadd.f32 %v1075, %v1101
        %v1115 = vadd.f32 %v1076, %v1101
        %v1116 = vadd.f32 %v1077, %v1101
        %v1117 = vadd.f32 %v1078, %v1101
        %v1118 = vadd.f32 %v1079, %v1101
        %v1119 = vadd.f32 %v1080, %v1101
        %v1120 = vadd.f32 %v1081, %v1101
        %v1121 = vadd.f32 %v1082, %v1101
        %v1122 = vadd.f32 %v1083, %v1101
        %v1123 = vadd.f32 %v1084, %v1101
        %v1124 = vadd.f32 %v1085, %v1101
        %v1125 = vadd.f32 %v1086, %v1101
        %v1126 = vadd.f32 %v1087, %v1101
        %v1127 = vadd.f32 %v1088, %v1101
        %v1128 = vadd.f32 %v1089, %v1101
        %v1129 = vadd.f32 %v1090, %v1101
        %v1130 = vadd.f32 %v1091, %v1101
        %v1131 = vadd.f32 %v1092, %v1101
        %v1132 = vadd.f32 %v1093, %v1101
        %v1133 = vadd.f32 %v1094, %v1101
        %v1134 = vadd.f32 %v1095, %v1101
        %v1135 = vpack.c.bf16 %v1104, %v1103
        %v1136 = vpack.c.bf16 %v1106, %v1105
        %v1137 = vpack.c.bf16 %v1108, %v1107
        %v1138 = vpack.c.bf16 %v1110, %v1109
        %v1139 = vpack.c.bf16 %v1112, %v1111
        %v1140 = vpack.c.bf16 %v1114, %v1113
        %v1141 = vpack.c.bf16 %v1116, %v1115
        %v1142 = vpack.c.bf16 %v1118, %v1117
        %v1143 = vpack.c.bf16 %v1120, %v1119
        %v1144 = vpack.c.bf16 %v1122, %v1121
        %v1145 = vpack.c.bf16 %v1124, %v1123
        %v1146 = vpack.c.bf16 %v1126, %v1125
        %v1147 = vpack.c.bf16 %v1128, %v1127
        %v1148 = vpack.c.bf16 %v1130, %v1129
        %v1149 = vpack.c.bf16 %v1132, %v1131
        %v1150 = vpack.c.bf16 %v1134, %v1133
        %v1167 = vunpack.c.l.b16 %v1135
        %v1168 = vunpack.c.h.b16 %v1135
        %v1169 = vunpack.c.l.b16 %v1136
        %v1170 = vunpack.c.h.b16 %v1136
        %v1171 = vunpack.c.l.b16 %v1137
        %v1172 = vunpack.c.h.b16 %v1137
        %v1173 = vunpack.c.l.b16 %v1138
        %v1174 = vunpack.c.h.b16 %v1138
        %v1175 = vunpack.c.l.b16 %v1139
        %v1176 = vunpack.c.h.b16 %v1139
        %v1177 = vunpack.c.l.b16 %v1140
        %v1178 = vunpack.c.h.b16 %v1140
        %v1179 = vunpack.c.l.b16 %v1141
        %v1180 = vunpack.c.h.b16 %v1141
        %v1181 = vunpack.c.l.b16 %v1142
        %v1182 = vunpack.c.h.b16 %v1142
        %v1183 = vunpack.c.l.b16 %v1143
        %v1184 = vunpack.c.h.b16 %v1143
        %v1185 = vunpack.c.l.b16 %v1144
        %v1186 = vunpack.c.h.b16 %v1144
        %v1187 = vunpack.c.l.b16 %v1145
        %v1188 = vunpack.c.h.b16 %v1145
        %v1189 = vunpack.c.l.b16 %v1146
        %v1190 = vunpack.c.h.b16 %v1146
        %v1191 = vunpack.c.l.b16 %v1147
        %v1192 = vunpack.c.h.b16 %v1147
        %v1193 = vunpack.c.l.b16 %v1148
        %v1194 = vunpack.c.h.b16 %v1148
        %v1195 = vunpack.c.l.b16 %v1149
        %v1196 = vunpack.c.h.b16 %v1149
        %v1197 = vunpack.c.l.b16 %v1150
        %v1198 = vunpack.c.h.b16 %v1150
        %v1199 = vpack.c.b16 %v1167, %v1167
        %v1200 = vpack.c.b16 %v1168, %v1168
        %v1201 = vpack.c.b16 %v1169, %v1169
        %v1202 = vpack.c.b16 %v1170, %v1170
        %v1203 = vpack.c.b16 %v1171, %v1171
        %v1204 = vpack.c.b16 %v1172, %v1172
        %v1205 = vpack.c.b16 %v1173, %v1173
        %v1206 = vpack.c.b16 %v1174, %v1174
        %v1207 = vpack.c.b16 %v1175, %v1175
        %v1208 = vpack.c.b16 %v1176, %v1176
        %v1209 = vpack.c.b16 %v1177, %v1177
        %v1210 = vpack.c.b16 %v1178, %v1178
        %v1211 = vpack.c.b16 %v1179, %v1179
        %v1212 = vpack.c.b16 %v1180, %v1180
        %v1213 = vpack.c.b16 %v1181, %v1181
        %v1214 = vpack.c.b16 %v1182, %v1182
        %v1215 = vpack.c.b16 %v1183, %v1183
        %v1216 = vpack.c.b16 %v1184, %v1184
        %v1217 = vpack.c.b16 %v1185, %v1185
        %v1218 = vpack.c.b16 %v1186, %v1186
        %v1219 = vpack.c.b16 %v1187, %v1187
        %v1220 = vpack.c.b16 %v1188, %v1188
        %v1221 = vpack.c.b16 %v1189, %v1189
        %v1222 = vpack.c.b16 %v1190, %v1190
        %v1223 = vpack.c.b16 %v1191, %v1191
        %v1224 = vpack.c.b16 %v1192, %v1192
        %v1225 = vpack.c.b16 %v1193, %v1193
        %v1226 = vpack.c.b16 %v1194, %v1194
        %v1227 = vpack.c.b16 %v1195, %v1195
        %v1228 = vpack.c.b16 %v1196, %v1196
        %v1229 = vpack.c.b16 %v1197, %v1197
        %v1230 = vpack.c.b16 %v1198, %v1198
        %s1263 = scalar_lea.vmem [#allocation3], 20
        %1264 = vst.msk [vmem:[%s1263 + $0x8] sm:$0xf] %vm547, %v1199
        %1265 = vst.msk [vmem:[%s1263 + $0xc] sm:$0xf] %vm547, %v1200
        %1266 = vst.msk [vmem:[%s1263 + $0x1c] sm:$0xf] %vm547, %v1201
        %1267 = vst.msk [vmem:[%s1263 + $0x20] sm:$0xf] %vm547, %v1202
        %1268 = vst.msk [vmem:[%s1263 + $0x30] sm:$0xf] %vm547, %v1203
        %1269 = vst.msk [vmem:[%s1263 + $0x34] sm:$0xf] %vm547, %v1204
        %1270 = vst.msk [vmem:[%s1263 + $0x44] sm:$0xf] %vm547, %v1205
        %1271 = vst.msk [vmem:[%s1263 + $0x48] sm:$0xf] %vm547, %v1206
        %1272 = vst.msk [vmem:[%s1263 + $0x58] sm:$0xf] %vm547, %v1207
        %1273 = vst.msk [vmem:[%s1263 + $0x5c] sm:$0xf] %vm547, %v1208
        %1274 = vst.msk [vmem:[%s1263 + $0x6c] sm:$0xf] %vm547, %v1209
        %1275 = vst.msk [vmem:[%s1263 + $0x70] sm:$0xf] %vm547, %v1210
        %1276 = vst.msk [vmem:[%s1263 + $0x80] sm:$0xf] %vm547, %v1211
        %1277 = vst.msk [vmem:[%s1263 + $0x84] sm:$0xf] %vm547, %v1212
        %1278 = vst.msk [vmem:[%s1263 + $0x94] sm:$0xf] %vm547, %v1213
        %1279 = vst.msk [vmem:[%s1263 + $0x98] sm:$0xf] %vm547, %v1214
        %1280 = vst.msk [vmem:[%s1263 + $0xa8] sm:$0xf] %vm547, %v1215
        %1281 = vst.msk [vmem:[%s1263 + $0xac] sm:$0xf] %vm547, %v1216
        %1282 = vst.msk [vmem:[%s1263 + $0xbc] sm:$0xf] %vm547, %v1217
        %1283 = vst.msk [vmem:[%s1263 + $0xc0] sm:$0xf] %vm547, %v1218
        %1284 = vst.msk [vmem:[%s1263 + $0xd0] sm:$0xf] %vm547, %v1219
        %1285 = vst.msk [vmem:[%s1263 + $0xd4] sm:$0xf] %vm547, %v1220
        %1286 = vst.msk [vmem:[%s1263 + $0xe4] sm:$0xf] %vm547, %v1221
        %1287 = vst.msk [vmem:[%s1263 + $0xe8] sm:$0xf] %vm547, %v1222
        %1288 = vst.msk [vmem:[%s1263 + $0xf8] sm:$0xf] %vm547, %v1223
        %1289 = vst.msk [vmem:[%s1263 + $0xfc] sm:$0xf] %vm547, %v1224
        %1290 = vst.msk [vmem:[%s1263 + $0x10c] sm:$0xf] %vm547, %v1225
        %1291 = vst.msk [vmem:[%s1263 + $0x110] sm:$0xf] %vm547, %v1226
        %1292 = vst.msk [vmem:[%s1263 + $0x120] sm:$0xf] %vm547, %v1227
        %1293 = vst.msk [vmem:[%s1263 + $0x124] sm:$0xf] %vm547, %v1228
        %1294 = vst.msk [vmem:[%s1263 + $0x134] sm:$0xf] %vm547, %v1229
        %1295 = vst.msk [vmem:[%s1263 + $0x138] sm:$0xf] %vm547, %v1230
        loop: start=0, step=1, limit=2
        $region96: #{convnet_forward.1} parent=87 // loop_pre_header
          _
        $region97: #{convnet_forward.1} parent=87 // loop_header
          %s1297 = sphi 0, %s1301
          %p1298 = scmp.ge.s32.totalorder %s1297, 2
        $region98: #{convnet_forward.1} parent=87 // loop_header_branch
          %1300 = sbr.rel (%p1298) target = $region102
        $region99: #{convnet_forward.1} parent=87 // loop_body
          %s1302 = smul.u32 %s1297, 8
          %s1303 = smul.u32 %s1302, 5
          %s1304 = smul.addr %s1303, 4
          %s1305 = scalar_lea.vmem [#allocation3], %s1304
          %v1306 = vld [vmem:[%s1305 + $0x4] sm:$0x8]
          %v1307 = vld [vmem:[%s1305 + $0x8] sm:$0xf]
          %v1308 = vld [vmem:[%s1305 + $0xc] sm:$0xf]
          %v1309 = vld [vmem:[%s1305 + $0x18] sm:$0x8]
          %v1310 = vld [vmem:[%s1305 + $0x1c] sm:$0xf]
          %v1311 = vld [vmem:[%s1305 + $0x20] sm:$0xf]
          %v1312 = vld [vmem:[%s1305 + $0x2c] sm:$0x8]
          %v1313 = vld [vmem:[%s1305 + $0x30] sm:$0xf]
          %v1314 = vld [vmem:[%s1305 + $0x34] sm:$0xf]
          %v1315 = vld [vmem:[%s1305 + $0x40] sm:$0x8]
          %v1316 = vld [vmem:[%s1305 + $0x44] sm:$0xf]
          %v1317 = vld [vmem:[%s1305 + $0x48] sm:$0xf]
          %v1318 = vld [vmem:[%s1305 + $0x54] sm:$0x8]
          %v1319 = vld [vmem:[%s1305 + $0x58] sm:$0xf]
          %v1320 = vld [vmem:[%s1305 + $0x5c] sm:$0xf]
          %v1321 = vld [vmem:[%s1305 + $0x68] sm:$0x8]
          %v1322 = vld [vmem:[%s1305 + $0x6c] sm:$0xf]
          %v1323 = vld [vmem:[%s1305 + $0x70] sm:$0xf]
          %v1324 = vld [vmem:[%s1305 + $0x7c] sm:$0x8]
          %v1325 = vld [vmem:[%s1305 + $0x80] sm:$0xf]
          %v1326 = vld [vmem:[%s1305 + $0x84] sm:$0xf]
          %v1327 = vld [vmem:[%s1305 + $0x90] sm:$0x8]
          %v1328 = vld [vmem:[%s1305 + $0x94] sm:$0xf]
          %v1329 = vld [vmem:[%s1305 + $0x98] sm:$0xf]
          %vm1330 = vsmask.f32 256
          %vm1331 = vsmask.f32 4368
          %vm1332 = vmor %vm1330, %vm1331
          %v1334 = vshrl.u32 %v1306, 16
          %v1336 = vrot.slane %v1334, 7
          %v1337 = vrot.slane %v1336, 4
          %v1339 = vshrl.u32 %v1307, 16
          %v1341 = vrot.slane %v1339, 7
          %v1342 = vshll.u32 %v1307, 16
          %v1344 = vor.u32 %v1341, %v1342
          %v1345 = vsel %vm1332, %v1337, %v1344
          %v1346 = vrot.slane %v1341, 4
          %v1348 = vshrl.u32 %v1308, 16
          %v1350 = vrot.slane %v1348, 7
          %v1351 = vshll.u32 %v1308, 16
          %v1353 = vor.u32 %v1350, %v1351
          %v1354 = vsel %vm1332, %v1346, %v1353
          %v1356 = vshrl.u32 %v1309, 16
          %v1358 = vrot.slane %v1356, 7
          %v1359 = vrot.slane %v1358, 4
          %v1361 = vshrl.u32 %v1310, 16
          %v1363 = vrot.slane %v1361, 7
          %v1364 = vshll.u32 %v1310, 16
          %v1366 = vor.u32 %v1363, %v1364
          %v1367 = vsel %vm1332, %v1359, %v1366
          %v1368 = vrot.slane %v1363, 4
          %v1370 = vshrl.u32 %v1311, 16
          %v1372 = vrot.slane %v1370, 7
          %v1373 = vshll.u32 %v1311, 16
          %v1375 = vor.u32 %v1372, %v1373
          %v1376 = vsel %vm1332, %v1368, %v1375
          %v1378 = vshrl.u32 %v1312, 16
          %v1380 = vrot.slane %v1378, 7
          %v1381 = vrot.slane %v1380, 4
          %v1383 = vshrl.u32 %v1313, 16
          %v1385 = vrot.slane %v1383, 7
          %v1386 = vshll.u32 %v1313, 16
          %v1388 = vor.u32 %v1385, %v1386
          %v1389 = vsel %vm1332, %v1381, %v1388
          %v1390 = vrot.slane %v1385, 4
          %v1392 = vshrl.u32 %v1314, 16
          %v1394 = vrot.slane %v1392, 7
          %v1395 = vshll.u32 %v1314, 16
          %v1397 = vor.u32 %v1394, %v1395
          %v1398 = vsel %vm1332, %v1390, %v1397
          %v1400 = vshrl.u32 %v1315, 16
          %v1402 = vrot.slane %v1400, 7
          %v1403 = vrot.slane %v1402, 4
          %v1405 = vshrl.u32 %v1316, 16
          %v1407 = vrot.slane %v1405, 7
          %v1408 = vshll.u32 %v1316, 16
          %v1410 = vor.u32 %v1407, %v1408
          %v1411 = vsel %vm1332, %v1403, %v1410
          %v1412 = vrot.slane %v1407, 4
          %v1414 = vshrl.u32 %v1317, 16
          %v1416 = vrot.slane %v1414, 7
          %v1417 = vshll.u32 %v1317, 16
          %v1419 = vor.u32 %v1416, %v1417
          %v1420 = vsel %vm1332, %v1412, %v1419
          %v1422 = vshrl.u32 %v1318, 16
          %v1424 = vrot.slane %v1422, 7
          %v1425 = vrot.slane %v1424, 4
          %v1427 = vshrl.u32 %v1319, 16
          %v1429 = vrot.slane %v1427, 7
          %v1430 = vshll.u32 %v1319, 16
          %v1432 = vor.u32 %v1429, %v1430
          %v1433 = vsel %vm1332, %v1425, %v1432
          %v1434 = vrot.slane %v1429, 4
          %v1436 = vshrl.u32 %v1320, 16
          %v1438 = vrot.slane %v1436, 7
          %v1439 = vshll.u32 %v1320, 16
          %v1441 = vor.u32 %v1438, %v1439
          %v1442 = vsel %vm1332, %v1434, %v1441
          %v1444 = vshrl.u32 %v1321, 16
          %v1446 = vrot.slane %v1444, 7
          %v1447 = vrot.slane %v1446, 4
          %v1449 = vshrl.u32 %v1322, 16
          %v1451 = vrot.slane %v1449, 7
          %v1452 = vshll.u32 %v1322, 16
          %v1454 = vor.u32 %v1451, %v1452
          %v1455 = vsel %vm1332, %v1447, %v1454
          %v1456 = vrot.slane %v1451, 4
          %v1458 = vshrl.u32 %v1323, 16
          %v1460 = vrot.slane %v1458, 7
          %v1461 = vshll.u32 %v1323, 16
          %v1463 = vor.u32 %v1460, %v1461
          %v1464 = vsel %vm1332, %v1456, %v1463
          %v1466 = vshrl.u32 %v1324, 16
          %v1468 = vrot.slane %v1466, 7
          %v1469 = vrot.slane %v1468, 4
          %v1471 = vshrl.u32 %v1325, 16
          %v1473 = vrot.slane %v1471, 7
          %v1474 = vshll.u32 %v1325, 16
          %v1476 = vor.u32 %v1473, %v1474
          %v1477 = vsel %vm1332, %v1469, %v1476
          %v1478 = vrot.slane %v1473, 4
          %v1480 = vshrl.u32 %v1326, 16
          %v1482 = vrot.slane %v1480, 7
          %v1483 = vshll.u32 %v1326, 16
          %v1485 = vor.u32 %v1482, %v1483
          %v1486 = vsel %vm1332, %v1478, %v1485
          %v1488 = vshrl.u32 %v1327, 16
          %v1490 = vrot.slane %v1488, 7
          %v1491 = vrot.slane %v1490, 4
          %v1493 = vshrl.u32 %v1328, 16
          %v1495 = vrot.slane %v1493, 7
          %v1496 = vshll.u32 %v1328, 16
          %v1498 = vor.u32 %v1495, %v1496
          %v1499 = vsel %vm1332, %v1491, %v1498
          %v1500 = vrot.slane %v1495, 4
          %v1502 = vshrl.u32 %v1329, 16
          %v1504 = vrot.slane %v1502, 7
          %v1505 = vshll.u32 %v1329, 16
          %v1507 = vor.u32 %v1504, %v1505
          %v1508 = vsel %vm1332, %v1500, %v1507
          %v1509 = vld [vmem:[%s5] sm:$0xf]
          %v1510 = vld [vmem:[%s5 + $0x4] sm:$0xf]
          %v1511 = vld [vmem:[%s5 + $0x8] sm:$0xf]
          %v1512 = vld [vmem:[%s5 + $0xc] sm:$0xf]
          %s1513 = scalar_lea.vmem %s5, 16
          %v1514 = vld [vmem:[%s1513] sm:$0xf]
          %v1515 = vld [vmem:[%s1513 + $0x4] sm:$0xf]
          %v1516 = vld [vmem:[%s1513 + $0x8] sm:$0xf]
          %v1517 = vld [vmem:[%s1513 + $0xc] sm:$0xf]
          %v1534 = vunpack.c.l.b16 %v1307
          %v1535 = vunpack.c.l.b16 %v1308
          %v1536 = vunpack.c.l.b16 %v1310
          %v1537 = vunpack.c.l.b16 %v1311
          %v1538 = vunpack.c.l.b16 %v1313
          %v1539 = vunpack.c.l.b16 %v1314
          %v1540 = vunpack.c.l.b16 %v1316
          %v1541 = vunpack.c.l.b16 %v1317
          %v1542 = vunpack.c.l.b16 %v1319
          %v1543 = vunpack.c.l.b16 %v1320
          %v1544 = vunpack.c.l.b16 %v1322
          %v1545 = vunpack.c.l.b16 %v1323
          %v1546 = vunpack.c.l.b16 %v1325
          %v1547 = vunpack.c.l.b16 %v1326
          %v1548 = vunpack.c.l.b16 %v1328
          %v1549 = vunpack.c.l.b16 %v1329
          %v1550 = vpack.c.b16 %v1535, %v1534
          %v1551 = vpack.c.b16 %v1537, %v1536
          %v1552 = vpack.c.b16 %v1539, %v1538
          %v1553 = vpack.c.b16 %v1541, %v1540
          %v1554 = vpack.c.b16 %v1543, %v1542
          %v1555 = vpack.c.b16 %v1545, %v1544
          %v1556 = vpack.c.b16 %v1547, %v1546
          %v1557 = vpack.c.b16 %v1549, %v1548
          %v1562 = vunpack.c.l.b16 %v1514
          %v1563 = vunpack.c.l.b16 %v1515
          %v1564 = vunpack.c.l.b16 %v1516
          %v1565 = vunpack.c.l.b16 %v1517
          %v1566 = vpack.c.b16 %v1563, %v1562
          %v1567 = vpack.c.b16 %v1565, %v1564
          %vm1570 = vcmask 261120
          %v1572 = vsel %vm1570, %v1550, 0
          %v1575 = vsel %vm1570, %v1551, 0
          %v1578 = vsel %vm1570, %v1552, 0
          %v1581 = vsel %vm1570, %v1553, 0
          %v1584 = vsel %vm1570, %v1554, 0
          %v1587 = vsel %vm1570, %v1555, 0
          %v1590 = vsel %vm1570, %v1556, 0
          %v1593 = vsel %vm1570, %v1557, 0
          %1595 = vmatprep.subr.bf16.mxu0 0
          %1596 = vmatpush1.bf16.msra.mxu0 %v1566
          %1597 = vmatprep.subr.bf16.mxu0 0
          %1598 = vmatpush1.bf16.msra.mxu0 %v1567
          %1599 = vmatprep.subr.bf16.mxu0 0
          %1600 = vmatpush1.bf16.msra.mxu0 0
          %1601 = vmatprep.subr.bf16.mxu0 0
          %1602 = vmatpush1.bf16.msra.mxu0 0
          %1603 = vmatprep.subr.bf16.mxu0 0
          %1604 = vmatpush1.bf16.msra.mxu0 0
          %1605 = vmatprep.subr.bf16.mxu0 0
          %1606 = vmatpush1.bf16.msra.mxu0 0
          %1607 = vmatprep.subr.bf16.mxu0 0
          %1608 = vmatpush1.bf16.msra.mxu0 0
          %1609 = vmatprep.subr.bf16.mxu0 0
          %1610 = vmatpush1.bf16.msra.mxu0 0
          %1611 = vmatprep.subr.bf16.mxu0 0
          %1612 = vmatpush1.bf16.msra.mxu0 0
          %1613 = vmatprep.subr.bf16.mxu0 0
          %1614 = vmatpush1.bf16.msra.mxu0 0
          %1615 = vmatprep.subr.bf16.mxu0 0
          %1616 = vmatpush1.bf16.msra.mxu0 0
          %1617 = vmatprep.subr.bf16.mxu0 0
          %1618 = vmatpush1.bf16.msra.mxu0 0
          %1619 = vmatprep.subr.bf16.mxu0 0
          %1620 = vmatpush1.bf16.msra.mxu0 0
          %1621 = vmatprep.subr.bf16.mxu0 0
          %1622 = vmatpush1.bf16.msra.mxu0 0
          %1623 = vmatprep.subr.bf16.mxu0 0
          %1624 = vmatpush1.bf16.msra.mxu0 0
          %1625 = vmatprep.subr.bf16.mxu0 0
          %1626 = vmatpush1.bf16.msra.mxu0 0
          %1627 = vmatprep.mubr.bf16.mxu0 0
          %1628 = vmatmul.mubr.bf16.gmra.mrb[0].mxu0 %v1572
          %v1629 = vpop.f32.mrb[0].mxu0
          %v1630 = vadd.f32 0.0, %v1629
          %v1631 = vpop.f32.mrb[0].mxu0
          %v1632 = vpop.f32.mrb[0].mxu0
          %v1633 = vadd.f32 0.0, %v1632
          %v1634 = vpop.f32.mrb[0].mxu0
          %1635 = vmatprep.mubr.bf16.mxu0 0
          %1636 = vmatmul.mubr.bf16.gmra.mrb[0].mxu0 %v1575
          %v1637 = vpop.f32.mrb[0].mxu0
          %v1638 = vadd.f32 0.0, %v1637
          %v1639 = vpop.f32.mrb[0].mxu0
          %v1640 = vpop.f32.mrb[0].mxu0
          %v1641 = vadd.f32 0.0, %v1640
          %v1642 = vpop.f32.mrb[0].mxu0
          %1643 = vmatprep.mubr.bf16.mxu0 0
          %1644 = vmatmul.mubr.bf16.gmra.mrb[0].mxu0 %v1578
          %v1645 = vpop.f32.mrb[0].mxu0
          %v1646 = vadd.f32 0.0, %v1645
          %v1647 = vpop.f32.mrb[0].mxu0
          %v1648 = vpop.f32.mrb[0].mxu0
          %v1649 = vadd.f32 0.0, %v1648
          %v1650 = vpop.f32.mrb[0].mxu0
          %1651 = vmatprep.mubr.bf16.mxu0 0
          %1652 = vmatmul.mubr.bf16.gmra.mrb[0].mxu0 %v1581
          %v1653 = vpop.f32.mrb[0].mxu0
          %v1654 = vadd.f32 0.0, %v1653
          %v1655 = vpop.f32.mrb[0].mxu0
          %v1656 = vpop.f32.mrb[0].mxu0
          %v1657 = vadd.f32 0.0, %v1656
          %v1658 = vpop.f32.mrb[0].mxu0
          %1659 = vmatprep.mubr.bf16.mxu0 0
          %1660 = vmatmul.mubr.bf16.gmra.mrb[0].mxu0 %v1584
          %v1661 = vpop.f32.mrb[0].mxu0
          %v1662 = vadd.f32 0.0, %v1661
          %v1663 = vpop.f32.mrb[0].mxu0
          %v1664 = vpop.f32.mrb[0].mxu0
          %v1665 = vadd.f32 0.0, %v1664
          %v1666 = vpop.f32.mrb[0].mxu0
          %1667 = vmatprep.mubr.bf16.mxu0 0
          %1668 = vmatmul.mubr.bf16.gmra.mrb[0].mxu0 %v1587
          %v1669 = vpop.f32.mrb[0].mxu0
          %v1670 = vadd.f32 0.0, %v1669
          %v1671 = vpop.f32.mrb[0].mxu0
          %v1672 = vpop.f32.mrb[0].mxu0
          %v1673 = vadd.f32 0.0, %v1672
          %v1674 = vpop.f32.mrb[0].mxu0
          %1675 = vmatprep.mubr.bf16.mxu0 0
          %1676 = vmatmul.mubr.bf16.gmra.mrb[0].mxu0 %v1590
          %v1677 = vpop.f32.mrb[0].mxu0
          %v1678 = vadd.f32 0.0, %v1677
          %v1679 = vpop.f32.mrb[0].mxu0
          %v1680 = vpop.f32.mrb[0].mxu0
          %v1681 = vadd.f32 0.0, %v1680
          %v1682 = vpop.f32.mrb[0].mxu0
          %1683 = vmatprep.mubr.bf16.mxu0 0
          %1684 = vmatmul.mubr.bf16.gmra.mrb[0].mxu0 %v1593
          %v1685 = vpop.f32.mrb[0].mxu0
          %v1686 = vadd.f32 0.0, %v1685
          %v1687 = vpop.f32.mrb[0].mxu0
          %v1688 = vpop.f32.mrb[0].mxu0
          %v1689 = vadd.f32 0.0, %v1688
          %v1690 = vpop.f32.mrb[0].mxu0
          %1691 = vdwg.mxu0
          %v1692 = vunpack.c.l.b16 %v1345
          %v1693 = vunpack.c.l.b16 %v1354
          %v1694 = vunpack.c.l.b16 %v1367
          %v1695 = vunpack.c.l.b16 %v1376
          %v1696 = vunpack.c.l.b16 %v1389
          %v1697 = vunpack.c.l.b16 %v1398
          %v1698 = vunpack.c.l.b16 %v1411
          %v1699 = vunpack.c.l.b16 %v1420
          %v1700 = vunpack.c.l.b16 %v1433
          %v1701 = vunpack.c.l.b16 %v1442
          %v1702 = vunpack.c.l.b16 %v1455
          %v1703 = vunpack.c.l.b16 %v1464
          %v1704 = vunpack.c.l.b16 %v1477
          %v1705 = vunpack.c.l.b16 %v1486
          %v1706 = vunpack.c.l.b16 %v1499
          %v1707 = vunpack.c.l.b16 %v1508
          %v1708 = vpack.c.b16 %v1693, %v1692
          %v1709 = vpack.c.b16 %v1695, %v1694
          %v1710 = vpack.c.b16 %v1697, %v1696
          %v1711 = vpack.c.b16 %v1699, %v1698
          %v1712 = vpack.c.b16 %v1701, %v1700
          %v1713 = vpack.c.b16 %v1703, %v1702
          %v1714 = vpack.c.b16 %v1705, %v1704
          %v1715 = vpack.c.b16 %v1707, %v1706
          %v1720 = vunpack.c.l.b16 %v1509
          %v1721 = vunpack.c.l.b16 %v1510
          %v1722 = vunpack.c.l.b16 %v1511
          %v1723 = vunpack.c.l.b16 %v1512
          %v1724 = vpack.c.b16 %v1721, %v1720
          %v1725 = vpack.c.b16 %v1723, %v1722
          %v1729 = vsel %vm1570, %v1708, 0
          %v1732 = vsel %vm1570, %v1709, 0
          %v1735 = vsel %vm1570, %v1710, 0
          %v1738 = vsel %vm1570, %v1711, 0
          %v1741 = vsel %vm1570, %v1712, 0
          %v1744 = vsel %vm1570, %v1713, 0
          %v1747 = vsel %vm1570, %v1714, 0
          %v1750 = vsel %vm1570, %v1715, 0
          %1752 = vmatprep.subr.bf16.mxu0 0
          %1753 = vmatpush1.bf16.msra.mxu0 %v1724
          %1754 = vmatprep.subr.bf16.mxu0 0
          %1755 = vmatpush1.bf16.msra.mxu0 %v1725
          %1756 = vmatprep.subr.bf16.mxu0 0
          %1757 = vmatpush1.bf16.msra.mxu0 0
          %1758 = vmatprep.subr.bf16.mxu0 0
          %1759 = vmatpush1.bf16.msra.mxu0 0
          %1760 = vmatprep.subr.bf16.mxu0 0
          %1761 = vmatpush1.bf16.msra.mxu0 0
          %1762 = vmatprep.subr.bf16.mxu0 0
          %1763 = vmatpush1.bf16.msra.mxu0 0
          %1764 = vmatprep.subr.bf16.mxu0 0
          %1765 = vmatpush1.bf16.msra.mxu0 0
          %1766 = vmatprep.subr.bf16.mxu0 0
          %1767 = vmatpush1.bf16.msra.mxu0 0
          %1768 = vmatprep.subr.bf16.mxu0 0
          %1769 = vmatpush1.bf16.msra.mxu0 0
          %1770 = vmatprep.subr.bf16.mxu0 0
          %1771 = vmatpush1.bf16.msra.mxu0 0
          %1772 = vmatprep.subr.bf16.mxu0 0
          %1773 = vmatpush1.bf16.msra.mxu0 0
          %1774 = vmatprep.subr.bf16.mxu0 0
          %1775 = vmatpush1.bf16.msra.mxu0 0
          %1776 = vmatprep.subr.bf16.mxu0 0
          %1777 = vmatpush1.bf16.msra.mxu0 0
          %1778 = vmatprep.subr.bf16.mxu0 0
          %1779 = vmatpush1.bf16.msra.mxu0 0
          %1780 = vmatprep.subr.bf16.mxu0 0
          %1781 = vmatpush1.bf16.msra.mxu0 0
          %1782 = vmatprep.subr.bf16.mxu0 0
          %1783 = vmatpush1.bf16.msra.mxu0 0
          %1784 = vmatprep.mubr.bf16.mxu0 0
          %1785 = vmatmul.mubr.bf16.gmra.mrb[0].mxu0 %v1729
          %v1786 = vpop.f32.mrb[0].mxu0
          %v1787 = vadd.f32 %v1630, %v1786
          %v1788 = vpop.f32.mrb[0].mxu0
          %v1789 = vpop.f32.mrb[0].mxu0
          %v1790 = vadd.f32 %v1633, %v1789
          %v1791 = vpop.f32.mrb[0].mxu0
          %1792 = vmatprep.mubr.bf16.mxu0 0
          %1793 = vmatmul.mubr.bf16.gmra.mrb[0].mxu0 %v1732
          %v1794 = vpop.f32.mrb[0].mxu0
          %v1795 = vadd.f32 %v1638, %v1794
          %v1796 = vpop.f32.mrb[0].mxu0
          %v1797 = vpop.f32.mrb[0].mxu0
          %v1798 = vadd.f32 %v1641, %v1797
          %v1799 = vpop.f32.mrb[0].mxu0
          %1800 = vmatprep.mubr.bf16.mxu0 0
          %1801 = vmatmul.mubr.bf16.gmra.mrb[0].mxu0 %v1735
          %v1802 = vpop.f32.mrb[0].mxu0
          %v1803 = vadd.f32 %v1646, %v1802
          %v1804 = vpop.f32.mrb[0].mxu0
          %v1805 = vpop.f32.mrb[0].mxu0
          %v1806 = vadd.f32 %v1649, %v1805
          %v1807 = vpop.f32.mrb[0].mxu0
          %1808 = vmatprep.mubr.bf16.mxu0 0
          %1809 = vmatmul.mubr.bf16.gmra.mrb[0].mxu0 %v1738
          %v1810 = vpop.f32.mrb[0].mxu0
          %v1811 = vadd.f32 %v1654, %v1810
          %v1812 = vpop.f32.mrb[0].mxu0
          %v1813 = vpop.f32.mrb[0].mxu0
          %v1814 = vadd.f32 %v1657, %v1813
          %v1815 = vpop.f32.mrb[0].mxu0
          %1816 = vmatprep.mubr.bf16.mxu0 0
          %1817 = vmatmul.mubr.bf16.gmra.mrb[0].mxu0 %v1741
          %v1818 = vpop.f32.mrb[0].mxu0
          %v1819 = vadd.f32 %v1662, %v1818
          %v1820 = vpop.f32.mrb[0].mxu0
          %v1821 = vpop.f32.mrb[0].mxu0
          %v1822 = vadd.f32 %v1665, %v1821
          %v1823 = vpop.f32.mrb[0].mxu0
          %1824 = vmatprep.mubr.bf16.mxu0 0
          %1825 = vmatmul.mubr.bf16.gmra.mrb[0].mxu0 %v1744
          %v1826 = vpop.f32.mrb[0].mxu0
          %v1827 = vadd.f32 %v1670, %v1826
          %v1828 = vpop.f32.mrb[0].mxu0
          %v1829 = vpop.f32.mrb[0].mxu0
          %v1830 = vadd.f32 %v1673, %v1829
          %v1831 = vpop.f32.mrb[0].mxu0
          %1832 = vmatprep.mubr.bf16.mxu0 0
          %1833 = vmatmul.mubr.bf16.gmra.mrb[0].mxu0 %v1747
          %v1834 = vpop.f32.mrb[0].mxu0
          %v1835 = vadd.f32 %v1678, %v1834
          %v1836 = vpop.f32.mrb[0].mxu0
          %v1837 = vpop.f32.mrb[0].mxu0
          %v1838 = vadd.f32 %v1681, %v1837
          %v1839 = vpop.f32.mrb[0].mxu0
          %1840 = vmatprep.mubr.bf16.mxu0 0
          %1841 = vmatmul.mubr.bf16.gmra.mrb[0].mxu0 %v1750
          %v1842 = vpop.f32.mrb[0].mxu0
          %v1843 = vadd.f32 %v1686, %v1842
          %v1844 = vpop.f32.mrb[0].mxu0
          %v1845 = vpop.f32.mrb[0].mxu0
          %v1846 = vadd.f32 %v1689, %v1845
          %v1847 = vpop.f32.mrb[0].mxu0
          %1848 = vdwg.mxu0
          %v1849 = vld [vmem:[%s1305 + $0x8] sm:$0xf]
          %v1850 = vld [vmem:[%s1305 + $0xc] sm:$0xf]
          %v1851 = vld [vmem:[%s1305 + $0x10] sm:$0x1]
          %v1852 = vld [vmem:[%s1305 + $0x1c] sm:$0xf]
          %v1853 = vld [vmem:[%s1305 + $0x20] sm:$0xf]
          %v1854 = vld [vmem:[%s1305 + $0x24] sm:$0x1]
          %v1855 = vld [vmem:[%s1305 + $0x30] sm:$0xf]
          %v1856 = vld [vmem:[%s1305 + $0x34] sm:$0xf]
          %v1857 = vld [vmem:[%s1305 + $0x38] sm:$0x1]
          %v1858 = vld [vmem:[%s1305 + $0x44] sm:$0xf]
          %v1859 = vld [vmem:[%s1305 + $0x48] sm:$0xf]
          %v1860 = vld [vmem:[%s1305 + $0x4c] sm:$0x1]
          %v1861 = vld [vmem:[%s1305 + $0x58] sm:$0xf]
          %v1862 = vld [vmem:[%s1305 + $0x5c] sm:$0xf]
          %v1863 = vld [vmem:[%s1305 + $0x60] sm:$0x1]
          %v1864 = vld [vmem:[%s1305 + $0x6c] sm:$0xf]
          %v1865 = vld [vmem:[%s1305 + $0x70] sm:$0xf]
          %v1866 = vld [vmem:[%s1305 + $0x74] sm:$0x1]
          %v1867 = vld [vmem:[%s1305 + $0x80] sm:$0xf]
          %v1868 = vld [vmem:[%s1305 + $0x84] sm:$0xf]
          %v1869 = vld [vmem:[%s1305 + $0x88] sm:$0x1]
          %v1870 = vld [vmem:[%s1305 + $0x94] sm:$0xf]
          %v1871 = vld [vmem:[%s1305 + $0x98] sm:$0xf]
          %v1872 = vld [vmem:[%s1305 + $0x9c] sm:$0x1]
          %vm1873 = vsmask.f32 3328
          %vm1874 = vsmask.f32 7440
          %vm1875 = vmor %vm1873, %vm1874
          %v1877 = vshrl.u32 %v1849, 16
          %v1879 = vrot.slane %v1877, 4
          %v1880 = vshll.u32 %v1849, 16
          %v1882 = vrot.slane %v1880, 5
          %v1883 = vor.u32 %v1879, %v1882
          %v1884 = vrot.slane %v1883, 4
          %v1886 = vshll.u32 %v1850, 16
          %v1888 = vrot.slane %v1886, 5
          %v1889 = vsel %vm1875, %v1884, %v1888
          %v1890 = vshrl.u32 %v1850, 16
          %v1892 = vrot.slane %v1890, 4
          %v1893 = vor.u32 %v1892, %v1888
          %v1894 = vrot.slane %v1893, 4
          %v1896 = vshll.u32 %v1851, 16
          %v1898 = vrot.slane %v1896, 5
          %v1899 = vsel %vm1875, %v1894, %v1898
          %v1901 = vshrl.u32 %v1852, 16
          %v1903 = vrot.slane %v1901, 4
          %v1904 = vshll.u32 %v1852, 16
          %v1906 = vrot.slane %v1904, 5
          %v1907 = vor.u32 %v1903, %v1906
          %v1908 = vrot.slane %v1907, 4
          %v1910 = vshll.u32 %v1853, 16
          %v1912 = vrot.slane %v1910, 5
          %v1913 = vsel %vm1875, %v1908, %v1912
          %v1914 = vshrl.u32 %v1853, 16
          %v1916 = vrot.slane %v1914, 4
          %v1917 = vor.u32 %v1916, %v1912
          %v1918 = vrot.slane %v1917, 4
          %v1920 = vshll.u32 %v1854, 16
          %v1922 = vrot.slane %v1920, 5
          %v1923 = vsel %vm1875, %v1918, %v1922
          %v1925 = vshrl.u32 %v1855, 16
          %v1927 = vrot.slane %v1925, 4
          %v1928 = vshll.u32 %v1855, 16
          %v1930 = vrot.slane %v1928, 5
          %v1931 = vor.u32 %v1927, %v1930
          %v1932 = vrot.slane %v1931, 4
          %v1934 = vshll.u32 %v1856, 16
          %v1936 = vrot.slane %v1934, 5
          %v1937 = vsel %vm1875, %v1932, %v1936
          %v1938 = vshrl.u32 %v1856, 16
          %v1940 = vrot.slane %v1938, 4
          %v1941 = vor.u32 %v1940, %v1936
          %v1942 = vrot.slane %v1941, 4
          %v1944 = vshll.u32 %v1857, 16
          %v1946 = vrot.slane %v1944, 5
          %v1947 = vsel %vm1875, %v1942, %v1946
          %v1949 = vshrl.u32 %v1858, 16
          %v1951 = vrot.slane %v1949, 4
          %v1952 = vshll.u32 %v1858, 16
          %v1954 = vrot.slane %v1952, 5
          %v1955 = vor.u32 %v1951, %v1954
          %v1956 = vrot.slane %v1955, 4
          %v1958 = vshll.u32 %v1859, 16
          %v1960 = vrot.slane %v1958, 5
          %v1961 = vsel %vm1875, %v1956, %v1960
          %v1962 = vshrl.u32 %v1859, 16
          %v1964 = vrot.slane %v1962, 4
          %v1965 = vor.u32 %v1964, %v1960
          %v1966 = vrot.slane %v1965, 4
          %v1968 = vshll.u32 %v1860, 16
          %v1970 = vrot.slane %v1968, 5
          %v1971 = vsel %vm1875, %v1966, %v1970
          %v1973 = vshrl.u32 %v1861, 16
          %v1975 = vrot.slane %v1973, 4
          %v1976 = vshll.u32 %v1861, 16
          %v1978 = vrot.slane %v1976, 5
          %v1979 = vor.u32 %v1975, %v1978
          %v1980 = vrot.slane %v1979, 4
          %v1982 = vshll.u32 %v1862, 16
          %v1984 = vrot.slane %v1982, 5
          %v1985 = vsel %vm1875, %v1980, %v1984
          %v1986 = vshrl.u32 %v1862, 16
          %v1988 = vrot.slane %v1986, 4
          %v1989 = vor.u32 %v1988, %v1984
          %v1990 = vrot.slane %v1989, 4
          %v1992 = vshll.u32 %v1863, 16
          %v1994 = vrot.slane %v1992, 5
          %v1995 = vsel %vm1875, %v1990, %v1994
          %v1997 = vshrl.u32 %v1864, 16
          %v1999 = vrot.slane %v1997, 4
          %v2000 = vshll.u32 %v1864, 16
          %v2002 = vrot.slane %v2000, 5
          %v2003 = vor.u32 %v1999, %v2002
          %v2004 = vrot.slane %v2003, 4
          %v2006 = vshll.u32 %v1865, 16
          %v2008 = vrot.slane %v2006, 5
          %v2009 = vsel %vm1875, %v2004, %v2008
          %v2010 = vshrl.u32 %v1865, 16
          %v2012 = vrot.slane %v2010, 4
          %v2013 = vor.u32 %v2012, %v2008
          %v2014 = vrot.slane %v2013, 4
          %v2016 = vshll.u32 %v1866, 16
          %v2018 = vrot.slane %v2016, 5
          %v2019 = vsel %vm1875, %v2014, %v2018
          %v2021 = vshrl.u32 %v1867, 16
          %v2023 = vrot.slane %v2021, 4
          %v2024 = vshll.u32 %v1867, 16
          %v2026 = vrot.slane %v2024, 5
          %v2027 = vor.u32 %v2023, %v2026
          %v2028 = vrot.slane %v2027, 4
          %v2030 = vshll.u32 %v1868, 16
          %v2032 = vrot.slane %v2030, 5
          %v2033 = vsel %vm1875, %v2028, %v2032
          %v2034 = vshrl.u32 %v1868, 16
          %v2036 = vrot.slane %v2034, 4
          %v2037 = vor.u32 %v2036, %v2032
          %v2038 = vrot.slane %v2037, 4
          %v2040 = vshll.u32 %v1869, 16
          %v2042 = vrot.slane %v2040, 5
          %v2043 = vsel %vm1875, %v2038, %v2042
          %v2045 = vshrl.u32 %v1870, 16
          %v2047 = vrot.slane %v2045, 4
          %v2048 = vshll.u32 %v1870, 16
          %v2050 = vrot.slane %v2048, 5
          %v2051 = vor.u32 %v2047, %v2050
          %v2052 = vrot.slane %v2051, 4
          %v2054 = vshll.u32 %v1871, 16
          %v2056 = vrot.slane %v2054, 5
          %v2057 = vsel %vm1875, %v2052, %v2056
          %v2058 = vshrl.u32 %v1871, 16
          %v2060 = vrot.slane %v2058, 4
          %v2061 = vor.u32 %v2060, %v2056
          %v2062 = vrot.slane %v2061, 4
          %v2064 = vshll.u32 %v1872, 16
          %v2066 = vrot.slane %v2064, 5
          %v2067 = vsel %vm1875, %v2062, %v2066
          %s2068 = scalar_lea.vmem %s5, 32
          %v2069 = vld [vmem:[%s2068] sm:$0xf]
          %v2070 = vld [vmem:[%s2068 + $0x4] sm:$0xf]
          %v2071 = vld [vmem:[%s2068 + $0x8] sm:$0xf]
          %v2072 = vld [vmem:[%s2068 + $0xc] sm:$0xf]
          %v2073 = vunpack.c.l.b16 %v1889
          %v2074 = vunpack.c.l.b16 %v1899
          %v2075 = vunpack.c.l.b16 %v1913
          %v2076 = vunpack.c.l.b16 %v1923
          %v2077 = vunpack.c.l.b16 %v1937
          %v2078 = vunpack.c.l.b16 %v1947
          %v2079 = vunpack.c.l.b16 %v1961
          %v2080 = vunpack.c.l.b16 %v1971
          %v2081 = vunpack.c.l.b16 %v1985
          %v2082 = vunpack.c.l.b16 %v1995
          %v2083 = vunpack.c.l.b16 %v2009
          %v2084 = vunpack.c.l.b16 %v2019
          %v2085 = vunpack.c.l.b16 %v2033
          %v2086 = vunpack.c.l.b16 %v2043
          %v2087 = vunpack.c.l.b16 %v2057
          %v2088 = vunpack.c.l.b16 %v2067
          %v2089 = vpack.c.b16 %v2074, %v2073
          %v2090 = vpack.c.b16 %v2076, %v2075
          %v2091 = vpack.c.b16 %v2078, %v2077
          %v2092 = vpack.c.b16 %v2080, %v2079
          %v2093 = vpack.c.b16 %v2082, %v2081
          %v2094 = vpack.c.b16 %v2084, %v2083
          %v2095 = vpack.c.b16 %v2086, %v2085
          %v2096 = vpack.c.b16 %v2088, %v2087
          %v2101 = vunpack.c.l.b16 %v2069
          %v2102 = vunpack.c.l.b16 %v2070
          %v2103 = vunpack.c.l.b16 %v2071
          %v2104 = vunpack.c.l.b16 %v2072
          %v2105 = vpack.c.b16 %v2102, %v2101
          %v2106 = vpack.c.b16 %v2104, %v2103
          %v2110 = vsel %vm1570, %v2089, 0
          %v2113 = vsel %vm1570, %v2090, 0
          %v2116 = vsel %vm1570, %v2091, 0
          %v2119 = vsel %vm1570, %v2092, 0
          %v2122 = vsel %vm1570, %v2093, 0
          %v2125 = vsel %vm1570, %v2094, 0
          %v2128 = vsel %vm1570, %v2095, 0
          %v2131 = vsel %vm1570, %v2096, 0
          %2133 = vmatprep.subr.bf16.mxu0 0
          %2134 = vmatpush1.bf16.msra.mxu0 %v2105
          %2135 = vmatprep.subr.bf16.mxu0 0
          %2136 = vmatpush1.bf16.msra.mxu0 %v2106
          %2137 = vmatprep.subr.bf16.mxu0 0
          %2138 = vmatpush1.bf16.msra.mxu0 0
          %2139 = vmatprep.subr.bf16.mxu0 0
          %2140 = vmatpush1.bf16.msra.mxu0 0
          %2141 = vmatprep.subr.bf16.mxu0 0
          %2142 = vmatpush1.bf16.msra.mxu0 0
          %2143 = vmatprep.subr.bf16.mxu0 0
          %2144 = vmatpush1.bf16.msra.mxu0 0
          %2145 = vmatprep.subr.bf16.mxu0 0
          %2146 = vmatpush1.bf16.msra.mxu0 0
          %2147 = vmatprep.subr.bf16.mxu0 0
          %2148 = vmatpush1.bf16.msra.mxu0 0
          %2149 = vmatprep.subr.bf16.mxu0 0
          %2150 = vmatpush1.bf16.msra.mxu0 0
          %2151 = vmatprep.subr.bf16.mxu0 0
          %2152 = vmatpush1.bf16.msra.mxu0 0
          %2153 = vmatprep.subr.bf16.mxu0 0
          %2154 = vmatpush1.bf16.msra.mxu0 0
          %2155 = vmatprep.subr.bf16.mxu0 0
          %2156 = vmatpush1.bf16.msra.mxu0 0
          %2157 = vmatprep.subr.bf16.mxu0 0
          %2158 = vmatpush1.bf16.msra.mxu0 0
          %2159 = vmatprep.subr.bf16.mxu0 0
          %2160 = vmatpush1.bf16.msra.mxu0 0
          %2161 = vmatprep.subr.bf16.mxu0 0
          %2162 = vmatpush1.bf16.msra.mxu0 0
          %2163 = vmatprep.subr.bf16.mxu0 0
          %2164 = vmatpush1.bf16.msra.mxu0 0
          %2165 = vmatprep.mubr.bf16.mxu0 0
          %2166 = vmatmul.mubr.bf16.gmra.mrb[0].mxu0 %v2110
          %v2167 = vpop.f32.mrb[0].mxu0
          %v2168 = vadd.f32 0.0, %v2167
          %v2169 = vpop.f32.mrb[0].mxu0
          %v2170 = vpop.f32.mrb[0].mxu0
          %v2171 = vadd.f32 0.0, %v2170
          %v2172 = vpop.f32.mrb[0].mxu0
          %2173 = vmatprep.mubr.bf16.mxu0 0
          %2174 = vmatmul.mubr.bf16.gmra.mrb[0].mxu0 %v2113
          %v2175 = vpop.f32.mrb[0].mxu0
          %v2176 = vadd.f32 0.0, %v2175
          %v2177 = vpop.f32.mrb[0].mxu0
          %v2178 = vpop.f32.mrb[0].mxu0
          %v2179 = vadd.f32 0.0, %v2178
          %v2180 = vpop.f32.mrb[0].mxu0
          %2181 = vmatprep.mubr.bf16.mxu0 0
          %2182 = vmatmul.mubr.bf16.gmra.mrb[0].mxu0 %v2116
          %v2183 = vpop.f32.mrb[0].mxu0
          %v2184 = vadd.f32 0.0, %v2183
          %v2185 = vpop.f32.mrb[0].mxu0
          %v2186 = vpop.f32.mrb[0].mxu0
          %v2187 = vadd.f32 0.0, %v2186
          %v2188 = vpop.f32.mrb[0].mxu0
          %2189 = vmatprep.mubr.bf16.mxu0 0
          %2190 = vmatmul.mubr.bf16.gmra.mrb[0].mxu0 %v2119
          %v2191 = vpop.f32.mrb[0].mxu0
          %v2192 = vadd.f32 0.0, %v2191
          %v2193 = vpop.f32.mrb[0].mxu0
          %v2194 = vpop.f32.mrb[0].mxu0
          %v2195 = vadd.f32 0.0, %v2194
          %v2196 = vpop.f32.mrb[0].mxu0
          %2197 = vmatprep.mubr.bf16.mxu0 0
          %2198 = vmatmul.mubr.bf16.gmra.mrb[0].mxu0 %v2122
          %v2199 = vpop.f32.mrb[0].mxu0
          %v2200 = vadd.f32 0.0, %v2199
          %v2201 = vpop.f32.mrb[0].mxu0
          %v2202 = vpop.f32.mrb[0].mxu0
          %v2203 = vadd.f32 0.0, %v2202
          %v2204 = vpop.f32.mrb[0].mxu0
          %2205 = vmatprep.mubr.bf16.mxu0 0
          %2206 = vmatmul.mubr.bf16.gmra.mrb[0].mxu0 %v2125
          %v2207 = vpop.f32.mrb[0].mxu0
          %v2208 = vadd.f32 0.0, %v2207
          %v2209 = vpop.f32.mrb[0].mxu0
          %v2210 = vpop.f32.mrb[0].mxu0
          %v2211 = vadd.f32 0.0, %v2210
          %v2212 = vpop.f32.mrb[0].mxu0
          %2213 = vmatprep.mubr.bf16.mxu0 0
          %2214 = vmatmul.mubr.bf16.gmra.mrb[0].mxu0 %v2128
          %v2215 = vpop.f32.mrb[0].mxu0
          %v2216 = vadd.f32 0.0, %v2215
          %v2217 = vpop.f32.mrb[0].mxu0
          %v2218 = vpop.f32.mrb[0].mxu0
          %v2219 = vadd.f32 0.0, %v2218
          %v2220 = vpop.f32.mrb[0].mxu0
          %2221 = vmatprep.mubr.bf16.mxu0 0
          %2222 = vmatmul.mubr.bf16.gmra.mrb[0].mxu0 %v2131
          %v2223 = vpop.f32.mrb[0].mxu0
          %v2224 = vadd.f32 0.0, %v2223
          %v2225 = vpop.f32.mrb[0].mxu0
          %v2226 = vpop.f32.mrb[0].mxu0
          %v2227 = vadd.f32 0.0, %v2226
          %v2228 = vpop.f32.mrb[0].mxu0
          %2229 = vdwg.mxu0
          %v2230 = vadd.f32 %v1787, %v2168
          %v2231 = vadd.f32 %v1790, %v2171
          %v2232 = vadd.f32 %v1795, %v2176
          %v2233 = vadd.f32 %v1798, %v2179
          %v2234 = vadd.f32 %v1803, %v2184
          %v2235 = vadd.f32 %v1806, %v2187
          %v2236 = vadd.f32 %v1811, %v2192
          %v2237 = vadd.f32 %v1814, %v2195
          %v2238 = vadd.f32 %v1819, %v2200
          %v2239 = vadd.f32 %v1822, %v2203
          %v2240 = vadd.f32 %v1827, %v2208
          %v2241 = vadd.f32 %v1830, %v2211
          %v2242 = vadd.f32 %v1835, %v2216
          %v2243 = vadd.f32 %v1838, %v2219
          %v2244 = vadd.f32 %v1843, %v2224
          %v2245 = vadd.f32 %v1846, %v2227
          %s2246 = sadd.s32 %s1302, 1
          %s2247 = smul.u32 %s2246, 5
          %s2248 = smul.addr %s2247, 4
          %s2249 = scalar_lea.vmem [#allocation3], %s2248
          %v2250 = vld [vmem:[%s2249 + $0x4] sm:$0x8]
          %v2251 = vld [vmem:[%s2249 + $0x8] sm:$0xf]
          %v2252 = vld [vmem:[%s2249 + $0xc] sm:$0xf]
          %v2253 = vld [vmem:[%s2249 + $0x18] sm:$0x8]
          %v2254 = vld [vmem:[%s2249 + $0x1c] sm:$0xf]
          %v2255 = vld [vmem:[%s2249 + $0x20] sm:$0xf]
          %v2256 = vld [vmem:[%s2249 + $0x2c] sm:$0x8]
          %v2257 = vld [vmem:[%s2249 + $0x30] sm:$0xf]
          %v2258 = vld [vmem:[%s2249 + $0x34] sm:$0xf]
          %v2259 = vld [vmem:[%s2249 + $0x40] sm:$0x8]
          %v2260 = vld [vmem:[%s2249 + $0x44] sm:$0xf]
          %v2261 = vld [vmem:[%s2249 + $0x48] sm:$0xf]
          %v2262 = vld [vmem:[%s2249 + $0x54] sm:$0x8]
          %v2263 = vld [vmem:[%s2249 + $0x58] sm:$0xf]
          %v2264 = vld [vmem:[%s2249 + $0x5c] sm:$0xf]
          %v2265 = vld [vmem:[%s2249 + $0x68] sm:$0x8]
          %v2266 = vld [vmem:[%s2249 + $0x6c] sm:$0xf]
          %v2267 = vld [vmem:[%s2249 + $0x70] sm:$0xf]
          %v2268 = vld [vmem:[%s2249 + $0x7c] sm:$0x8]
          %v2269 = vld [vmem:[%s2249 + $0x80] sm:$0xf]
          %v2270 = vld [vmem:[%s2249 + $0x84] sm:$0xf]
          %v2271 = vld [vmem:[%s2249 + $0x90] sm:$0x8]
          %v2272 = vld [vmem:[%s2249 + $0x94] sm:$0xf]
          %v2273 = vld [vmem:[%s2249 + $0x98] sm:$0xf]
          %v2275 = vshrl.u32 %v2250, 16
          %v2277 = vrot.slane %v2275, 7
          %v2278 = vrot.slane %v2277, 4
          %v2280 = vshrl.u32 %v2251, 16
          %v2282 = vrot.slane %v2280, 7
          %v2283 = vshll.u32 %v2251, 16
          %v2285 = vor.u32 %v2282, %v2283
          %v2286 = vsel %vm1332, %v2278, %v2285
          %v2287 = vrot.slane %v2282, 4
          %v2289 = vshrl.u32 %v2252, 16
          %v2291 = vrot.slane %v2289, 7
          %v2292 = vshll.u32 %v2252, 16
          %v2294 = vor.u32 %v2291, %v2292
          %v2295 = vsel %vm1332, %v2287, %v2294
          %v2297 = vshrl.u32 %v2253, 16
          %v2299 = vrot.slane %v2297, 7
          %v2300 = vrot.slane %v2299, 4
          %v2302 = vshrl.u32 %v2254, 16
          %v2304 = vrot.slane %v2302, 7
          %v2305 = vshll.u32 %v2254, 16
          %v2307 = vor.u32 %v2304, %v2305
          %v2308 = vsel %vm1332, %v2300, %v2307
          %v2309 = vrot.slane %v2304, 4
          %v2311 = vshrl.u32 %v2255, 16
          %v2313 = vrot.slane %v2311, 7
          %v2314 = vshll.u32 %v2255, 16
          %v2316 = vor.u32 %v2313, %v2314
          %v2317 = vsel %vm1332, %v2309, %v2316
          %v2319 = vshrl.u32 %v2256, 16
          %v2321 = vrot.slane %v2319, 7
          %v2322 = vrot.slane %v2321, 4
          %v2324 = vshrl.u32 %v2257, 16
          %v2326 = vrot.slane %v2324, 7
          %v2327 = vshll.u32 %v2257, 16
          %v2329 = vor.u32 %v2326, %v2327
          %v2330 = vsel %vm1332, %v2322, %v2329
          %v2331 = vrot.slane %v2326, 4
          %v2333 = vshrl.u32 %v2258, 16
          %v2335 = vrot.slane %v2333, 7
          %v2336 = vshll.u32 %v2258, 16
          %v2338 = vor.u32 %v2335, %v2336
          %v2339 = vsel %vm1332, %v2331, %v2338
          %v2341 = vshrl.u32 %v2259, 16
          %v2343 = vrot.slane %v2341, 7
          %v2344 = vrot.slane %v2343, 4
          %v2346 = vshrl.u32 %v2260, 16
          %v2348 = vrot.slane %v2346, 7
          %v2349 = vshll.u32 %v2260, 16
          %v2351 = vor.u32 %v2348, %v2349
          %v2352 = vsel %vm1332, %v2344, %v2351
          %v2353 = vrot.slane %v2348, 4
          %v2355 = vshrl.u32 %v2261, 16
          %v2357 = vrot.slane %v2355, 7
          %v2358 = vshll.u32 %v2261, 16
          %v2360 = vor.u32 %v2357, %v2358
          %v2361 = vsel %vm1332, %v2353, %v2360
          %v2363 = vshrl.u32 %v2262, 16
          %v2365 = vrot.slane %v2363, 7
          %v2366 = vrot.slane %v2365, 4
          %v2368 = vshrl.u32 %v2263, 16
          %v2370 = vrot.slane %v2368, 7
          %v2371 = vshll.u32 %v2263, 16
          %v2373 = vor.u32 %v2370, %v2371
          %v2374 = vsel %vm1332, %v2366, %v2373
          %v2375 = vrot.slane %v2370, 4
          %v2377 = vshrl.u32 %v2264, 16
          %v2379 = vrot.slane %v2377, 7
          %v2380 = vshll.u32 %v2264, 16
          %v2382 = vor.u32 %v2379, %v2380
          %v2383 = vsel %vm1332, %v2375, %v2382
          %v2385 = vshrl.u32 %v2265, 16
          %v2387 = vrot.slane %v2385, 7
          %v2388 = vrot.slane %v2387, 4
          %v2390 = vshrl.u32 %v2266, 16
          %v2392 = vrot.slane %v2390, 7
          %v2393 = vshll.u32 %v2266, 16
          %v2395 = vor.u32 %v2392, %v2393
          %v2396 = vsel %vm1332, %v2388, %v2395
          %v2397 = vrot.slane %v2392, 4
          %v2399 = vshrl.u32 %v2267, 16
          %v2401 = vrot.slane %v2399, 7
          %v2402 = vshll.u32 %v2267, 16
          %v2404 = vor.u32 %v2401, %v2402
          %v2405 = vsel %vm1332, %v2397, %v2404
          %v2407 = vshrl.u32 %v2268, 16
          %v2409 = vrot.slane %v2407, 7
          %v2410 = vrot.slane %v2409, 4
          %v2412 = vshrl.u32 %v2269, 16
          %v2414 = vrot.slane %v2412, 7
          %v2415 = vshll.u32 %v2269, 16
          %v2417 = vor.u32 %v2414, %v2415
          %v2418 = vsel %vm1332, %v2410, %v2417
          %v2419 = vrot.slane %v2414, 4
          %v2421 = vshrl.u32 %v2270, 16
          %v2423 = vrot.slane %v2421, 7
          %v2424 = vshll.u32 %v2270, 16
          %v2426 = vor.u32 %v2423, %v2424
          %v2427 = vsel %vm1332, %v2419, %v2426
          %v2429 = vshrl.u32 %v2271, 16
          %v2431 = vrot.slane %v2429, 7
          %v2432 = vrot.slane %v2431, 4
          %v2434 = vshrl.u32 %v2272, 16
          %v2436 = vrot.slane %v2434, 7
          %v2437 = vshll.u32 %v2272, 16
          %v2439 = vor.u32 %v2436, %v2437
          %v2440 = vsel %vm1332, %v2432, %v2439
          %v2441 = vrot.slane %v2436, 4
          %v2443 = vshrl.u32 %v2273, 16
          %v2445 = vrot.slane %v2443, 7
          %v2446 = vshll.u32 %v2273, 16
          %v2448 = vor.u32 %v2445, %v2446
          %v2449 = vsel %vm1332, %v2441, %v2448
          %s2450 = scalar_lea.vmem %s5, 48
          %v2451 = vld [vmem:[%s2450] sm:$0xf]
          %v2452 = vld [vmem:[%s2450 + $0x4] sm:$0xf]
          %v2453 = vld [vmem:[%s2450 + $0x8] sm:$0xf]
          %v2454 = vld [vmem:[%s2450 + $0xc] sm:$0xf]
          %v2455 = vunpack.c.l.b16 %v2286
          %v2456 = vunpack.c.l.b16 %v2295
          %v2457 = vunpack.c.l.b16 %v2308
          %v2458 = vunpack.c.l.b16 %v2317
          %v2459 = vunpack.c.l.b16 %v2330
          %v2460 = vunpack.c.l.b16 %v2339
          %v2461 = vunpack.c.l.b16 %v2352
          %v2462 = vunpack.c.l.b16 %v2361
          %v2463 = vunpack.c.l.b16 %v2374
          %v2464 = vunpack.c.l.b16 %v2383
          %v2465 = vunpack.c.l.b16 %v2396
          %v2466 = vunpack.c.l.b16 %v2405
          %v2467 = vunpack.c.l.b16 %v2418
          %v2468 = vunpack.c.l.b16 %v2427
          %v2469 = vunpack.c.l.b16 %v2440
          %v2470 = vunpack.c.l.b16 %v2449
          %v2471 = vpack.c.b16 %v2456, %v2455
          %v2472 = vpack.c.b16 %v2458, %v2457
          %v2473 = vpack.c.b16 %v2460, %v2459
          %v2474 = vpack.c.b16 %v2462, %v2461
          %v2475 = vpack.c.b16 %v2464, %v2463
          %v2476 = vpack.c.b16 %v2466, %v2465
          %v2477 = vpack.c.b16 %v2468, %v2467
          %v2478 = vpack.c.b16 %v2470, %v2469
          %v2483 = vunpack.c.l.b16 %v2451
          %v2484 = vunpack.c.l.b16 %v2452
          %v2485 = vunpack.c.l.b16 %v2453
          %v2486 = vunpack.c.l.b16 %v2454
          %v2487 = vpack.c.b16 %v2484, %v2483
          %v2488 = vpack.c.b16 %v2486, %v2485
          %v2492 = vsel %vm1570, %v2471, 0
          %v2495 = vsel %vm1570, %v2472, 0
          %v2498 = vsel %vm1570, %v2473, 0
          %v2501 = vsel %vm1570, %v2474, 0
          %v2504 = vsel %vm1570, %v2475, 0
          %v2507 = vsel %vm1570, %v2476, 0
          %v2510 = vsel %vm1570, %v2477, 0
          %v2513 = vsel %vm1570, %v2478, 0
          %2515 = vmatprep.subr.bf16.mxu0 0
          %2516 = vmatpush1.bf16.msra.mxu0 %v2487
          %2517 = vmatprep.subr.bf16.mxu0 0
          %2518 = vmatpush1.bf16.msra.mxu0 %v2488
          %2519 = vmatprep.subr.bf16.mxu0 0
          %2520 = vmatpush1.bf16.msra.mxu0 0
          %2521 = vmatprep.subr.bf16.mxu0 0
          %2522 = vmatpush1.bf16.msra.mxu0 0
          %2523 = vmatprep.subr.bf16.mxu0 0
          %2524 = vmatpush1.bf16.msra.mxu0 0
          %2525 = vmatprep.subr.bf16.mxu0 0
          %2526 = vmatpush1.bf16.msra.mxu0 0
          %2527 = vmatprep.subr.bf16.mxu0 0
          %2528 = vmatpush1.bf16.msra.mxu0 0
          %2529 = vmatprep.subr.bf16.mxu0 0
          %2530 = vmatpush1.bf16.msra.mxu0 0
          %2531 = vmatprep.subr.bf16.mxu0 0
          %2532 = vmatpush1.bf16.msra.mxu0 0
          %2533 = vmatprep.subr.bf16.mxu0 0
          %2534 = vmatpush1.bf16.msra.mxu0 0
          %2535 = vmatprep.subr.bf16.mxu0 0
          %2536 = vmatpush1.bf16.msra.mxu0 0
          %2537 = vmatprep.subr.bf16.mxu0 0
          %2538 = vmatpush1.bf16.msra.mxu0 0
          %2539 = vmatprep.subr.bf16.mxu0 0
          %2540 = vmatpush1.bf16.msra.mxu0 0
          %2541 = vmatprep.subr.bf16.mxu0 0
          %2542 = vmatpush1.bf16.msra.mxu0 0
          %2543 = vmatprep.subr.bf16.mxu0 0
          %2544 = vmatpush1.bf16.msra.mxu0 0
          %2545 = vmatprep.subr.bf16.mxu0 0
          %2546 = vmatpush1.bf16.msra.mxu0 0
          %2547 = vmatprep.mubr.bf16.mxu0 0
          %2548 = vmatmul.mubr.bf16.gmra.mrb[0].mxu0 %v2492
          %v2549 = vpop.f32.mrb[0].mxu0
          %v2550 = vadd.f32 0.0, %v2549
          %v2551 = vpop.f32.mrb[0].mxu0
          %v2552 = vpop.f32.mrb[0].mxu0
          %v2553 = vadd.f32 0.0, %v2552
          %v2554 = vpop.f32.mrb[0].mxu0
          %2555 = vmatprep.mubr.bf16.mxu0 0
          %2556 = vmatmul.mubr.bf16.gmra.mrb[0].mxu0 %v2495
          %v2557 = vpop.f32.mrb[0].mxu0
          %v2558 = vadd.f32 0.0, %v2557
          %v2559 = vpop.f32.mrb[0].mxu0
          %v2560 = vpop.f32.mrb[0].mxu0
          %v2561 = vadd.f32 0.0, %v2560
          %v2562 = vpop.f32.mrb[0].mxu0
          %2563 = vmatprep.mubr.bf16.mxu0 0
          %2564 = vmatmul.mubr.bf16.gmra.mrb[0].mxu0 %v2498
          %v2565 = vpop.f32.mrb[0].mxu0
          %v2566 = vadd.f32 0.0, %v2565
          %v2567 = vpop.f32.mrb[0].mxu0
          %v2568 = vpop.f32.mrb[0].mxu0
          %v2569 = vadd.f32 0.0, %v2568
          %v2570 = vpop.f32.mrb[0].mxu0
          %2571 = vmatprep.mubr.bf16.mxu0 0
          %2572 = vmatmul.mubr.bf16.gmra.mrb[0].mxu0 %v2501
          %v2573 = vpop.f32.mrb[0].mxu0
          %v2574 = vadd.f32 0.0, %v2573
          %v2575 = vpop.f32.mrb[0].mxu0
          %v2576 = vpop.f32.mrb[0].mxu0
          %v2577 = vadd.f32 0.0, %v2576
          %v2578 = vpop.f32.mrb[0].mxu0
          %2579 = vmatprep.mubr.bf16.mxu0 0
          %2580 = vmatmul.mubr.bf16.gmra.mrb[0].mxu0 %v2504
          %v2581 = vpop.f32.mrb[0].mxu0
          %v2582 = vadd.f32 0.0, %v2581
          %v2583 = vpop.f32.mrb[0].mxu0
          %v2584 = vpop.f32.mrb[0].mxu0
          %v2585 = vadd.f32 0.0, %v2584
          %v2586 = vpop.f32.mrb[0].mxu0
          %2587 = vmatprep.mubr.bf16.mxu0 0
          %2588 = vmatmul.mubr.bf16.gmra.mrb[0].mxu0 %v2507
          %v2589 = vpop.f32.mrb[0].mxu0
          %v2590 = vadd.f32 0.0, %v2589
          %v2591 = vpop.f32.mrb[0].mxu0
          %v2592 = vpop.f32.mrb[0].mxu0
          %v2593 = vadd.f32 0.0, %v2592
          %v2594 = vpop.f32.mrb[0].mxu0
          %2595 = vmatprep.mubr.bf16.mxu0 0
          %2596 = vmatmul.mubr.bf16.gmra.mrb[0].mxu0 %v2510
          %v2597 = vpop.f32.mrb[0].mxu0
          %v2598 = vadd.f32 0.0, %v2597
          %v2599 = vpop.f32.mrb[0].mxu0
          %v2600 = vpop.f32.mrb[0].mxu0
          %v2601 = vadd.f32 0.0, %v2600
          %v2602 = vpop.f32.mrb[0].mxu0
          %2603 = vmatprep.mubr.bf16.mxu0 0
          %2604 = vmatmul.mubr.bf16.gmra.mrb[0].mxu0 %v2513
          %v2605 = vpop.f32.mrb[0].mxu0
          %v2606 = vadd.f32 0.0, %v2605
          %v2607 = vpop.f32.mrb[0].mxu0
          %v2608 = vpop.f32.mrb[0].mxu0
          %v2609 = vadd.f32 0.0, %v2608
          %v2610 = vpop.f32.mrb[0].mxu0
          %2611 = vdwg.mxu0
          %v2612 = vadd.f32 %v2230, %v2550
          %v2613 = vadd.f32 %v2231, %v2553
          %v2614 = vadd.f32 %v2232, %v2558
          %v2615 = vadd.f32 %v2233, %v2561
          %v2616 = vadd.f32 %v2234, %v2566
          %v2617 = vadd.f32 %v2235, %v2569
          %v2618 = vadd.f32 %v2236, %v2574
          %v2619 = vadd.f32 %v2237, %v2577
          %v2620 = vadd.f32 %v2238, %v2582
          %v2621 = vadd.f32 %v2239, %v2585
          %v2622 = vadd.f32 %v2240, %v2590
          %v2623 = vadd.f32 %v2241, %v2593
          %v2624 = vadd.f32 %v2242, %v2598
          %v2625 = vadd.f32 %v2243, %v2601
          %v2626 = vadd.f32 %v2244, %v2606
          %v2627 = vadd.f32 %v2245, %v2609
          %s2628 = scalar_lea.vmem %s5, 64
          %v2629 = vld [vmem:[%s2628] sm:$0xf]
          %v2630 = vld [vmem:[%s2628 + $0x4] sm:$0xf]
          %v2631 = vld [vmem:[%s2628 + $0x8] sm:$0xf]
          %v2632 = vld [vmem:[%s2628 + $0xc] sm:$0xf]
          %v2649 = vunpack.c.l.b16 %v2251
          %v2650 = vunpack.c.l.b16 %v2252
          %v2651 = vunpack.c.l.b16 %v2254
          %v2652 = vunpack.c.l.b16 %v2255
          %v2653 = vunpack.c.l.b16 %v2257
          %v2654 = vunpack.c.l.b16 %v2258
          %v2655 = vunpack.c.l.b16 %v2260
          %v2656 = vunpack.c.l.b16 %v2261
          %v2657 = vunpack.c.l.b16 %v2263
          %v2658 = vunpack.c.l.b16 %v2264
          %v2659 = vunpack.c.l.b16 %v2266
          %v2660 = vunpack.c.l.b16 %v2267
          %v2661 = vunpack.c.l.b16 %v2269
          %v2662 = vunpack.c.l.b16 %v2270
          %v2663 = vunpack.c.l.b16 %v2272
          %v2664 = vunpack.c.l.b16 %v2273
          %v2665 = vpack.c.b16 %v2650, %v2649
          %v2666 = vpack.c.b16 %v2652, %v2651
          %v2667 = vpack.c.b16 %v2654, %v2653
          %v2668 = vpack.c.b16 %v2656, %v2655
          %v2669 = vpack.c.b16 %v2658, %v2657
          %v2670 = vpack.c.b16 %v2660, %v2659
          %v2671 = vpack.c.b16 %v2662, %v2661
          %v2672 = vpack.c.b16 %v2664, %v2663
          %v2677 = vunpack.c.l.b16 %v2629
          %v2678 = vunpack.c.l.b16 %v2630
          %v2679 = vunpack.c.l.b16 %v2631
          %v2680 = vunpack.c.l.b16 %v2632
          %v2681 = vpack.c.b16 %v2678, %v2677
          %v2682 = vpack.c.b16 %v2680, %v2679
          %v2686 = vsel %vm1570, %v2665, 0
          %v2689 = vsel %vm1570, %v2666, 0
          %v2692 = vsel %vm1570, %v2667, 0
          %v2695 = vsel %vm1570, %v2668, 0
          %v2698 = vsel %vm1570, %v2669, 0
          %v2701 = vsel %vm1570, %v2670, 0
          %v2704 = vsel %vm1570, %v2671, 0
          %v2707 = vsel %vm1570, %v2672, 0
          %2709 = vmatprep.subr.bf16.mxu0 0
          %2710 = vmatpush1.bf16.msra.mxu0 %v2681
          %2711 = vmatprep.subr.bf16.mxu0 0
          %2712 = vmatpush1.bf16.msra.mxu0 %v2682
          %2713 = vmatprep.subr.bf16.mxu0 0
          %2714 = vmatpush1.bf16.msra.mxu0 0
          %2715 = vmatprep.subr.bf16.mxu0 0
          %2716 = vmatpush1.bf16.msra.mxu0 0
          %2717 = vmatprep.subr.bf16.mxu0 0
          %2718 = vmatpush1.bf16.msra.mxu0 0
          %2719 = vmatprep.subr.bf16.mxu0 0
          %2720 = vmatpush1.bf16.msra.mxu0 0
          %2721 = vmatprep.subr.bf16.mxu0 0
          %2722 = vmatpush1.bf16.msra.mxu0 0
          %2723 = vmatprep.subr.bf16.mxu0 0
          %2724 = vmatpush1.bf16.msra.mxu0 0
          %2725 = vmatprep.subr.bf16.mxu0 0
          %2726 = vmatpush1.bf16.msra.mxu0 0
          %2727 = vmatprep.subr.bf16.mxu0 0
          %2728 = vmatpush1.bf16.msra.mxu0 0
          %2729 = vmatprep.subr.bf16.mxu0 0
          %2730 = vmatpush1.bf16.msra.mxu0 0
          %2731 = vmatprep.subr.bf16.mxu0 0
          %2732 = vmatpush1.bf16.msra.mxu0 0
          %2733 = vmatprep.subr.bf16.mxu0 0
          %2734 = vmatpush1.bf16.msra.mxu0 0
          %2735 = vmatprep.subr.bf16.mxu0 0
          %2736 = vmatpush1.bf16.msra.mxu0 0
          %2737 = vmatprep.subr.bf16.mxu0 0
          %2738 = vmatpush1.bf16.msra.mxu0 0
          %2739 = vmatprep.subr.bf16.mxu0 0
          %2740 = vmatpush1.bf16.msra.mxu0 0
          %2741 = vmatprep.mubr.bf16.mxu0 0
          %2742 = vmatmul.mubr.bf16.gmra.mrb[0].mxu0 %v2686
          %v2743 = vpop.f32.mrb[0].mxu0
          %v2744 = vadd.f32 0.0, %v2743
          %v2745 = vpop.f32.mrb[0].mxu0
          %v2746 = vpop.f32.mrb[0].mxu0
          %v2747 = vadd.f32 0.0, %v2746
          %v2748 = vpop.f32.mrb[0].mxu0
          %2749 = vmatprep.mubr.bf16.mxu0 0
          %2750 = vmatmul.mubr.bf16.gmra.mrb[0].mxu0 %v2689
          %v2751 = vpop.f32.mrb[0].mxu0
          %v2752 = vadd.f32 0.0, %v2751
          %v2753 = vpop.f32.mrb[0].mxu0
          %v2754 = vpop.f32.mrb[0].mxu0
          %v2755 = vadd.f32 0.0, %v2754
          %v2756 = vpop.f32.mrb[0].mxu0
          %2757 = vmatprep.mubr.bf16.mxu0 0
          %2758 = vmatmul.mubr.bf16.gmra.mrb[0].mxu0 %v2692
          %v2759 = vpop.f32.mrb[0].mxu0
          %v2760 = vadd.f32 0.0, %v2759
          %v2761 = vpop.f32.mrb[0].mxu0
          %v2762 = vpop.f32.mrb[0].mxu0
          %v2763 = vadd.f32 0.0, %v2762
          %v2764 = vpop.f32.mrb[0].mxu0
          %2765 = vmatprep.mubr.bf16.mxu0 0
          %2766 = vmatmul.mubr.bf16.gmra.mrb[0].mxu0 %v2695
          %v2767 = vpop.f32.mrb[0].mxu0
          %v2768 = vadd.f32 0.0, %v2767
          %v2769 = vpop.f32.mrb[0].mxu0
          %v2770 = vpop.f32.mrb[0].mxu0
          %v2771 = vadd.f32 0.0, %v2770
          %v2772 = vpop.f32.mrb[0].mxu0
          %2773 = vmatprep.mubr.bf16.mxu0 0
          %2774 = vmatmul.mubr.bf16.gmra.mrb[0].mxu0 %v2698
          %v2775 = vpop.f32.mrb[0].mxu0
          %v2776 = vadd.f32 0.0, %v2775
          %v2777 = vpop.f32.mrb[0].mxu0
          %v2778 = vpop.f32.mrb[0].mxu0
          %v2779 = vadd.f32 0.0, %v2778
          %v2780 = vpop.f32.mrb[0].mxu0
          %2781 = vmatprep.mubr.bf16.mxu0 0
          %2782 = vmatmul.mubr.bf16.gmra.mrb[0].mxu0 %v2701
          %v2783 = vpop.f32.mrb[0].mxu0
          %v2784 = vadd.f32 0.0, %v2783
          %v2785 = vpop.f32.mrb[0].mxu0
          %v2786 = vpop.f32.mrb[0].mxu0
          %v2787 = vadd.f32 0.0, %v2786
          %v2788 = vpop.f32.mrb[0].mxu0
          %2789 = vmatprep.mubr.bf16.mxu0 0
          %2790 = vmatmul.mubr.bf16.gmra.mrb[0].mxu0 %v2704
          %v2791 = vpop.f32.mrb[0].mxu0
          %v2792 = vadd.f32 0.0, %v2791
          %v2793 = vpop.f32.mrb[0].mxu0
          %v2794 = vpop.f32.mrb[0].mxu0
          %v2795 = vadd.f32 0.0, %v2794
          %v2796 = vpop.f32.mrb[0].mxu0
          %2797 = vmatprep.mubr.bf16.mxu0 0
          %2798 = vmatmul.mubr.bf16.gmra.mrb[0].mxu0 %v2707
          %v2799 = vpop.f32.mrb[0].mxu0
          %v2800 = vadd.f32 0.0, %v2799
          %v2801 = vpop.f32.mrb[0].mxu0
          %v2802 = vpop.f32.mrb[0].mxu0
          %v2803 = vadd.f32 0.0, %v2802
          %v2804 = vpop.f32.mrb[0].mxu0
          %2805 = vdwg.mxu0
          %v2806 = vadd.f32 %v2612, %v2744
          %v2807 = vadd.f32 %v2613, %v2747
          %v2808 = vadd.f32 %v2614, %v2752
          %v2809 = vadd.f32 %v2615, %v2755
          %v2810 = vadd.f32 %v2616, %v2760
          %v2811 = vadd.f32 %v2617, %v2763
          %v2812 = vadd.f32 %v2618, %v2768
          %v2813 = vadd.f32 %v2619, %v2771
          %v2814 = vadd.f32 %v2620, %v2776
          %v2815 = vadd.f32 %v2621, %v2779
          %v2816 = vadd.f32 %v2622, %v2784
          %v2817 = vadd.f32 %v2623, %v2787
          %v2818 = vadd.f32 %v2624, %v2792
          %v2819 = vadd.f32 %v2625, %v2795
          %v2820 = vadd.f32 %v2626, %v2800
          %v2821 = vadd.f32 %v2627, %v2803
          %v2822 = vld [vmem:[%s2249 + $0x8] sm:$0xf]
          %v2823 = vld [vmem:[%s2249 + $0xc] sm:$0xf]
          %v2824 = vld [vmem:[%s2249 + $0x10] sm:$0x1]
          %v2825 = vld [vmem:[%s2249 + $0x1c] sm:$0xf]
          %v2826 = vld [vmem:[%s2249 + $0x20] sm:$0xf]
          %v2827 = vld [vmem:[%s2249 + $0x24] sm:$0x1]
          %v2828 = vld [vmem:[%s2249 + $0x30] sm:$0xf]
          %v2829 = vld [vmem:[%s2249 + $0x34] sm:$0xf]
          %v2830 = vld [vmem:[%s2249 + $0x38] sm:$0x1]
          %v2831 = vld [vmem:[%s2249 + $0x44] sm:$0xf]
          %v2832 = vld [vmem:[%s2249 + $0x48] sm:$0xf]
          %v2833 = vld [vmem:[%s2249 + $0x4c] sm:$0x1]
          %v2834 = vld [vmem:[%s2249 + $0x58] sm:$0xf]
          %v2835 = vld [vmem:[%s2249 + $0x5c] sm:$0xf]
          %v2836 = vld [vmem:[%s2249 + $0x60] sm:$0x1]
          %v2837 = vld [vmem:[%s2249 + $0x6c] sm:$0xf]
          %v2838 = vld [vmem:[%s2249 + $0x70] sm:$0xf]
          %v2839 = vld [vmem:[%s2249 + $0x74] sm:$0x1]
          %v2840 = vld [vmem:[%s2249 + $0x80] sm:$0xf]
          %v2841 = vld [vmem:[%s2249 + $0x84] sm:$0xf]
          %v2842 = vld [vmem:[%s2249 + $0x88] sm:$0x1]
          %v2843 = vld [vmem:[%s2249 + $0x94] sm:$0xf]
          %v2844 = vld [vmem:[%s2249 + $0x98] sm:$0xf]
          %v2845 = vld [vmem:[%s2249 + $0x9c] sm:$0x1]
          %v2847 = vshrl.u32 %v2822, 16
          %v2849 = vrot.slane %v2847, 4
          %v2850 = vshll.u32 %v2822, 16
          %v2852 = vrot.slane %v2850, 5
          %v2853 = vor.u32 %v2849, %v2852
          %v2854 = vrot.slane %v2853, 4
          %v2856 = vshll.u32 %v2823, 16
          %v2858 = vrot.slane %v2856, 5
          %v2859 = vsel %vm1875, %v2854, %v2858
          %v2860 = vshrl.u32 %v2823, 16
          %v2862 = vrot.slane %v2860, 4
          %v2863 = vor.u32 %v2862, %v2858
          %v2864 = vrot.slane %v2863, 4
          %v2866 = vshll.u32 %v2824, 16
          %v2868 = vrot.slane %v2866, 5
          %v2869 = vsel %vm1875, %v2864, %v2868
          %v2871 = vshrl.u32 %v2825, 16
          %v2873 = vrot.slane %v2871, 4
          %v2874 = vshll.u32 %v2825, 16
          %v2876 = vrot.slane %v2874, 5
          %v2877 = vor.u32 %v2873, %v2876
          %v2878 = vrot.slane %v2877, 4
          %v2880 = vshll.u32 %v2826, 16
          %v2882 = vrot.slane %v2880, 5
          %v2883 = vsel %vm1875, %v2878, %v2882
          %v2884 = vshrl.u32 %v2826, 16
          %v2886 = vrot.slane %v2884, 4
          %v2887 = vor.u32 %v2886, %v2882
          %v2888 = vrot.slane %v2887, 4
          %v2890 = vshll.u32 %v2827, 16
          %v2892 = vrot.slane %v2890, 5
          %v2893 = vsel %vm1875, %v2888, %v2892
          %v2895 = vshrl.u32 %v2828, 16
          %v2897 = vrot.slane %v2895, 4
          %v2898 = vshll.u32 %v2828, 16
          %v2900 = vrot.slane %v2898, 5
          %v2901 = vor.u32 %v2897, %v2900
          %v2902 = vrot.slane %v2901, 4
          %v2904 = vshll.u32 %v2829, 16
          %v2906 = vrot.slane %v2904, 5
          %v2907 = vsel %vm1875, %v2902, %v2906
          %v2908 = vshrl.u32 %v2829, 16
          %v2910 = vrot.slane %v2908, 4
          %v2911 = vor.u32 %v2910, %v2906
          %v2912 = vrot.slane %v2911, 4
          %v2914 = vshll.u32 %v2830, 16
          %v2916 = vrot.slane %v2914, 5
          %v2917 = vsel %vm1875, %v2912, %v2916
          %v2919 = vshrl.u32 %v2831, 16
          %v2921 = vrot.slane %v2919, 4
          %v2922 = vshll.u32 %v2831, 16
          %v2924 = vrot.slane %v2922, 5
          %v2925 = vor.u32 %v2921, %v2924
          %v2926 = vrot.slane %v2925, 4
          %v2928 = vshll.u32 %v2832, 16
          %v2930 = vrot.slane %v2928, 5
          %v2931 = vsel %vm1875, %v2926, %v2930
          %v2932 = vshrl.u32 %v2832, 16
          %v2934 = vrot.slane %v2932, 4
          %v2935 = vor.u32 %v2934, %v2930
          %v2936 = vrot.slane %v2935, 4
          %v2938 = vshll.u32 %v2833, 16
          %v2940 = vrot.slane %v2938, 5
          %v2941 = vsel %vm1875, %v2936, %v2940
          %v2943 = vshrl.u32 %v2834, 16
          %v2945 = vrot.slane %v2943, 4
          %v2946 = vshll.u32 %v2834, 16
          %v2948 = vrot.slane %v2946, 5
          %v2949 = vor.u32 %v2945, %v2948
          %v2950 = vrot.slane %v2949, 4
          %v2952 = vshll.u32 %v2835, 16
          %v2954 = vrot.slane %v2952, 5
          %v2955 = vsel %vm1875, %v2950, %v2954
          %v2956 = vshrl.u32 %v2835, 16
          %v2958 = vrot.slane %v2956, 4
          %v2959 = vor.u32 %v2958, %v2954
          %v2960 = vrot.slane %v2959, 4
          %v2962 = vshll.u32 %v2836, 16
          %v2964 = vrot.slane %v2962, 5
          %v2965 = vsel %vm1875, %v2960, %v2964
          %v2967 = vshrl.u32 %v2837, 16
          %v2969 = vrot.slane %v2967, 4
          %v2970 = vshll.u32 %v2837, 16
          %v2972 = vrot.slane %v2970, 5
          %v2973 = vor.u32 %v2969, %v2972
          %v2974 = vrot.slane %v2973, 4
          %v2976 = vshll.u32 %v2838, 16
          %v2978 = vrot.slane %v2976, 5
          %v2979 = vsel %vm1875, %v2974, %v2978
          %v2980 = vshrl.u32 %v2838, 16
          %v2982 = vrot.slane %v2980, 4
          %v2983 = vor.u32 %v2982, %v2978
          %v2984 = vrot.slane %v2983, 4
          %v2986 = vshll.u32 %v2839, 16
          %v2988 = vrot.slane %v2986, 5
          %v2989 = vsel %vm1875, %v2984, %v2988
          %v2991 = vshrl.u32 %v2840, 16
          %v2993 = vrot.slane %v2991, 4
          %v2994 = vshll.u32 %v2840, 16
          %v2996 = vrot.slane %v2994, 5
          %v2997 = vor.u32 %v2993, %v2996
          %v2998 = vrot.slane %v2997, 4
          %v3000 = vshll.u32 %v2841, 16
          %v3002 = vrot.slane %v3000, 5
          %v3003 = vsel %vm1875, %v2998, %v3002
          %v3004 = vshrl.u32 %v2841, 16
          %v3006 = vrot.slane %v3004, 4
          %v3007 = vor.u32 %v3006, %v3002
          %v3008 = vrot.slane %v3007, 4
          %v3010 = vshll.u32 %v2842, 16
          %v3012 = vrot.slane %v3010, 5
          %v3013 = vsel %vm1875, %v3008, %v3012
          %v3015 = vshrl.u32 %v2843, 16
          %v3017 = vrot.slane %v3015, 4
          %v3018 = vshll.u32 %v2843, 16
          %v3020 = vrot.slane %v3018, 5
          %v3021 = vor.u32 %v3017, %v3020
          %v3022 = vrot.slane %v3021, 4
          %v3024 = vshll.u32 %v2844, 16
          %v3026 = vrot.slane %v3024, 5
          %v3027 = vsel %vm1875, %v3022, %v3026
          %v3028 = vshrl.u32 %v2844, 16
          %v3030 = vrot.slane %v3028, 4
          %v3031 = vor.u32 %v3030, %v3026
          %v3032 = vrot.slane %v3031, 4
          %v3034 = vshll.u32 %v2845, 16
          %v3036 = vrot.slane %v3034, 5
          %v3037 = vsel %vm1875, %v3032, %v3036
          %s3038 = scalar_lea.vmem %s5, 80
          %v3039 = vld [vmem:[%s3038] sm:$0xf]
          %v3040 = vld [vmem:[%s3038 + $0x4] sm:$0xf]
          %v3041 = vld [vmem:[%s3038 + $0x8] sm:$0xf]
          %v3042 = vld [vmem:[%s3038 + $0xc] sm:$0xf]
          %v3043 = vunpack.c.l.b16 %v2859
          %v3044 = vunpack.c.l.b16 %v2869
          %v3045 = vunpack.c.l.b16 %v2883
          %v3046 = vunpack.c.l.b16 %v2893
          %v3047 = vunpack.c.l.b16 %v2907
          %v3048 = vunpack.c.l.b16 %v2917
          %v3049 = vunpack.c.l.b16 %v2931
          %v3050 = vunpack.c.l.b16 %v2941
          %v3051 = vunpack.c.l.b16 %v2955
          %v3052 = vunpack.c.l.b16 %v2965
          %v3053 = vunpack.c.l.b16 %v2979
          %v3054 = vunpack.c.l.b16 %v2989
          %v3055 = vunpack.c.l.b16 %v3003
          %v3056 = vunpack.c.l.b16 %v3013
          %v3057 = vunpack.c.l.b16 %v3027
          %v3058 = vunpack.c.l.b16 %v3037
          %v3059 = vpack.c.b16 %v3044, %v3043
          %v3060 = vpack.c.b16 %v3046, %v3045
          %v3061 = vpack.c.b16 %v3048, %v3047
          %v3062 = vpack.c.b16 %v3050, %v3049
          %v3063 = vpack.c.b16 %v3052, %v3051
          %v3064 = vpack.c.b16 %v3054, %v3053
          %v3065 = vpack.c.b16 %v3056, %v3055
          %v3066 = vpack.c.b16 %v3058, %v3057
          %v3071 = vunpack.c.l.b16 %v3039
          %v3072 = vunpack.c.l.b16 %v3040
          %v3073 = vunpack.c.l.b16 %v3041
          %v3074 = vunpack.c.l.b16 %v3042
          %v3075 = vpack.c.b16 %v3072, %v3071
          %v3076 = vpack.c.b16 %v3074, %v3073
          %v3080 = vsel %vm1570, %v3059, 0
          %v3083 = vsel %vm1570, %v3060, 0
          %v3086 = vsel %vm1570, %v3061, 0
          %v3089 = vsel %vm1570, %v3062, 0
          %v3092 = vsel %vm1570, %v3063, 0
          %v3095 = vsel %vm1570, %v3064, 0
          %v3098 = vsel %vm1570, %v3065, 0
          %v3101 = vsel %vm1570, %v3066, 0
          %3103 = vmatprep.subr.bf16.mxu0 0
          %3104 = vmatpush1.bf16.msra.mxu0 %v3075
          %3105 = vmatprep.subr.bf16.mxu0 0
          %3106 = vmatpush1.bf16.msra.mxu0 %v3076
          %3107 = vmatprep.subr.bf16.mxu0 0
          %3108 = vmatpush1.bf16.msra.mxu0 0
          %3109 = vmatprep.subr.bf16.mxu0 0
          %3110 = vmatpush1.bf16.msra.mxu0 0
          %3111 = vmatprep.subr.bf16.mxu0 0
          %3112 = vmatpush1.bf16.msra.mxu0 0
          %3113 = vmatprep.subr.bf16.mxu0 0
          %3114 = vmatpush1.bf16.msra.mxu0 0
          %3115 = vmatprep.subr.bf16.mxu0 0
          %3116 = vmatpush1.bf16.msra.mxu0 0
          %3117 = vmatprep.subr.bf16.mxu0 0
          %3118 = vmatpush1.bf16.msra.mxu0 0
          %3119 = vmatprep.subr.bf16.mxu0 0
          %3120 = vmatpush1.bf16.msra.mxu0 0
          %3121 = vmatprep.subr.bf16.mxu0 0
          %3122 = vmatpush1.bf16.msra.mxu0 0
          %3123 = vmatprep.subr.bf16.mxu0 0
          %3124 = vmatpush1.bf16.msra.mxu0 0
          %3125 = vmatprep.subr.bf16.mxu0 0
          %3126 = vmatpush1.bf16.msra.mxu0 0
          %3127 = vmatprep.subr.bf16.mxu0 0
          %3128 = vmatpush1.bf16.msra.mxu0 0
          %3129 = vmatprep.subr.bf16.mxu0 0
          %3130 = vmatpush1.bf16.msra.mxu0 0
          %3131 = vmatprep.subr.bf16.mxu0 0
          %3132 = vmatpush1.bf16.msra.mxu0 0
          %3133 = vmatprep.subr.bf16.mxu0 0
          %3134 = vmatpush1.bf16.msra.mxu0 0
          %3135 = vmatprep.mubr.bf16.mxu0 0
          %3136 = vmatmul.mubr.bf16.gmra.mrb[0].mxu0 %v3080
          %v3137 = vpop.f32.mrb[0].mxu0
          %v3138 = vadd.f32 0.0, %v3137
          %v3139 = vpop.f32.mrb[0].mxu0
          %v3140 = vpop.f32.mrb[0].mxu0
          %v3141 = vadd.f32 0.0, %v3140
          %v3142 = vpop.f32.mrb[0].mxu0
          %3143 = vmatprep.mubr.bf16.mxu0 0
          %3144 = vmatmul.mubr.bf16.gmra.mrb[0].mxu0 %v3083
          %v3145 = vpop.f32.mrb[0].mxu0
          %v3146 = vadd.f32 0.0, %v3145
          %v3147 = vpop.f32.mrb[0].mxu0
          %v3148 = vpop.f32.mrb[0].mxu0
          %v3149 = vadd.f32 0.0, %v3148
          %v3150 = vpop.f32.mrb[0].mxu0
          %3151 = vmatprep.mubr.bf16.mxu0 0
          %3152 = vmatmul.mubr.bf16.gmra.mrb[0].mxu0 %v3086
          %v3153 = vpop.f32.mrb[0].mxu0
          %v3154 = vadd.f32 0.0, %v3153
          %v3155 = vpop.f32.mrb[0].mxu0
          %v3156 = vpop.f32.mrb[0].mxu0
          %v3157 = vadd.f32 0.0, %v3156
          %v3158 = vpop.f32.mrb[0].mxu0
          %3159 = vmatprep.mubr.bf16.mxu0 0
          %3160 = vmatmul.mubr.bf16.gmra.mrb[0].mxu0 %v3089
          %v3161 = vpop.f32.mrb[0].mxu0
          %v3162 = vadd.f32 0.0, %v3161
          %v3163 = vpop.f32.mrb[0].mxu0
          %v3164 = vpop.f32.mrb[0].mxu0
          %v3165 = vadd.f32 0.0, %v3164
          %v3166 = vpop.f32.mrb[0].mxu0
          %3167 = vmatprep.mubr.bf16.mxu0 0
          %3168 = vmatmul.mubr.bf16.gmra.mrb[0].mxu0 %v3092
          %v3169 = vpop.f32.mrb[0].mxu0
          %v3170 = vadd.f32 0.0, %v3169
          %v3171 = vpop.f32.mrb[0].mxu0
          %v3172 = vpop.f32.mrb[0].mxu0
          %v3173 = vadd.f32 0.0, %v3172
          %v3174 = vpop.f32.mrb[0].mxu0
          %3175 = vmatprep.mubr.bf16.mxu0 0
          %3176 = vmatmul.mubr.bf16.gmra.mrb[0].mxu0 %v3095
          %v3177 = vpop.f32.mrb[0].mxu0
          %v3178 = vadd.f32 0.0, %v3177
          %v3179 = vpop.f32.mrb[0].mxu0
          %v3180 = vpop.f32.mrb[0].mxu0
          %v3181 = vadd.f32 0.0, %v3180
          %v3182 = vpop.f32.mrb[0].mxu0
          %3183 = vmatprep.mubr.bf16.mxu0 0
          %3184 = vmatmul.mubr.bf16.gmra.mrb[0].mxu0 %v3098
          %v3185 = vpop.f32.mrb[0].mxu0
          %v3186 = vadd.f32 0.0, %v3185
          %v3187 = vpop.f32.mrb[0].mxu0
          %v3188 = vpop.f32.mrb[0].mxu0
          %v3189 = vadd.f32 0.0, %v3188
          %v3190 = vpop.f32.mrb[0].mxu0
          %3191 = vmatprep.mubr.bf16.mxu0 0
          %3192 = vmatmul.mubr.bf16.gmra.mrb[0].mxu0 %v3101
          %v3193 = vpop.f32.mrb[0].mxu0
          %v3194 = vadd.f32 0.0, %v3193
          %v3195 = vpop.f32.mrb[0].mxu0
          %v3196 = vpop.f32.mrb[0].mxu0
          %v3197 = vadd.f32 0.0, %v3196
          %v3198 = vpop.f32.mrb[0].mxu0
          %3199 = vdwg.mxu0
          %v3200 = vadd.f32 %v2806, %v3138
          %v3201 = vadd.f32 %v2807, %v3141
          %v3202 = vadd.f32 %v2808, %v3146
          %v3203 = vadd.f32 %v2809, %v3149
          %v3204 = vadd.f32 %v2810, %v3154
          %v3205 = vadd.f32 %v2811, %v3157
          %v3206 = vadd.f32 %v2812, %v3162
          %v3207 = vadd.f32 %v2813, %v3165
          %v3208 = vadd.f32 %v2814, %v3170
          %v3209 = vadd.f32 %v2815, %v3173
          %v3210 = vadd.f32 %v2816, %v3178
          %v3211 = vadd.f32 %v2817, %v3181
          %v3212 = vadd.f32 %v2818, %v3186
          %v3213 = vadd.f32 %v2819, %v3189
          %v3214 = vadd.f32 %v2820, %v3194
          %v3215 = vadd.f32 %v2821, %v3197
          %s3216 = sadd.s32 %s1302, 2
          %s3217 = smul.u32 %s3216, 5
          %s3218 = smul.addr %s3217, 4
          %s3219 = scalar_lea.vmem [#allocation3], %s3218
          %v3220 = vld [vmem:[%s3219 + $0x4] sm:$0x8]
          %v3221 = vld [vmem:[%s3219 + $0x8] sm:$0xf]
          %v3222 = vld [vmem:[%s3219 + $0xc] sm:$0xf]
          %v3223 = vld [vmem:[%s3219 + $0x18] sm:$0x8]
          %v3224 = vld [vmem:[%s3219 + $0x1c] sm:$0xf]
          %v3225 = vld [vmem:[%s3219 + $0x20] sm:$0xf]
          %v3226 = vld [vmem:[%s3219 + $0x2c] sm:$0x8]
          %v3227 = vld [vmem:[%s3219 + $0x30] sm:$0xf]
          %v3228 = vld [vmem:[%s3219 + $0x34] sm:$0xf]
          %v3229 = vld [vmem:[%s3219 + $0x40] sm:$0x8]
          %v3230 = vld [vmem:[%s3219 + $0x44] sm:$0xf]
          %v3231 = vld [vmem:[%s3219 + $0x48] sm:$0xf]
          %v3232 = vld [vmem:[%s3219 + $0x54] sm:$0x8]
          %v3233 = vld [vmem:[%s3219 + $0x58] sm:$0xf]
          %v3234 = vld [vmem:[%s3219 + $0x5c] sm:$0xf]
          %v3235 = vld [vmem:[%s3219 + $0x68] sm:$0x8]
          %v3236 = vld [vmem:[%s3219 + $0x6c] sm:$0xf]
          %v3237 = vld [vmem:[%s3219 + $0x70] sm:$0xf]
          %v3238 = vld [vmem:[%s3219 + $0x7c] sm:$0x8]
          %v3239 = vld [vmem:[%s3219 + $0x80] sm:$0xf]
          %v3240 = vld [vmem:[%s3219 + $0x84] sm:$0xf]
          %v3241 = vld [vmem:[%s3219 + $0x90] sm:$0x8]
          %v3242 = vld [vmem:[%s3219 + $0x94] sm:$0xf]
          %v3243 = vld [vmem:[%s3219 + $0x98] sm:$0xf]
          %v3245 = vshrl.u32 %v3220, 16
          %v3247 = vrot.slane %v3245, 7
          %v3248 = vrot.slane %v3247, 4
          %v3250 = vshrl.u32 %v3221, 16
          %v3252 = vrot.slane %v3250, 7
          %v3253 = vshll.u32 %v3221, 16
          %v3255 = vor.u32 %v3252, %v3253
          %v3256 = vsel %vm1332, %v3248, %v3255
          %v3257 = vrot.slane %v3252, 4
          %v3259 = vshrl.u32 %v3222, 16
          %v3261 = vrot.slane %v3259, 7
          %v3262 = vshll.u32 %v3222, 16
          %v3264 = vor.u32 %v3261, %v3262
          %v3265 = vsel %vm1332, %v3257, %v3264
          %v3267 = vshrl.u32 %v3223, 16
          %v3269 = vrot.slane %v3267, 7
          %v3270 = vrot.slane %v3269, 4
          %v3272 = vshrl.u32 %v3224, 16
          %v3274 = vrot.slane %v3272, 7
          %v3275 = vshll.u32 %v3224, 16
          %v3277 = vor.u32 %v3274, %v3275
          %v3278 = vsel %vm1332, %v3270, %v3277
          %v3279 = vrot.slane %v3274, 4
          %v3281 = vshrl.u32 %v3225, 16
          %v3283 = vrot.slane %v3281, 7
          %v3284 = vshll.u32 %v3225, 16
          %v3286 = vor.u32 %v3283, %v3284
          %v3287 = vsel %vm1332, %v3279, %v3286
          %v3289 = vshrl.u32 %v3226, 16
          %v3291 = vrot.slane %v3289, 7
          %v3292 = vrot.slane %v3291, 4
          %v3294 = vshrl.u32 %v3227, 16
          %v3296 = vrot.slane %v3294, 7
          %v3297 = vshll.u32 %v3227, 16
          %v3299 = vor.u32 %v3296, %v3297
          %v3300 = vsel %vm1332, %v3292, %v3299
          %v3301 = vrot.slane %v3296, 4
          %v3303 = vshrl.u32 %v3228, 16
          %v3305 = vrot.slane %v3303, 7
          %v3306 = vshll.u32 %v3228, 16
          %v3308 = vor.u32 %v3305, %v3306
          %v3309 = vsel %vm1332, %v3301, %v3308
          %v3311 = vshrl.u32 %v3229, 16
          %v3313 = vrot.slane %v3311, 7
          %v3314 = vrot.slane %v3313, 4
          %v3316 = vshrl.u32 %v3230, 16
          %v3318 = vrot.slane %v3316, 7
          %v3319 = vshll.u32 %v3230, 16
          %v3321 = vor.u32 %v3318, %v3319
          %v3322 = vsel %vm1332, %v3314, %v3321
          %v3323 = vrot.slane %v3318, 4
          %v3325 = vshrl.u32 %v3231, 16
          %v3327 = vrot.slane %v3325, 7
          %v3328 = vshll.u32 %v3231, 16
          %v3330 = vor.u32 %v3327, %v3328
          %v3331 = vsel %vm1332, %v3323, %v3330
          %v3333 = vshrl.u32 %v3232, 16
          %v3335 = vrot.slane %v3333, 7
          %v3336 = vrot.slane %v3335, 4
          %v3338 = vshrl.u32 %v3233, 16
          %v3340 = vrot.slane %v3338, 7
          %v3341 = vshll.u32 %v3233, 16
          %v3343 = vor.u32 %v3340, %v3341
          %v3344 = vsel %vm1332, %v3336, %v3343
          %v3345 = vrot.slane %v3340, 4
          %v3347 = vshrl.u32 %v3234, 16
          %v3349 = vrot.slane %v3347, 7
          %v3350 = vshll.u32 %v3234, 16
          %v3352 = vor.u32 %v3349, %v3350
          %v3353 = vsel %vm1332, %v3345, %v3352
          %v3355 = vshrl.u32 %v3235, 16
          %v3357 = vrot.slane %v3355, 7
          %v3358 = vrot.slane %v3357, 4
          %v3360 = vshrl.u32 %v3236, 16
          %v3362 = vrot.slane %v3360, 7
          %v3363 = vshll.u32 %v3236, 16
          %v3365 = vor.u32 %v3362, %v3363
          %v3366 = vsel %vm1332, %v3358, %v3365
          %v3367 = vrot.slane %v3362, 4
          %v3369 = vshrl.u32 %v3237, 16
          %v3371 = vrot.slane %v3369, 7
          %v3372 = vshll.u32 %v3237, 16
          %v3374 = vor.u32 %v3371, %v3372
          %v3375 = vsel %vm1332, %v3367, %v3374
          %v3377 = vshrl.u32 %v3238, 16
          %v3379 = vrot.slane %v3377, 7
          %v3380 = vrot.slane %v3379, 4
          %v3382 = vshrl.u32 %v3239, 16
          %v3384 = vrot.slane %v3382, 7
          %v3385 = vshll.u32 %v3239, 16
          %v3387 = vor.u32 %v3384, %v3385
          %v3388 = vsel %vm1332, %v3380, %v3387
          %v3389 = vrot.slane %v3384, 4
          %v3391 = vshrl.u32 %v3240, 16
          %v3393 = vrot.slane %v3391, 7
          %v3394 = vshll.u32 %v3240, 16
          %v3396 = vor.u32 %v3393, %v3394
          %v3397 = vsel %vm1332, %v3389, %v3396
          %v3399 = vshrl.u32 %v3241, 16
          %v3401 = vrot.slane %v3399, 7
          %v3402 = vrot.slane %v3401, 4
          %v3404 = vshrl.u32 %v3242, 16
          %v3406 = vrot.slane %v3404, 7
          %v3407 = vshll.u32 %v3242, 16
          %v3409 = vor.u32 %v3406, %v3407
          %v3410 = vsel %vm1332, %v3402, %v3409
          %v3411 = vrot.slane %v3406, 4
          %v3413 = vshrl.u32 %v3243, 16
          %v3415 = vrot.slane %v3413, 7
          %v3416 = vshll.u32 %v3243, 16
          %v3418 = vor.u32 %v3415, %v3416
          %v3419 = vsel %vm1332, %v3411, %v3418
          %s3420 = scalar_lea.vmem %s5, 96
          %v3421 = vld [vmem:[%s3420] sm:$0xf]
          %v3422 = vld [vmem:[%s3420 + $0x4] sm:$0xf]
          %v3423 = vld [vmem:[%s3420 + $0x8] sm:$0xf]
          %v3424 = vld [vmem:[%s3420 + $0xc] sm:$0xf]
          %v3425 = vunpack.c.l.b16 %v3256
          %v3426 = vunpack.c.l.b16 %v3265
          %v3427 = vunpack.c.l.b16 %v3278
          %v3428 = vunpack.c.l.b16 %v3287
          %v3429 = vunpack.c.l.b16 %v3300
          %v3430 = vunpack.c.l.b16 %v3309
          %v3431 = vunpack.c.l.b16 %v3322
          %v3432 = vunpack.c.l.b16 %v3331
          %v3433 = vunpack.c.l.b16 %v3344
          %v3434 = vunpack.c.l.b16 %v3353
          %v3435 = vunpack.c.l.b16 %v3366
          %v3436 = vunpack.c.l.b16 %v3375
          %v3437 = vunpack.c.l.b16 %v3388
          %v3438 = vunpack.c.l.b16 %v3397
          %v3439 = vunpack.c.l.b16 %v3410
          %v3440 = vunpack.c.l.b16 %v3419
          %v3441 = vpack.c.b16 %v3426, %v3425
          %v3442 = vpack.c.b16 %v3428, %v3427
          %v3443 = vpack.c.b16 %v3430, %v3429
          %v3444 = vpack.c.b16 %v3432, %v3431
          %v3445 = vpack.c.b16 %v3434, %v3433
          %v3446 = vpack.c.b16 %v3436, %v3435
          %v3447 = vpack.c.b16 %v3438, %v3437
          %v3448 = vpack.c.b16 %v3440, %v3439
          %v3453 = vunpack.c.l.b16 %v3421
          %v3454 = vunpack.c.l.b16 %v3422
          %v3455 = vunpack.c.l.b16 %v3423
          %v3456 = vunpack.c.l.b16 %v3424
          %v3457 = vpack.c.b16 %v3454, %v3453
          %v3458 = vpack.c.b16 %v3456, %v3455
          %v3462 = vsel %vm1570, %v3441, 0
          %v3465 = vsel %vm1570, %v3442, 0
          %v3468 = vsel %vm1570, %v3443, 0
          %v3471 = vsel %vm1570, %v3444, 0
          %v3474 = vsel %vm1570, %v3445, 0
          %v3477 = vsel %vm1570, %v3446, 0
          %v3480 = vsel %vm1570, %v3447, 0
          %v3483 = vsel %vm1570, %v3448, 0
          %3485 = vmatprep.subr.bf16.mxu0 0
          %3486 = vmatpush1.bf16.msra.mxu0 %v3457
          %3487 = vmatprep.subr.bf16.mxu0 0
          %3488 = vmatpush1.bf16.msra.mxu0 %v3458
          %3489 = vmatprep.subr.bf16.mxu0 0
          %3490 = vmatpush1.bf16.msra.mxu0 0
          %3491 = vmatprep.subr.bf16.mxu0 0
          %3492 = vmatpush1.bf16.msra.mxu0 0
          %3493 = vmatprep.subr.bf16.mxu0 0
          %3494 = vmatpush1.bf16.msra.mxu0 0
          %3495 = vmatprep.subr.bf16.mxu0 0
          %3496 = vmatpush1.bf16.msra.mxu0 0
          %3497 = vmatprep.subr.bf16.mxu0 0
          %3498 = vmatpush1.bf16.msra.mxu0 0
          %3499 = vmatprep.subr.bf16.mxu0 0
          %3500 = vmatpush1.bf16.msra.mxu0 0
          %3501 = vmatprep.subr.bf16.mxu0 0
          %3502 = vmatpush1.bf16.msra.mxu0 0
          %3503 = vmatprep.subr.bf16.mxu0 0
          %3504 = vmatpush1.bf16.msra.mxu0 0
          %3505 = vmatprep.subr.bf16.mxu0 0
          %3506 = vmatpush1.bf16.msra.mxu0 0
          %3507 = vmatprep.subr.bf16.mxu0 0
          %3508 = vmatpush1.bf16.msra.mxu0 0
          %3509 = vmatprep.subr.bf16.mxu0 0
          %3510 = vmatpush1.bf16.msra.mxu0 0
          %3511 = vmatprep.subr.bf16.mxu0 0
          %3512 = vmatpush1.bf16.msra.mxu0 0
          %3513 = vmatprep.subr.bf16.mxu0 0
          %3514 = vmatpush1.bf16.msra.mxu0 0
          %3515 = vmatprep.subr.bf16.mxu0 0
          %3516 = vmatpush1.bf16.msra.mxu0 0
          %3517 = vmatprep.mubr.bf16.mxu0 0
          %3518 = vmatmul.mubr.bf16.gmra.mrb[0].mxu0 %v3462
          %v3519 = vpop.f32.mrb[0].mxu0
          %v3520 = vadd.f32 0.0, %v3519
          %v3521 = vpop.f32.mrb[0].mxu0
          %v3522 = vpop.f32.mrb[0].mxu0
          %v3523 = vadd.f32 0.0, %v3522
          %v3524 = vpop.f32.mrb[0].mxu0
          %3525 = vmatprep.mubr.bf16.mxu0 0
          %3526 = vmatmul.mubr.bf16.gmra.mrb[0].mxu0 %v3465
          %v3527 = vpop.f32.mrb[0].mxu0
          %v3528 = vadd.f32 0.0, %v3527
          %v3529 = vpop.f32.mrb[0].mxu0
          %v3530 = vpop.f32.mrb[0].mxu0
          %v3531 = vadd.f32 0.0, %v3530
          %v3532 = vpop.f32.mrb[0].mxu0
          %3533 = vmatprep.mubr.bf16.mxu0 0
          %3534 = vmatmul.mubr.bf16.gmra.mrb[0].mxu0 %v3468
          %v3535 = vpop.f32.mrb[0].mxu0
          %v3536 = vadd.f32 0.0, %v3535
          %v3537 = vpop.f32.mrb[0].mxu0
          %v3538 = vpop.f32.mrb[0].mxu0
          %v3539 = vadd.f32 0.0, %v3538
          %v3540 = vpop.f32.mrb[0].mxu0
          %3541 = vmatprep.mubr.bf16.mxu0 0
          %3542 = vmatmul.mubr.bf16.gmra.mrb[0].mxu0 %v3471
          %v3543 = vpop.f32.mrb[0].mxu0
          %v3544 = vadd.f32 0.0, %v3543
          %v3545 = vpop.f32.mrb[0].mxu0
          %v3546 = vpop.f32.mrb[0].mxu0
          %v3547 = vadd.f32 0.0, %v3546
          %v3548 = vpop.f32.mrb[0].mxu0
          %3549 = vmatprep.mubr.bf16.mxu0 0
          %3550 = vmatmul.mubr.bf16.gmra.mrb[0].mxu0 %v3474
          %v3551 = vpop.f32.mrb[0].mxu0
          %v3552 = vadd.f32 0.0, %v3551
          %v3553 = vpop.f32.mrb[0].mxu0
          %v3554 = vpop.f32.mrb[0].mxu0
          %v3555 = vadd.f32 0.0, %v3554
          %v3556 = vpop.f32.mrb[0].mxu0
          %3557 = vmatprep.mubr.bf16.mxu0 0
          %3558 = vmatmul.mubr.bf16.gmra.mrb[0].mxu0 %v3477
          %v3559 = vpop.f32.mrb[0].mxu0
          %v3560 = vadd.f32 0.0, %v3559
          %v3561 = vpop.f32.mrb[0].mxu0
          %v3562 = vpop.f32.mrb[0].mxu0
          %v3563 = vadd.f32 0.0, %v3562
          %v3564 = vpop.f32.mrb[0].mxu0
          %3565 = vmatprep.mubr.bf16.mxu0 0
          %3566 = vmatmul.mubr.bf16.gmra.mrb[0].mxu0 %v3480
          %v3567 = vpop.f32.mrb[0].mxu0
          %v3568 = vadd.f32 0.0, %v3567
          %v3569 = vpop.f32.mrb[0].mxu0
          %v3570 = vpop.f32.mrb[0].mxu0
          %v3571 = vadd.f32 0.0, %v3570
          %v3572 = vpop.f32.mrb[0].mxu0
          %3573 = vmatprep.mubr.bf16.mxu0 0
          %3574 = vmatmul.mubr.bf16.gmra.mrb[0].mxu0 %v3483
          %v3575 = vpop.f32.mrb[0].mxu0
          %v3576 = vadd.f32 0.0, %v3575
          %v3577 = vpop.f32.mrb[0].mxu0
          %v3578 = vpop.f32.mrb[0].mxu0
          %v3579 = vadd.f32 0.0, %v3578
          %v3580 = vpop.f32.mrb[0].mxu0
          %3581 = vdwg.mxu0
          %v3582 = vadd.f32 %v3200, %v3520
          %v3583 = vadd.f32 %v3201, %v3523
          %v3584 = vadd.f32 %v3202, %v3528
          %v3585 = vadd.f32 %v3203, %v3531
          %v3586 = vadd.f32 %v3204, %v3536
          %v3587 = vadd.f32 %v3205, %v3539
          %v3588 = vadd.f32 %v3206, %v3544
          %v3589 = vadd.f32 %v3207, %v3547
          %v3590 = vadd.f32 %v3208, %v3552
          %v3591 = vadd.f32 %v3209, %v3555
          %v3592 = vadd.f32 %v3210, %v3560
          %v3593 = vadd.f32 %v3211, %v3563
          %v3594 = vadd.f32 %v3212, %v3568
          %v3595 = vadd.f32 %v3213, %v3571
          %v3596 = vadd.f32 %v3214, %v3576
          %v3597 = vadd.f32 %v3215, %v3579
          %s3598 = scalar_lea.vmem %s5, 112
          %v3599 = vld [vmem:[%s3598] sm:$0xf]
          %v3600 = vld [vmem:[%s3598 + $0x4] sm:$0xf]
          %v3601 = vld [vmem:[%s3598 + $0x8] sm:$0xf]
          %v3602 = vld [vmem:[%s3598 + $0xc] sm:$0xf]
          %v3619 = vunpack.c.l.b16 %v3221
          %v3620 = vunpack.c.l.b16 %v3222
          %v3621 = vunpack.c.l.b16 %v3224
          %v3622 = vunpack.c.l.b16 %v3225
          %v3623 = vunpack.c.l.b16 %v3227
          %v3624 = vunpack.c.l.b16 %v3228
          %v3625 = vunpack.c.l.b16 %v3230
          %v3626 = vunpack.c.l.b16 %v3231
          %v3627 = vunpack.c.l.b16 %v3233
          %v3628 = vunpack.c.l.b16 %v3234
          %v3629 = vunpack.c.l.b16 %v3236
          %v3630 = vunpack.c.l.b16 %v3237
          %v3631 = vunpack.c.l.b16 %v3239
          %v3632 = vunpack.c.l.b16 %v3240
          %v3633 = vunpack.c.l.b16 %v3242
          %v3634 = vunpack.c.l.b16 %v3243
          %v3635 = vpack.c.b16 %v3620, %v3619
          %v3636 = vpack.c.b16 %v3622, %v3621
          %v3637 = vpack.c.b16 %v3624, %v3623
          %v3638 = vpack.c.b16 %v3626, %v3625
          %v3639 = vpack.c.b16 %v3628, %v3627
          %v3640 = vpack.c.b16 %v3630, %v3629
          %v3641 = vpack.c.b16 %v3632, %v3631
          %v3642 = vpack.c.b16 %v3634, %v3633
          %v3647 = vunpack.c.l.b16 %v3599
          %v3648 = vunpack.c.l.b16 %v3600
          %v3649 = vunpack.c.l.b16 %v3601
          %v3650 = vunpack.c.l.b16 %v3602
          %v3651 = vpack.c.b16 %v3648, %v3647
          %v3652 = vpack.c.b16 %v3650, %v3649
          %v3656 = vsel %vm1570, %v3635, 0
          %v3659 = vsel %vm1570, %v3636, 0
          %v3662 = vsel %vm1570, %v3637, 0
          %v3665 = vsel %vm1570, %v3638, 0
          %v3668 = vsel %vm1570, %v3639, 0
          %v3671 = vsel %vm1570, %v3640, 0
          %v3674 = vsel %vm1570, %v3641, 0
          %v3677 = vsel %vm1570, %v3642, 0
          %3679 = vmatprep.subr.bf16.mxu0 0
          %3680 = vmatpush1.bf16.msra.mxu0 %v3651
          %3681 = vmatprep.subr.bf16.mxu0 0
          %3682 = vmatpush1.bf16.msra.mxu0 %v3652
          %3683 = vmatprep.subr.bf16.mxu0 0
          %3684 = vmatpush1.bf16.msra.mxu0 0
          %3685 = vmatprep.subr.bf16.mxu0 0
          %3686 = vmatpush1.bf16.msra.mxu0 0
          %3687 = vmatprep.subr.bf16.mxu0 0
          %3688 = vmatpush1.bf16.msra.mxu0 0
          %3689 = vmatprep.subr.bf16.mxu0 0
          %3690 = vmatpush1.bf16.msra.mxu0 0
          %3691 = vmatprep.subr.bf16.mxu0 0
          %3692 = vmatpush1.bf16.msra.mxu0 0
          %3693 = vmatprep.subr.bf16.mxu0 0
          %3694 = vmatpush1.bf16.msra.mxu0 0
          %3695 = vmatprep.subr.bf16.mxu0 0
          %3696 = vmatpush1.bf16.msra.mxu0 0
          %3697 = vmatprep.subr.bf16.mxu0 0
          %3698 = vmatpush1.bf16.msra.mxu0 0
          %3699 = vmatprep.subr.bf16.mxu0 0
          %3700 = vmatpush1.bf16.msra.mxu0 0
          %3701 = vmatprep.subr.bf16.mxu0 0
          %3702 = vmatpush1.bf16.msra.mxu0 0
          %3703 = vmatprep.subr.bf16.mxu0 0
          %3704 = vmatpush1.bf16.msra.mxu0 0
          %3705 = vmatprep.subr.bf16.mxu0 0
          %3706 = vmatpush1.bf16.msra.mxu0 0
          %3707 = vmatprep.subr.bf16.mxu0 0
          %3708 = vmatpush1.bf16.msra.mxu0 0
          %3709 = vmatprep.subr.bf16.mxu0 0
          %3710 = vmatpush1.bf16.msra.mxu0 0
          %3711 = vmatprep.mubr.bf16.mxu0 0
          %3712 = vmatmul.mubr.bf16.gmra.mrb[0].mxu0 %v3656
          %v3713 = vpop.f32.mrb[0].mxu0
          %v3714 = vadd.f32 0.0, %v3713
          %v3715 = vpop.f32.mrb[0].mxu0
          %v3716 = vpop.f32.mrb[0].mxu0
          %v3717 = vadd.f32 0.0, %v3716
          %v3718 = vpop.f32.mrb[0].mxu0
          %3719 = vmatprep.mubr.bf16.mxu0 0
          %3720 = vmatmul.mubr.bf16.gmra.mrb[0].mxu0 %v3659
          %v3721 = vpop.f32.mrb[0].mxu0
          %v3722 = vadd.f32 0.0, %v3721
          %v3723 = vpop.f32.mrb[0].mxu0
          %v3724 = vpop.f32.mrb[0].mxu0
          %v3725 = vadd.f32 0.0, %v3724
          %v3726 = vpop.f32.mrb[0].mxu0
          %3727 = vmatprep.mubr.bf16.mxu0 0
          %3728 = vmatmul.mubr.bf16.gmra.mrb[0].mxu0 %v3662
          %v3729 = vpop.f32.mrb[0].mxu0
          %v3730 = vadd.f32 0.0, %v3729
          %v3731 = vpop.f32.mrb[0].mxu0
          %v3732 = vpop.f32.mrb[0].mxu0
          %v3733 = vadd.f32 0.0, %v3732
          %v3734 = vpop.f32.mrb[0].mxu0
          %3735 = vmatprep.mubr.bf16.mxu0 0
          %3736 = vmatmul.mubr.bf16.gmra.mrb[0].mxu0 %v3665
          %v3737 = vpop.f32.mrb[0].mxu0
          %v3738 = vadd.f32 0.0, %v3737
          %v3739 = vpop.f32.mrb[0].mxu0
          %v3740 = vpop.f32.mrb[0].mxu0
          %v3741 = vadd.f32 0.0, %v3740
          %v3742 = vpop.f32.mrb[0].mxu0
          %3743 = vmatprep.mubr.bf16.mxu0 0
          %3744 = vmatmul.mubr.bf16.gmra.mrb[0].mxu0 %v3668
          %v3745 = vpop.f32.mrb[0].mxu0
          %v3746 = vadd.f32 0.0, %v3745
          %v3747 = vpop.f32.mrb[0].mxu0
          %v3748 = vpop.f32.mrb[0].mxu0
          %v3749 = vadd.f32 0.0, %v3748
          %v3750 = vpop.f32.mrb[0].mxu0
          %3751 = vmatprep.mubr.bf16.mxu0 0
          %3752 = vmatmul.mubr.bf16.gmra.mrb[0].mxu0 %v3671
          %v3753 = vpop.f32.mrb[0].mxu0
          %v3754 = vadd.f32 0.0, %v3753
          %v3755 = vpop.f32.mrb[0].mxu0
          %v3756 = vpop.f32.mrb[0].mxu0
          %v3757 = vadd.f32 0.0, %v3756
          %v3758 = vpop.f32.mrb[0].mxu0
          %3759 = vmatprep.mubr.bf16.mxu0 0
          %3760 = vmatmul.mubr.bf16.gmra.mrb[0].mxu0 %v3674
          %v3761 = vpop.f32.mrb[0].mxu0
          %v3762 = vadd.f32 0.0, %v3761
          %v3763 = vpop.f32.mrb[0].mxu0
          %v3764 = vpop.f32.mrb[0].mxu0
          %v3765 = vadd.f32 0.0, %v3764
          %v3766 = vpop.f32.mrb[0].mxu0
          %3767 = vmatprep.mubr.bf16.mxu0 0
          %3768 = vmatmul.mubr.bf16.gmra.mrb[0].mxu0 %v3677
          %v3769 = vpop.f32.mrb[0].mxu0
          %v3770 = vadd.f32 0.0, %v3769
          %v3771 = vpop.f32.mrb[0].mxu0
          %v3772 = vpop.f32.mrb[0].mxu0
          %v3773 = vadd.f32 0.0, %v3772
          %v3774 = vpop.f32.mrb[0].mxu0
          %3775 = vdwg.mxu0
          %v3776 = vadd.f32 %v3582, %v3714
          %v3777 = vadd.f32 %v3583, %v3717
          %v3778 = vadd.f32 %v3584, %v3722
          %v3779 = vadd.f32 %v3585, %v3725
          %v3780 = vadd.f32 %v3586, %v3730
          %v3781 = vadd.f32 %v3587, %v3733
          %v3782 = vadd.f32 %v3588, %v3738
          %v3783 = vadd.f32 %v3589, %v3741
          %v3784 = vadd.f32 %v3590, %v3746
          %v3785 = vadd.f32 %v3591, %v3749
          %v3786 = vadd.f32 %v3592, %v3754
          %v3787 = vadd.f32 %v3593, %v3757
          %v3788 = vadd.f32 %v3594, %v3762
          %v3789 = vadd.f32 %v3595, %v3765
          %v3790 = vadd.f32 %v3596, %v3770
          %v3791 = vadd.f32 %v3597, %v3773
          %v3792 = vld [vmem:[%s3219 + $0x8] sm:$0xf]
          %v3793 = vld [vmem:[%s3219 + $0xc] sm:$0xf]
          %v3794 = vld [vmem:[%s3219 + $0x10] sm:$0x1]
          %v3795 = vld [vmem:[%s3219 + $0x1c] sm:$0xf]
          %v3796 = vld [vmem:[%s3219 + $0x20] sm:$0xf]
          %v3797 = vld [vmem:[%s3219 + $0x24] sm:$0x1]
          %v3798 = vld [vmem:[%s3219 + $0x30] sm:$0xf]
          %v3799 = vld [vmem:[%s3219 + $0x34] sm:$0xf]
          %v3800 = vld [vmem:[%s3219 + $0x38] sm:$0x1]
          %v3801 = vld [vmem:[%s3219 + $0x44] sm:$0xf]
          %v3802 = vld [vmem:[%s3219 + $0x48] sm:$0xf]
          %v3803 = vld [vmem:[%s3219 + $0x4c] sm:$0x1]
          %v3804 = vld [vmem:[%s3219 + $0x58] sm:$0xf]
          %v3805 = vld [vmem:[%s3219 + $0x5c] sm:$0xf]
          %v3806 = vld [vmem:[%s3219 + $0x60] sm:$0x1]
          %v3807 = vld [vmem:[%s3219 + $0x6c] sm:$0xf]
          %v3808 = vld [vmem:[%s3219 + $0x70] sm:$0xf]
          %v3809 = vld [vmem:[%s3219 + $0x74] sm:$0x1]
          %v3810 = vld [vmem:[%s3219 + $0x80] sm:$0xf]
          %v3811 = vld [vmem:[%s3219 + $0x84] sm:$0xf]
          %v3812 = vld [vmem:[%s3219 + $0x88] sm:$0x1]
          %v3813 = vld [vmem:[%s3219 + $0x94] sm:$0xf]
          %v3814 = vld [vmem:[%s3219 + $0x98] sm:$0xf]
          %v3815 = vld [vmem:[%s3219 + $0x9c] sm:$0x1]
          %v3817 = vshrl.u32 %v3792, 16
          %v3819 = vrot.slane %v3817, 4
          %v3820 = vshll.u32 %v3792, 16
          %v3822 = vrot.slane %v3820, 5
          %v3823 = vor.u32 %v3819, %v3822
          %v3824 = vrot.slane %v3823, 4
          %v3826 = vshll.u32 %v3793, 16
          %v3828 = vrot.slane %v3826, 5
          %v3829 = vsel %vm1875, %v3824, %v3828
          %v3830 = vshrl.u32 %v3793, 16
          %v3832 = vrot.slane %v3830, 4
          %v3833 = vor.u32 %v3832, %v3828
          %v3834 = vrot.slane %v3833, 4
          %v3836 = vshll.u32 %v3794, 16
          %v3838 = vrot.slane %v3836, 5
          %v3839 = vsel %vm1875, %v3834, %v3838
          %v3841 = vshrl.u32 %v3795, 16
          %v3843 = vrot.slane %v3841, 4
          %v3844 = vshll.u32 %v3795, 16
          %v3846 = vrot.slane %v3844, 5
          %v3847 = vor.u32 %v3843, %v3846
          %v3848 = vrot.slane %v3847, 4
          %v3850 = vshll.u32 %v3796, 16
          %v3852 = vrot.slane %v3850, 5
          %v3853 = vsel %vm1875, %v3848, %v3852
          %v3854 = vshrl.u32 %v3796, 16
          %v3856 = vrot.slane %v3854, 4
          %v3857 = vor.u32 %v3856, %v3852
          %v3858 = vrot.slane %v3857, 4
          %v3860 = vshll.u32 %v3797, 16
          %v3862 = vrot.slane %v3860, 5
          %v3863 = vsel %vm1875, %v3858, %v3862
          %v3865 = vshrl.u32 %v3798, 16
          %v3867 = vrot.slane %v3865, 4
          %v3868 = vshll.u32 %v3798, 16
          %v3870 = vrot.slane %v3868, 5
          %v3871 = vor.u32 %v3867, %v3870
          %v3872 = vrot.slane %v3871, 4
          %v3874 = vshll.u32 %v3799, 16
          %v3876 = vrot.slane %v3874, 5
          %v3877 = vsel %vm1875, %v3872, %v3876
          %v3878 = vshrl.u32 %v3799, 16
          %v3880 = vrot.slane %v3878, 4
          %v3881 = vor.u32 %v3880, %v3876
          %v3882 = vrot.slane %v3881, 4
          %v3884 = vshll.u32 %v3800, 16
          %v3886 = vrot.slane %v3884, 5
          %v3887 = vsel %vm1875, %v3882, %v3886
          %v3889 = vshrl.u32 %v3801, 16
          %v3891 = vrot.slane %v3889, 4
          %v3892 = vshll.u32 %v3801, 16
          %v3894 = vrot.slane %v3892, 5
          %v3895 = vor.u32 %v3891, %v3894
          %v3896 = vrot.slane %v3895, 4
          %v3898 = vshll.u32 %v3802, 16
          %v3900 = vrot.slane %v3898, 5
          %v3901 = vsel %vm1875, %v3896, %v3900
          %v3902 = vshrl.u32 %v3802, 16
          %v3904 = vrot.slane %v3902, 4
          %v3905 = vor.u32 %v3904, %v3900
          %v3906 = vrot.slane %v3905, 4
          %v3908 = vshll.u32 %v3803, 16
          %v3910 = vrot.slane %v3908, 5
          %v3911 = vsel %vm1875, %v3906, %v3910
          %v3913 = vshrl.u32 %v3804, 16
          %v3915 = vrot.slane %v3913, 4
          %v3916 = vshll.u32 %v3804, 16
          %v3918 = vrot.slane %v3916, 5
          %v3919 = vor.u32 %v3915, %v3918
          %v3920 = vrot.slane %v3919, 4
          %v3922 = vshll.u32 %v3805, 16
          %v3924 = vrot.slane %v3922, 5
          %v3925 = vsel %vm1875, %v3920, %v3924
          %v3926 = vshrl.u32 %v3805, 16
          %v3928 = vrot.slane %v3926, 4
          %v3929 = vor.u32 %v3928, %v3924
          %v3930 = vrot.slane %v3929, 4
          %v3932 = vshll.u32 %v3806, 16
          %v3934 = vrot.slane %v3932, 5
          %v3935 = vsel %vm1875, %v3930, %v3934
          %v3937 = vshrl.u32 %v3807, 16
          %v3939 = vrot.slane %v3937, 4
          %v3940 = vshll.u32 %v3807, 16
          %v3942 = vrot.slane %v3940, 5
          %v3943 = vor.u32 %v3939, %v3942
          %v3944 = vrot.slane %v3943, 4
          %v3946 = vshll.u32 %v3808, 16
          %v3948 = vrot.slane %v3946, 5
          %v3949 = vsel %vm1875, %v3944, %v3948
          %v3950 = vshrl.u32 %v3808, 16
          %v3952 = vrot.slane %v3950, 4
          %v3953 = vor.u32 %v3952, %v3948
          %v3954 = vrot.slane %v3953, 4
          %v3956 = vshll.u32 %v3809, 16
          %v3958 = vrot.slane %v3956, 5
          %v3959 = vsel %vm1875, %v3954, %v3958
          %v3961 = vshrl.u32 %v3810, 16
          %v3963 = vrot.slane %v3961, 4
          %v3964 = vshll.u32 %v3810, 16
          %v3966 = vrot.slane %v3964, 5
          %v3967 = vor.u32 %v3963, %v3966
          %v3968 = vrot.slane %v3967, 4
          %v3970 = vshll.u32 %v3811, 16
          %v3972 = vrot.slane %v3970, 5
          %v3973 = vsel %vm1875, %v3968, %v3972
          %v3974 = vshrl.u32 %v3811, 16
          %v3976 = vrot.slane %v3974, 4
          %v3977 = vor.u32 %v3976, %v3972
          %v3978 = vrot.slane %v3977, 4
          %v3980 = vshll.u32 %v3812, 16
          %v3982 = vrot.slane %v3980, 5
          %v3983 = vsel %vm1875, %v3978, %v3982
          %v3985 = vshrl.u32 %v3813, 16
          %v3987 = vrot.slane %v3985, 4
          %v3988 = vshll.u32 %v3813, 16
          %v3990 = vrot.slane %v3988, 5
          %v3991 = vor.u32 %v3987, %v3990
          %v3992 = vrot.slane %v3991, 4
          %v3994 = vshll.u32 %v3814, 16
          %v3996 = vrot.slane %v3994, 5
          %v3997 = vsel %vm1875, %v3992, %v3996
          %v3998 = vshrl.u32 %v3814, 16
          %v4000 = vrot.slane %v3998, 4
          %v4001 = vor.u32 %v4000, %v3996
          %v4002 = vrot.slane %v4001, 4
          %v4004 = vshll.u32 %v3815, 16
          %v4006 = vrot.slane %v4004, 5
          %v4007 = vsel %vm1875, %v4002, %v4006
          %s4008 = scalar_lea.vmem %s5, 128
          %v4009 = vld [vmem:[%s4008] sm:$0xf]
          %v4010 = vld [vmem:[%s4008 + $0x4] sm:$0xf]
          %v4011 = vld [vmem:[%s4008 + $0x8] sm:$0xf]
          %v4012 = vld [vmem:[%s4008 + $0xc] sm:$0xf]
          %v4013 = vunpack.c.l.b16 %v3829
          %v4014 = vunpack.c.l.b16 %v3839
          %v4015 = vunpack.c.l.b16 %v3853
          %v4016 = vunpack.c.l.b16 %v3863
          %v4017 = vunpack.c.l.b16 %v3877
          %v4018 = vunpack.c.l.b16 %v3887
          %v4019 = vunpack.c.l.b16 %v3901
          %v4020 = vunpack.c.l.b16 %v3911
          %v4021 = vunpack.c.l.b16 %v3925
          %v4022 = vunpack.c.l.b16 %v3935
          %v4023 = vunpack.c.l.b16 %v3949
          %v4024 = vunpack.c.l.b16 %v3959
          %v4025 = vunpack.c.l.b16 %v3973
          %v4026 = vunpack.c.l.b16 %v3983
          %v4027 = vunpack.c.l.b16 %v3997
          %v4028 = vunpack.c.l.b16 %v4007
          %v4029 = vpack.c.b16 %v4014, %v4013
          %v4030 = vpack.c.b16 %v4016, %v4015
          %v4031 = vpack.c.b16 %v4018, %v4017
          %v4032 = vpack.c.b16 %v4020, %v4019
          %v4033 = vpack.c.b16 %v4022, %v4021
          %v4034 = vpack.c.b16 %v4024, %v4023
          %v4035 = vpack.c.b16 %v4026, %v4025
          %v4036 = vpack.c.b16 %v4028, %v4027
          %v4041 = vunpack.c.l.b16 %v4009
          %v4042 = vunpack.c.l.b16 %v4010
          %v4043 = vunpack.c.l.b16 %v4011
          %v4044 = vunpack.c.l.b16 %v4012
          %v4045 = vpack.c.b16 %v4042, %v4041
          %v4046 = vpack.c.b16 %v4044, %v4043
          %v4050 = vsel %vm1570, %v4029, 0
          %v4053 = vsel %vm1570, %v4030, 0
          %v4056 = vsel %vm1570, %v4031, 0
          %v4059 = vsel %vm1570, %v4032, 0
          %v4062 = vsel %vm1570, %v4033, 0
          %v4065 = vsel %vm1570, %v4034, 0
          %v4068 = vsel %vm1570, %v4035, 0
          %v4071 = vsel %vm1570, %v4036, 0
          %4073 = vmatprep.subr.bf16.mxu0 0
          %4074 = vmatpush1.bf16.msra.mxu0 %v4045
          %4075 = vmatprep.subr.bf16.mxu0 0
          %4076 = vmatpush1.bf16.msra.mxu0 %v4046
          %4077 = vmatprep.subr.bf16.mxu0 0
          %4078 = vmatpush1.bf16.msra.mxu0 0
          %4079 = vmatprep.subr.bf16.mxu0 0
          %4080 = vmatpush1.bf16.msra.mxu0 0
          %4081 = vmatprep.subr.bf16.mxu0 0
          %4082 = vmatpush1.bf16.msra.mxu0 0
          %4083 = vmatprep.subr.bf16.mxu0 0
          %4084 = vmatpush1.bf16.msra.mxu0 0
          %4085 = vmatprep.subr.bf16.mxu0 0
          %4086 = vmatpush1.bf16.msra.mxu0 0
          %4087 = vmatprep.subr.bf16.mxu0 0
          %4088 = vmatpush1.bf16.msra.mxu0 0
          %4089 = vmatprep.subr.bf16.mxu0 0
          %4090 = vmatpush1.bf16.msra.mxu0 0
          %4091 = vmatprep.subr.bf16.mxu0 0
          %4092 = vmatpush1.bf16.msra.mxu0 0
          %4093 = vmatprep.subr.bf16.mxu0 0
          %4094 = vmatpush1.bf16.msra.mxu0 0
          %4095 = vmatprep.subr.bf16.mxu0 0
          %4096 = vmatpush1.bf16.msra.mxu0 0
          %4097 = vmatprep.subr.bf16.mxu0 0
          %4098 = vmatpush1.bf16.msra.mxu0 0
          %4099 = vmatprep.subr.bf16.mxu0 0
          %4100 = vmatpush1.bf16.msra.mxu0 0
          %4101 = vmatprep.subr.bf16.mxu0 0
          %4102 = vmatpush1.bf16.msra.mxu0 0
          %4103 = vmatprep.subr.bf16.mxu0 0
          %4104 = vmatpush1.bf16.msra.mxu0 0
          %4105 = vmatprep.mubr.bf16.mxu0 0
          %4106 = vmatmul.mubr.bf16.gmra.mrb[0].mxu0 %v4050
          %v4107 = vpop.f32.mrb[0].mxu0
          %v4108 = vadd.f32 0.0, %v4107
          %v4109 = vpop.f32.mrb[0].mxu0
          %v4110 = vpop.f32.mrb[0].mxu0
          %v4111 = vadd.f32 0.0, %v4110
          %v4112 = vpop.f32.mrb[0].mxu0
          %4113 = vmatprep.mubr.bf16.mxu0 0
          %4114 = vmatmul.mubr.bf16.gmra.mrb[0].mxu0 %v4053
          %v4115 = vpop.f32.mrb[0].mxu0
          %v4116 = vadd.f32 0.0, %v4115
          %v4117 = vpop.f32.mrb[0].mxu0
          %v4118 = vpop.f32.mrb[0].mxu0
          %v4119 = vadd.f32 0.0, %v4118
          %v4120 = vpop.f32.mrb[0].mxu0
          %4121 = vmatprep.mubr.bf16.mxu0 0
          %4122 = vmatmul.mubr.bf16.gmra.mrb[0].mxu0 %v4056
          %v4123 = vpop.f32.mrb[0].mxu0
          %v4124 = vadd.f32 0.0, %v4123
          %v4125 = vpop.f32.mrb[0].mxu0
          %v4126 = vpop.f32.mrb[0].mxu0
          %v4127 = vadd.f32 0.0, %v4126
          %v4128 = vpop.f32.mrb[0].mxu0
          %4129 = vmatprep.mubr.bf16.mxu0 0
          %4130 = vmatmul.mubr.bf16.gmra.mrb[0].mxu0 %v4059
          %v4131 = vpop.f32.mrb[0].mxu0
          %v4132 = vadd.f32 0.0, %v4131
          %v4133 = vpop.f32.mrb[0].mxu0
          %v4134 = vpop.f32.mrb[0].mxu0
          %v4135 = vadd.f32 0.0, %v4134
          %v4136 = vpop.f32.mrb[0].mxu0
          %4137 = vmatprep.mubr.bf16.mxu0 0
          %4138 = vmatmul.mubr.bf16.gmra.mrb[0].mxu0 %v4062
          %v4139 = vpop.f32.mrb[0].mxu0
          %v4140 = vadd.f32 0.0, %v4139
          %v4141 = vpop.f32.mrb[0].mxu0
          %v4142 = vpop.f32.mrb[0].mxu0
          %v4143 = vadd.f32 0.0, %v4142
          %v4144 = vpop.f32.mrb[0].mxu0
          %4145 = vmatprep.mubr.bf16.mxu0 0
          %4146 = vmatmul.mubr.bf16.gmra.mrb[0].mxu0 %v4065
          %v4147 = vpop.f32.mrb[0].mxu0
          %v4148 = vadd.f32 0.0, %v4147
          %v4149 = vpop.f32.mrb[0].mxu0
          %v4150 = vpop.f32.mrb[0].mxu0
          %v4151 = vadd.f32 0.0, %v4150
          %v4152 = vpop.f32.mrb[0].mxu0
          %4153 = vmatprep.mubr.bf16.mxu0 0
          %4154 = vmatmul.mubr.bf16.gmra.mrb[0].mxu0 %v4068
          %v4155 = vpop.f32.mrb[0].mxu0
          %v4156 = vadd.f32 0.0, %v4155
          %v4157 = vpop.f32.mrb[0].mxu0
          %v4158 = vpop.f32.mrb[0].mxu0
          %v4159 = vadd.f32 0.0, %v4158
          %v4160 = vpop.f32.mrb[0].mxu0
          %4161 = vmatprep.mubr.bf16.mxu0 0
          %4162 = vmatmul.mubr.bf16.gmra.mrb[0].mxu0 %v4071
          %v4163 = vpop.f32.mrb[0].mxu0
          %v4164 = vadd.f32 0.0, %v4163
          %v4165 = vpop.f32.mrb[0].mxu0
          %v4166 = vpop.f32.mrb[0].mxu0
          %v4167 = vadd.f32 0.0, %v4166
          %v4168 = vpop.f32.mrb[0].mxu0
          %4169 = vdwg.mxu0
          %v4170 = vadd.f32 %v3776, %v4108
          %v4171 = vadd.f32 %v3777, %v4111
          %v4172 = vadd.f32 %v3778, %v4116
          %v4173 = vadd.f32 %v3779, %v4119
          %v4174 = vadd.f32 %v3780, %v4124
          %v4175 = vadd.f32 %v3781, %v4127
          %v4176 = vadd.f32 %v3782, %v4132
          %v4177 = vadd.f32 %v3783, %v4135
          %v4178 = vadd.f32 %v3784, %v4140
          %v4179 = vadd.f32 %v3785, %v4143
          %v4180 = vadd.f32 %v3786, %v4148
          %v4181 = vadd.f32 %v3787, %v4151
          %v4182 = vadd.f32 %v3788, %v4156
          %v4183 = vadd.f32 %v3789, %v4159
          %v4184 = vadd.f32 %v3790, %v4164
          %v4185 = vadd.f32 %v3791, %v4167
          %v4186 = vld [vmem:[%s6] sm:$0x1]
          %v4188 = vlaneseq
          %v4189 = vshrl.u32 %v4188, 7
          %v4190 = vsub.s32 0, %v4189
          %v4191 = vrot.slane %v4186, %v4190
          %v4193 = vadd.f32 %v4170, %v4191
          %v4194 = vadd.f32 %v4171, %v4191
          %v4195 = vadd.f32 %v4172, %v4191
          %v4196 = vadd.f32 %v4173, %v4191
          %v4197 = vadd.f32 %v4174, %v4191
          %v4198 = vadd.f32 %v4175, %v4191
          %v4199 = vadd.f32 %v4176, %v4191
          %v4200 = vadd.f32 %v4177, %v4191
          %v4201 = vadd.f32 %v4178, %v4191
          %v4202 = vadd.f32 %v4179, %v4191
          %v4203 = vadd.f32 %v4180, %v4191
          %v4204 = vadd.f32 %v4181, %v4191
          %v4205 = vadd.f32 %v4182, %v4191
          %v4206 = vadd.f32 %v4183, %v4191
          %v4207 = vadd.f32 %v4184, %v4191
          %v4208 = vadd.f32 %v4185, %v4191
          %v4209 = vmax.f32 %v4193, 0.0
          %v4210 = vmax.f32 %v4194, 0.0
          %v4211 = vmax.f32 %v4195, 0.0
          %v4212 = vmax.f32 %v4196, 0.0
          %v4213 = vmax.f32 %v4197, 0.0
          %v4214 = vmax.f32 %v4198, 0.0
          %v4215 = vmax.f32 %v4199, 0.0
          %v4216 = vmax.f32 %v4200, 0.0
          %v4217 = vmax.f32 %v4201, 0.0
          %v4218 = vmax.f32 %v4202, 0.0
          %v4219 = vmax.f32 %v4203, 0.0
          %v4220 = vmax.f32 %v4204, 0.0
          %v4221 = vmax.f32 %v4205, 0.0
          %v4222 = vmax.f32 %v4206, 0.0
          %v4223 = vmax.f32 %v4207, 0.0
          %v4224 = vmax.f32 %v4208, 0.0
          %v4225 = vmax.f32 %v4209, %v4211
          %v4226 = vmax.f32 %v4210, %v4212
          %v4227 = vmax.f32 %v4213, %v4215
          %v4228 = vmax.f32 %v4214, %v4216
          %v4229 = vmax.f32 %v4217, %v4219
          %v4230 = vmax.f32 %v4218, %v4220
          %v4231 = vmax.f32 %v4221, %v4223
          %v4232 = vmax.f32 %v4222, %v4224
          %s4233 = smul.u32 %s1297, 64
          %s4234 = scalar_lea.vmem [#allocation4], %s4233
          %4235 = vst.msk [vmem:[%s4234] sm:$0xff] %vm638, %v4225
          %4236 = vst.msk [vmem:[%s4234 + $0x8] sm:$0xff] %vm638, %v4226
          %4237 = vst.msk [vmem:[%s4234 + $0x10] sm:$0xff] %vm638, %v4227
          %4238 = vst.msk [vmem:[%s4234 + $0x18] sm:$0xff] %vm638, %v4228
          %4239 = vst.msk [vmem:[%s4234 + $0x20] sm:$0xff] %vm638, %v4229
          %4240 = vst.msk [vmem:[%s4234 + $0x28] sm:$0xff] %vm638, %v4230
          %4241 = vst.msk [vmem:[%s4234 + $0x30] sm:$0xff] %vm638, %v4231
          %4242 = vst.msk [vmem:[%s4234 + $0x38] sm:$0xff] %vm638, %v4232
        $region100: #{convnet_forward.1} parent=87 // loop_footer
          %s1301 = sadd.s32 1, %s1297
        $region101: #{convnet_forward.1} parent=87 // loop_footer_branch
          %1296 = sbr.rel target = $region97
        $region102: #{convnet_forward.1} parent=87 // loop_exit
          _
        %v4243 = vld [vmem:[#allocation4] ss:$2 sm:$0xff]
        %s4244 = scalar_lea.vmem [#allocation4], 16
        %v4245 = vld [vmem:[%s4244] ss:$2 sm:$0xff]
        %s4246 = scalar_lea.vmem [#allocation4], 32
        %v4247 = vld [vmem:[%s4246] ss:$2 sm:$0xff]
        %s4248 = scalar_lea.vmem [#allocation4], 48
        %v4249 = vld [vmem:[%s4248] ss:$2 sm:$0xff]
        %s4250 = scalar_lea.vmem [#allocation4], 64
        %v4251 = vld [vmem:[%s4250] ss:$2 sm:$0xff]
        %s4252 = scalar_lea.vmem [#allocation4], 80
        %v4253 = vld [vmem:[%s4252] ss:$2 sm:$0xff]
        %s4254 = scalar_lea.vmem [#allocation4], 96
        %v4255 = vld [vmem:[%s4254] ss:$2 sm:$0xff]
        %s4256 = scalar_lea.vmem [#allocation4], 112
        %v4257 = vld [vmem:[%s4256] ss:$2 sm:$0xff]
        %s4258 = scalar_lea.vmem [#allocation4], 1
        %v4259 = vld [vmem:[%s4258] ss:$2 sm:$0xff]
        %s4260 = scalar_lea.vmem [#allocation4], 17
        %v4261 = vld [vmem:[%s4260] ss:$2 sm:$0xff]
        %s4262 = scalar_lea.vmem [#allocation4], 33
        %v4263 = vld [vmem:[%s4262] ss:$2 sm:$0xff]
        %s4264 = scalar_lea.vmem [#allocation4], 49
        %v4265 = vld [vmem:[%s4264] ss:$2 sm:$0xff]
        %s4266 = scalar_lea.vmem [#allocation4], 65
        %v4267 = vld [vmem:[%s4266] ss:$2 sm:$0xff]
        %s4268 = scalar_lea.vmem [#allocation4], 81
        %v4269 = vld [vmem:[%s4268] ss:$2 sm:$0xff]
        %s4270 = scalar_lea.vmem [#allocation4], 97
        %v4271 = vld [vmem:[%s4270] ss:$2 sm:$0xff]
        %s4272 = scalar_lea.vmem [#allocation4], 113
        %v4273 = vld [vmem:[%s4272] ss:$2 sm:$0xff]
        %v4274 = vmax.f32 %v4243, %v4259
        %v4275 = vmax.f32 %v4245, %v4261
        %v4276 = vmax.f32 %v4247, %v4263
        %v4277 = vmax.f32 %v4249, %v4265
        %v4278 = vmax.f32 %v4251, %v4267
        %v4279 = vmax.f32 %v4253, %v4269
        %v4280 = vmax.f32 %v4255, %v4271
        %v4281 = vmax.f32 %v4257, %v4273
        %v4282 = vld [vmem:[%s7] sm:$0x1]
        %v4284 = vlaneseq
        %v4285 = vshrl.u32 %v4284, 7
        %v4286 = vsub.s32 0, %v4285
        %v4287 = vrot.slane %v4282, %v4286
        %v4289 = vmul.f32 %v4274, %v4287
        %v4290 = vmul.f32 %v4275, %v4287
        %v4291 = vmul.f32 %v4276, %v4287
        %v4292 = vmul.f32 %v4277, %v4287
        %v4293 = vmul.f32 %v4278, %v4287
        %v4294 = vmul.f32 %v4279, %v4287
        %v4295 = vmul.f32 %v4280, %v4287
        %v4296 = vmul.f32 %v4281, %v4287
        %v4297 = vld [vmem:[%s8] sm:$0x1]
        %v4299 = vlaneseq
        %v4300 = vshrl.u32 %v4299, 7
        %v4301 = vsub.s32 0, %v4300
        %v4302 = vrot.slane %v4297, %v4301
        %v4304 = vadd.f32 %v4289, %v4302
        %v4305 = vadd.f32 %v4290, %v4302
        %v4306 = vadd.f32 %v4291, %v4302
        %v4307 = vadd.f32 %v4292, %v4302
        %v4308 = vadd.f32 %v4293, %v4302
        %v4309 = vadd.f32 %v4294, %v4302
        %v4310 = vadd.f32 %v4295, %v4302
        %v4311 = vadd.f32 %v4296, %v4302
        %v4312 = vpack.c.bf16 %v4304, %v4304
        %v4313 = vpack.c.bf16 %v4305, %v4305
        %v4314 = vpack.c.bf16 %v4306, %v4306
        %v4315 = vpack.c.bf16 %v4307, %v4307
        %v4316 = vpack.c.bf16 %v4308, %v4308
        %v4317 = vpack.c.bf16 %v4309, %v4309
        %v4318 = vpack.c.bf16 %v4310, %v4310
        %v4319 = vpack.c.bf16 %v4311, %v4311
        %s4320 = scalar_lea.vmem [#allocation5], 16
        %vm4321 = vcmask 519168
        %4322 = vst.msk [vmem:[%s4320 + $0x8] sm:$0xf] %vm4321, %v4312
        %4323 = vst.msk [vmem:[%s4320 + $0x18] sm:$0xf] %vm4321, %v4313
        %4324 = vst.msk [vmem:[%s4320 + $0x28] sm:$0xf] %vm4321, %v4314
        %4325 = vst.msk [vmem:[%s4320 + $0x38] sm:$0xf] %vm4321, %v4315
        %4326 = vst.msk [vmem:[%s4320 + $0x48] sm:$0xf] %vm4321, %v4316
        %4327 = vst.msk [vmem:[%s4320 + $0x58] sm:$0xf] %vm4321, %v4317
        %4328 = vst.msk [vmem:[%s4320 + $0x68] sm:$0xf] %vm4321, %v4318
        %4329 = vst.msk [vmem:[%s4320 + $0x78] sm:$0xf] %vm4321, %v4319
        %v4330 = vld [vmem:[#allocation5] sm:$0x80]
        %v4331 = vld [vmem:[#allocation5 + $0x8] sm:$0xf]
        %v4332 = vld [vmem:[#allocation5 + $0x10] sm:$0x80]
        %v4333 = vld [vmem:[#allocation5 + $0x18] sm:$0xf]
        %v4334 = vld [vmem:[#allocation5 + $0x20] sm:$0x80]
        %v4335 = vld [vmem:[#allocation5 + $0x28] sm:$0xf]
        %v4336 = vld [vmem:[#allocation5 + $0x30] sm:$0x80]
        %v4337 = vld [vmem:[#allocation5 + $0x38] sm:$0xf]
        %v4338 = vld [vmem:[#allocation5 + $0x40] sm:$0x80]
        %v4339 = vld [vmem:[#allocation5 + $0x48] sm:$0xf]
        %v4340 = vld [vmem:[#allocation5 + $0x50] sm:$0x80]
        %v4341 = vld [vmem:[#allocation5 + $0x58] sm:$0xf]
        %v4342 = vld [vmem:[#allocation5 + $0x60] sm:$0x80]
        %v4343 = vld [vmem:[#allocation5 + $0x68] sm:$0xf]
        %v4344 = vld [vmem:[#allocation5 + $0x70] sm:$0x80]
        %v4345 = vld [vmem:[#allocation5 + $0x78] sm:$0xf]
        %v4362 = vunpack.c.h.b16 %v4330
        %v4363 = vunpack.c.l.b16 %v4331
        %v4364 = vunpack.c.h.b16 %v4332
        %v4365 = vunpack.c.l.b16 %v4333
        %v4366 = vunpack.c.h.b16 %v4334
        %v4367 = vunpack.c.l.b16 %v4335
        %v4368 = vunpack.c.h.b16 %v4336
        %v4369 = vunpack.c.l.b16 %v4337
        %v4370 = vunpack.c.h.b16 %v4338
        %v4371 = vunpack.c.l.b16 %v4339
        %v4372 = vunpack.c.h.b16 %v4340
        %v4373 = vunpack.c.l.b16 %v4341
        %v4374 = vunpack.c.h.b16 %v4342
        %v4375 = vunpack.c.l.b16 %v4343
        %v4376 = vunpack.c.h.b16 %v4344
        %v4377 = vunpack.c.l.b16 %v4345
        %v4378 = vpack.c.b16 %v4362, %v4362
        %v4379 = vpack.c.b16 %v4363, %v4363
        %v4380 = vpack.c.b16 %v4364, %v4364
        %v4381 = vpack.c.b16 %v4365, %v4365
        %v4382 = vpack.c.b16 %v4366, %v4366
        %v4383 = vpack.c.b16 %v4367, %v4367
        %v4384 = vpack.c.b16 %v4368, %v4368
        %v4385 = vpack.c.b16 %v4369, %v4369
        %v4386 = vpack.c.b16 %v4370, %v4370
        %v4387 = vpack.c.b16 %v4371, %v4371
        %v4388 = vpack.c.b16 %v4372, %v4372
        %v4389 = vpack.c.b16 %v4373, %v4373
        %v4390 = vpack.c.b16 %v4374, %v4374
        %v4391 = vpack.c.b16 %v4375, %v4375
        %v4392 = vpack.c.b16 %v4376, %v4376
        %v4393 = vpack.c.b16 %v4377, %v4377
        %vm4394 = vsmask.f32 256
        %vm4395 = vsmask.f32 4368
        %vm4396 = vmor %vm4394, %vm4395
        %v4398 = vshrl.u32 %v4378, 16
        %v4400 = vrot.slane %v4398, 7
        %v4401 = vrot.slane %v4400, 4
        %v4403 = vshrl.u32 %v4379, 16
        %v4405 = vrot.slane %v4403, 7
        %v4406 = vshll.u32 %v4379, 16
        %v4408 = vor.u32 %v4405, %v4406
        %v4409 = vsel %vm4396, %v4401, %v4408
        %v4411 = vshrl.u32 %v4380, 16
        %v4413 = vrot.slane %v4411, 7
        %v4414 = vrot.slane %v4413, 4
        %v4416 = vshrl.u32 %v4381, 16
        %v4418 = vrot.slane %v4416, 7
        %v4419 = vshll.u32 %v4381, 16
        %v4421 = vor.u32 %v4418, %v4419
        %v4422 = vsel %vm4396, %v4414, %v4421
        %v4424 = vshrl.u32 %v4382, 16
        %v4426 = vrot.slane %v4424, 7
        %v4427 = vrot.slane %v4426, 4
        %v4429 = vshrl.u32 %v4383, 16
        %v4431 = vrot.slane %v4429, 7
        %v4432 = vshll.u32 %v4383, 16
        %v4434 = vor.u32 %v4431, %v4432
        %v4435 = vsel %vm4396, %v4427, %v4434
        %v4437 = vshrl.u32 %v4384, 16
        %v4439 = vrot.slane %v4437, 7
        %v4440 = vrot.slane %v4439, 4
        %v4442 = vshrl.u32 %v4385, 16
        %v4444 = vrot.slane %v4442, 7
        %v4445 = vshll.u32 %v4385, 16
        %v4447 = vor.u32 %v4444, %v4445
        %v4448 = vsel %vm4396, %v4440, %v4447
        %v4450 = vshrl.u32 %v4386, 16
        %v4452 = vrot.slane %v4450, 7
        %v4453 = vrot.slane %v4452, 4
        %v4455 = vshrl.u32 %v4387, 16
        %v4457 = vrot.slane %v4455, 7
        %v4458 = vshll.u32 %v4387, 16
        %v4460 = vor.u32 %v4457, %v4458
        %v4461 = vsel %vm4396, %v4453, %v4460
        %v4463 = vshrl.u32 %v4388, 16
        %v4465 = vrot.slane %v4463, 7
        %v4466 = vrot.slane %v4465, 4
        %v4468 = vshrl.u32 %v4389, 16
        %v4470 = vrot.slane %v4468, 7
        %v4471 = vshll.u32 %v4389, 16
        %v4473 = vor.u32 %v4470, %v4471
        %v4474 = vsel %vm4396, %v4466, %v4473
        %v4476 = vshrl.u32 %v4390, 16
        %v4478 = vrot.slane %v4476, 7
        %v4479 = vrot.slane %v4478, 4
        %v4481 = vshrl.u32 %v4391, 16
        %v4483 = vrot.slane %v4481, 7
        %v4484 = vshll.u32 %v4391, 16
        %v4486 = vor.u32 %v4483, %v4484
        %v4487 = vsel %vm4396, %v4479, %v4486
        %v4489 = vshrl.u32 %v4392, 16
        %v4491 = vrot.slane %v4489, 7
        %v4492 = vrot.slane %v4491, 4
        %v4494 = vshrl.u32 %v4393, 16
        %v4496 = vrot.slane %v4494, 7
        %v4497 = vshll.u32 %v4393, 16
        %v4499 = vor.u32 %v4496, %v4497
        %v4500 = vsel %vm4396, %v4492, %v4499
        %v4501 = vld [vmem:[%s9] sm:$0xf]
        %v4502 = vld [vmem:[%s9 + $0x4] sm:$0xf]
        %v4503 = vld [vmem:[%s9 + $0x8] sm:$0xf]
        %v4504 = vld [vmem:[%s9 + $0xc] sm:$0xf]
        %v4505 = vld [vmem:[%s9 + $0x10] sm:$0xf]
        %v4506 = vld [vmem:[%s9 + $0x14] sm:$0xf]
        %v4507 = vld [vmem:[%s9 + $0x18] sm:$0xf]
        %v4508 = vld [vmem:[%s9 + $0x1c] sm:$0xf]
        %s4509 = scalar_lea.vmem %s9, 32
        %v4510 = vld [vmem:[%s4509] sm:$0xf]
        %v4511 = vld [vmem:[%s4509 + $0x4] sm:$0xf]
        %v4512 = vld [vmem:[%s4509 + $0x8] sm:$0xf]
        %v4513 = vld [vmem:[%s4509 + $0xc] sm:$0xf]
        %v4514 = vld [vmem:[%s4509 + $0x10] sm:$0xf]
        %v4515 = vld [vmem:[%s4509 + $0x14] sm:$0xf]
        %v4516 = vld [vmem:[%s4509 + $0x18] sm:$0xf]
        %v4517 = vld [vmem:[%s4509 + $0x1c] sm:$0xf]
        %v4518 = vpack.c.b16 %v4365, %v4363
        %v4519 = vpack.c.b16 %v4369, %v4367
        %v4520 = vpack.c.b16 %v4373, %v4371
        %v4521 = vpack.c.b16 %v4377, %v4375
        %v4530 = vunpack.c.l.b16 %v4510
        %v4531 = vunpack.c.l.b16 %v4511
        %v4532 = vunpack.c.l.b16 %v4512
        %v4533 = vunpack.c.l.b16 %v4513
        %v4534 = vunpack.c.l.b16 %v4514
        %v4535 = vunpack.c.l.b16 %v4515
        %v4536 = vunpack.c.l.b16 %v4516
        %v4537 = vunpack.c.l.b16 %v4517
        %v4538 = vpack.c.b16 %v4531, %v4530
        %v4539 = vpack.c.b16 %v4533, %v4532
        %v4540 = vpack.c.b16 %v4535, %v4534
        %v4541 = vpack.c.b16 %v4537, %v4536
        %v4547 = vsel %vm638, %v4518, 0
        %v4550 = vsel %vm638, %v4519, 0
        %v4553 = vsel %vm638, %v4520, 0
        %v4556 = vsel %vm638, %v4521, 0
        %4558 = vmatprep.subr.bf16.mxu0 0
        %4559 = vmatpush1.bf16.msra.mxu0 %v4538
        %4560 = vmatprep.subr.bf16.mxu0 0
        %4561 = vmatpush1.bf16.msra.mxu0 %v4539
        %4562 = vmatprep.subr.bf16.mxu0 0
        %4563 = vmatpush1.bf16.msra.mxu0 %v4540
        %4564 = vmatprep.subr.bf16.mxu0 0
        %4565 = vmatpush1.bf16.msra.mxu0 %v4541
        %4566 = vmatprep.subr.bf16.mxu0 0
        %4567 = vmatpush1.bf16.msra.mxu0 0
        %4568 = vmatprep.subr.bf16.mxu0 0
        %4569 = vmatpush1.bf16.msra.mxu0 0
        %4570 = vmatprep.subr.bf16.mxu0 0
        %4571 = vmatpush1.bf16.msra.mxu0 0
        %4572 = vmatprep.subr.bf16.mxu0 0
        %4573 = vmatpush1.bf16.msra.mxu0 0
        %4574 = vmatprep.subr.bf16.mxu0 0
        %4575 = vmatpush1.bf16.msra.mxu0 0
        %4576 = vmatprep.subr.bf16.mxu0 0
        %4577 = vmatpush1.bf16.msra.mxu0 0
        %4578 = vmatprep.subr.bf16.mxu0 0
        %4579 = vmatpush1.bf16.msra.mxu0 0
        %4580 = vmatprep.subr.bf16.mxu0 0
        %4581 = vmatpush1.bf16.msra.mxu0 0
        %4582 = vmatprep.subr.bf16.mxu0 0
        %4583 = vmatpush1.bf16.msra.mxu0 0
        %4584 = vmatprep.subr.bf16.mxu0 0
        %4585 = vmatpush1.bf16.msra.mxu0 0
        %4586 = vmatprep.subr.bf16.mxu0 0
        %4587 = vmatpush1.bf16.msra.mxu0 0
        %4588 = vmatprep.subr.bf16.mxu0 0
        %4589 = vmatpush1.bf16.msra.mxu0 0
        %4590 = vmatprep.mubr.bf16.mxu0 0
        %4591 = vmatmul.mubr.bf16.gmra.mrb[0].mxu0 %v4547
        %v4592 = vpop.f32.mrb[0].mxu0
        %v4593 = vadd.f32 0.0, %v4592
        %v4594 = vpop.f32.mrb[0].mxu0
        %v4595 = vpop.f32.mrb[0].mxu0
        %v4596 = vadd.f32 0.0, %v4595
        %v4597 = vpop.f32.mrb[0].mxu0
        %4598 = vmatprep.mubr.bf16.mxu0 0
        %4599 = vmatmul.mubr.bf16.gmra.mrb[0].mxu0 %v4550
        %v4600 = vpop.f32.mrb[0].mxu0
        %v4601 = vadd.f32 0.0, %v4600
        %v4602 = vpop.f32.mrb[0].mxu0
        %v4603 = vpop.f32.mrb[0].mxu0
        %v4604 = vadd.f32 0.0, %v4603
        %v4605 = vpop.f32.mrb[0].mxu0
        %4606 = vmatprep.mubr.bf16.mxu0 0
        %4607 = vmatmul.mubr.bf16.gmra.mrb[0].mxu0 %v4553
        %v4608 = vpop.f32.mrb[0].mxu0
        %v4609 = vadd.f32 0.0, %v4608
        %v4610 = vpop.f32.mrb[0].mxu0
        %v4611 = vpop.f32.mrb[0].mxu0
        %v4612 = vadd.f32 0.0, %v4611
        %v4613 = vpop.f32.mrb[0].mxu0
        %4614 = vmatprep.mubr.bf16.mxu0 0
        %4615 = vmatmul.mubr.bf16.gmra.mrb[0].mxu0 %v4556
        %v4616 = vpop.f32.mrb[0].mxu0
        %v4617 = vadd.f32 0.0, %v4616
        %v4618 = vpop.f32.mrb[0].mxu0
        %v4619 = vpop.f32.mrb[0].mxu0
        %v4620 = vadd.f32 0.0, %v4619
        %v4621 = vpop.f32.mrb[0].mxu0
        %4622 = vdwg.mxu0
        %v4623 = vunpack.c.l.b16 %v4409
        %v4624 = vunpack.c.l.b16 %v4422
        %v4625 = vunpack.c.l.b16 %v4435
        %v4626 = vunpack.c.l.b16 %v4448
        %v4627 = vunpack.c.l.b16 %v4461
        %v4628 = vunpack.c.l.b16 %v4474
        %v4629 = vunpack.c.l.b16 %v4487
        %v4630 = vunpack.c.l.b16 %v4500
        %v4631 = vpack.c.b16 %v4624, %v4623
        %v4632 = vpack.c.b16 %v4626, %v4625
        %v4633 = vpack.c.b16 %v4628, %v4627
        %v4634 = vpack.c.b16 %v4630, %v4629
        %v4643 = vunpack.c.l.b16 %v4501
        %v4644 = vunpack.c.l.b16 %v4502
        %v4645 = vunpack.c.l.b16 %v4503
        %v4646 = vunpack.c.l.b16 %v4504
        %v4647 = vunpack.c.l.b16 %v4505
        %v4648 = vunpack.c.l.b16 %v4506
        %v4649 = vunpack.c.l.b16 %v4507
        %v4650 = vunpack.c.l.b16 %v4508
        %v4651 = vpack.c.b16 %v4644, %v4643
        %v4652 = vpack.c.b16 %v4646, %v4645
        %v4653 = vpack.c.b16 %v4648, %v4647
        %v4654 = vpack.c.b16 %v4650, %v4649
        %v4660 = vsel %vm638, %v4631, 0
        %v4663 = vsel %vm638, %v4632, 0
        %v4666 = vsel %vm638, %v4633, 0
        %v4669 = vsel %vm638, %v4634, 0
        %4671 = vmatprep.subr.bf16.mxu0 0
        %4672 = vmatpush1.bf16.msra.mxu0 %v4651
        %4673 = vmatprep.subr.bf16.mxu0 0
        %4674 = vmatpush1.bf16.msra.mxu0 %v4652
        %4675 = vmatprep.subr.bf16.mxu0 0
        %4676 = vmatpush1.bf16.msra.mxu0 %v4653
        %4677 = vmatprep.subr.bf16.mxu0 0
        %4678 = vmatpush1.bf16.msra.mxu0 %v4654
        %4679 = vmatprep.subr.bf16.mxu0 0
        %4680 = vmatpush1.bf16.msra.mxu0 0
        %4681 = vmatprep.subr.bf16.mxu0 0
        %4682 = vmatpush1.bf16.msra.mxu0 0
        %4683 = vmatprep.subr.bf16.mxu0 0
        %4684 = vmatpush1.bf16.msra.mxu0 0
        %4685 = vmatprep.subr.bf16.mxu0 0
        %4686 = vmatpush1.bf16.msra.mxu0 0
        %4687 = vmatprep.subr.bf16.mxu0 0
        %4688 = vmatpush1.bf16.msra.mxu0 0
        %4689 = vmatprep.subr.bf16.mxu0 0
        %4690 = vmatpush1.bf16.msra.mxu0 0
        %4691 = vmatprep.subr.bf16.mxu0 0
        %4692 = vmatpush1.bf16.msra.mxu0 0
        %4693 = vmatprep.subr.bf16.mxu0 0
        %4694 = vmatpush1.bf16.msra.mxu0 0
        %4695 = vmatprep.subr.bf16.mxu0 0
        %4696 = vmatpush1.bf16.msra.mxu0 0
        %4697 = vmatprep.subr.bf16.mxu0 0
        %4698 = vmatpush1.bf16.msra.mxu0 0
        %4699 = vmatprep.subr.bf16.mxu0 0
        %4700 = vmatpush1.bf16.msra.mxu0 0
        %4701 = vmatprep.subr.bf16.mxu0 0
        %4702 = vmatpush1.bf16.msra.mxu0 0
        %4703 = vmatprep.mubr.bf16.mxu0 0
        %4704 = vmatmul.mubr.bf16.gmra.mrb[0].mxu0 %v4660
        %v4705 = vpop.f32.mrb[0].mxu0
        %v4706 = vadd.f32 %v4593, %v4705
        %v4707 = vpop.f32.mrb[0].mxu0
        %v4708 = vpop.f32.mrb[0].mxu0
        %v4709 = vadd.f32 %v4596, %v4708
        %v4710 = vpop.f32.mrb[0].mxu0
        %4711 = vmatprep.mubr.bf16.mxu0 0
        %4712 = vmatmul.mubr.bf16.gmra.mrb[0].mxu0 %v4663
        %v4713 = vpop.f32.mrb[0].mxu0
        %v4714 = vadd.f32 %v4601, %v4713
        %v4715 = vpop.f32.mrb[0].mxu0
        %v4716 = vpop.f32.mrb[0].mxu0
        %v4717 = vadd.f32 %v4604, %v4716
        %v4718 = vpop.f32.mrb[0].mxu0
        %4719 = vmatprep.mubr.bf16.mxu0 0
        %4720 = vmatmul.mubr.bf16.gmra.mrb[0].mxu0 %v4666
        %v4721 = vpop.f32.mrb[0].mxu0
        %v4722 = vadd.f32 %v4609, %v4721
        %v4723 = vpop.f32.mrb[0].mxu0
        %v4724 = vpop.f32.mrb[0].mxu0
        %v4725 = vadd.f32 %v4612, %v4724
        %v4726 = vpop.f32.mrb[0].mxu0
        %4727 = vmatprep.mubr.bf16.mxu0 0
        %4728 = vmatmul.mubr.bf16.gmra.mrb[0].mxu0 %v4669
        %v4729 = vpop.f32.mrb[0].mxu0
        %v4730 = vadd.f32 %v4617, %v4729
        %v4731 = vpop.f32.mrb[0].mxu0
        %v4732 = vpop.f32.mrb[0].mxu0
        %v4733 = vadd.f32 %v4620, %v4732
        %v4734 = vpop.f32.mrb[0].mxu0
        %4735 = vdwg.mxu0
        %v4736 = vld [vmem:[#allocation5 + $0x8] sm:$0x1f]
        %v4737 = vld [vmem:[#allocation5 + $0x18] sm:$0x1f]
        %v4738 = vld [vmem:[#allocation5 + $0x28] sm:$0x1f]
        %v4739 = vld [vmem:[#allocation5 + $0x38] sm:$0x1f]
        %v4740 = vld [vmem:[#allocation5 + $0x48] sm:$0x1f]
        %v4741 = vld [vmem:[#allocation5 + $0x58] sm:$0x1f]
        %v4742 = vld [vmem:[#allocation5 + $0x68] sm:$0x1f]
        %v4743 = vld [vmem:[#allocation5 + $0x78] sm:$0x1f]
        %v4752 = vunpack.c.l.b16 %v4736
        %v4753 = vunpack.c.h.b16 %v4736
        %v4754 = vunpack.c.l.b16 %v4737
        %v4755 = vunpack.c.h.b16 %v4737
        %v4756 = vunpack.c.l.b16 %v4738
        %v4757 = vunpack.c.h.b16 %v4738
        %v4758 = vunpack.c.l.b16 %v4739
        %v4759 = vunpack.c.h.b16 %v4739
        %v4760 = vunpack.c.l.b16 %v4740
        %v4761 = vunpack.c.h.b16 %v4740
        %v4762 = vunpack.c.l.b16 %v4741
        %v4763 = vunpack.c.h.b16 %v4741
        %v4764 = vunpack.c.l.b16 %v4742
        %v4765 = vunpack.c.h.b16 %v4742
        %v4766 = vunpack.c.l.b16 %v4743
        %v4767 = vunpack.c.h.b16 %v4743
        %v4768 = vpack.c.b16 %v4752, %v4752
        %v4769 = vpack.c.b16 %v4753, %v4753
        %v4770 = vpack.c.b16 %v4754, %v4754
        %v4771 = vpack.c.b16 %v4755, %v4755
        %v4772 = vpack.c.b16 %v4756, %v4756
        %v4773 = vpack.c.b16 %v4757, %v4757
        %v4774 = vpack.c.b16 %v4758, %v4758
        %v4775 = vpack.c.b16 %v4759, %v4759
        %v4776 = vpack.c.b16 %v4760, %v4760
        %v4777 = vpack.c.b16 %v4761, %v4761
        %v4778 = vpack.c.b16 %v4762, %v4762
        %v4779 = vpack.c.b16 %v4763, %v4763
        %v4780 = vpack.c.b16 %v4764, %v4764
        %v4781 = vpack.c.b16 %v4765, %v4765
        %v4782 = vpack.c.b16 %v4766, %v4766
        %v4783 = vpack.c.b16 %v4767, %v4767
        %vm4784 = vsmask.f32 3328
        %vm4785 = vsmask.f32 7440
        %vm4786 = vmor %vm4784, %vm4785
        %v4788 = vshrl.u32 %v4768, 16
        %v4790 = vrot.slane %v4788, 4
        %v4791 = vshll.u32 %v4768, 16
        %v4793 = vrot.slane %v4791, 5
        %v4794 = vor.u32 %v4790, %v4793
        %v4795 = vrot.slane %v4794, 4
        %v4797 = vshll.u32 %v4769, 16
        %v4799 = vrot.slane %v4797, 5
        %v4800 = vsel %vm4786, %v4795, %v4799
        %v4802 = vshrl.u32 %v4770, 16
        %v4804 = vrot.slane %v4802, 4
        %v4805 = vshll.u32 %v4770, 16
        %v4807 = vrot.slane %v4805, 5
        %v4808 = vor.u32 %v4804, %v4807
        %v4809 = vrot.slane %v4808, 4
        %v4811 = vshll.u32 %v4771, 16
        %v4813 = vrot.slane %v4811, 5
        %v4814 = vsel %vm4786, %v4809, %v4813
        %v4816 = vshrl.u32 %v4772, 16
        %v4818 = vrot.slane %v4816, 4
        %v4819 = vshll.u32 %v4772, 16
        %v4821 = vrot.slane %v4819, 5
        %v4822 = vor.u32 %v4818, %v4821
        %v4823 = vrot.slane %v4822, 4
        %v4825 = vshll.u32 %v4773, 16
        %v4827 = vrot.slane %v4825, 5
        %v4828 = vsel %vm4786, %v4823, %v4827
        %v4830 = vshrl.u32 %v4774, 16
        %v4832 = vrot.slane %v4830, 4
        %v4833 = vshll.u32 %v4774, 16
        %v4835 = vrot.slane %v4833, 5
        %v4836 = vor.u32 %v4832, %v4835
        %v4837 = vrot.slane %v4836, 4
        %v4839 = vshll.u32 %v4775, 16
        %v4841 = vrot.slane %v4839, 5
        %v4842 = vsel %vm4786, %v4837, %v4841
        %v4844 = vshrl.u32 %v4776, 16
        %v4846 = vrot.slane %v4844, 4
        %v4847 = vshll.u32 %v4776, 16
        %v4849 = vrot.slane %v4847, 5
        %v4850 = vor.u32 %v4846, %v4849
        %v4851 = vrot.slane %v4850, 4
        %v4853 = vshll.u32 %v4777, 16
        %v4855 = vrot.slane %v4853, 5
        %v4856 = vsel %vm4786, %v4851, %v4855
        %v4858 = vshrl.u32 %v4778, 16
        %v4860 = vrot.slane %v4858, 4
        %v4861 = vshll.u32 %v4778, 16
        %v4863 = vrot.slane %v4861, 5
        %v4864 = vor.u32 %v4860, %v4863
        %v4865 = vrot.slane %v4864, 4
        %v4867 = vshll.u32 %v4779, 16
        %v4869 = vrot.slane %v4867, 5
        %v4870 = vsel %vm4786, %v4865, %v4869
        %v4872 = vshrl.u32 %v4780, 16
        %v4874 = vrot.slane %v4872, 4
        %v4875 = vshll.u32 %v4780, 16
        %v4877 = vrot.slane %v4875, 5
        %v4878 = vor.u32 %v4874, %v4877
        %v4879 = vrot.slane %v4878, 4
        %v4881 = vshll.u32 %v4781, 16
        %v4883 = vrot.slane %v4881, 5
        %v4884 = vsel %vm4786, %v4879, %v4883
        %v4886 = vshrl.u32 %v4782, 16
        %v4888 = vrot.slane %v4886, 4
        %v4889 = vshll.u32 %v4782, 16
        %v4891 = vrot.slane %v4889, 5
        %v4892 = vor.u32 %v4888, %v4891
        %v4893 = vrot.slane %v4892, 4
        %v4895 = vshll.u32 %v4783, 16
        %v4897 = vrot.slane %v4895, 5
        %v4898 = vsel %vm4786, %v4893, %v4897
        %s4899 = scalar_lea.vmem %s9, 64
        %v4900 = vld [vmem:[%s4899] sm:$0xf]
        %v4901 = vld [vmem:[%s4899 + $0x4] sm:$0xf]
        %v4902 = vld [vmem:[%s4899 + $0x8] sm:$0xf]
        %v4903 = vld [vmem:[%s4899 + $0xc] sm:$0xf]
        %v4904 = vld [vmem:[%s4899 + $0x10] sm:$0xf]
        %v4905 = vld [vmem:[%s4899 + $0x14] sm:$0xf]
        %v4906 = vld [vmem:[%s4899 + $0x18] sm:$0xf]
        %v4907 = vld [vmem:[%s4899 + $0x1c] sm:$0xf]
        %v4908 = vunpack.c.l.b16 %v4800
        %v4909 = vunpack.c.l.b16 %v4814
        %v4910 = vunpack.c.l.b16 %v4828
        %v4911 = vunpack.c.l.b16 %v4842
        %v4912 = vunpack.c.l.b16 %v4856
        %v4913 = vunpack.c.l.b16 %v4870
        %v4914 = vunpack.c.l.b16 %v4884
        %v4915 = vunpack.c.l.b16 %v4898
        %v4916 = vpack.c.b16 %v4909, %v4908
        %v4917 = vpack.c.b16 %v4911, %v4910
        %v4918 = vpack.c.b16 %v4913, %v4912
        %v4919 = vpack.c.b16 %v4915, %v4914
        %v4928 = vunpack.c.l.b16 %v4900
        %v4929 = vunpack.c.l.b16 %v4901
        %v4930 = vunpack.c.l.b16 %v4902
        %v4931 = vunpack.c.l.b16 %v4903
        %v4932 = vunpack.c.l.b16 %v4904
        %v4933 = vunpack.c.l.b16 %v4905
        %v4934 = vunpack.c.l.b16 %v4906
        %v4935 = vunpack.c.l.b16 %v4907
        %v4936 = vpack.c.b16 %v4929, %v4928
        %v4937 = vpack.c.b16 %v4931, %v4930
        %v4938 = vpack.c.b16 %v4933, %v4932
        %v4939 = vpack.c.b16 %v4935, %v4934
        %v4945 = vsel %vm638, %v4916, 0
        %v4948 = vsel %vm638, %v4917, 0
        %v4951 = vsel %vm638, %v4918, 0
        %v4954 = vsel %vm638, %v4919, 0
        %4956 = vmatprep.subr.bf16.mxu0 0
        %4957 = vmatpush1.bf16.msra.mxu0 %v4936
        %4958 = vmatprep.subr.bf16.mxu0 0
        %4959 = vmatpush1.bf16.msra.mxu0 %v4937
        %4960 = vmatprep.subr.bf16.mxu0 0
        %4961 = vmatpush1.bf16.msra.mxu0 %v4938
        %4962 = vmatprep.subr.bf16.mxu0 0
        %4963 = vmatpush1.bf16.msra.mxu0 %v4939
        %4964 = vmatprep.subr.bf16.mxu0 0
        %4965 = vmatpush1.bf16.msra.mxu0 0
        %4966 = vmatprep.subr.bf16.mxu0 0
        %4967 = vmatpush1.bf16.msra.mxu0 0
        %4968 = vmatprep.subr.bf16.mxu0 0
        %4969 = vmatpush1.bf16.msra.mxu0 0
        %4970 = vmatprep.subr.bf16.mxu0 0
        %4971 = vmatpush1.bf16.msra.mxu0 0
        %4972 = vmatprep.subr.bf16.mxu0 0
        %4973 = vmatpush1.bf16.msra.mxu0 0
        %4974 = vmatprep.subr.bf16.mxu0 0
        %4975 = vmatpush1.bf16.msra.mxu0 0
        %4976 = vmatprep.subr.bf16.mxu0 0
        %4977 = vmatpush1.bf16.msra.mxu0 0
        %4978 = vmatprep.subr.bf16.mxu0 0
        %4979 = vmatpush1.bf16.msra.mxu0 0
        %4980 = vmatprep.subr.bf16.mxu0 0
        %4981 = vmatpush1.bf16.msra.mxu0 0
        %4982 = vmatprep.subr.bf16.mxu0 0
        %4983 = vmatpush1.bf16.msra.mxu0 0
        %4984 = vmatprep.subr.bf16.mxu0 0
        %4985 = vmatpush1.bf16.msra.mxu0 0
        %4986 = vmatprep.subr.bf16.mxu0 0
        %4987 = vmatpush1.bf16.msra.mxu0 0
        %4988 = vmatprep.mubr.bf16.mxu0 0
        %4989 = vmatmul.mubr.bf16.gmra.mrb[0].mxu0 %v4945
        %v4990 = vpop.f32.mrb[0].mxu0
        %v4991 = vadd.f32 0.0, %v4990
        %v4992 = vpop.f32.mrb[0].mxu0
        %v4993 = vpop.f32.mrb[0].mxu0
        %v4994 = vadd.f32 0.0, %v4993
        %v4995 = vpop.f32.mrb[0].mxu0
        %4996 = vmatprep.mubr.bf16.mxu0 0
        %4997 = vmatmul.mubr.bf16.gmra.mrb[0].mxu0 %v4948
        %v4998 = vpop.f32.mrb[0].mxu0
        %v4999 = vadd.f32 0.0, %v4998
        %v5000 = vpop.f32.mrb[0].mxu0
        %v5001 = vpop.f32.mrb[0].mxu0
        %v5002 = vadd.f32 0.0, %v5001
        %v5003 = vpop.f32.mrb[0].mxu0
        %5004 = vmatprep.mubr.bf16.mxu0 0
        %5005 = vmatmul.mubr.bf16.gmra.mrb[0].mxu0 %v4951
        %v5006 = vpop.f32.mrb[0].mxu0
        %v5007 = vadd.f32 0.0, %v5006
        %v5008 = vpop.f32.mrb[0].mxu0
        %v5009 = vpop.f32.mrb[0].mxu0
        %v5010 = vadd.f32 0.0, %v5009
        %v5011 = vpop.f32.mrb[0].mxu0
        %5012 = vmatprep.mubr.bf16.mxu0 0
        %5013 = vmatmul.mubr.bf16.gmra.mrb[0].mxu0 %v4954
        %v5014 = vpop.f32.mrb[0].mxu0
        %v5015 = vadd.f32 0.0, %v5014
        %v5016 = vpop.f32.mrb[0].mxu0
        %v5017 = vpop.f32.mrb[0].mxu0
        %v5018 = vadd.f32 0.0, %v5017
        %v5019 = vpop.f32.mrb[0].mxu0
        %5020 = vdwg.mxu0
        %v5021 = vadd.f32 %v4706, %v4991
        %v5022 = vadd.f32 %v4709, %v4994
        %v5023 = vadd.f32 %v4714, %v4999
        %v5024 = vadd.f32 %v4717, %v5002
        %v5025 = vadd.f32 %v4722, %v5007
        %v5026 = vadd.f32 %v4725, %v5010
        %v5027 = vadd.f32 %v4730, %v5015
        %v5028 = vadd.f32 %v4733, %v5018
        %v5029 = vld [vmem:[%s4320] sm:$0x80]
        %v5030 = vld [vmem:[%s4320 + $0x8] sm:$0xf]
        %v5031 = vld [vmem:[%s4320 + $0x10] sm:$0x80]
        %v5032 = vld [vmem:[%s4320 + $0x18] sm:$0xf]
        %v5033 = vld [vmem:[%s4320 + $0x20] sm:$0x80]
        %v5034 = vld [vmem:[%s4320 + $0x28] sm:$0xf]
        %v5035 = vld [vmem:[%s4320 + $0x30] sm:$0x80]
        %v5036 = vld [vmem:[%s4320 + $0x38] sm:$0xf]
        %v5037 = vld [vmem:[%s4320 + $0x40] sm:$0x80]
        %v5038 = vld [vmem:[%s4320 + $0x48] sm:$0xf]
        %v5039 = vld [vmem:[%s4320 + $0x50] sm:$0x80]
        %v5040 = vld [vmem:[%s4320 + $0x58] sm:$0xf]
        %v5041 = vld [vmem:[%s4320 + $0x60] sm:$0x80]
        %v5042 = vld [vmem:[%s4320 + $0x68] sm:$0xf]
        %v5043 = vld [vmem:[%s4320 + $0x70] sm:$0x80]
        %v5044 = vld [vmem:[%s4320 + $0x78] sm:$0xf]
        %v5061 = vunpack.c.h.b16 %v5029
        %v5062 = vunpack.c.l.b16 %v5030
        %v5063 = vunpack.c.h.b16 %v5031
        %v5064 = vunpack.c.l.b16 %v5032
        %v5065 = vunpack.c.h.b16 %v5033
        %v5066 = vunpack.c.l.b16 %v5034
        %v5067 = vunpack.c.h.b16 %v5035
        %v5068 = vunpack.c.l.b16 %v5036
        %v5069 = vunpack.c.h.b16 %v5037
        %v5070 = vunpack.c.l.b16 %v5038
        %v5071 = vunpack.c.h.b16 %v5039
        %v5072 = vunpack.c.l.b16 %v5040
        %v5073 = vunpack.c.h.b16 %v5041
        %v5074 = vunpack.c.l.b16 %v5042
        %v5075 = vunpack.c.h.b16 %v5043
        %v5076 = vunpack.c.l.b16 %v5044
        %v5077 = vpack.c.b16 %v5061, %v5061
        %v5078 = vpack.c.b16 %v5062, %v5062
        %v5079 = vpack.c.b16 %v5063, %v5063
        %v5080 = vpack.c.b16 %v5064, %v5064
        %v5081 = vpack.c.b16 %v5065, %v5065
        %v5082 = vpack.c.b16 %v5066, %v5066
        %v5083 = vpack.c.b16 %v5067, %v5067
        %v5084 = vpack.c.b16 %v5068, %v5068
        %v5085 = vpack.c.b16 %v5069, %v5069
        %v5086 = vpack.c.b16 %v5070, %v5070
        %v5087 = vpack.c.b16 %v5071, %v5071
        %v5088 = vpack.c.b16 %v5072, %v5072
        %v5089 = vpack.c.b16 %v5073, %v5073
        %v5090 = vpack.c.b16 %v5074, %v5074
        %v5091 = vpack.c.b16 %v5075, %v5075
        %v5092 = vpack.c.b16 %v5076, %v5076
        %v5094 = vshrl.u32 %v5077, 16
        %v5096 = vrot.slane %v5094, 7
        %v5097 = vrot.slane %v5096, 4
        %v5099 = vshrl.u32 %v5078, 16
        %v5101 = vrot.slane %v5099, 7
        %v5102 = vshll.u32 %v5078, 16
        %v5104 = vor.u32 %v5101, %v5102
        %v5105 = vsel %vm4396, %v5097, %v5104
        %v5107 = vshrl.u32 %v5079, 16
        %v5109 = vrot.slane %v5107, 7
        %v5110 = vrot.slane %v5109, 4
        %v5112 = vshrl.u32 %v5080, 16
        %v5114 = vrot.slane %v5112, 7
        %v5115 = vshll.u32 %v5080, 16
        %v5117 = vor.u32 %v5114, %v5115
        %v5118 = vsel %vm4396, %v5110, %v5117
        %v5120 = vshrl.u32 %v5081, 16
        %v5122 = vrot.slane %v5120, 7
        %v5123 = vrot.slane %v5122, 4
        %v5125 = vshrl.u32 %v5082, 16
        %v5127 = vrot.slane %v5125, 7
        %v5128 = vshll.u32 %v5082, 16
        %v5130 = vor.u32 %v5127, %v5128
        %v5131 = vsel %vm4396, %v5123, %v5130
        %v5133 = vshrl.u32 %v5083, 16
        %v5135 = vrot.slane %v5133, 7
        %v5136 = vrot.slane %v5135, 4
        %v5138 = vshrl.u32 %v5084, 16
        %v5140 = vrot.slane %v5138, 7
        %v5141 = vshll.u32 %v5084, 16
        %v5143 = vor.u32 %v5140, %v5141
        %v5144 = vsel %vm4396, %v5136, %v5143
        %v5146 = vshrl.u32 %v5085, 16
        %v5148 = vrot.slane %v5146, 7
        %v5149 = vrot.slane %v5148, 4
        %v5151 = vshrl.u32 %v5086, 16
        %v5153 = vrot.slane %v5151, 7
        %v5154 = vshll.u32 %v5086, 16
        %v5156 = vor.u32 %v5153, %v5154
        %v5157 = vsel %vm4396, %v5149, %v5156
        %v5159 = vshrl.u32 %v5087, 16
        %v5161 = vrot.slane %v5159, 7
        %v5162 = vrot.slane %v5161, 4
        %v5164 = vshrl.u32 %v5088, 16
        %v5166 = vrot.slane %v5164, 7
        %v5167 = vshll.u32 %v5088, 16
        %v5169 = vor.u32 %v5166, %v5167
        %v5170 = vsel %vm4396, %v5162, %v5169
        %v5172 = vshrl.u32 %v5089, 16
        %v5174 = vrot.slane %v5172, 7
        %v5175 = vrot.slane %v5174, 4
        %v5177 = vshrl.u32 %v5090, 16
        %v5179 = vrot.slane %v5177, 7
        %v5180 = vshll.u32 %v5090, 16
        %v5182 = vor.u32 %v5179, %v5180
        %v5183 = vsel %vm4396, %v5175, %v5182
        %v5185 = vshrl.u32 %v5091, 16
        %v5187 = vrot.slane %v5185, 7
        %v5188 = vrot.slane %v5187, 4
        %v5190 = vshrl.u32 %v5092, 16
        %v5192 = vrot.slane %v5190, 7
        %v5193 = vshll.u32 %v5092, 16
        %v5195 = vor.u32 %v5192, %v5193
        %v5196 = vsel %vm4396, %v5188, %v5195
        %s5197 = scalar_lea.vmem %s9, 96
        %v5198 = vld [vmem:[%s5197] sm:$0xf]
        %v5199 = vld [vmem:[%s5197 + $0x4] sm:$0xf]
        %v5200 = vld [vmem:[%s5197 + $0x8] sm:$0xf]
        %v5201 = vld [vmem:[%s5197 + $0xc] sm:$0xf]
        %v5202 = vld [vmem:[%s5197 + $0x10] sm:$0xf]
        %v5203 = vld [vmem:[%s5197 + $0x14] sm:$0xf]
        %v5204 = vld [vmem:[%s5197 + $0x18] sm:$0xf]
        %v5205 = vld [vmem:[%s5197 + $0x1c] sm:$0xf]
        %v5206 = vunpack.c.l.b16 %v5105
        %v5207 = vunpack.c.l.b16 %v5118
        %v5208 = vunpack.c.l.b16 %v5131
        %v5209 = vunpack.c.l.b16 %v5144
        %v5210 = vunpack.c.l.b16 %v5157
        %v5211 = vunpack.c.l.b16 %v5170
        %v5212 = vunpack.c.l.b16 %v5183
        %v5213 = vunpack.c.l.b16 %v5196
        %v5214 = vpack.c.b16 %v5207, %v5206
        %v5215 = vpack.c.b16 %v5209, %v5208
        %v5216 = vpack.c.b16 %v5211, %v5210
        %v5217 = vpack.c.b16 %v5213, %v5212
        %v5226 = vunpack.c.l.b16 %v5198
        %v5227 = vunpack.c.l.b16 %v5199
        %v5228 = vunpack.c.l.b16 %v5200
        %v5229 = vunpack.c.l.b16 %v5201
        %v5230 = vunpack.c.l.b16 %v5202
        %v5231 = vunpack.c.l.b16 %v5203
        %v5232 = vunpack.c.l.b16 %v5204
        %v5233 = vunpack.c.l.b16 %v5205
        %v5234 = vpack.c.b16 %v5227, %v5226
        %v5235 = vpack.c.b16 %v5229, %v5228
        %v5236 = vpack.c.b16 %v5231, %v5230
        %v5237 = vpack.c.b16 %v5233, %v5232
        %v5243 = vsel %vm638, %v5214, 0
        %v5246 = vsel %vm638, %v5215, 0
        %v5249 = vsel %vm638, %v5216, 0
        %v5252 = vsel %vm638, %v5217, 0
        %5254 = vmatprep.subr.bf16.mxu0 0
        %5255 = vmatpush1.bf16.msra.mxu0 %v5234
        %5256 = vmatprep.subr.bf16.mxu0 0
        %5257 = vmatpush1.bf16.msra.mxu0 %v5235
        %5258 = vmatprep.subr.bf16.mxu0 0
        %5259 = vmatpush1.bf16.msra.mxu0 %v5236
        %5260 = vmatprep.subr.bf16.mxu0 0
        %5261 = vmatpush1.bf16.msra.mxu0 %v5237
        %5262 = vmatprep.subr.bf16.mxu0 0
        %5263 = vmatpush1.bf16.msra.mxu0 0
        %5264 = vmatprep.subr.bf16.mxu0 0
        %5265 = vmatpush1.bf16.msra.mxu0 0
        %5266 = vmatprep.subr.bf16.mxu0 0
        %5267 = vmatpush1.bf16.msra.mxu0 0
        %5268 = vmatprep.subr.bf16.mxu0 0
        %5269 = vmatpush1.bf16.msra.mxu0 0
        %5270 = vmatprep.subr.bf16.mxu0 0
        %5271 = vmatpush1.bf16.msra.mxu0 0
        %5272 = vmatprep.subr.bf16.mxu0 0
        %5273 = vmatpush1.bf16.msra.mxu0 0
        %5274 = vmatprep.subr.bf16.mxu0 0
        %5275 = vmatpush1.bf16.msra.mxu0 0
        %5276 = vmatprep.subr.bf16.mxu0 0
        %5277 = vmatpush1.bf16.msra.mxu0 0
        %5278 = vmatprep.subr.bf16.mxu0 0
        %5279 = vmatpush1.bf16.msra.mxu0 0
        %5280 = vmatprep.subr.bf16.mxu0 0
        %5281 = vmatpush1.bf16.msra.mxu0 0
        %5282 = vmatprep.subr.bf16.mxu0 0
        %5283 = vmatpush1.bf16.msra.mxu0 0
        %5284 = vmatprep.subr.bf16.mxu0 0
        %5285 = vmatpush1.bf16.msra.mxu0 0
        %5286 = vmatprep.mubr.bf16.mxu0 0
        %5287 = vmatmul.mubr.bf16.gmra.mrb[0].mxu0 %v5243
        %v5288 = vpop.f32.mrb[0].mxu0
        %v5289 = vadd.f32 0.0, %v5288
        %v5290 = vpop.f32.mrb[0].mxu0
        %v5291 = vpop.f32.mrb[0].mxu0
        %v5292 = vadd.f32 0.0, %v5291
        %v5293 = vpop.f32.mrb[0].mxu0
        %5294 = vmatprep.mubr.bf16.mxu0 0
        %5295 = vmatmul.mubr.bf16.gmra.mrb[0].mxu0 %v5246
        %v5296 = vpop.f32.mrb[0].mxu0
        %v5297 = vadd.f32 0.0, %v5296
        %v5298 = vpop.f32.mrb[0].mxu0
        %v5299 = vpop.f32.mrb[0].mxu0
        %v5300 = vadd.f32 0.0, %v5299
        %v5301 = vpop.f32.mrb[0].mxu0
        %5302 = vmatprep.mubr.bf16.mxu0 0
        %5303 = vmatmul.mubr.bf16.gmra.mrb[0].mxu0 %v5249
        %v5304 = vpop.f32.mrb[0].mxu0
        %v5305 = vadd.f32 0.0, %v5304
        %v5306 = vpop.f32.mrb[0].mxu0
        %v5307 = vpop.f32.mrb[0].mxu0
        %v5308 = vadd.f32 0.0, %v5307
        %v5309 = vpop.f32.mrb[0].mxu0
        %5310 = vmatprep.mubr.bf16.mxu0 0
        %5311 = vmatmul.mubr.bf16.gmra.mrb[0].mxu0 %v5252
        %v5312 = vpop.f32.mrb[0].mxu0
        %v5313 = vadd.f32 0.0, %v5312
        %v5314 = vpop.f32.mrb[0].mxu0
        %v5315 = vpop.f32.mrb[0].mxu0
        %v5316 = vadd.f32 0.0, %v5315
        %v5317 = vpop.f32.mrb[0].mxu0
        %5318 = vdwg.mxu0
        %v5319 = vadd.f32 %v5021, %v5289
        %v5320 = vadd.f32 %v5022, %v5292
        %v5321 = vadd.f32 %v5023, %v5297
        %v5322 = vadd.f32 %v5024, %v5300
        %v5323 = vadd.f32 %v5025, %v5305
        %v5324 = vadd.f32 %v5026, %v5308
        %v5325 = vadd.f32 %v5027, %v5313
        %v5326 = vadd.f32 %v5028, %v5316
        %s5327 = scalar_lea.vmem %s9, 128
        %v5328 = vld [vmem:[%s5327] sm:$0xf]
        %v5329 = vld [vmem:[%s5327 + $0x4] sm:$0xf]
        %v5330 = vld [vmem:[%s5327 + $0x8] sm:$0xf]
        %v5331 = vld [vmem:[%s5327 + $0xc] sm:$0xf]
        %v5332 = vld [vmem:[%s5327 + $0x10] sm:$0xf]
        %v5333 = vld [vmem:[%s5327 + $0x14] sm:$0xf]
        %v5334 = vld [vmem:[%s5327 + $0x18] sm:$0xf]
        %v5335 = vld [vmem:[%s5327 + $0x1c] sm:$0xf]
        %v5336 = vpack.c.b16 %v5064, %v5062
        %v5337 = vpack.c.b16 %v5068, %v5066
        %v5338 = vpack.c.b16 %v5072, %v5070
        %v5339 = vpack.c.b16 %v5076, %v5074
        %v5348 = vunpack.c.l.b16 %v5328
        %v5349 = vunpack.c.l.b16 %v5329
        %v5350 = vunpack.c.l.b16 %v5330
        %v5351 = vunpack.c.l.b16 %v5331
        %v5352 = vunpack.c.l.b16 %v5332
        %v5353 = vunpack.c.l.b16 %v5333
        %v5354 = vunpack.c.l.b16 %v5334
        %v5355 = vunpack.c.l.b16 %v5335
        %v5356 = vpack.c.b16 %v5349, %v5348
        %v5357 = vpack.c.b16 %v5351, %v5350
        %v5358 = vpack.c.b16 %v5353, %v5352
        %v5359 = vpack.c.b16 %v5355, %v5354
        %v5365 = vsel %vm638, %v5336, 0
        %v5368 = vsel %vm638, %v5337, 0
        %v5371 = vsel %vm638, %v5338, 0
        %v5374 = vsel %vm638, %v5339, 0
        %5376 = vmatprep.subr.bf16.mxu0 0
        %5377 = vmatpush1.bf16.msra.mxu0 %v5356
        %5378 = vmatprep.subr.bf16.mxu0 0
        %5379 = vmatpush1.bf16.msra.mxu0 %v5357
        %5380 = vmatprep.subr.bf16.mxu0 0
        %5381 = vmatpush1.bf16.msra.mxu0 %v5358
        %5382 = vmatprep.subr.bf16.mxu0 0
        %5383 = vmatpush1.bf16.msra.mxu0 %v5359
        %5384 = vmatprep.subr.bf16.mxu0 0
        %5385 = vmatpush1.bf16.msra.mxu0 0
        %5386 = vmatprep.subr.bf16.mxu0 0
        %5387 = vmatpush1.bf16.msra.mxu0 0
        %5388 = vmatprep.subr.bf16.mxu0 0
        %5389 = vmatpush1.bf16.msra.mxu0 0
        %5390 = vmatprep.subr.bf16.mxu0 0
        %5391 = vmatpush1.bf16.msra.mxu0 0
        %5392 = vmatprep.subr.bf16.mxu0 0
        %5393 = vmatpush1.bf16.msra.mxu0 0
        %5394 = vmatprep.subr.bf16.mxu0 0
        %5395 = vmatpush1.bf16.msra.mxu0 0
        %5396 = vmatprep.subr.bf16.mxu0 0
        %5397 = vmatpush1.bf16.msra.mxu0 0
        %5398 = vmatprep.subr.bf16.mxu0 0
        %5399 = vmatpush1.bf16.msra.mxu0 0
        %5400 = vmatprep.subr.bf16.mxu0 0
        %5401 = vmatpush1.bf16.msra.mxu0 0
        %5402 = vmatprep.subr.bf16.mxu0 0
        %5403 = vmatpush1.bf16.msra.mxu0 0
        %5404 = vmatprep.subr.bf16.mxu0 0
        %5405 = vmatpush1.bf16.msra.mxu0 0
        %5406 = vmatprep.subr.bf16.mxu0 0
        %5407 = vmatpush1.bf16.msra.mxu0 0
        %5408 = vmatprep.mubr.bf16.mxu0 0
        %5409 = vmatmul.mubr.bf16.gmra.mrb[0].mxu0 %v5365
        %v5410 = vpop.f32.mrb[0].mxu0
        %v5411 = vadd.f32 0.0, %v5410
        %v5412 = vpop.f32.mrb[0].mxu0
        %v5413 = vpop.f32.mrb[0].mxu0
        %v5414 = vadd.f32 0.0, %v5413
        %v5415 = vpop.f32.mrb[0].mxu0
        %5416 = vmatprep.mubr.bf16.mxu0 0
        %5417 = vmatmul.mubr.bf16.gmra.mrb[0].mxu0 %v5368
        %v5418 = vpop.f32.mrb[0].mxu0
        %v5419 = vadd.f32 0.0, %v5418
        %v5420 = vpop.f32.mrb[0].mxu0
        %v5421 = vpop.f32.mrb[0].mxu0
        %v5422 = vadd.f32 0.0, %v5421
        %v5423 = vpop.f32.mrb[0].mxu0
        %5424 = vmatprep.mubr.bf16.mxu0 0
        %5425 = vmatmul.mubr.bf16.gmra.mrb[0].mxu0 %v5371
        %v5426 = vpop.f32.mrb[0].mxu0
        %v5427 = vadd.f32 0.0, %v5426
        %v5428 = vpop.f32.mrb[0].mxu0
        %v5429 = vpop.f32.mrb[0].mxu0
        %v5430 = vadd.f32 0.0, %v5429
        %v5431 = vpop.f32.mrb[0].mxu0
        %5432 = vmatprep.mubr.bf16.mxu0 0
        %5433 = vmatmul.mubr.bf16.gmra.mrb[0].mxu0 %v5374
        %v5434 = vpop.f32.mrb[0].mxu0
        %v5435 = vadd.f32 0.0, %v5434
        %v5436 = vpop.f32.mrb[0].mxu0
        %v5437 = vpop.f32.mrb[0].mxu0
        %v5438 = vadd.f32 0.0, %v5437
        %v5439 = vpop.f32.mrb[0].mxu0
        %5440 = vdwg.mxu0
        %v5441 = vadd.f32 %v5319, %v5411
        %v5442 = vadd.f32 %v5320, %v5414
        %v5443 = vadd.f32 %v5321, %v5419
        %v5444 = vadd.f32 %v5322, %v5422
        %v5445 = vadd.f32 %v5323, %v5427
        %v5446 = vadd.f32 %v5324, %v5430
        %v5447 = vadd.f32 %v5325, %v5435
        %v5448 = vadd.f32 %v5326, %v5438
        %v5449 = vld [vmem:[%s4320 + $0x8] sm:$0x1f]
        %v5450 = vld [vmem:[%s4320 + $0x18] sm:$0x1f]
        %v5451 = vld [vmem:[%s4320 + $0x28] sm:$0x1f]
        %v5452 = vld [vmem:[%s4320 + $0x38] sm:$0x1f]
        %v5453 = vld [vmem:[%s4320 + $0x48] sm:$0x1f]
        %v5454 = vld [vmem:[%s4320 + $0x58] sm:$0x1f]
        %v5455 = vld [vmem:[%s4320 + $0x68] sm:$0x1f]
        %v5456 = vld [vmem:[%s4320 + $0x78] sm:$0x1f]
        %v5465 = vunpack.c.l.b16 %v5449
        %v5466 = vunpack.c.h.b16 %v5449
        %v5467 = vunpack.c.l.b16 %v5450
        %v5468 = vunpack.c.h.b16 %v5450
        %v5469 = vunpack.c.l.b16 %v5451
        %v5470 = vunpack.c.h.b16 %v5451
        %v5471 = vunpack.c.l.b16 %v5452
        %v5472 = vunpack.c.h.b16 %v5452
        %v5473 = vunpack.c.l.b16 %v5453
        %v5474 = vunpack.c.h.b16 %v5453
        %v5475 = vunpack.c.l.b16 %v5454
        %v5476 = vunpack.c.h.b16 %v5454
        %v5477 = vunpack.c.l.b16 %v5455
        %v5478 = vunpack.c.h.b16 %v5455
        %v5479 = vunpack.c.l.b16 %v5456
        %v5480 = vunpack.c.h.b16 %v5456
        %v5481 = vpack.c.b16 %v5465, %v5465
        %v5482 = vpack.c.b16 %v5466, %v5466
        %v5483 = vpack.c.b16 %v5467, %v5467
        %v5484 = vpack.c.b16 %v5468, %v5468
        %v5485 = vpack.c.b16 %v5469, %v5469
        %v5486 = vpack.c.b16 %v5470, %v5470
        %v5487 = vpack.c.b16 %v5471, %v5471
        %v5488 = vpack.c.b16 %v5472, %v5472
        %v5489 = vpack.c.b16 %v5473, %v5473
        %v5490 = vpack.c.b16 %v5474, %v5474
        %v5491 = vpack.c.b16 %v5475, %v5475
        %v5492 = vpack.c.b16 %v5476, %v5476
        %v5493 = vpack.c.b16 %v5477, %v5477
        %v5494 = vpack.c.b16 %v5478, %v5478
        %v5495 = vpack.c.b16 %v5479, %v5479
        %v5496 = vpack.c.b16 %v5480, %v5480
        %v5498 = vshrl.u32 %v5481, 16
        %v5500 = vrot.slane %v5498, 4
        %v5501 = vshll.u32 %v5481, 16
        %v5503 = vrot.slane %v5501, 5
        %v5504 = vor.u32 %v5500, %v5503
        %v5505 = vrot.slane %v5504, 4
        %v5507 = vshll.u32 %v5482, 16
        %v5509 = vrot.slane %v5507, 5
        %v5510 = vsel %vm4786, %v5505, %v5509
        %v5512 = vshrl.u32 %v5483, 16
        %v5514 = vrot.slane %v5512, 4
        %v5515 = vshll.u32 %v5483, 16
        %v5517 = vrot.slane %v5515, 5
        %v5518 = vor.u32 %v5514, %v5517
        %v5519 = vrot.slane %v5518, 4
        %v5521 = vshll.u32 %v5484, 16
        %v5523 = vrot.slane %v5521, 5
        %v5524 = vsel %vm4786, %v5519, %v5523
        %v5526 = vshrl.u32 %v5485, 16
        %v5528 = vrot.slane %v5526, 4
        %v5529 = vshll.u32 %v5485, 16
        %v5531 = vrot.slane %v5529, 5
        %v5532 = vor.u32 %v5528, %v5531
        %v5533 = vrot.slane %v5532, 4
        %v5535 = vshll.u32 %v5486, 16
        %v5537 = vrot.slane %v5535, 5
        %v5538 = vsel %vm4786, %v5533, %v5537
        %v5540 = vshrl.u32 %v5487, 16
        %v5542 = vrot.slane %v5540, 4
        %v5543 = vshll.u32 %v5487, 16
        %v5545 = vrot.slane %v5543, 5
        %v5546 = vor.u32 %v5542, %v5545
        %v5547 = vrot.slane %v5546, 4
        %v5549 = vshll.u32 %v5488, 16
        %v5551 = vrot.slane %v5549, 5
        %v5552 = vsel %vm4786, %v5547, %v5551
        %v5554 = vshrl.u32 %v5489, 16
        %v5556 = vrot.slane %v5554, 4
        %v5557 = vshll.u32 %v5489, 16
        %v5559 = vrot.slane %v5557, 5
        %v5560 = vor.u32 %v5556, %v5559
        %v5561 = vrot.slane %v5560, 4
        %v5563 = vshll.u32 %v5490, 16
        %v5565 = vrot.slane %v5563, 5
        %v5566 = vsel %vm4786, %v5561, %v5565
        %v5568 = vshrl.u32 %v5491, 16
        %v5570 = vrot.slane %v5568, 4
        %v5571 = vshll.u32 %v5491, 16
        %v5573 = vrot.slane %v5571, 5
        %v5574 = vor.u32 %v5570, %v5573
        %v5575 = vrot.slane %v5574, 4
        %v5577 = vshll.u32 %v5492, 16
        %v5579 = vrot.slane %v5577, 5
        %v5580 = vsel %vm4786, %v5575, %v5579
        %v5582 = vshrl.u32 %v5493, 16
        %v5584 = vrot.slane %v5582, 4
        %v5585 = vshll.u32 %v5493, 16
        %v5587 = vrot.slane %v5585, 5
        %v5588 = vor.u32 %v5584, %v5587
        %v5589 = vrot.slane %v5588, 4
        %v5591 = vshll.u32 %v5494, 16
        %v5593 = vrot.slane %v5591, 5
        %v5594 = vsel %vm4786, %v5589, %v5593
        %v5596 = vshrl.u32 %v5495, 16
        %v5598 = vrot.slane %v5596, 4
        %v5599 = vshll.u32 %v5495, 16
        %v5601 = vrot.slane %v5599, 5
        %v5602 = vor.u32 %v5598, %v5601
        %v5603 = vrot.slane %v5602, 4
        %v5605 = vshll.u32 %v5496, 16
        %v5607 = vrot.slane %v5605, 5
        %v5608 = vsel %vm4786, %v5603, %v5607
        %s5609 = scalar_lea.vmem %s9, 160
        %v5610 = vld [vmem:[%s5609] sm:$0xf]
        %v5611 = vld [vmem:[%s5609 + $0x4] sm:$0xf]
        %v5612 = vld [vmem:[%s5609 + $0x8] sm:$0xf]
        %v5613 = vld [vmem:[%s5609 + $0xc] sm:$0xf]
        %v5614 = vld [vmem:[%s5609 + $0x10] sm:$0xf]
        %v5615 = vld [vmem:[%s5609 + $0x14] sm:$0xf]
        %v5616 = vld [vmem:[%s5609 + $0x18] sm:$0xf]
        %v5617 = vld [vmem:[%s5609 + $0x1c] sm:$0xf]
        %v5618 = vunpack.c.l.b16 %v5510
        %v5619 = vunpack.c.l.b16 %v5524
        %v5620 = vunpack.c.l.b16 %v5538
        %v5621 = vunpack.c.l.b16 %v5552
        %v5622 = vunpack.c.l.b16 %v5566
        %v5623 = vunpack.c.l.b16 %v5580
        %v5624 = vunpack.c.l.b16 %v5594
        %v5625 = vunpack.c.l.b16 %v5608
        %v5626 = vpack.c.b16 %v5619, %v5618
        %v5627 = vpack.c.b16 %v5621, %v5620
        %v5628 = vpack.c.b16 %v5623, %v5622
        %v5629 = vpack.c.b16 %v5625, %v5624
        %v5638 = vunpack.c.l.b16 %v5610
        %v5639 = vunpack.c.l.b16 %v5611
        %v5640 = vunpack.c.l.b16 %v5612
        %v5641 = vunpack.c.l.b16 %v5613
        %v5642 = vunpack.c.l.b16 %v5614
        %v5643 = vunpack.c.l.b16 %v5615
        %v5644 = vunpack.c.l.b16 %v5616
        %v5645 = vunpack.c.l.b16 %v5617
        %v5646 = vpack.c.b16 %v5639, %v5638
        %v5647 = vpack.c.b16 %v5641, %v5640
        %v5648 = vpack.c.b16 %v5643, %v5642
        %v5649 = vpack.c.b16 %v5645, %v5644
        %v5655 = vsel %vm638, %v5626, 0
        %v5658 = vsel %vm638, %v5627, 0
        %v5661 = vsel %vm638, %v5628, 0
        %v5664 = vsel %vm638, %v5629, 0
        %5666 = vmatprep.subr.bf16.mxu0 0
        %5667 = vmatpush1.bf16.msra.mxu0 %v5646
        %5668 = vmatprep.subr.bf16.mxu0 0
        %5669 = vmatpush1.bf16.msra.mxu0 %v5647
        %5670 = vmatprep.subr.bf16.mxu0 0
        %5671 = vmatpush1.bf16.msra.mxu0 %v5648
        %5672 = vmatprep.subr.bf16.mxu0 0
        %5673 = vmatpush1.bf16.msra.mxu0 %v5649
        %5674 = vmatprep.subr.bf16.mxu0 0
        %5675 = vmatpush1.bf16.msra.mxu0 0
        %5676 = vmatprep.subr.bf16.mxu0 0
        %5677 = vmatpush1.bf16.msra.mxu0 0
        %5678 = vmatprep.subr.bf16.mxu0 0
        %5679 = vmatpush1.bf16.msra.mxu0 0
        %5680 = vmatprep.subr.bf16.mxu0 0
        %5681 = vmatpush1.bf16.msra.mxu0 0
        %5682 = vmatprep.subr.bf16.mxu0 0
        %5683 = vmatpush1.bf16.msra.mxu0 0
        %5684 = vmatprep.subr.bf16.mxu0 0
        %5685 = vmatpush1.bf16.msra.mxu0 0
        %5686 = vmatprep.subr.bf16.mxu0 0
        %5687 = vmatpush1.bf16.msra.mxu0 0
        %5688 = vmatprep.subr.bf16.mxu0 0
        %5689 = vmatpush1.bf16.msra.mxu0 0
        %5690 = vmatprep.subr.bf16.mxu0 0
        %5691 = vmatpush1.bf16.msra.mxu0 0
        %5692 = vmatprep.subr.bf16.mxu0 0
        %5693 = vmatpush1.bf16.msra.mxu0 0
        %5694 = vmatprep.subr.bf16.mxu0 0
        %5695 = vmatpush1.bf16.msra.mxu0 0
        %5696 = vmatprep.subr.bf16.mxu0 0
        %5697 = vmatpush1.bf16.msra.mxu0 0
        %5698 = vmatprep.mubr.bf16.mxu0 0
        %5699 = vmatmul.mubr.bf16.gmra.mrb[0].mxu0 %v5655
        %v5700 = vpop.f32.mrb[0].mxu0
        %v5701 = vadd.f32 0.0, %v5700
        %v5702 = vpop.f32.mrb[0].mxu0
        %v5703 = vpop.f32.mrb[0].mxu0
        %v5704 = vadd.f32 0.0, %v5703
        %v5705 = vpop.f32.mrb[0].mxu0
        %5706 = vmatprep.mubr.bf16.mxu0 0
        %5707 = vmatmul.mubr.bf16.gmra.mrb[0].mxu0 %v5658
        %v5708 = vpop.f32.mrb[0].mxu0
        %v5709 = vadd.f32 0.0, %v5708
        %v5710 = vpop.f32.mrb[0].mxu0
        %v5711 = vpop.f32.mrb[0].mxu0
        %v5712 = vadd.f32 0.0, %v5711
        %v5713 = vpop.f32.mrb[0].mxu0
        %5714 = vmatprep.mubr.bf16.mxu0 0
        %5715 = vmatmul.mubr.bf16.gmra.mrb[0].mxu0 %v5661
        %v5716 = vpop.f32.mrb[0].mxu0
        %v5717 = vadd.f32 0.0, %v5716
        %v5718 = vpop.f32.mrb[0].mxu0
        %v5719 = vpop.f32.mrb[0].mxu0
        %v5720 = vadd.f32 0.0, %v5719
        %v5721 = vpop.f32.mrb[0].mxu0
        %5722 = vmatprep.mubr.bf16.mxu0 0
        %5723 = vmatmul.mubr.bf16.gmra.mrb[0].mxu0 %v5664
        %v5724 = vpop.f32.mrb[0].mxu0
        %v5725 = vadd.f32 0.0, %v5724
        %v5726 = vpop.f32.mrb[0].mxu0
        %v5727 = vpop.f32.mrb[0].mxu0
        %v5728 = vadd.f32 0.0, %v5727
        %v5729 = vpop.f32.mrb[0].mxu0
        %5730 = vdwg.mxu0
        %v5731 = vadd.f32 %v5441, %v5701
        %v5732 = vadd.f32 %v5442, %v5704
        %v5733 = vadd.f32 %v5443, %v5709
        %v5734 = vadd.f32 %v5444, %v5712
        %v5735 = vadd.f32 %v5445, %v5717
        %v5736 = vadd.f32 %v5446, %v5720
        %v5737 = vadd.f32 %v5447, %v5725
        %v5738 = vadd.f32 %v5448, %v5728
        %s5739 = scalar_lea.vmem [#allocation5], 32
        %v5740 = vld [vmem:[%s5739] sm:$0x80]
        %v5741 = vld [vmem:[%s5739 + $0x8] sm:$0xf]
        %v5742 = vld [vmem:[%s5739 + $0x10] sm:$0x80]
        %v5743 = vld [vmem:[%s5739 + $0x18] sm:$0xf]
        %v5744 = vld [vmem:[%s5739 + $0x20] sm:$0x80]
        %v5745 = vld [vmem:[%s5739 + $0x28] sm:$0xf]
        %v5746 = vld [vmem:[%s5739 + $0x30] sm:$0x80]
        %v5747 = vld [vmem:[%s5739 + $0x38] sm:$0xf]
        %v5748 = vld [vmem:[%s5739 + $0x40] sm:$0x80]
        %v5749 = vld [vmem:[%s5739 + $0x48] sm:$0xf]
        %v5750 = vld [vmem:[%s5739 + $0x50] sm:$0x80]
        %v5751 = vld [vmem:[%s5739 + $0x58] sm:$0xf]
        %v5752 = vld [vmem:[%s5739 + $0x60] sm:$0x80]
        %v5753 = vld [vmem:[%s5739 + $0x68] sm:$0xf]
        %v5754 = vld [vmem:[%s5739 + $0x70] sm:$0x80]
        %v5755 = vld [vmem:[%s5739 + $0x78] sm:$0xf]
        %v5772 = vunpack.c.h.b16 %v5740
        %v5773 = vunpack.c.l.b16 %v5741
        %v5774 = vunpack.c.h.b16 %v5742
        %v5775 = vunpack.c.l.b16 %v5743
        %v5776 = vunpack.c.h.b16 %v5744
        %v5777 = vunpack.c.l.b16 %v5745
        %v5778 = vunpack.c.h.b16 %v5746
        %v5779 = vunpack.c.l.b16 %v5747
        %v5780 = vunpack.c.h.b16 %v5748
        %v5781 = vunpack.c.l.b16 %v5749
        %v5782 = vunpack.c.h.b16 %v5750
        %v5783 = vunpack.c.l.b16 %v5751
        %v5784 = vunpack.c.h.b16 %v5752
        %v5785 = vunpack.c.l.b16 %v5753
        %v5786 = vunpack.c.h.b16 %v5754
        %v5787 = vunpack.c.l.b16 %v5755
        %v5788 = vpack.c.b16 %v5772, %v5772
        %v5789 = vpack.c.b16 %v5773, %v5773
        %v5790 = vpack.c.b16 %v5774, %v5774
        %v5791 = vpack.c.b16 %v5775, %v5775
        %v5792 = vpack.c.b16 %v5776, %v5776
        %v5793 = vpack.c.b16 %v5777, %v5777
        %v5794 = vpack.c.b16 %v5778, %v5778
        %v5795 = vpack.c.b16 %v5779, %v5779
        %v5796 = vpack.c.b16 %v5780, %v5780
        %v5797 = vpack.c.b16 %v5781, %v5781
        %v5798 = vpack.c.b16 %v5782, %v5782
        %v5799 = vpack.c.b16 %v5783, %v5783
        %v5800 = vpack.c.b16 %v5784, %v5784
        %v5801 = vpack.c.b16 %v5785, %v5785
        %v5802 = vpack.c.b16 %v5786, %v5786
        %v5803 = vpack.c.b16 %v5787, %v5787
        %v5805 = vshrl.u32 %v5788, 16
        %v5807 = vrot.slane %v5805, 7
        %v5808 = vrot.slane %v5807, 4
        %v5810 = vshrl.u32 %v5789, 16
        %v5812 = vrot.slane %v5810, 7
        %v5813 = vshll.u32 %v5789, 16
        %v5815 = vor.u32 %v5812, %v5813
        %v5816 = vsel %vm4396, %v5808, %v5815
        %v5818 = vshrl.u32 %v5790, 16
        %v5820 = vrot.slane %v5818, 7
        %v5821 = vrot.slane %v5820, 4
        %v5823 = vshrl.u32 %v5791, 16
        %v5825 = vrot.slane %v5823, 7
        %v5826 = vshll.u32 %v5791, 16
        %v5828 = vor.u32 %v5825, %v5826
        %v5829 = vsel %vm4396, %v5821, %v5828
        %v5831 = vshrl.u32 %v5792, 16
        %v5833 = vrot.slane %v5831, 7
        %v5834 = vrot.slane %v5833, 4
        %v5836 = vshrl.u32 %v5793, 16
        %v5838 = vrot.slane %v5836, 7
        %v5839 = vshll.u32 %v5793, 16
        %v5841 = vor.u32 %v5838, %v5839
        %v5842 = vsel %vm4396, %v5834, %v5841
        %v5844 = vshrl.u32 %v5794, 16
        %v5846 = vrot.slane %v5844, 7
        %v5847 = vrot.slane %v5846, 4
        %v5849 = vshrl.u32 %v5795, 16
        %v5851 = vrot.slane %v5849, 7
        %v5852 = vshll.u32 %v5795, 16
        %v5854 = vor.u32 %v5851, %v5852
        %v5855 = vsel %vm4396, %v5847, %v5854
        %v5857 = vshrl.u32 %v5796, 16
        %v5859 = vrot.slane %v5857, 7
        %v5860 = vrot.slane %v5859, 4
        %v5862 = vshrl.u32 %v5797, 16
        %v5864 = vrot.slane %v5862, 7
        %v5865 = vshll.u32 %v5797, 16
        %v5867 = vor.u32 %v5864, %v5865
        %v5868 = vsel %vm4396, %v5860, %v5867
        %v5870 = vshrl.u32 %v5798, 16
        %v5872 = vrot.slane %v5870, 7
        %v5873 = vrot.slane %v5872, 4
        %v5875 = vshrl.u32 %v5799, 16
        %v5877 = vrot.slane %v5875, 7
        %v5878 = vshll.u32 %v5799, 16
        %v5880 = vor.u32 %v5877, %v5878
        %v5881 = vsel %vm4396, %v5873, %v5880
        %v5883 = vshrl.u32 %v5800, 16
        %v5885 = vrot.slane %v5883, 7
        %v5886 = vrot.slane %v5885, 4
        %v5888 = vshrl.u32 %v5801, 16
        %v5890 = vrot.slane %v5888, 7
        %v5891 = vshll.u32 %v5801, 16
        %v5893 = vor.u32 %v5890, %v5891
        %v5894 = vsel %vm4396, %v5886, %v5893
        %v5896 = vshrl.u32 %v5802, 16
        %v5898 = vrot.slane %v5896, 7
        %v5899 = vrot.slane %v5898, 4
        %v5901 = vshrl.u32 %v5803, 16
        %v5903 = vrot.slane %v5901, 7
        %v5904 = vshll.u32 %v5803, 16
        %v5906 = vor.u32 %v5903, %v5904
        %v5907 = vsel %vm4396, %v5899, %v5906
        %s5908 = scalar_lea.vmem %s9, 192
        %v5909 = vld [vmem:[%s5908] sm:$0xf]
        %v5910 = vld [vmem:[%s5908 + $0x4] sm:$0xf]
        %v5911 = vld [vmem:[%s5908 + $0x8] sm:$0xf]
        %v5912 = vld [vmem:[%s5908 + $0xc] sm:$0xf]
        %v5913 = vld [vmem:[%s5908 + $0x10] sm:$0xf]
        %v5914 = vld [vmem:[%s5908 + $0x14] sm:$0xf]
        %v5915 = vld [vmem:[%s5908 + $0x18] sm:$0xf]
        %v5916 = vld [vmem:[%s5908 + $0x1c] sm:$0xf]
        %v5917 = vunpack.c.l.b16 %v5816
        %v5918 = vunpack.c.l.b16 %v5829
        %v5919 = vunpack.c.l.b16 %v5842
        %v5920 = vunpack.c.l.b16 %v5855
        %v5921 = vunpack.c.l.b16 %v5868
        %v5922 = vunpack.c.l.b16 %v5881
        %v5923 = vunpack.c.l.b16 %v5894
        %v5924 = vunpack.c.l.b16 %v5907
        %v5925 = vpack.c.b16 %v5918, %v5917
        %v5926 = vpack.c.b16 %v5920, %v5919
        %v5927 = vpack.c.b16 %v5922, %v5921
        %v5928 = vpack.c.b16 %v5924, %v5923
        %v5937 = vunpack.c.l.b16 %v5909
        %v5938 = vunpack.c.l.b16 %v5910
        %v5939 = vunpack.c.l.b16 %v5911
        %v5940 = vunpack.c.l.b16 %v5912
        %v5941 = vunpack.c.l.b16 %v5913
        %v5942 = vunpack.c.l.b16 %v5914
        %v5943 = vunpack.c.l.b16 %v5915
        %v5944 = vunpack.c.l.b16 %v5916
        %v5945 = vpack.c.b16 %v5938, %v5937
        %v5946 = vpack.c.b16 %v5940, %v5939
        %v5947 = vpack.c.b16 %v5942, %v5941
        %v5948 = vpack.c.b16 %v5944, %v5943
        %v5954 = vsel %vm638, %v5925, 0
        %v5957 = vsel %vm638, %v5926, 0
        %v5960 = vsel %vm638, %v5927, 0
        %v5963 = vsel %vm638, %v5928, 0
        %5965 = vmatprep.subr.bf16.mxu0 0
        %5966 = vmatpush1.bf16.msra.mxu0 %v5945
        %5967 = vmatprep.subr.bf16.mxu0 0
        %5968 = vmatpush1.bf16.msra.mxu0 %v5946
        %5969 = vmatprep.subr.bf16.mxu0 0
        %5970 = vmatpush1.bf16.msra.mxu0 %v5947
        %5971 = vmatprep.subr.bf16.mxu0 0
        %5972 = vmatpush1.bf16.msra.mxu0 %v5948
        %5973 = vmatprep.subr.bf16.mxu0 0
        %5974 = vmatpush1.bf16.msra.mxu0 0
        %5975 = vmatprep.subr.bf16.mxu0 0
        %5976 = vmatpush1.bf16.msra.mxu0 0
        %5977 = vmatprep.subr.bf16.mxu0 0
        %5978 = vmatpush1.bf16.msra.mxu0 0
        %5979 = vmatprep.subr.bf16.mxu0 0
        %5980 = vmatpush1.bf16.msra.mxu0 0
        %5981 = vmatprep.subr.bf16.mxu0 0
        %5982 = vmatpush1.bf16.msra.mxu0 0
        %5983 = vmatprep.subr.bf16.mxu0 0
        %5984 = vmatpush1.bf16.msra.mxu0 0
        %5985 = vmatprep.subr.bf16.mxu0 0
        %5986 = vmatpush1.bf16.msra.mxu0 0
        %5987 = vmatprep.subr.bf16.mxu0 0
        %5988 = vmatpush1.bf16.msra.mxu0 0
        %5989 = vmatprep.subr.bf16.mxu0 0
        %5990 = vmatpush1.bf16.msra.mxu0 0
        %5991 = vmatprep.subr.bf16.mxu0 0
        %5992 = vmatpush1.bf16.msra.mxu0 0
        %5993 = vmatprep.subr.bf16.mxu0 0
        %5994 = vmatpush1.bf16.msra.mxu0 0
        %5995 = vmatprep.subr.bf16.mxu0 0
        %5996 = vmatpush1.bf16.msra.mxu0 0
        %5997 = vmatprep.mubr.bf16.mxu0 0
        %5998 = vmatmul.mubr.bf16.gmra.mrb[0].mxu0 %v5954
        %v5999 = vpop.f32.mrb[0].mxu0
        %v6000 = vadd.f32 0.0, %v5999
        %v6001 = vpop.f32.mrb[0].mxu0
        %v6002 = vpop.f32.mrb[0].mxu0
        %v6003 = vadd.f32 0.0, %v6002
        %v6004 = vpop.f32.mrb[0].mxu0
        %6005 = vmatprep.mubr.bf16.mxu0 0
        %6006 = vmatmul.mubr.bf16.gmra.mrb[0].mxu0 %v5957
        %v6007 = vpop.f32.mrb[0].mxu0
        %v6008 = vadd.f32 0.0, %v6007
        %v6009 = vpop.f32.mrb[0].mxu0
        %v6010 = vpop.f32.mrb[0].mxu0
        %v6011 = vadd.f32 0.0, %v6010
        %v6012 = vpop.f32.mrb[0].mxu0
        %6013 = vmatprep.mubr.bf16.mxu0 0
        %6014 = vmatmul.mubr.bf16.gmra.mrb[0].mxu0 %v5960
        %v6015 = vpop.f32.mrb[0].mxu0
        %v6016 = vadd.f32 0.0, %v6015
        %v6017 = vpop.f32.mrb[0].mxu0
        %v6018 = vpop.f32.mrb[0].mxu0
        %v6019 = vadd.f32 0.0, %v6018
        %v6020 = vpop.f32.mrb[0].mxu0
        %6021 = vmatprep.mubr.bf16.mxu0 0
        %6022 = vmatmul.mubr.bf16.gmra.mrb[0].mxu0 %v5963
        %v6023 = vpop.f32.mrb[0].mxu0
        %v6024 = vadd.f32 0.0, %v6023
        %v6025 = vpop.f32.mrb[0].mxu0
        %v6026 = vpop.f32.mrb[0].mxu0
        %v6027 = vadd.f32 0.0, %v6026
        %v6028 = vpop.f32.mrb[0].mxu0
        %6029 = vdwg.mxu0
        %v6030 = vadd.f32 %v5731, %v6000
        %v6031 = vadd.f32 %v5732, %v6003
        %v6032 = vadd.f32 %v5733, %v6008
        %v6033 = vadd.f32 %v5734, %v6011
        %v6034 = vadd.f32 %v5735, %v6016
        %v6035 = vadd.f32 %v5736, %v6019
        %v6036 = vadd.f32 %v5737, %v6024
        %v6037 = vadd.f32 %v5738, %v6027
        %s6038 = scalar_lea.vmem %s9, 224
        %v6039 = vld [vmem:[%s6038] sm:$0xf]
        %v6040 = vld [vmem:[%s6038 + $0x4] sm:$0xf]
        %v6041 = vld [vmem:[%s6038 + $0x8] sm:$0xf]
        %v6042 = vld [vmem:[%s6038 + $0xc] sm:$0xf]
        %v6043 = vld [vmem:[%s6038 + $0x10] sm:$0xf]
        %v6044 = vld [vmem:[%s6038 + $0x14] sm:$0xf]
        %v6045 = vld [vmem:[%s6038 + $0x18] sm:$0xf]
        %v6046 = vld [vmem:[%s6038 + $0x1c] sm:$0xf]
        %v6047 = vpack.c.b16 %v5775, %v5773
        %v6048 = vpack.c.b16 %v5779, %v5777
        %v6049 = vpack.c.b16 %v5783, %v5781
        %v6050 = vpack.c.b16 %v5787, %v5785
        %v6059 = vunpack.c.l.b16 %v6039
        %v6060 = vunpack.c.l.b16 %v6040
        %v6061 = vunpack.c.l.b16 %v6041
        %v6062 = vunpack.c.l.b16 %v6042
        %v6063 = vunpack.c.l.b16 %v6043
        %v6064 = vunpack.c.l.b16 %v6044
        %v6065 = vunpack.c.l.b16 %v6045
        %v6066 = vunpack.c.l.b16 %v6046
        %v6067 = vpack.c.b16 %v6060, %v6059
        %v6068 = vpack.c.b16 %v6062, %v6061
        %v6069 = vpack.c.b16 %v6064, %v6063
        %v6070 = vpack.c.b16 %v6066, %v6065
        %v6076 = vsel %vm638, %v6047, 0
        %v6079 = vsel %vm638, %v6048, 0
        %v6082 = vsel %vm638, %v6049, 0
        %v6085 = vsel %vm638, %v6050, 0
        %6087 = vmatprep.subr.bf16.mxu0 0
        %6088 = vmatpush1.bf16.msra.mxu0 %v6067
        %6089 = vmatprep.subr.bf16.mxu0 0
        %6090 = vmatpush1.bf16.msra.mxu0 %v6068
        %6091 = vmatprep.subr.bf16.mxu0 0
        %6092 = vmatpush1.bf16.msra.mxu0 %v6069
        %6093 = vmatprep.subr.bf16.mxu0 0
        %6094 = vmatpush1.bf16.msra.mxu0 %v6070
        %6095 = vmatprep.subr.bf16.mxu0 0
        %6096 = vmatpush1.bf16.msra.mxu0 0
        %6097 = vmatprep.subr.bf16.mxu0 0
        %6098 = vmatpush1.bf16.msra.mxu0 0
        %6099 = vmatprep.subr.bf16.mxu0 0
        %6100 = vmatpush1.bf16.msra.mxu0 0
        %6101 = vmatprep.subr.bf16.mxu0 0
        %6102 = vmatpush1.bf16.msra.mxu0 0
        %6103 = vmatprep.subr.bf16.mxu0 0
        %6104 = vmatpush1.bf16.msra.mxu0 0
        %6105 = vmatprep.subr.bf16.mxu0 0
        %6106 = vmatpush1.bf16.msra.mxu0 0
        %6107 = vmatprep.subr.bf16.mxu0 0
        %6108 = vmatpush1.bf16.msra.mxu0 0
        %6109 = vmatprep.subr.bf16.mxu0 0
        %6110 = vmatpush1.bf16.msra.mxu0 0
        %6111 = vmatprep.subr.bf16.mxu0 0
        %6112 = vmatpush1.bf16.msra.mxu0 0
        %6113 = vmatprep.subr.bf16.mxu0 0
        %6114 = vmatpush1.bf16.msra.mxu0 0
        %6115 = vmatprep.subr.bf16.mxu0 0
        %6116 = vmatpush1.bf16.msra.mxu0 0
        %6117 = vmatprep.subr.bf16.mxu0 0
        %6118 = vmatpush1.bf16.msra.mxu0 0
        %6119 = vmatprep.mubr.bf16.mxu0 0
        %6120 = vmatmul.mubr.bf16.gmra.mrb[0].mxu0 %v6076
        %v6121 = vpop.f32.mrb[0].mxu0
        %v6122 = vadd.f32 0.0, %v6121
        %v6123 = vpop.f32.mrb[0].mxu0
        %v6124 = vpop.f32.mrb[0].mxu0
        %v6125 = vadd.f32 0.0, %v6124
        %v6126 = vpop.f32.mrb[0].mxu0
        %6127 = vmatprep.mubr.bf16.mxu0 0
        %6128 = vmatmul.mubr.bf16.gmra.mrb[0].mxu0 %v6079
        %v6129 = vpop.f32.mrb[0].mxu0
        %v6130 = vadd.f32 0.0, %v6129
        %v6131 = vpop.f32.mrb[0].mxu0
        %v6132 = vpop.f32.mrb[0].mxu0
        %v6133 = vadd.f32 0.0, %v6132
        %v6134 = vpop.f32.mrb[0].mxu0
        %6135 = vmatprep.mubr.bf16.mxu0 0
        %6136 = vmatmul.mubr.bf16.gmra.mrb[0].mxu0 %v6082
        %v6137 = vpop.f32.mrb[0].mxu0
        %v6138 = vadd.f32 0.0, %v6137
        %v6139 = vpop.f32.mrb[0].mxu0
        %v6140 = vpop.f32.mrb[0].mxu0
        %v6141 = vadd.f32 0.0, %v6140
        %v6142 = vpop.f32.mrb[0].mxu0
        %6143 = vmatprep.mubr.bf16.mxu0 0
        %6144 = vmatmul.mubr.bf16.gmra.mrb[0].mxu0 %v6085
        %v6145 = vpop.f32.mrb[0].mxu0
        %v6146 = vadd.f32 0.0, %v6145
        %v6147 = vpop.f32.mrb[0].mxu0
        %v6148 = vpop.f32.mrb[0].mxu0
        %v6149 = vadd.f32 0.0, %v6148
        %v6150 = vpop.f32.mrb[0].mxu0
        %6151 = vdwg.mxu0
        %v6152 = vadd.f32 %v6030, %v6122
        %v6153 = vadd.f32 %v6031, %v6125
        %v6154 = vadd.f32 %v6032, %v6130
        %v6155 = vadd.f32 %v6033, %v6133
        %v6156 = vadd.f32 %v6034, %v6138
        %v6157 = vadd.f32 %v6035, %v6141
        %v6158 = vadd.f32 %v6036, %v6146
        %v6159 = vadd.f32 %v6037, %v6149
        %v6160 = vld [vmem:[%s5739 + $0x8] sm:$0x1f]
        %v6161 = vld [vmem:[%s5739 + $0x18] sm:$0x1f]
        %v6162 = vld [vmem:[%s5739 + $0x28] sm:$0x1f]
        %v6163 = vld [vmem:[%s5739 + $0x38] sm:$0x1f]
        %v6164 = vld [vmem:[%s5739 + $0x48] sm:$0x1f]
        %v6165 = vld [vmem:[%s5739 + $0x58] sm:$0x1f]
        %v6166 = vld [vmem:[%s5739 + $0x68] sm:$0x1f]
        %v6167 = vld [vmem:[%s5739 + $0x78] sm:$0x1f]
        %v6176 = vunpack.c.l.b16 %v6160
        %v6177 = vunpack.c.h.b16 %v6160
        %v6178 = vunpack.c.l.b16 %v6161
        %v6179 = vunpack.c.h.b16 %v6161
        %v6180 = vunpack.c.l.b16 %v6162
        %v6181 = vunpack.c.h.b16 %v6162
        %v6182 = vunpack.c.l.b16 %v6163
        %v6183 = vunpack.c.h.b16 %v6163
        %v6184 = vunpack.c.l.b16 %v6164
        %v6185 = vunpack.c.h.b16 %v6164
        %v6186 = vunpack.c.l.b16 %v6165
        %v6187 = vunpack.c.h.b16 %v6165
        %v6188 = vunpack.c.l.b16 %v6166
        %v6189 = vunpack.c.h.b16 %v6166
        %v6190 = vunpack.c.l.b16 %v6167
        %v6191 = vunpack.c.h.b16 %v6167
        %v6192 = vpack.c.b16 %v6176, %v6176
        %v6193 = vpack.c.b16 %v6177, %v6177
        %v6194 = vpack.c.b16 %v6178, %v6178
        %v6195 = vpack.c.b16 %v6179, %v6179
        %v6196 = vpack.c.b16 %v6180, %v6180
        %v6197 = vpack.c.b16 %v6181, %v6181
        %v6198 = vpack.c.b16 %v6182, %v6182
        %v6199 = vpack.c.b16 %v6183, %v6183
        %v6200 = vpack.c.b16 %v6184, %v6184
        %v6201 = vpack.c.b16 %v6185, %v6185
        %v6202 = vpack.c.b16 %v6186, %v6186
        %v6203 = vpack.c.b16 %v6187, %v6187
        %v6204 = vpack.c.b16 %v6188, %v6188
        %v6205 = vpack.c.b16 %v6189, %v6189
        %v6206 = vpack.c.b16 %v6190, %v6190
        %v6207 = vpack.c.b16 %v6191, %v6191
        %v6209 = vshrl.u32 %v6192, 16
        %v6211 = vrot.slane %v6209, 4
        %v6212 = vshll.u32 %v6192, 16
        %v6214 = vrot.slane %v6212, 5
        %v6215 = vor.u32 %v6211, %v6214
        %v6216 = vrot.slane %v6215, 4
        %v6218 = vshll.u32 %v6193, 16
        %v6220 = vrot.slane %v6218, 5
        %v6221 = vsel %vm4786, %v6216, %v6220
        %v6223 = vshrl.u32 %v6194, 16
        %v6225 = vrot.slane %v6223, 4
        %v6226 = vshll.u32 %v6194, 16
        %v6228 = vrot.slane %v6226, 5
        %v6229 = vor.u32 %v6225, %v6228
        %v6230 = vrot.slane %v6229, 4
        %v6232 = vshll.u32 %v6195, 16
        %v6234 = vrot.slane %v6232, 5
        %v6235 = vsel %vm4786, %v6230, %v6234
        %v6237 = vshrl.u32 %v6196, 16
        %v6239 = vrot.slane %v6237, 4
        %v6240 = vshll.u32 %v6196, 16
        %v6242 = vrot.slane %v6240, 5
        %v6243 = vor.u32 %v6239, %v6242
        %v6244 = vrot.slane %v6243, 4
        %v6246 = vshll.u32 %v6197, 16
        %v6248 = vrot.slane %v6246, 5
        %v6249 = vsel %vm4786, %v6244, %v6248
        %v6251 = vshrl.u32 %v6198, 16
        %v6253 = vrot.slane %v6251, 4
        %v6254 = vshll.u32 %v6198, 16
        %v6256 = vrot.slane %v6254, 5
        %v6257 = vor.u32 %v6253, %v6256
        %v6258 = vrot.slane %v6257, 4
        %v6260 = vshll.u32 %v6199, 16
        %v6262 = vrot.slane %v6260, 5
        %v6263 = vsel %vm4786, %v6258, %v6262
        %v6265 = vshrl.u32 %v6200, 16
        %v6267 = vrot.slane %v6265, 4
        %v6268 = vshll.u32 %v6200, 16
        %v6270 = vrot.slane %v6268, 5
        %v6271 = vor.u32 %v6267, %v6270
        %v6272 = vrot.slane %v6271, 4
        %v6274 = vshll.u32 %v6201, 16
        %v6276 = vrot.slane %v6274, 5
        %v6277 = vsel %vm4786, %v6272, %v6276
        %v6279 = vshrl.u32 %v6202, 16
        %v6281 = vrot.slane %v6279, 4
        %v6282 = vshll.u32 %v6202, 16
        %v6284 = vrot.slane %v6282, 5
        %v6285 = vor.u32 %v6281, %v6284
        %v6286 = vrot.slane %v6285, 4
        %v6288 = vshll.u32 %v6203, 16
        %v6290 = vrot.slane %v6288, 5
        %v6291 = vsel %vm4786, %v6286, %v6290
        %v6293 = vshrl.u32 %v6204, 16
        %v6295 = vrot.slane %v6293, 4
        %v6296 = vshll.u32 %v6204, 16
        %v6298 = vrot.slane %v6296, 5
        %v6299 = vor.u32 %v6295, %v6298
        %v6300 = vrot.slane %v6299, 4
        %v6302 = vshll.u32 %v6205, 16
        %v6304 = vrot.slane %v6302, 5
        %v6305 = vsel %vm4786, %v6300, %v6304
        %v6307 = vshrl.u32 %v6206, 16
        %v6309 = vrot.slane %v6307, 4
        %v6310 = vshll.u32 %v6206, 16
        %v6312 = vrot.slane %v6310, 5
        %v6313 = vor.u32 %v6309, %v6312
        %v6314 = vrot.slane %v6313, 4
        %v6316 = vshll.u32 %v6207, 16
        %v6318 = vrot.slane %v6316, 5
        %v6319 = vsel %vm4786, %v6314, %v6318
        %s6320 = scalar_lea.vmem %s9, 256
        %v6321 = vld [vmem:[%s6320] sm:$0xf]
        %v6322 = vld [vmem:[%s6320 + $0x4] sm:$0xf]
        %v6323 = vld [vmem:[%s6320 + $0x8] sm:$0xf]
        %v6324 = vld [vmem:[%s6320 + $0xc] sm:$0xf]
        %v6325 = vld [vmem:[%s6320 + $0x10] sm:$0xf]
        %v6326 = vld [vmem:[%s6320 + $0x14] sm:$0xf]
        %v6327 = vld [vmem:[%s6320 + $0x18] sm:$0xf]
        %v6328 = vld [vmem:[%s6320 + $0x1c] sm:$0xf]
        %v6329 = vunpack.c.l.b16 %v6221
        %v6330 = vunpack.c.l.b16 %v6235
        %v6331 = vunpack.c.l.b16 %v6249
        %v6332 = vunpack.c.l.b16 %v6263
        %v6333 = vunpack.c.l.b16 %v6277
        %v6334 = vunpack.c.l.b16 %v6291
        %v6335 = vunpack.c.l.b16 %v6305
        %v6336 = vunpack.c.l.b16 %v6319
        %v6337 = vpack.c.b16 %v6330, %v6329
        %v6338 = vpack.c.b16 %v6332, %v6331
        %v6339 = vpack.c.b16 %v6334, %v6333
        %v6340 = vpack.c.b16 %v6336, %v6335
        %v6349 = vunpack.c.l.b16 %v6321
        %v6350 = vunpack.c.l.b16 %v6322
        %v6351 = vunpack.c.l.b16 %v6323
        %v6352 = vunpack.c.l.b16 %v6324
        %v6353 = vunpack.c.l.b16 %v6325
        %v6354 = vunpack.c.l.b16 %v6326
        %v6355 = vunpack.c.l.b16 %v6327
        %v6356 = vunpack.c.l.b16 %v6328
        %v6357 = vpack.c.b16 %v6350, %v6349
        %v6358 = vpack.c.b16 %v6352, %v6351
        %v6359 = vpack.c.b16 %v6354, %v6353
        %v6360 = vpack.c.b16 %v6356, %v6355
        %v6366 = vsel %vm638, %v6337, 0
        %v6369 = vsel %vm638, %v6338, 0
        %v6372 = vsel %vm638, %v6339, 0
        %v6375 = vsel %vm638, %v6340, 0
        %6377 = vmatprep.subr.bf16.mxu0 0
        %6378 = vmatpush1.bf16.msra.mxu0 %v6357
        %6379 = vmatprep.subr.bf16.mxu0 0
        %6380 = vmatpush1.bf16.msra.mxu0 %v6358
        %6381 = vmatprep.subr.bf16.mxu0 0
        %6382 = vmatpush1.bf16.msra.mxu0 %v6359
        %6383 = vmatprep.subr.bf16.mxu0 0
        %6384 = vmatpush1.bf16.msra.mxu0 %v6360
        %6385 = vmatprep.subr.bf16.mxu0 0
        %6386 = vmatpush1.bf16.msra.mxu0 0
        %6387 = vmatprep.subr.bf16.mxu0 0
        %6388 = vmatpush1.bf16.msra.mxu0 0
        %6389 = vmatprep.subr.bf16.mxu0 0
        %6390 = vmatpush1.bf16.msra.mxu0 0
        %6391 = vmatprep.subr.bf16.mxu0 0
        %6392 = vmatpush1.bf16.msra.mxu0 0
        %6393 = vmatprep.subr.bf16.mxu0 0
        %6394 = vmatpush1.bf16.msra.mxu0 0
        %6395 = vmatprep.subr.bf16.mxu0 0
        %6396 = vmatpush1.bf16.msra.mxu0 0
        %6397 = vmatprep.subr.bf16.mxu0 0
        %6398 = vmatpush1.bf16.msra.mxu0 0
        %6399 = vmatprep.subr.bf16.mxu0 0
        %6400 = vmatpush1.bf16.msra.mxu0 0
        %6401 = vmatprep.subr.bf16.mxu0 0
        %6402 = vmatpush1.bf16.msra.mxu0 0
        %6403 = vmatprep.subr.bf16.mxu0 0
        %6404 = vmatpush1.bf16.msra.mxu0 0
        %6405 = vmatprep.subr.bf16.mxu0 0
        %6406 = vmatpush1.bf16.msra.mxu0 0
        %6407 = vmatprep.subr.bf16.mxu0 0
        %6408 = vmatpush1.bf16.msra.mxu0 0
        %6409 = vmatprep.mubr.bf16.mxu0 0
        %6410 = vmatmul.mubr.bf16.gmra.mrb[0].mxu0 %v6366
        %v6411 = vpop.f32.mrb[0].mxu0
        %v6412 = vadd.f32 0.0, %v6411
        %v6413 = vpop.f32.mrb[0].mxu0
        %v6414 = vpop.f32.mrb[0].mxu0
        %v6415 = vadd.f32 0.0, %v6414
        %v6416 = vpop.f32.mrb[0].mxu0
        %6417 = vmatprep.mubr.bf16.mxu0 0
        %6418 = vmatmul.mubr.bf16.gmra.mrb[0].mxu0 %v6369
        %v6419 = vpop.f32.mrb[0].mxu0
        %v6420 = vadd.f32 0.0, %v6419
        %v6421 = vpop.f32.mrb[0].mxu0
        %v6422 = vpop.f32.mrb[0].mxu0
        %v6423 = vadd.f32 0.0, %v6422
        %v6424 = vpop.f32.mrb[0].mxu0
        %6425 = vmatprep.mubr.bf16.mxu0 0
        %6426 = vmatmul.mubr.bf16.gmra.mrb[0].mxu0 %v6372
        %v6427 = vpop.f32.mrb[0].mxu0
        %v6428 = vadd.f32 0.0, %v6427
        %v6429 = vpop.f32.mrb[0].mxu0
        %v6430 = vpop.f32.mrb[0].mxu0
        %v6431 = vadd.f32 0.0, %v6430
        %v6432 = vpop.f32.mrb[0].mxu0
        %6433 = vmatprep.mubr.bf16.mxu0 0
        %6434 = vmatmul.mubr.bf16.gmra.mrb[0].mxu0 %v6375
        %v6435 = vpop.f32.mrb[0].mxu0
        %v6436 = vadd.f32 0.0, %v6435
        %v6437 = vpop.f32.mrb[0].mxu0
        %v6438 = vpop.f32.mrb[0].mxu0
        %v6439 = vadd.f32 0.0, %v6438
        %v6440 = vpop.f32.mrb[0].mxu0
        %6441 = vdwg.mxu0
        %v6442 = vadd.f32 %v6152, %v6412
        %v6443 = vadd.f32 %v6153, %v6415
        %v6444 = vadd.f32 %v6154, %v6420
        %v6445 = vadd.f32 %v6155, %v6423
        %v6446 = vadd.f32 %v6156, %v6428
        %v6447 = vadd.f32 %v6157, %v6431
        %v6448 = vadd.f32 %v6158, %v6436
        %v6449 = vadd.f32 %v6159, %v6439
        %v6450 = vld [vmem:[%s10] sm:$0x1]
        %v6452 = vlaneseq
        %v6453 = vshrl.u32 %v6452, 7
        %v6454 = vsub.s32 0, %v6453
        %v6455 = vrot.slane %v6450, %v6454
        %v6457 = vadd.f32 %v6442, %v6455
        %v6458 = vadd.f32 %v6443, %v6455
        %v6459 = vadd.f32 %v6444, %v6455
        %v6460 = vadd.f32 %v6445, %v6455
        %v6461 = vadd.f32 %v6446, %v6455
        %v6462 = vadd.f32 %v6447, %v6455
        %v6463 = vadd.f32 %v6448, %v6455
        %v6464 = vadd.f32 %v6449, %v6455
        %v6465 = vmax.f32 %v6457, 0.0
        %v6466 = vmax.f32 %v6458, 0.0
        %v6467 = vmax.f32 %v6459, 0.0
        %v6468 = vmax.f32 %v6460, 0.0
        %v6469 = vmax.f32 %v6461, 0.0
        %v6470 = vmax.f32 %v6462, 0.0
        %v6471 = vmax.f32 %v6463, 0.0
        %v6472 = vmax.f32 %v6464, 0.0
        %v6473 = vmax.f32 %v6465, %v6466
        %v6474 = vmax.f32 %v6467, %v6468
        %v6475 = vmax.f32 %v6469, %v6470
        %v6476 = vmax.f32 %v6471, %v6472
        %6477 = vst [vmem:[#allocation6] sm:$0xff] %v6473
        %6478 = vst [vmem:[#allocation6 + $0x8] sm:$0xff] %v6474
        %6479 = vst [vmem:[#allocation6 + $0x10] sm:$0xff] %v6475
        %6480 = vst [vmem:[#allocation6 + $0x18] sm:$0xff] %v6476
        %v6481 = vld [vmem:[#allocation6] ss:$2 sm:$0xff]
        %s6482 = scalar_lea.vmem [#allocation6], 16
        %v6483 = vld [vmem:[%s6482] ss:$2 sm:$0xff]
        %s6484 = scalar_lea.vmem [#allocation6], 1
        %v6485 = vld [vmem:[%s6484] ss:$2 sm:$0xff]
        %s6486 = scalar_lea.vmem [#allocation6], 17
        %v6487 = vld [vmem:[%s6486] ss:$2 sm:$0xff]
        %v6488 = vmax.f32 %v6481, %v6485
        %v6489 = vmax.f32 %v6483, %v6487
        %v6490 = vld [vmem:[%s11] sm:$0x1]
        %v6492 = vlaneseq
        %v6493 = vshrl.u32 %v6492, 7
        %v6494 = vsub.s32 0, %v6493
        %v6495 = vrot.slane %v6490, %v6494
        %v6497 = vmul.f32 %v6488, %v6495
        %v6498 = vmul.f32 %v6489, %v6495
        %v6499 = vld [vmem:[%s12] sm:$0x1]
        %v6501 = vlaneseq
        %v6502 = vshrl.u32 %v6501, 7
        %v6503 = vsub.s32 0, %v6502
        %v6504 = vrot.slane %v6499, %v6503
        %v6506 = vadd.f32 %v6497, %v6504
        %v6507 = vadd.f32 %v6498, %v6504
        %v6508 = vld [vmem:[%s14] sm:$0x1]
        %v6509 = vpack.c.bf16 %v6506, %v6506
        %v6510 = vld [vmem:[%s13] sm:$0xf]
        %v6511 = vld [vmem:[%s13 + $0x4] sm:$0xf]
        %v6512 = vld [vmem:[%s13 + $0x8] sm:$0xf]
        %v6513 = vld [vmem:[%s13 + $0xc] sm:$0xf]
        %v6514 = vld [vmem:[%s13 + $0x10] sm:$0xf]
        %v6515 = vld [vmem:[%s13 + $0x14] sm:$0xf]
        %v6516 = vld [vmem:[%s13 + $0x18] sm:$0xf]
        %v6517 = vld [vmem:[%s13 + $0x1c] sm:$0xf]
        %v6518 = vld [vmem:[%s13 + $0x20] sm:$0xf]
        %v6519 = vld [vmem:[%s13 + $0x24] sm:$0xf]
        %v6520 = vld [vmem:[%s13 + $0x28] sm:$0xf]
        %v6521 = vld [vmem:[%s13 + $0x2c] sm:$0xf]
        %v6522 = vld [vmem:[%s13 + $0x30] sm:$0xf]
        %v6523 = vld [vmem:[%s13 + $0x34] sm:$0xf]
        %v6524 = vld [vmem:[%s13 + $0x38] sm:$0xf]
        %v6525 = vld [vmem:[%s13 + $0x3c] sm:$0xf]
        %v6542 = vunpack.c.l.b16 %v6510
        %v6543 = vunpack.c.l.b16 %v6511
        %v6544 = vunpack.c.l.b16 %v6512
        %v6545 = vunpack.c.l.b16 %v6513
        %v6546 = vunpack.c.l.b16 %v6514
        %v6547 = vunpack.c.l.b16 %v6515
        %v6548 = vunpack.c.l.b16 %v6516
        %v6549 = vunpack.c.l.b16 %v6517
        %v6550 = vunpack.c.l.b16 %v6518
        %v6551 = vunpack.c.l.b16 %v6519
        %v6552 = vunpack.c.l.b16 %v6520
        %v6553 = vunpack.c.l.b16 %v6521
        %v6554 = vunpack.c.l.b16 %v6522
        %v6555 = vunpack.c.l.b16 %v6523
        %v6556 = vunpack.c.l.b16 %v6524
        %v6557 = vunpack.c.l.b16 %v6525
        %v6558 = vpack.c.b16 %v6543, %v6542
        %v6559 = vpack.c.b16 %v6545, %v6544
        %v6560 = vpack.c.b16 %v6547, %v6546
        %v6561 = vpack.c.b16 %v6549, %v6548
        %v6562 = vpack.c.b16 %v6551, %v6550
        %v6563 = vpack.c.b16 %v6553, %v6552
        %v6564 = vpack.c.b16 %v6555, %v6554
        %v6565 = vpack.c.b16 %v6557, %v6556
        %6574 = vmatprep.subr.bf16.mxu0 0
        %6575 = vmatpush1.bf16.msra.mxu0 %v6558
        %6576 = vmatprep.subr.bf16.mxu0 0
        %6577 = vmatpush1.bf16.msra.mxu0 %v6559
        %6578 = vmatprep.subr.bf16.mxu0 0
        %6579 = vmatpush1.bf16.msra.mxu0 %v6560
        %6580 = vmatprep.subr.bf16.mxu0 0
        %6581 = vmatpush1.bf16.msra.mxu0 %v6561
        %6582 = vmatprep.subr.bf16.mxu0 0
        %6583 = vmatpush1.bf16.msra.mxu0 %v6562
        %6584 = vmatprep.subr.bf16.mxu0 0
        %6585 = vmatpush1.bf16.msra.mxu0 %v6563
        %6586 = vmatprep.subr.bf16.mxu0 0
        %6587 = vmatpush1.bf16.msra.mxu0 %v6564
        %6588 = vmatprep.subr.bf16.mxu0 0
        %6589 = vmatpush1.bf16.msra.mxu0 %v6565
        %6590 = vmatprep.subr.bf16.mxu0 0
        %6591 = vmatpush1.bf16.msra.mxu0 0
        %6592 = vmatprep.subr.bf16.mxu0 0
        %6593 = vmatpush1.bf16.msra.mxu0 0
        %6594 = vmatprep.subr.bf16.mxu0 0
        %6595 = vmatpush1.bf16.msra.mxu0 0
        %6596 = vmatprep.subr.bf16.mxu0 0
        %6597 = vmatpush1.bf16.msra.mxu0 0
        %6598 = vmatprep.subr.bf16.mxu0 0
        %6599 = vmatpush1.bf16.msra.mxu0 0
        %6600 = vmatprep.subr.bf16.mxu0 0
        %6601 = vmatpush1.bf16.msra.mxu0 0
        %6602 = vmatprep.subr.bf16.mxu0 0
        %6603 = vmatpush1.bf16.msra.mxu0 0
        %6604 = vmatprep.subr.bf16.mxu0 0
        %6605 = vmatpush1.bf16.msra.mxu0 0
        %6606 = vmatprep.mubr.bf16.mxu0 0
        %6607 = vmatmul.mubr.bf16.gmra.mrb[0].mxu0 %v6509
        %v6608 = vpop.f32.mrb[0].mxu0
        %v6609 = vadd.f32 0.0, %v6608
        %v6610 = vpop.f32.mrb[0].mxu0
        %v6611 = vpop.f32.mrb[0].mxu0
        %v6612 = vpop.f32.mrb[0].mxu0
        %6613 = vdwg.mxu0
        %v6614 = vadd.f32 %v6508, %v6609
        %s6615 = scalar_lea.vmem %s13, 64
        %v6616 = vld [vmem:[%s6615] sm:$0xf]
        %v6617 = vld [vmem:[%s6615 + $0x4] sm:$0xf]
        %v6618 = vld [vmem:[%s6615 + $0x8] sm:$0xf]
        %v6619 = vld [vmem:[%s6615 + $0xc] sm:$0xf]
        %v6620 = vld [vmem:[%s6615 + $0x10] sm:$0xf]
        %v6621 = vld [vmem:[%s6615 + $0x14] sm:$0xf]
        %v6622 = vld [vmem:[%s6615 + $0x18] sm:$0xf]
        %v6623 = vld [vmem:[%s6615 + $0x1c] sm:$0xf]
        %v6624 = vld [vmem:[%s6615 + $0x20] sm:$0xf]
        %v6625 = vld [vmem:[%s6615 + $0x24] sm:$0xf]
        %v6626 = vld [vmem:[%s6615 + $0x28] sm:$0xf]
        %v6627 = vld [vmem:[%s6615 + $0x2c] sm:$0xf]
        %v6628 = vld [vmem:[%s6615 + $0x30] sm:$0xf]
        %v6629 = vld [vmem:[%s6615 + $0x34] sm:$0xf]
        %v6630 = vld [vmem:[%s6615 + $0x38] sm:$0xf]
        %v6631 = vld [vmem:[%s6615 + $0x3c] sm:$0xf]
        %v6633 = vshrl.u32 %v6509, 16
        %v6652 = vunpack.c.l.b16 %v6616
        %v6653 = vunpack.c.l.b16 %v6617
        %v6654 = vunpack.c.l.b16 %v6618
        %v6655 = vunpack.c.l.b16 %v6619
        %v6656 = vunpack.c.l.b16 %v6620
        %v6657 = vunpack.c.l.b16 %v6621
        %v6658 = vunpack.c.l.b16 %v6622
        %v6659 = vunpack.c.l.b16 %v6623
        %v6660 = vunpack.c.l.b16 %v6624
        %v6661 = vunpack.c.l.b16 %v6625
        %v6662 = vunpack.c.l.b16 %v6626
        %v6663 = vunpack.c.l.b16 %v6627
        %v6664 = vunpack.c.l.b16 %v6628
        %v6665 = vunpack.c.l.b16 %v6629
        %v6666 = vunpack.c.l.b16 %v6630
        %v6667 = vunpack.c.l.b16 %v6631
        %v6668 = vpack.c.b16 %v6653, %v6652
        %v6669 = vpack.c.b16 %v6655, %v6654
        %v6670 = vpack.c.b16 %v6657, %v6656
        %v6671 = vpack.c.b16 %v6659, %v6658
        %v6672 = vpack.c.b16 %v6661, %v6660
        %v6673 = vpack.c.b16 %v6663, %v6662
        %v6674 = vpack.c.b16 %v6665, %v6664
        %v6675 = vpack.c.b16 %v6667, %v6666
        %6684 = vmatprep.subr.bf16.mxu0 0
        %6685 = vmatpush1.bf16.msra.mxu0 %v6668
        %6686 = vmatprep.subr.bf16.mxu0 0
        %6687 = vmatpush1.bf16.msra.mxu0 %v6669
        %6688 = vmatprep.subr.bf16.mxu0 0
        %6689 = vmatpush1.bf16.msra.mxu0 %v6670
        %6690 = vmatprep.subr.bf16.mxu0 0
        %6691 = vmatpush1.bf16.msra.mxu0 %v6671
        %6692 = vmatprep.subr.bf16.mxu0 0
        %6693 = vmatpush1.bf16.msra.mxu0 %v6672
        %6694 = vmatprep.subr.bf16.mxu0 0
        %6695 = vmatpush1.bf16.msra.mxu0 %v6673
        %6696 = vmatprep.subr.bf16.mxu0 0
        %6697 = vmatpush1.bf16.msra.mxu0 %v6674
        %6698 = vmatprep.subr.bf16.mxu0 0
        %6699 = vmatpush1.bf16.msra.mxu0 %v6675
        %6700 = vmatprep.subr.bf16.mxu0 0
        %6701 = vmatpush1.bf16.msra.mxu0 0
        %6702 = vmatprep.subr.bf16.mxu0 0
        %6703 = vmatpush1.bf16.msra.mxu0 0
        %6704 = vmatprep.subr.bf16.mxu0 0
        %6705 = vmatpush1.bf16.msra.mxu0 0
        %6706 = vmatprep.subr.bf16.mxu0 0
        %6707 = vmatpush1.bf16.msra.mxu0 0
        %6708 = vmatprep.subr.bf16.mxu0 0
        %6709 = vmatpush1.bf16.msra.mxu0 0
        %6710 = vmatprep.subr.bf16.mxu0 0
        %6711 = vmatpush1.bf16.msra.mxu0 0
        %6712 = vmatprep.subr.bf16.mxu0 0
        %6713 = vmatpush1.bf16.msra.mxu0 0
        %6714 = vmatprep.subr.bf16.mxu0 0
        %6715 = vmatpush1.bf16.msra.mxu0 0
        %6716 = vmatprep.mubr.bf16.mxu0 0
        %6717 = vmatmul.mubr.bf16.gmra.mrb[0].mxu0 %v6633
        %v6718 = vpop.f32.mrb[0].mxu0
        %v6719 = vadd.f32 0.0, %v6718
        %v6720 = vpop.f32.mrb[0].mxu0
        %v6721 = vpop.f32.mrb[0].mxu0
        %v6722 = vpop.f32.mrb[0].mxu0
        %6723 = vdwg.mxu0
        %v6724 = vadd.f32 %v6614, %v6719
        %s6725 = scalar_lea.vmem %s13, 128
        %v6726 = vld [vmem:[%s6725] sm:$0xf]
        %v6727 = vld [vmem:[%s6725 + $0x4] sm:$0xf]
        %v6728 = vld [vmem:[%s6725 + $0x8] sm:$0xf]
        %v6729 = vld [vmem:[%s6725 + $0xc] sm:$0xf]
        %v6730 = vld [vmem:[%s6725 + $0x10] sm:$0xf]
        %v6731 = vld [vmem:[%s6725 + $0x14] sm:$0xf]
        %v6732 = vld [vmem:[%s6725 + $0x18] sm:$0xf]
        %v6733 = vld [vmem:[%s6725 + $0x1c] sm:$0xf]
        %v6734 = vld [vmem:[%s6725 + $0x20] sm:$0xf]
        %v6735 = vld [vmem:[%s6725 + $0x24] sm:$0xf]
        %v6736 = vld [vmem:[%s6725 + $0x28] sm:$0xf]
        %v6737 = vld [vmem:[%s6725 + $0x2c] sm:$0xf]
        %v6738 = vld [vmem:[%s6725 + $0x30] sm:$0xf]
        %v6739 = vld [vmem:[%s6725 + $0x34] sm:$0xf]
        %v6740 = vld [vmem:[%s6725 + $0x38] sm:$0xf]
        %v6741 = vld [vmem:[%s6725 + $0x3c] sm:$0xf]
        %v6743 = vrot.slane %v6509, 1
        %v6761 = vunpack.c.l.b16 %v6726
        %v6762 = vunpack.c.l.b16 %v6727
        %v6763 = vunpack.c.l.b16 %v6728
        %v6764 = vunpack.c.l.b16 %v6729
        %v6765 = vunpack.c.l.b16 %v6730
        %v6766 = vunpack.c.l.b16 %v6731
        %v6767 = vunpack.c.l.b16 %v6732
        %v6768 = vunpack.c.l.b16 %v6733
        %v6769 = vunpack.c.l.b16 %v6734
        %v6770 = vunpack.c.l.b16 %v6735
        %v6771 = vunpack.c.l.b16 %v6736
        %v6772 = vunpack.c.l.b16 %v6737
        %v6773 = vunpack.c.l.b16 %v6738
        %v6774 = vunpack.c.l.b16 %v6739
        %v6775 = vunpack.c.l.b16 %v6740
        %v6776 = vunpack.c.l.b16 %v6741
        %v6777 = vpack.c.b16 %v6762, %v6761
        %v6778 = vpack.c.b16 %v6764, %v6763
        %v6779 = vpack.c.b16 %v6766, %v6765
        %v6780 = vpack.c.b16 %v6768, %v6767
        %v6781 = vpack.c.b16 %v6770, %v6769
        %v6782 = vpack.c.b16 %v6772, %v6771
        %v6783 = vpack.c.b16 %v6774, %v6773
        %v6784 = vpack.c.b16 %v6776, %v6775
        %6793 = vmatprep.subr.bf16.mxu0 0
        %6794 = vmatpush1.bf16.msra.mxu0 %v6777
        %6795 = vmatprep.subr.bf16.mxu0 0
        %6796 = vmatpush1.bf16.msra.mxu0 %v6778
        %6797 = vmatprep.subr.bf16.mxu0 0
        %6798 = vmatpush1.bf16.msra.mxu0 %v6779
        %6799 = vmatprep.subr.bf16.mxu0 0
        %6800 = vmatpush1.bf16.msra.mxu0 %v6780
        %6801 = vmatprep.subr.bf16.mxu0 0
        %6802 = vmatpush1.bf16.msra.mxu0 %v6781
        %6803 = vmatprep.subr.bf16.mxu0 0
        %6804 = vmatpush1.bf16.msra.mxu0 %v6782
        %6805 = vmatprep.subr.bf16.mxu0 0
        %6806 = vmatpush1.bf16.msra.mxu0 %v6783
        %6807 = vmatprep.subr.bf16.mxu0 0
        %6808 = vmatpush1.bf16.msra.mxu0 %v6784
        %6809 = vmatprep.subr.bf16.mxu0 0
        %6810 = vmatpush1.bf16.msra.mxu0 0
        %6811 = vmatprep.subr.bf16.mxu0 0
        %6812 = vmatpush1.bf16.msra.mxu0 0
        %6813 = vmatprep.subr.bf16.mxu0 0
        %6814 = vmatpush1.bf16.msra.mxu0 0
        %6815 = vmatprep.subr.bf16.mxu0 0
        %6816 = vmatpush1.bf16.msra.mxu0 0
        %6817 = vmatprep.subr.bf16.mxu0 0
        %6818 = vmatpush1.bf16.msra.mxu0 0
        %6819 = vmatprep.subr.bf16.mxu0 0
        %6820 = vmatpush1.bf16.msra.mxu0 0
        %6821 = vmatprep.subr.bf16.mxu0 0
        %6822 = vmatpush1.bf16.msra.mxu0 0
        %6823 = vmatprep.subr.bf16.mxu0 0
        %6824 = vmatpush1.bf16.msra.mxu0 0
        %6825 = vmatprep.mubr.bf16.mxu0 0
        %6826 = vmatmul.mubr.bf16.gmra.mrb[0].mxu0 %v6743
        %v6827 = vpop.f32.mrb[0].mxu0
        %v6828 = vadd.f32 0.0, %v6827
        %v6829 = vpop.f32.mrb[0].mxu0
        %v6830 = vpop.f32.mrb[0].mxu0
        %v6831 = vpop.f32.mrb[0].mxu0
        %6832 = vdwg.mxu0
        %v6833 = vadd.f32 %v6724, %v6828
        %s6834 = scalar_lea.vmem %s13, 192
        %v6835 = vld [vmem:[%s6834] sm:$0xf]
        %v6836 = vld [vmem:[%s6834 + $0x4] sm:$0xf]
        %v6837 = vld [vmem:[%s6834 + $0x8] sm:$0xf]
        %v6838 = vld [vmem:[%s6834 + $0xc] sm:$0xf]
        %v6839 = vld [vmem:[%s6834 + $0x10] sm:$0xf]
        %v6840 = vld [vmem:[%s6834 + $0x14] sm:$0xf]
        %v6841 = vld [vmem:[%s6834 + $0x18] sm:$0xf]
        %v6842 = vld [vmem:[%s6834 + $0x1c] sm:$0xf]
        %v6843 = vld [vmem:[%s6834 + $0x20] sm:$0xf]
        %v6844 = vld [vmem:[%s6834 + $0x24] sm:$0xf]
        %v6845 = vld [vmem:[%s6834 + $0x28] sm:$0xf]
        %v6846 = vld [vmem:[%s6834 + $0x2c] sm:$0xf]
        %v6847 = vld [vmem:[%s6834 + $0x30] sm:$0xf]
        %v6848 = vld [vmem:[%s6834 + $0x34] sm:$0xf]
        %v6849 = vld [vmem:[%s6834 + $0x38] sm:$0xf]
        %v6850 = vld [vmem:[%s6834 + $0x3c] sm:$0xf]
        %v6851 = vrot.slane %v6633, 1
        %v6869 = vunpack.c.l.b16 %v6835
        %v6870 = vunpack.c.l.b16 %v6836
        %v6871 = vunpack.c.l.b16 %v6837
        %v6872 = vunpack.c.l.b16 %v6838
        %v6873 = vunpack.c.l.b16 %v6839
        %v6874 = vunpack.c.l.b16 %v6840
        %v6875 = vunpack.c.l.b16 %v6841
        %v6876 = vunpack.c.l.b16 %v6842
        %v6877 = vunpack.c.l.b16 %v6843
        %v6878 = vunpack.c.l.b16 %v6844
        %v6879 = vunpack.c.l.b16 %v6845
        %v6880 = vunpack.c.l.b16 %v6846
        %v6881 = vunpack.c.l.b16 %v6847
        %v6882 = vunpack.c.l.b16 %v6848
        %v6883 = vunpack.c.l.b16 %v6849
        %v6884 = vunpack.c.l.b16 %v6850
        %v6885 = vpack.c.b16 %v6870, %v6869
        %v6886 = vpack.c.b16 %v6872, %v6871
        %v6887 = vpack.c.b16 %v6874, %v6873
        %v6888 = vpack.c.b16 %v6876, %v6875
        %v6889 = vpack.c.b16 %v6878, %v6877
        %v6890 = vpack.c.b16 %v6880, %v6879
        %v6891 = vpack.c.b16 %v6882, %v6881
        %v6892 = vpack.c.b16 %v6884, %v6883
        %6901 = vmatprep.subr.bf16.mxu0 0
        %6902 = vmatpush1.bf16.msra.mxu0 %v6885
        %6903 = vmatprep.subr.bf16.mxu0 0
        %6904 = vmatpush1.bf16.msra.mxu0 %v6886
        %6905 = vmatprep.subr.bf16.mxu0 0
        %6906 = vmatpush1.bf16.msra.mxu0 %v6887
        %6907 = vmatprep.subr.bf16.mxu0 0
        %6908 = vmatpush1.bf16.msra.mxu0 %v6888
        %6909 = vmatprep.subr.bf16.mxu0 0
        %6910 = vmatpush1.bf16.msra.mxu0 %v6889
        %6911 = vmatprep.subr.bf16.mxu0 0
        %6912 = vmatpush1.bf16.msra.mxu0 %v6890
        %6913 = vmatprep.subr.bf16.mxu0 0
        %6914 = vmatpush1.bf16.msra.mxu0 %v6891
        %6915 = vmatprep.subr.bf16.mxu0 0
        %6916 = vmatpush1.bf16.msra.mxu0 %v6892
        %6917 = vmatprep.subr.bf16.mxu0 0
        %6918 = vmatpush1.bf16.msra.mxu0 0
        %6919 = vmatprep.subr.bf16.mxu0 0
        %6920 = vmatpush1.bf16.msra.mxu0 0
        %6921 = vmatprep.subr.bf16.mxu0 0
        %6922 = vmatpush1.bf16.msra.mxu0 0
        %6923 = vmatprep.subr.bf16.mxu0 0
        %6924 = vmatpush1.bf16.msra.mxu0 0
        %6925 = vmatprep.subr.bf16.mxu0 0
        %6926 = vmatpush1.bf16.msra.mxu0 0
        %6927 = vmatprep.subr.bf16.mxu0 0
        %6928 = vmatpush1.bf16.msra.mxu0 0
        %6929 = vmatprep.subr.bf16.mxu0 0
        %6930 = vmatpush1.bf16.msra.mxu0 0
        %6931 = vmatprep.subr.bf16.mxu0 0
        %6932 = vmatpush1.bf16.msra.mxu0 0
        %6933 = vmatprep.mubr.bf16.mxu0 0
        %6934 = vmatmul.mubr.bf16.gmra.mrb[0].mxu0 %v6851
        %v6935 = vpop.f32.mrb[0].mxu0
        %v6936 = vadd.f32 0.0, %v6935
        %v6937 = vpop.f32.mrb[0].mxu0
        %v6938 = vpop.f32.mrb[0].mxu0
        %v6939 = vpop.f32.mrb[0].mxu0
        %6940 = vdwg.mxu0
        %v6941 = vadd.f32 %v6833, %v6936
        %s6942 = scalar_lea.vmem %s13, 256
        %v6943 = vld [vmem:[%s6942] sm:$0xf]
        %v6944 = vld [vmem:[%s6942 + $0x4] sm:$0xf]
        %v6945 = vld [vmem:[%s6942 + $0x8] sm:$0xf]
        %v6946 = vld [vmem:[%s6942 + $0xc] sm:$0xf]
        %v6947 = vld [vmem:[%s6942 + $0x10] sm:$0xf]
        %v6948 = vld [vmem:[%s6942 + $0x14] sm:$0xf]
        %v6949 = vld [vmem:[%s6942 + $0x18] sm:$0xf]
        %v6950 = vld [vmem:[%s6942 + $0x1c] sm:$0xf]
        %v6951 = vld [vmem:[%s6942 + $0x20] sm:$0xf]
        %v6952 = vld [vmem:[%s6942 + $0x24] sm:$0xf]
        %v6953 = vld [vmem:[%s6942 + $0x28] sm:$0xf]
        %v6954 = vld [vmem:[%s6942 + $0x2c] sm:$0xf]
        %v6955 = vld [vmem:[%s6942 + $0x30] sm:$0xf]
        %v6956 = vld [vmem:[%s6942 + $0x34] sm:$0xf]
        %v6957 = vld [vmem:[%s6942 + $0x38] sm:$0xf]
        %v6958 = vld [vmem:[%s6942 + $0x3c] sm:$0xf]
        %v6959 = vrot.slane %v6509, 2
        %v6977 = vunpack.c.l.b16 %v6943
        %v6978 = vunpack.c.l.b16 %v6944
        %v6979 = vunpack.c.l.b16 %v6945
        %v6980 = vunpack.c.l.b16 %v6946
        %v6981 = vunpack.c.l.b16 %v6947
        %v6982 = vunpack.c.l.b16 %v6948
        %v6983 = vunpack.c.l.b16 %v6949
        %v6984 = vunpack.c.l.b16 %v6950
        %v6985 = vunpack.c.l.b16 %v6951
        %v6986 = vunpack.c.l.b16 %v6952
        %v6987 = vunpack.c.l.b16 %v6953
        %v6988 = vunpack.c.l.b16 %v6954
        %v6989 = vunpack.c.l.b16 %v6955
        %v6990 = vunpack.c.l.b16 %v6956
        %v6991 = vunpack.c.l.b16 %v6957
        %v6992 = vunpack.c.l.b16 %v6958
        %v6993 = vpack.c.b16 %v6978, %v6977
        %v6994 = vpack.c.b16 %v6980, %v6979
        %v6995 = vpack.c.b16 %v6982, %v6981
        %v6996 = vpack.c.b16 %v6984, %v6983
        %v6997 = vpack.c.b16 %v6986, %v6985
        %v6998 = vpack.c.b16 %v6988, %v6987
        %v6999 = vpack.c.b16 %v6990, %v6989
        %v7000 = vpack.c.b16 %v6992, %v6991
        %7009 = vmatprep.subr.bf16.mxu0 0
        %7010 = vmatpush1.bf16.msra.mxu0 %v6993
        %7011 = vmatprep.subr.bf16.mxu0 0
        %7012 = vmatpush1.bf16.msra.mxu0 %v6994
        %7013 = vmatprep.subr.bf16.mxu0 0
        %7014 = vmatpush1.bf16.msra.mxu0 %v6995
        %7015 = vmatprep.subr.bf16.mxu0 0
        %7016 = vmatpush1.bf16.msra.mxu0 %v6996
        %7017 = vmatprep.subr.bf16.mxu0 0
        %7018 = vmatpush1.bf16.msra.mxu0 %v6997
        %7019 = vmatprep.subr.bf16.mxu0 0
        %7020 = vmatpush1.bf16.msra.mxu0 %v6998
        %7021 = vmatprep.subr.bf16.mxu0 0
        %7022 = vmatpush1.bf16.msra.mxu0 %v6999
        %7023 = vmatprep.subr.bf16.mxu0 0
        %7024 = vmatpush1.bf16.msra.mxu0 %v7000
        %7025 = vmatprep.subr.bf16.mxu0 0
        %7026 = vmatpush1.bf16.msra.mxu0 0
        %7027 = vmatprep.subr.bf16.mxu0 0
        %7028 = vmatpush1.bf16.msra.mxu0 0
        %7029 = vmatprep.subr.bf16.mxu0 0
        %7030 = vmatpush1.bf16.msra.mxu0 0
        %7031 = vmatprep.subr.bf16.mxu0 0
        %7032 = vmatpush1.bf16.msra.mxu0 0
        %7033 = vmatprep.subr.bf16.mxu0 0
        %7034 = vmatpush1.bf16.msra.mxu0 0
        %7035 = vmatprep.subr.bf16.mxu0 0
        %7036 = vmatpush1.bf16.msra.mxu0 0
        %7037 = vmatprep.subr.bf16.mxu0 0
        %7038 = vmatpush1.bf16.msra.mxu0 0
        %7039 = vmatprep.subr.bf16.mxu0 0
        %7040 = vmatpush1.bf16.msra.mxu0 0
        %7041 = vmatprep.mubr.bf16.mxu0 0
        %7042 = vmatmul.mubr.bf16.gmra.mrb[0].mxu0 %v6959
        %v7043 = vpop.f32.mrb[0].mxu0
        %v7044 = vadd.f32 0.0, %v7043
        %v7045 = vpop.f32.mrb[0].mxu0
        %v7046 = vpop.f32.mrb[0].mxu0
        %v7047 = vpop.f32.mrb[0].mxu0
        %7048 = vdwg.mxu0
        %v7049 = vadd.f32 %v6941, %v7044
        %s7050 = scalar_lea.vmem %s13, 320
        %v7051 = vld [vmem:[%s7050] sm:$0xf]
        %v7052 = vld [vmem:[%s7050 + $0x4] sm:$0xf]
        %v7053 = vld [vmem:[%s7050 + $0x8] sm:$0xf]
        %v7054 = vld [vmem:[%s7050 + $0xc] sm:$0xf]
        %v7055 = vld [vmem:[%s7050 + $0x10] sm:$0xf]
        %v7056 = vld [vmem:[%s7050 + $0x14] sm:$0xf]
        %v7057 = vld [vmem:[%s7050 + $0x18] sm:$0xf]
        %v7058 = vld [vmem:[%s7050 + $0x1c] sm:$0xf]
        %v7059 = vld [vmem:[%s7050 + $0x20] sm:$0xf]
        %v7060 = vld [vmem:[%s7050 + $0x24] sm:$0xf]
        %v7061 = vld [vmem:[%s7050 + $0x28] sm:$0xf]
        %v7062 = vld [vmem:[%s7050 + $0x2c] sm:$0xf]
        %v7063 = vld [vmem:[%s7050 + $0x30] sm:$0xf]
        %v7064 = vld [vmem:[%s7050 + $0x34] sm:$0xf]
        %v7065 = vld [vmem:[%s7050 + $0x38] sm:$0xf]
        %v7066 = vld [vmem:[%s7050 + $0x3c] sm:$0xf]
        %v7067 = vrot.slane %v6633, 2
        %v7085 = vunpack.c.l.b16 %v7051
        %v7086 = vunpack.c.l.b16 %v7052
        %v7087 = vunpack.c.l.b16 %v7053
        %v7088 = vunpack.c.l.b16 %v7054
        %v7089 = vunpack.c.l.b16 %v7055
        %v7090 = vunpack.c.l.b16 %v7056
        %v7091 = vunpack.c.l.b16 %v7057
        %v7092 = vunpack.c.l.b16 %v7058
        %v7093 = vunpack.c.l.b16 %v7059
        %v7094 = vunpack.c.l.b16 %v7060
        %v7095 = vunpack.c.l.b16 %v7061
        %v7096 = vunpack.c.l.b16 %v7062
        %v7097 = vunpack.c.l.b16 %v7063
        %v7098 = vunpack.c.l.b16 %v7064
        %v7099 = vunpack.c.l.b16 %v7065
        %v7100 = vunpack.c.l.b16 %v7066
        %v7101 = vpack.c.b16 %v7086, %v7085
        %v7102 = vpack.c.b16 %v7088, %v7087
        %v7103 = vpack.c.b16 %v7090, %v7089
        %v7104 = vpack.c.b16 %v7092, %v7091
        %v7105 = vpack.c.b16 %v7094, %v7093
        %v7106 = vpack.c.b16 %v7096, %v7095
        %v7107 = vpack.c.b16 %v7098, %v7097
        %v7108 = vpack.c.b16 %v7100, %v7099
        %7117 = vmatprep.subr.bf16.mxu0 0
        %7118 = vmatpush1.bf16.msra.mxu0 %v7101
        %7119 = vmatprep.subr.bf16.mxu0 0
        %7120 = vmatpush1.bf16.msra.mxu0 %v7102
        %7121 = vmatprep.subr.bf16.mxu0 0
        %7122 = vmatpush1.bf16.msra.mxu0 %v7103
        %7123 = vmatprep.subr.bf16.mxu0 0
        %7124 = vmatpush1.bf16.msra.mxu0 %v7104
        %7125 = vmatprep.subr.bf16.mxu0 0
        %7126 = vmatpush1.bf16.msra.mxu0 %v7105
        %7127 = vmatprep.subr.bf16.mxu0 0
        %7128 = vmatpush1.bf16.msra.mxu0 %v7106
        %7129 = vmatprep.subr.bf16.mxu0 0
        %7130 = vmatpush1.bf16.msra.mxu0 %v7107
        %7131 = vmatprep.subr.bf16.mxu0 0
        %7132 = vmatpush1.bf16.msra.mxu0 %v7108
        %7133 = vmatprep.subr.bf16.mxu0 0
        %7134 = vmatpush1.bf16.msra.mxu0 0
        %7135 = vmatprep.subr.bf16.mxu0 0
        %7136 = vmatpush1.bf16.msra.mxu0 0
        %7137 = vmatprep.subr.bf16.mxu0 0
        %7138 = vmatpush1.bf16.msra.mxu0 0
        %7139 = vmatprep.subr.bf16.mxu0 0
        %7140 = vmatpush1.bf16.msra.mxu0 0
        %7141 = vmatprep.subr.bf16.mxu0 0
        %7142 = vmatpush1.bf16.msra.mxu0 0
        %7143 = vmatprep.subr.bf16.mxu0 0
        %7144 = vmatpush1.bf16.msra.mxu0 0
        %7145 = vmatprep.subr.bf16.mxu0 0
        %7146 = vmatpush1.bf16.msra.mxu0 0
        %7147 = vmatprep.subr.bf16.mxu0 0
        %7148 = vmatpush1.bf16.msra.mxu0 0
        %7149 = vmatprep.mubr.bf16.mxu0 0
        %7150 = vmatmul.mubr.bf16.gmra.mrb[0].mxu0 %v7067
        %v7151 = vpop.f32.mrb[0].mxu0
        %v7152 = vadd.f32 0.0, %v7151
        %v7153 = vpop.f32.mrb[0].mxu0
        %v7154 = vpop.f32.mrb[0].mxu0
        %v7155 = vpop.f32.mrb[0].mxu0
        %7156 = vdwg.mxu0
        %v7157 = vadd.f32 %v7049, %v7152
        %s7158 = scalar_lea.vmem %s13, 384
        %v7159 = vld [vmem:[%s7158] sm:$0xf]
        %v7160 = vld [vmem:[%s7158 + $0x4] sm:$0xf]
        %v7161 = vld [vmem:[%s7158 + $0x8] sm:$0xf]
        %v7162 = vld [vmem:[%s7158 + $0xc] sm:$0xf]
        %v7163 = vld [vmem:[%s7158 + $0x10] sm:$0xf]
        %v7164 = vld [vmem:[%s7158 + $0x14] sm:$0xf]
        %v7165 = vld [vmem:[%s7158 + $0x18] sm:$0xf]
        %v7166 = vld [vmem:[%s7158 + $0x1c] sm:$0xf]
        %v7167 = vld [vmem:[%s7158 + $0x20] sm:$0xf]
        %v7168 = vld [vmem:[%s7158 + $0x24] sm:$0xf]
        %v7169 = vld [vmem:[%s7158 + $0x28] sm:$0xf]
        %v7170 = vld [vmem:[%s7158 + $0x2c] sm:$0xf]
        %v7171 = vld [vmem:[%s7158 + $0x30] sm:$0xf]
        %v7172 = vld [vmem:[%s7158 + $0x34] sm:$0xf]
        %v7173 = vld [vmem:[%s7158 + $0x38] sm:$0xf]
        %v7174 = vld [vmem:[%s7158 + $0x3c] sm:$0xf]
        %v7175 = vrot.slane %v6509, 3
        %v7193 = vunpack.c.l.b16 %v7159
        %v7194 = vunpack.c.l.b16 %v7160
        %v7195 = vunpack.c.l.b16 %v7161
        %v7196 = vunpack.c.l.b16 %v7162
        %v7197 = vunpack.c.l.b16 %v7163
        %v7198 = vunpack.c.l.b16 %v7164
        %v7199 = vunpack.c.l.b16 %v7165
        %v7200 = vunpack.c.l.b16 %v7166
        %v7201 = vunpack.c.l.b16 %v7167
        %v7202 = vunpack.c.l.b16 %v7168
        %v7203 = vunpack.c.l.b16 %v7169
        %v7204 = vunpack.c.l.b16 %v7170
        %v7205 = vunpack.c.l.b16 %v7171
        %v7206 = vunpack.c.l.b16 %v7172
        %v7207 = vunpack.c.l.b16 %v7173
        %v7208 = vunpack.c.l.b16 %v7174
        %v7209 = vpack.c.b16 %v7194, %v7193
        %v7210 = vpack.c.b16 %v7196, %v7195
        %v7211 = vpack.c.b16 %v7198, %v7197
        %v7212 = vpack.c.b16 %v7200, %v7199
        %v7213 = vpack.c.b16 %v7202, %v7201
        %v7214 = vpack.c.b16 %v7204, %v7203
        %v7215 = vpack.c.b16 %v7206, %v7205
        %v7216 = vpack.c.b16 %v7208, %v7207
        %7225 = vmatprep.subr.bf16.mxu0 0
        %7226 = vmatpush1.bf16.msra.mxu0 %v7209
        %7227 = vmatprep.subr.bf16.mxu0 0
        %7228 = vmatpush1.bf16.msra.mxu0 %v7210
        %7229 = vmatprep.subr.bf16.mxu0 0
        %7230 = vmatpush1.bf16.msra.mxu0 %v7211
        %7231 = vmatprep.subr.bf16.mxu0 0
        %7232 = vmatpush1.bf16.msra.mxu0 %v7212
        %7233 = vmatprep.subr.bf16.mxu0 0
        %7234 = vmatpush1.bf16.msra.mxu0 %v7213
        %7235 = vmatprep.subr.bf16.mxu0 0
        %7236 = vmatpush1.bf16.msra.mxu0 %v7214
        %7237 = vmatprep.subr.bf16.mxu0 0
        %7238 = vmatpush1.bf16.msra.mxu0 %v7215
        %7239 = vmatprep.subr.bf16.mxu0 0
        %7240 = vmatpush1.bf16.msra.mxu0 %v7216
        %7241 = vmatprep.subr.bf16.mxu0 0
        %7242 = vmatpush1.bf16.msra.mxu0 0
        %7243 = vmatprep.subr.bf16.mxu0 0
        %7244 = vmatpush1.bf16.msra.mxu0 0
        %7245 = vmatprep.subr.bf16.mxu0 0
        %7246 = vmatpush1.bf16.msra.mxu0 0
        %7247 = vmatprep.subr.bf16.mxu0 0
        %7248 = vmatpush1.bf16.msra.mxu0 0
        %7249 = vmatprep.subr.bf16.mxu0 0
        %7250 = vmatpush1.bf16.msra.mxu0 0
        %7251 = vmatprep.subr.bf16.mxu0 0
        %7252 = vmatpush1.bf16.msra.mxu0 0
        %7253 = vmatprep.subr.bf16.mxu0 0
        %7254 = vmatpush1.bf16.msra.mxu0 0
        %7255 = vmatprep.subr.bf16.mxu0 0
        %7256 = vmatpush1.bf16.msra.mxu0 0
        %7257 = vmatprep.mubr.bf16.mxu0 0
        %7258 = vmatmul.mubr.bf16.gmra.mrb[0].mxu0 %v7175
        %v7259 = vpop.f32.mrb[0].mxu0
        %v7260 = vadd.f32 0.0, %v7259
        %v7261 = vpop.f32.mrb[0].mxu0
        %v7262 = vpop.f32.mrb[0].mxu0
        %v7263 = vpop.f32.mrb[0].mxu0
        %7264 = vdwg.mxu0
        %v7265 = vadd.f32 %v7157, %v7260
        %s7266 = scalar_lea.vmem %s13, 448
        %v7267 = vld [vmem:[%s7266] sm:$0xf]
        %v7268 = vld [vmem:[%s7266 + $0x4] sm:$0xf]
        %v7269 = vld [vmem:[%s7266 + $0x8] sm:$0xf]
        %v7270 = vld [vmem:[%s7266 + $0xc] sm:$0xf]
        %v7271 = vld [vmem:[%s7266 + $0x10] sm:$0xf]
        %v7272 = vld [vmem:[%s7266 + $0x14] sm:$0xf]
        %v7273 = vld [vmem:[%s7266 + $0x18] sm:$0xf]
        %v7274 = vld [vmem:[%s7266 + $0x1c] sm:$0xf]
        %v7275 = vld [vmem:[%s7266 + $0x20] sm:$0xf]
        %v7276 = vld [vmem:[%s7266 + $0x24] sm:$0xf]
        %v7277 = vld [vmem:[%s7266 + $0x28] sm:$0xf]
        %v7278 = vld [vmem:[%s7266 + $0x2c] sm:$0xf]
        %v7279 = vld [vmem:[%s7266 + $0x30] sm:$0xf]
        %v7280 = vld [vmem:[%s7266 + $0x34] sm:$0xf]
        %v7281 = vld [vmem:[%s7266 + $0x38] sm:$0xf]
        %v7282 = vld [vmem:[%s7266 + $0x3c] sm:$0xf]
        %v7283 = vrot.slane %v6633, 3
        %v7301 = vunpack.c.l.b16 %v7267
        %v7302 = vunpack.c.l.b16 %v7268
        %v7303 = vunpack.c.l.b16 %v7269
        %v7304 = vunpack.c.l.b16 %v7270
        %v7305 = vunpack.c.l.b16 %v7271
        %v7306 = vunpack.c.l.b16 %v7272
        %v7307 = vunpack.c.l.b16 %v7273
        %v7308 = vunpack.c.l.b16 %v7274
        %v7309 = vunpack.c.l.b16 %v7275
        %v7310 = vunpack.c.l.b16 %v7276
        %v7311 = vunpack.c.l.b16 %v7277
        %v7312 = vunpack.c.l.b16 %v7278
        %v7313 = vunpack.c.l.b16 %v7279
        %v7314 = vunpack.c.l.b16 %v7280
        %v7315 = vunpack.c.l.b16 %v7281
        %v7316 = vunpack.c.l.b16 %v7282
        %v7317 = vpack.c.b16 %v7302, %v7301
        %v7318 = vpack.c.b16 %v7304, %v7303
        %v7319 = vpack.c.b16 %v7306, %v7305
        %v7320 = vpack.c.b16 %v7308, %v7307
        %v7321 = vpack.c.b16 %v7310, %v7309
        %v7322 = vpack.c.b16 %v7312, %v7311
        %v7323 = vpack.c.b16 %v7314, %v7313
        %v7324 = vpack.c.b16 %v7316, %v7315
        %7333 = vmatprep.subr.bf16.mxu0 0
        %7334 = vmatpush1.bf16.msra.mxu0 %v7317
        %7335 = vmatprep.subr.bf16.mxu0 0
        %7336 = vmatpush1.bf16.msra.mxu0 %v7318
        %7337 = vmatprep.subr.bf16.mxu0 0
        %7338 = vmatpush1.bf16.msra.mxu0 %v7319
        %7339 = vmatprep.subr.bf16.mxu0 0
        %7340 = vmatpush1.bf16.msra.mxu0 %v7320
        %7341 = vmatprep.subr.bf16.mxu0 0
        %7342 = vmatpush1.bf16.msra.mxu0 %v7321
        %7343 = vmatprep.subr.bf16.mxu0 0
        %7344 = vmatpush1.bf16.msra.mxu0 %v7322
        %7345 = vmatprep.subr.bf16.mxu0 0
        %7346 = vmatpush1.bf16.msra.mxu0 %v7323
        %7347 = vmatprep.subr.bf16.mxu0 0
        %7348 = vmatpush1.bf16.msra.mxu0 %v7324
        %7349 = vmatprep.subr.bf16.mxu0 0
        %7350 = vmatpush1.bf16.msra.mxu0 0
        %7351 = vmatprep.subr.bf16.mxu0 0
        %7352 = vmatpush1.bf16.msra.mxu0 0
        %7353 = vmatprep.subr.bf16.mxu0 0
        %7354 = vmatpush1.bf16.msra.mxu0 0
        %7355 = vmatprep.subr.bf16.mxu0 0
        %7356 = vmatpush1.bf16.msra.mxu0 0
        %7357 = vmatprep.subr.bf16.mxu0 0
        %7358 = vmatpush1.bf16.msra.mxu0 0
        %7359 = vmatprep.subr.bf16.mxu0 0
        %7360 = vmatpush1.bf16.msra.mxu0 0
        %7361 = vmatprep.subr.bf16.mxu0 0
        %7362 = vmatpush1.bf16.msra.mxu0 0
        %7363 = vmatprep.subr.bf16.mxu0 0
        %7364 = vmatpush1.bf16.msra.mxu0 0
        %7365 = vmatprep.mubr.bf16.mxu0 0
        %7366 = vmatmul.mubr.bf16.gmra.mrb[0].mxu0 %v7283
        %v7367 = vpop.f32.mrb[0].mxu0
        %v7368 = vadd.f32 0.0, %v7367
        %v7369 = vpop.f32.mrb[0].mxu0
        %v7370 = vpop.f32.mrb[0].mxu0
        %v7371 = vpop.f32.mrb[0].mxu0
        %7372 = vdwg.mxu0
        %v7373 = vadd.f32 %v7265, %v7368
        %v7374 = vpack.c.bf16 %v6507, %v6507
        %s7375 = scalar_lea.vmem %s13, 512
        %v7376 = vld [vmem:[%s7375] sm:$0xf]
        %v7377 = vld [vmem:[%s7375 + $0x4] sm:$0xf]
        %v7378 = vld [vmem:[%s7375 + $0x8] sm:$0xf]
        %v7379 = vld [vmem:[%s7375 + $0xc] sm:$0xf]
        %v7380 = vld [vmem:[%s7375 + $0x10] sm:$0xf]
        %v7381 = vld [vmem:[%s7375 + $0x14] sm:$0xf]
        %v7382 = vld [vmem:[%s7375 + $0x18] sm:$0xf]
        %v7383 = vld [vmem:[%s7375 + $0x1c] sm:$0xf]
        %v7384 = vld [vmem:[%s7375 + $0x20] sm:$0xf]
        %v7385 = vld [vmem:[%s7375 + $0x24] sm:$0xf]
        %v7386 = vld [vmem:[%s7375 + $0x28] sm:$0xf]
        %v7387 = vld [vmem:[%s7375 + $0x2c] sm:$0xf]
        %v7388 = vld [vmem:[%s7375 + $0x30] sm:$0xf]
        %v7389 = vld [vmem:[%s7375 + $0x34] sm:$0xf]
        %v7390 = vld [vmem:[%s7375 + $0x38] sm:$0xf]
        %v7391 = vld [vmem:[%s7375 + $0x3c] sm:$0xf]
        %v7408 = vunpack.c.l.b16 %v7376
        %v7409 = vunpack.c.l.b16 %v7377
        %v7410 = vunpack.c.l.b16 %v7378
        %v7411 = vunpack.c.l.b16 %v7379
        %v7412 = vunpack.c.l.b16 %v7380
        %v7413 = vunpack.c.l.b16 %v7381
        %v7414 = vunpack.c.l.b16 %v7382
        %v7415 = vunpack.c.l.b16 %v7383
        %v7416 = vunpack.c.l.b16 %v7384
        %v7417 = vunpack.c.l.b16 %v7385
        %v7418 = vunpack.c.l.b16 %v7386
        %v7419 = vunpack.c.l.b16 %v7387
        %v7420 = vunpack.c.l.b16 %v7388
        %v7421 = vunpack.c.l.b16 %v7389
        %v7422 = vunpack.c.l.b16 %v7390
        %v7423 = vunpack.c.l.b16 %v7391
        %v7424 = vpack.c.b16 %v7409, %v7408
        %v7425 = vpack.c.b16 %v7411, %v7410
        %v7426 = vpack.c.b16 %v7413, %v7412
        %v7427 = vpack.c.b16 %v7415, %v7414
        %v7428 = vpack.c.b16 %v7417, %v7416
        %v7429 = vpack.c.b16 %v7419, %v7418
        %v7430 = vpack.c.b16 %v7421, %v7420
        %v7431 = vpack.c.b16 %v7423, %v7422
        %7440 = vmatprep.subr.bf16.mxu0 0
        %7441 = vmatpush1.bf16.msra.mxu0 %v7424
        %7442 = vmatprep.subr.bf16.mxu0 0
        %7443 = vmatpush1.bf16.msra.mxu0 %v7425
        %7444 = vmatprep.subr.bf16.mxu0 0
        %7445 = vmatpush1.bf16.msra.mxu0 %v7426
        %7446 = vmatprep.subr.bf16.mxu0 0
        %7447 = vmatpush1.bf16.msra.mxu0 %v7427
        %7448 = vmatprep.subr.bf16.mxu0 0
        %7449 = vmatpush1.bf16.msra.mxu0 %v7428
        %7450 = vmatprep.subr.bf16.mxu0 0
        %7451 = vmatpush1.bf16.msra.mxu0 %v7429
        %7452 = vmatprep.subr.bf16.mxu0 0
        %7453 = vmatpush1.bf16.msra.mxu0 %v7430
        %7454 = vmatprep.subr.bf16.mxu0 0
        %7455 = vmatpush1.bf16.msra.mxu0 %v7431
        %7456 = vmatprep.subr.bf16.mxu0 0
        %7457 = vmatpush1.bf16.msra.mxu0 0
        %7458 = vmatprep.subr.bf16.mxu0 0
        %7459 = vmatpush1.bf16.msra.mxu0 0
        %7460 = vmatprep.subr.bf16.mxu0 0
        %7461 = vmatpush1.bf16.msra.mxu0 0
        %7462 = vmatprep.subr.bf16.mxu0 0
        %7463 = vmatpush1.bf16.msra.mxu0 0
        %7464 = vmatprep.subr.bf16.mxu0 0
        %7465 = vmatpush1.bf16.msra.mxu0 0
        %7466 = vmatprep.subr.bf16.mxu0 0
        %7467 = vmatpush1.bf16.msra.mxu0 0
        %7468 = vmatprep.subr.bf16.mxu0 0
        %7469 = vmatpush1.bf16.msra.mxu0 0
        %7470 = vmatprep.subr.bf16.mxu0 0
        %7471 = vmatpush1.bf16.msra.mxu0 0
        %7472 = vmatprep.mubr.bf16.mxu0 0
        %7473 = vmatmul.mubr.bf16.gmra.mrb[0].mxu0 %v7374
        %v7474 = vpop.f32.mrb[0].mxu0
        %v7475 = vadd.f32 0.0, %v7474
        %v7476 = vpop.f32.mrb[0].mxu0
        %v7477 = vpop.f32.mrb[0].mxu0
        %v7478 = vpop.f32.mrb[0].mxu0
        %7479 = vdwg.mxu0
        %v7480 = vadd.f32 %v7373, %v7475
        %s7481 = scalar_lea.vmem %s13, 576
        %v7482 = vld [vmem:[%s7481] sm:$0xf]
        %v7483 = vld [vmem:[%s7481 + $0x4] sm:$0xf]
        %v7484 = vld [vmem:[%s7481 + $0x8] sm:$0xf]
        %v7485 = vld [vmem:[%s7481 + $0xc] sm:$0xf]
        %v7486 = vld [vmem:[%s7481 + $0x10] sm:$0xf]
        %v7487 = vld [vmem:[%s7481 + $0x14] sm:$0xf]
        %v7488 = vld [vmem:[%s7481 + $0x18] sm:$0xf]
        %v7489 = vld [vmem:[%s7481 + $0x1c] sm:$0xf]
        %v7490 = vld [vmem:[%s7481 + $0x20] sm:$0xf]
        %v7491 = vld [vmem:[%s7481 + $0x24] sm:$0xf]
        %v7492 = vld [vmem:[%s7481 + $0x28] sm:$0xf]
        %v7493 = vld [vmem:[%s7481 + $0x2c] sm:$0xf]
        %v7494 = vld [vmem:[%s7481 + $0x30] sm:$0xf]
        %v7495 = vld [vmem:[%s7481 + $0x34] sm:$0xf]
        %v7496 = vld [vmem:[%s7481 + $0x38] sm:$0xf]
        %v7497 = vld [vmem:[%s7481 + $0x3c] sm:$0xf]
        %v7499 = vshrl.u32 %v7374, 16
        %v7518 = vunpack.c.l.b16 %v7482
        %v7519 = vunpack.c.l.b16 %v7483
        %v7520 = vunpack.c.l.b16 %v7484
        %v7521 = vunpack.c.l.b16 %v7485
        %v7522 = vunpack.c.l.b16 %v7486
        %v7523 = vunpack.c.l.b16 %v7487
        %v7524 = vunpack.c.l.b16 %v7488
        %v7525 = vunpack.c.l.b16 %v7489
        %v7526 = vunpack.c.l.b16 %v7490
        %v7527 = vunpack.c.l.b16 %v7491
        %v7528 = vunpack.c.l.b16 %v7492
        %v7529 = vunpack.c.l.b16 %v7493
        %v7530 = vunpack.c.l.b16 %v7494
        %v7531 = vunpack.c.l.b16 %v7495
        %v7532 = vunpack.c.l.b16 %v7496
        %v7533 = vunpack.c.l.b16 %v7497
        %v7534 = vpack.c.b16 %v7519, %v7518
        %v7535 = vpack.c.b16 %v7521, %v7520
        %v7536 = vpack.c.b16 %v7523, %v7522
        %v7537 = vpack.c.b16 %v7525, %v7524
        %v7538 = vpack.c.b16 %v7527, %v7526
        %v7539 = vpack.c.b16 %v7529, %v7528
        %v7540 = vpack.c.b16 %v7531, %v7530
        %v7541 = vpack.c.b16 %v7533, %v7532
        %7550 = vmatprep.subr.bf16.mxu0 0
        %7551 = vmatpush1.bf16.msra.mxu0 %v7534
        %7552 = vmatprep.subr.bf16.mxu0 0
        %7553 = vmatpush1.bf16.msra.mxu0 %v7535
        %7554 = vmatprep.subr.bf16.mxu0 0
        %7555 = vmatpush1.bf16.msra.mxu0 %v7536
        %7556 = vmatprep.subr.bf16.mxu0 0
        %7557 = vmatpush1.bf16.msra.mxu0 %v7537
        %7558 = vmatprep.subr.bf16.mxu0 0
        %7559 = vmatpush1.bf16.msra.mxu0 %v7538
        %7560 = vmatprep.subr.bf16.mxu0 0
        %7561 = vmatpush1.bf16.msra.mxu0 %v7539
        %7562 = vmatprep.subr.bf16.mxu0 0
        %7563 = vmatpush1.bf16.msra.mxu0 %v7540
        %7564 = vmatprep.subr.bf16.mxu0 0
        %7565 = vmatpush1.bf16.msra.mxu0 %v7541
        %7566 = vmatprep.subr.bf16.mxu0 0
        %7567 = vmatpush1.bf16.msra.mxu0 0
        %7568 = vmatprep.subr.bf16.mxu0 0
        %7569 = vmatpush1.bf16.msra.mxu0 0
        %7570 = vmatprep.subr.bf16.mxu0 0
        %7571 = vmatpush1.bf16.msra.mxu0 0
        %7572 = vmatprep.subr.bf16.mxu0 0
        %7573 = vmatpush1.bf16.msra.mxu0 0
        %7574 = vmatprep.subr.bf16.mxu0 0
        %7575 = vmatpush1.bf16.msra.mxu0 0
        %7576 = vmatprep.subr.bf16.mxu0 0
        %7577 = vmatpush1.bf16.msra.mxu0 0
        %7578 = vmatprep.subr.bf16.mxu0 0
        %7579 = vmatpush1.bf16.msra.mxu0 0
        %7580 = vmatprep.subr.bf16.mxu0 0
        %7581 = vmatpush1.bf16.msra.mxu0 0
        %7582 = vmatprep.mubr.bf16.mxu0 0
        %7583 = vmatmul.mubr.bf16.gmra.mrb[0].mxu0 %v7499
        %v7584 = vpop.f32.mrb[0].mxu0
        %v7585 = vadd.f32 0.0, %v7584
        %v7586 = vpop.f32.mrb[0].mxu0
        %v7587 = vpop.f32.mrb[0].mxu0
        %v7588 = vpop.f32.mrb[0].mxu0
        %7589 = vdwg.mxu0
        %v7590 = vadd.f32 %v7480, %v7585
        %s7591 = scalar_lea.vmem %s13, 640
        %v7592 = vld [vmem:[%s7591] sm:$0xf]
        %v7593 = vld [vmem:[%s7591 + $0x4] sm:$0xf]
        %v7594 = vld [vmem:[%s7591 + $0x8] sm:$0xf]
        %v7595 = vld [vmem:[%s7591 + $0xc] sm:$0xf]
        %v7596 = vld [vmem:[%s7591 + $0x10] sm:$0xf]
        %v7597 = vld [vmem:[%s7591 + $0x14] sm:$0xf]
        %v7598 = vld [vmem:[%s7591 + $0x18] sm:$0xf]
        %v7599 = vld [vmem:[%s7591 + $0x1c] sm:$0xf]
        %v7600 = vld [vmem:[%s7591 + $0x20] sm:$0xf]
        %v7601 = vld [vmem:[%s7591 + $0x24] sm:$0xf]
        %v7602 = vld [vmem:[%s7591 + $0x28] sm:$0xf]
        %v7603 = vld [vmem:[%s7591 + $0x2c] sm:$0xf]
        %v7604 = vld [vmem:[%s7591 + $0x30] sm:$0xf]
        %v7605 = vld [vmem:[%s7591 + $0x34] sm:$0xf]
        %v7606 = vld [vmem:[%s7591 + $0x38] sm:$0xf]
        %v7607 = vld [vmem:[%s7591 + $0x3c] sm:$0xf]
        %v7609 = vrot.slane %v7374, 1
        %v7627 = vunpack.c.l.b16 %v7592
        %v7628 = vunpack.c.l.b16 %v7593
        %v7629 = vunpack.c.l.b16 %v7594
        %v7630 = vunpack.c.l.b16 %v7595
        %v7631 = vunpack.c.l.b16 %v7596
        %v7632 = vunpack.c.l.b16 %v7597
        %v7633 = vunpack.c.l.b16 %v7598
        %v7634 = vunpack.c.l.b16 %v7599
        %v7635 = vunpack.c.l.b16 %v7600
        %v7636 = vunpack.c.l.b16 %v7601
        %v7637 = vunpack.c.l.b16 %v7602
        %v7638 = vunpack.c.l.b16 %v7603
        %v7639 = vunpack.c.l.b16 %v7604
        %v7640 = vunpack.c.l.b16 %v7605
        %v7641 = vunpack.c.l.b16 %v7606
        %v7642 = vunpack.c.l.b16 %v7607
        %v7643 = vpack.c.b16 %v7628, %v7627
        %v7644 = vpack.c.b16 %v7630, %v7629
        %v7645 = vpack.c.b16 %v7632, %v7631
        %v7646 = vpack.c.b16 %v7634, %v7633
        %v7647 = vpack.c.b16 %v7636, %v7635
        %v7648 = vpack.c.b16 %v7638, %v7637
        %v7649 = vpack.c.b16 %v7640, %v7639
        %v7650 = vpack.c.b16 %v7642, %v7641
        %7659 = vmatprep.subr.bf16.mxu0 0
        %7660 = vmatpush1.bf16.msra.mxu0 %v7643
        %7661 = vmatprep.subr.bf16.mxu0 0
        %7662 = vmatpush1.bf16.msra.mxu0 %v7644
        %7663 = vmatprep.subr.bf16.mxu0 0
        %7664 = vmatpush1.bf16.msra.mxu0 %v7645
        %7665 = vmatprep.subr.bf16.mxu0 0
        %7666 = vmatpush1.bf16.msra.mxu0 %v7646
        %7667 = vmatprep.subr.bf16.mxu0 0
        %7668 = vmatpush1.bf16.msra.mxu0 %v7647
        %7669 = vmatprep.subr.bf16.mxu0 0
        %7670 = vmatpush1.bf16.msra.mxu0 %v7648
        %7671 = vmatprep.subr.bf16.mxu0 0
        %7672 = vmatpush1.bf16.msra.mxu0 %v7649
        %7673 = vmatprep.subr.bf16.mxu0 0
        %7674 = vmatpush1.bf16.msra.mxu0 %v7650
        %7675 = vmatprep.subr.bf16.mxu0 0
        %7676 = vmatpush1.bf16.msra.mxu0 0
        %7677 = vmatprep.subr.bf16.mxu0 0
        %7678 = vmatpush1.bf16.msra.mxu0 0
        %7679 = vmatprep.subr.bf16.mxu0 0
        %7680 = vmatpush1.bf16.msra.mxu0 0
        %7681 = vmatprep.subr.bf16.mxu0 0
        %7682 = vmatpush1.bf16.msra.mxu0 0
        %7683 = vmatprep.subr.bf16.mxu0 0
        %7684 = vmatpush1.bf16.msra.mxu0 0
        %7685 = vmatprep.subr.bf16.mxu0 0
        %7686 = vmatpush1.bf16.msra.mxu0 0
        %7687 = vmatprep.subr.bf16.mxu0 0
        %7688 = vmatpush1.bf16.msra.mxu0 0
        %7689 = vmatprep.subr.bf16.mxu0 0
        %7690 = vmatpush1.bf16.msra.mxu0 0
        %7691 = vmatprep.mubr.bf16.mxu0 0
        %7692 = vmatmul.mubr.bf16.gmra.mrb[0].mxu0 %v7609
        %v7693 = vpop.f32.mrb[0].mxu0
        %v7694 = vadd.f32 0.0, %v7693
        %v7695 = vpop.f32.mrb[0].mxu0
        %v7696 = vpop.f32.mrb[0].mxu0
        %v7697 = vpop.f32.mrb[0].mxu0
        %7698 = vdwg.mxu0
        %v7699 = vadd.f32 %v7590, %v7694
        %s7700 = scalar_lea.vmem %s13, 704
        %v7701 = vld [vmem:[%s7700] sm:$0xf]
        %v7702 = vld [vmem:[%s7700 + $0x4] sm:$0xf]
        %v7703 = vld [vmem:[%s7700 + $0x8] sm:$0xf]
        %v7704 = vld [vmem:[%s7700 + $0xc] sm:$0xf]
        %v7705 = vld [vmem:[%s7700 + $0x10] sm:$0xf]
        %v7706 = vld [vmem:[%s7700 + $0x14] sm:$0xf]
        %v7707 = vld [vmem:[%s7700 + $0x18] sm:$0xf]
        %v7708 = vld [vmem:[%s7700 + $0x1c] sm:$0xf]
        %v7709 = vld [vmem:[%s7700 + $0x20] sm:$0xf]
        %v7710 = vld [vmem:[%s7700 + $0x24] sm:$0xf]
        %v7711 = vld [vmem:[%s7700 + $0x28] sm:$0xf]
        %v7712 = vld [vmem:[%s7700 + $0x2c] sm:$0xf]
        %v7713 = vld [vmem:[%s7700 + $0x30] sm:$0xf]
        %v7714 = vld [vmem:[%s7700 + $0x34] sm:$0xf]
        %v7715 = vld [vmem:[%s7700 + $0x38] sm:$0xf]
        %v7716 = vld [vmem:[%s7700 + $0x3c] sm:$0xf]
        %v7717 = vrot.slane %v7499, 1
        %v7735 = vunpack.c.l.b16 %v7701
        %v7736 = vunpack.c.l.b16 %v7702
        %v7737 = vunpack.c.l.b16 %v7703
        %v7738 = vunpack.c.l.b16 %v7704
        %v7739 = vunpack.c.l.b16 %v7705
        %v7740 = vunpack.c.l.b16 %v7706
        %v7741 = vunpack.c.l.b16 %v7707
        %v7742 = vunpack.c.l.b16 %v7708
        %v7743 = vunpack.c.l.b16 %v7709
        %v7744 = vunpack.c.l.b16 %v7710
        %v7745 = vunpack.c.l.b16 %v7711
        %v7746 = vunpack.c.l.b16 %v7712
        %v7747 = vunpack.c.l.b16 %v7713
        %v7748 = vunpack.c.l.b16 %v7714
        %v7749 = vunpack.c.l.b16 %v7715
        %v7750 = vunpack.c.l.b16 %v7716
        %v7751 = vpack.c.b16 %v7736, %v7735
        %v7752 = vpack.c.b16 %v7738, %v7737
        %v7753 = vpack.c.b16 %v7740, %v7739
        %v7754 = vpack.c.b16 %v7742, %v7741
        %v7755 = vpack.c.b16 %v7744, %v7743
        %v7756 = vpack.c.b16 %v7746, %v7745
        %v7757 = vpack.c.b16 %v7748, %v7747
        %v7758 = vpack.c.b16 %v7750, %v7749
        %7767 = vmatprep.subr.bf16.mxu0 0
        %7768 = vmatpush1.bf16.msra.mxu0 %v7751
        %7769 = vmatprep.subr.bf16.mxu0 0
        %7770 = vmatpush1.bf16.msra.mxu0 %v7752
        %7771 = vmatprep.subr.bf16.mxu0 0
        %7772 = vmatpush1.bf16.msra.mxu0 %v7753
        %7773 = vmatprep.subr.bf16.mxu0 0
        %7774 = vmatpush1.bf16.msra.mxu0 %v7754
        %7775 = vmatprep.subr.bf16.mxu0 0
        %7776 = vmatpush1.bf16.msra.mxu0 %v7755
        %7777 = vmatprep.subr.bf16.mxu0 0
        %7778 = vmatpush1.bf16.msra.mxu0 %v7756
        %7779 = vmatprep.subr.bf16.mxu0 0
        %7780 = vmatpush1.bf16.msra.mxu0 %v7757
        %7781 = vmatprep.subr.bf16.mxu0 0
        %7782 = vmatpush1.bf16.msra.mxu0 %v7758
        %7783 = vmatprep.subr.bf16.mxu0 0
        %7784 = vmatpush1.bf16.msra.mxu0 0
        %7785 = vmatprep.subr.bf16.mxu0 0
        %7786 = vmatpush1.bf16.msra.mxu0 0
        %7787 = vmatprep.subr.bf16.mxu0 0
        %7788 = vmatpush1.bf16.msra.mxu0 0
        %7789 = vmatprep.subr.bf16.mxu0 0
        %7790 = vmatpush1.bf16.msra.mxu0 0
        %7791 = vmatprep.subr.bf16.mxu0 0
        %7792 = vmatpush1.bf16.msra.mxu0 0
        %7793 = vmatprep.subr.bf16.mxu0 0
        %7794 = vmatpush1.bf16.msra.mxu0 0
        %7795 = vmatprep.subr.bf16.mxu0 0
        %7796 = vmatpush1.bf16.msra.mxu0 0
        %7797 = vmatprep.subr.bf16.mxu0 0
        %7798 = vmatpush1.bf16.msra.mxu0 0
        %7799 = vmatprep.mubr.bf16.mxu0 0
        %7800 = vmatmul.mubr.bf16.gmra.mrb[0].mxu0 %v7717
        %v7801 = vpop.f32.mrb[0].mxu0
        %v7802 = vadd.f32 0.0, %v7801
        %v7803 = vpop.f32.mrb[0].mxu0
        %v7804 = vpop.f32.mrb[0].mxu0
        %v7805 = vpop.f32.mrb[0].mxu0
        %7806 = vdwg.mxu0
        %v7807 = vadd.f32 %v7699, %v7802
        %s7808 = scalar_lea.vmem %s13, 768
        %v7809 = vld [vmem:[%s7808] sm:$0xf]
        %v7810 = vld [vmem:[%s7808 + $0x4] sm:$0xf]
        %v7811 = vld [vmem:[%s7808 + $0x8] sm:$0xf]
        %v7812 = vld [vmem:[%s7808 + $0xc] sm:$0xf]
        %v7813 = vld [vmem:[%s7808 + $0x10] sm:$0xf]
        %v7814 = vld [vmem:[%s7808 + $0x14] sm:$0xf]
        %v7815 = vld [vmem:[%s7808 + $0x18] sm:$0xf]
        %v7816 = vld [vmem:[%s7808 + $0x1c] sm:$0xf]
        %v7817 = vld [vmem:[%s7808 + $0x20] sm:$0xf]
        %v7818 = vld [vmem:[%s7808 + $0x24] sm:$0xf]
        %v7819 = vld [vmem:[%s7808 + $0x28] sm:$0xf]
        %v7820 = vld [vmem:[%s7808 + $0x2c] sm:$0xf]
        %v7821 = vld [vmem:[%s7808 + $0x30] sm:$0xf]
        %v7822 = vld [vmem:[%s7808 + $0x34] sm:$0xf]
        %v7823 = vld [vmem:[%s7808 + $0x38] sm:$0xf]
        %v7824 = vld [vmem:[%s7808 + $0x3c] sm:$0xf]
        %v7825 = vrot.slane %v7374, 2
        %v7843 = vunpack.c.l.b16 %v7809
        %v7844 = vunpack.c.l.b16 %v7810
        %v7845 = vunpack.c.l.b16 %v7811
        %v7846 = vunpack.c.l.b16 %v7812
        %v7847 = vunpack.c.l.b16 %v7813
        %v7848 = vunpack.c.l.b16 %v7814
        %v7849 = vunpack.c.l.b16 %v7815
        %v7850 = vunpack.c.l.b16 %v7816
        %v7851 = vunpack.c.l.b16 %v7817
        %v7852 = vunpack.c.l.b16 %v7818
        %v7853 = vunpack.c.l.b16 %v7819
        %v7854 = vunpack.c.l.b16 %v7820
        %v7855 = vunpack.c.l.b16 %v7821
        %v7856 = vunpack.c.l.b16 %v7822
        %v7857 = vunpack.c.l.b16 %v7823
        %v7858 = vunpack.c.l.b16 %v7824
        %v7859 = vpack.c.b16 %v7844, %v7843
        %v7860 = vpack.c.b16 %v7846, %v7845
        %v7861 = vpack.c.b16 %v7848, %v7847
        %v7862 = vpack.c.b16 %v7850, %v7849
        %v7863 = vpack.c.b16 %v7852, %v7851
        %v7864 = vpack.c.b16 %v7854, %v7853
        %v7865 = vpack.c.b16 %v7856, %v7855
        %v7866 = vpack.c.b16 %v7858, %v7857
        %7875 = vmatprep.subr.bf16.mxu0 0
        %7876 = vmatpush1.bf16.msra.mxu0 %v7859
        %7877 = vmatprep.subr.bf16.mxu0 0
        %7878 = vmatpush1.bf16.msra.mxu0 %v7860
        %7879 = vmatprep.subr.bf16.mxu0 0
        %7880 = vmatpush1.bf16.msra.mxu0 %v7861
        %7881 = vmatprep.subr.bf16.mxu0 0
        %7882 = vmatpush1.bf16.msra.mxu0 %v7862
        %7883 = vmatprep.subr.bf16.mxu0 0
        %7884 = vmatpush1.bf16.msra.mxu0 %v7863
        %7885 = vmatprep.subr.bf16.mxu0 0
        %7886 = vmatpush1.bf16.msra.mxu0 %v7864
        %7887 = vmatprep.subr.bf16.mxu0 0
        %7888 = vmatpush1.bf16.msra.mxu0 %v7865
        %7889 = vmatprep.subr.bf16.mxu0 0
        %7890 = vmatpush1.bf16.msra.mxu0 %v7866
        %7891 = vmatprep.subr.bf16.mxu0 0
        %7892 = vmatpush1.bf16.msra.mxu0 0
        %7893 = vmatprep.subr.bf16.mxu0 0
        %7894 = vmatpush1.bf16.msra.mxu0 0
        %7895 = vmatprep.subr.bf16.mxu0 0
        %7896 = vmatpush1.bf16.msra.mxu0 0
        %7897 = vmatprep.subr.bf16.mxu0 0
        %7898 = vmatpush1.bf16.msra.mxu0 0
        %7899 = vmatprep.subr.bf16.mxu0 0
        %7900 = vmatpush1.bf16.msra.mxu0 0
        %7901 = vmatprep.subr.bf16.mxu0 0
        %7902 = vmatpush1.bf16.msra.mxu0 0
        %7903 = vmatprep.subr.bf16.mxu0 0
        %7904 = vmatpush1.bf16.msra.mxu0 0
        %7905 = vmatprep.subr.bf16.mxu0 0
        %7906 = vmatpush1.bf16.msra.mxu0 0
        %7907 = vmatprep.mubr.bf16.mxu0 0
        %7908 = vmatmul.mubr.bf16.gmra.mrb[0].mxu0 %v7825
        %v7909 = vpop.f32.mrb[0].mxu0
        %v7910 = vadd.f32 0.0, %v7909
        %v7911 = vpop.f32.mrb[0].mxu0
        %v7912 = vpop.f32.mrb[0].mxu0
        %v7913 = vpop.f32.mrb[0].mxu0
        %7914 = vdwg.mxu0
        %v7915 = vadd.f32 %v7807, %v7910
        %s7916 = scalar_lea.vmem %s13, 832
        %v7917 = vld [vmem:[%s7916] sm:$0xf]
        %v7918 = vld [vmem:[%s7916 + $0x4] sm:$0xf]
        %v7919 = vld [vmem:[%s7916 + $0x8] sm:$0xf]
        %v7920 = vld [vmem:[%s7916 + $0xc] sm:$0xf]
        %v7921 = vld [vmem:[%s7916 + $0x10] sm:$0xf]
        %v7922 = vld [vmem:[%s7916 + $0x14] sm:$0xf]
        %v7923 = vld [vmem:[%s7916 + $0x18] sm:$0xf]
        %v7924 = vld [vmem:[%s7916 + $0x1c] sm:$0xf]
        %v7925 = vld [vmem:[%s7916 + $0x20] sm:$0xf]
        %v7926 = vld [vmem:[%s7916 + $0x24] sm:$0xf]
        %v7927 = vld [vmem:[%s7916 + $0x28] sm:$0xf]
        %v7928 = vld [vmem:[%s7916 + $0x2c] sm:$0xf]
        %v7929 = vld [vmem:[%s7916 + $0x30] sm:$0xf]
        %v7930 = vld [vmem:[%s7916 + $0x34] sm:$0xf]
        %v7931 = vld [vmem:[%s7916 + $0x38] sm:$0xf]
        %v7932 = vld [vmem:[%s7916 + $0x3c] sm:$0xf]
        %v7933 = vrot.slane %v7499, 2
        %v7951 = vunpack.c.l.b16 %v7917
        %v7952 = vunpack.c.l.b16 %v7918
        %v7953 = vunpack.c.l.b16 %v7919
        %v7954 = vunpack.c.l.b16 %v7920
        %v7955 = vunpack.c.l.b16 %v7921
        %v7956 = vunpack.c.l.b16 %v7922
        %v7957 = vunpack.c.l.b16 %v7923
        %v7958 = vunpack.c.l.b16 %v7924
        %v7959 = vunpack.c.l.b16 %v7925
        %v7960 = vunpack.c.l.b16 %v7926
        %v7961 = vunpack.c.l.b16 %v7927
        %v7962 = vunpack.c.l.b16 %v7928
        %v7963 = vunpack.c.l.b16 %v7929
        %v7964 = vunpack.c.l.b16 %v7930
        %v7965 = vunpack.c.l.b16 %v7931
        %v7966 = vunpack.c.l.b16 %v7932
        %v7967 = vpack.c.b16 %v7952, %v7951
        %v7968 = vpack.c.b16 %v7954, %v7953
        %v7969 = vpack.c.b16 %v7956, %v7955
        %v7970 = vpack.c.b16 %v7958, %v7957
        %v7971 = vpack.c.b16 %v7960, %v7959
        %v7972 = vpack.c.b16 %v7962, %v7961
        %v7973 = vpack.c.b16 %v7964, %v7963
        %v7974 = vpack.c.b16 %v7966, %v7965
        %7983 = vmatprep.subr.bf16.mxu0 0
        %7984 = vmatpush1.bf16.msra.mxu0 %v7967
        %7985 = vmatprep.subr.bf16.mxu0 0
        %7986 = vmatpush1.bf16.msra.mxu0 %v7968
        %7987 = vmatprep.subr.bf16.mxu0 0
        %7988 = vmatpush1.bf16.msra.mxu0 %v7969
        %7989 = vmatprep.subr.bf16.mxu0 0
        %7990 = vmatpush1.bf16.msra.mxu0 %v7970
        %7991 = vmatprep.subr.bf16.mxu0 0
        %7992 = vmatpush1.bf16.msra.mxu0 %v7971
        %7993 = vmatprep.subr.bf16.mxu0 0
        %7994 = vmatpush1.bf16.msra.mxu0 %v7972
        %7995 = vmatprep.subr.bf16.mxu0 0
        %7996 = vmatpush1.bf16.msra.mxu0 %v7973
        %7997 = vmatprep.subr.bf16.mxu0 0
        %7998 = vmatpush1.bf16.msra.mxu0 %v7974
        %7999 = vmatprep.subr.bf16.mxu0 0
        %8000 = vmatpush1.bf16.msra.mxu0 0
        %8001 = vmatprep.subr.bf16.mxu0 0
        %8002 = vmatpush1.bf16.msra.mxu0 0
        %8003 = vmatprep.subr.bf16.mxu0 0
        %8004 = vmatpush1.bf16.msra.mxu0 0
        %8005 = vmatprep.subr.bf16.mxu0 0
        %8006 = vmatpush1.bf16.msra.mxu0 0
        %8007 = vmatprep.subr.bf16.mxu0 0
        %8008 = vmatpush1.bf16.msra.mxu0 0
        %8009 = vmatprep.subr.bf16.mxu0 0
        %8010 = vmatpush1.bf16.msra.mxu0 0
        %8011 = vmatprep.subr.bf16.mxu0 0
        %8012 = vmatpush1.bf16.msra.mxu0 0
        %8013 = vmatprep.subr.bf16.mxu0 0
        %8014 = vmatpush1.bf16.msra.mxu0 0
        %8015 = vmatprep.mubr.bf16.mxu0 0
        %8016 = vmatmul.mubr.bf16.gmra.mrb[0].mxu0 %v7933
        %v8017 = vpop.f32.mrb[0].mxu0
        %v8018 = vadd.f32 0.0, %v8017
        %v8019 = vpop.f32.mrb[0].mxu0
        %v8020 = vpop.f32.mrb[0].mxu0
        %v8021 = vpop.f32.mrb[0].mxu0
        %8022 = vdwg.mxu0
        %v8023 = vadd.f32 %v7915, %v8018
        %s8024 = scalar_lea.vmem %s13, 896
        %v8025 = vld [vmem:[%s8024] sm:$0xf]
        %v8026 = vld [vmem:[%s8024 + $0x4] sm:$0xf]
        %v8027 = vld [vmem:[%s8024 + $0x8] sm:$0xf]
        %v8028 = vld [vmem:[%s8024 + $0xc] sm:$0xf]
        %v8029 = vld [vmem:[%s8024 + $0x10] sm:$0xf]
        %v8030 = vld [vmem:[%s8024 + $0x14] sm:$0xf]
        %v8031 = vld [vmem:[%s8024 + $0x18] sm:$0xf]
        %v8032 = vld [vmem:[%s8024 + $0x1c] sm:$0xf]
        %v8033 = vld [vmem:[%s8024 + $0x20] sm:$0xf]
        %v8034 = vld [vmem:[%s8024 + $0x24] sm:$0xf]
        %v8035 = vld [vmem:[%s8024 + $0x28] sm:$0xf]
        %v8036 = vld [vmem:[%s8024 + $0x2c] sm:$0xf]
        %v8037 = vld [vmem:[%s8024 + $0x30] sm:$0xf]
        %v8038 = vld [vmem:[%s8024 + $0x34] sm:$0xf]
        %v8039 = vld [vmem:[%s8024 + $0x38] sm:$0xf]
        %v8040 = vld [vmem:[%s8024 + $0x3c] sm:$0xf]
        %v8041 = vrot.slane %v7374, 3
        %v8059 = vunpack.c.l.b16 %v8025
        %v8060 = vunpack.c.l.b16 %v8026
        %v8061 = vunpack.c.l.b16 %v8027
        %v8062 = vunpack.c.l.b16 %v8028
        %v8063 = vunpack.c.l.b16 %v8029
        %v8064 = vunpack.c.l.b16 %v8030
        %v8065 = vunpack.c.l.b16 %v8031
        %v8066 = vunpack.c.l.b16 %v8032
        %v8067 = vunpack.c.l.b16 %v8033
        %v8068 = vunpack.c.l.b16 %v8034
        %v8069 = vunpack.c.l.b16 %v8035
        %v8070 = vunpack.c.l.b16 %v8036
        %v8071 = vunpack.c.l.b16 %v8037
        %v8072 = vunpack.c.l.b16 %v8038
        %v8073 = vunpack.c.l.b16 %v8039
        %v8074 = vunpack.c.l.b16 %v8040
        %v8075 = vpack.c.b16 %v8060, %v8059
        %v8076 = vpack.c.b16 %v8062, %v8061
        %v8077 = vpack.c.b16 %v8064, %v8063
        %v8078 = vpack.c.b16 %v8066, %v8065
        %v8079 = vpack.c.b16 %v8068, %v8067
        %v8080 = vpack.c.b16 %v8070, %v8069
        %v8081 = vpack.c.b16 %v8072, %v8071
        %v8082 = vpack.c.b16 %v8074, %v8073
        %8091 = vmatprep.subr.bf16.mxu0 0
        %8092 = vmatpush1.bf16.msra.mxu0 %v8075
        %8093 = vmatprep.subr.bf16.mxu0 0
        %8094 = vmatpush1.bf16.msra.mxu0 %v8076
        %8095 = vmatprep.subr.bf16.mxu0 0
        %8096 = vmatpush1.bf16.msra.mxu0 %v8077
        %8097 = vmatprep.subr.bf16.mxu0 0
        %8098 = vmatpush1.bf16.msra.mxu0 %v8078
        %8099 = vmatprep.subr.bf16.mxu0 0
        %8100 = vmatpush1.bf16.msra.mxu0 %v8079
        %8101 = vmatprep.subr.bf16.mxu0 0
        %8102 = vmatpush1.bf16.msra.mxu0 %v8080
        %8103 = vmatprep.subr.bf16.mxu0 0
        %8104 = vmatpush1.bf16.msra.mxu0 %v8081
        %8105 = vmatprep.subr.bf16.mxu0 0
        %8106 = vmatpush1.bf16.msra.mxu0 %v8082
        %8107 = vmatprep.subr.bf16.mxu0 0
        %8108 = vmatpush1.bf16.msra.mxu0 0
        %8109 = vmatprep.subr.bf16.mxu0 0
        %8110 = vmatpush1.bf16.msra.mxu0 0
        %8111 = vmatprep.subr.bf16.mxu0 0
        %8112 = vmatpush1.bf16.msra.mxu0 0
        %8113 = vmatprep.subr.bf16.mxu0 0
        %8114 = vmatpush1.bf16.msra.mxu0 0
        %8115 = vmatprep.subr.bf16.mxu0 0
        %8116 = vmatpush1.bf16.msra.mxu0 0
        %8117 = vmatprep.subr.bf16.mxu0 0
        %8118 = vmatpush1.bf16.msra.mxu0 0
        %8119 = vmatprep.subr.bf16.mxu0 0
        %8120 = vmatpush1.bf16.msra.mxu0 0
        %8121 = vmatprep.subr.bf16.mxu0 0
        %8122 = vmatpush1.bf16.msra.mxu0 0
        %8123 = vmatprep.mubr.bf16.mxu0 0
        %8124 = vmatmul.mubr.bf16.gmra.mrb[0].mxu0 %v8041
        %v8125 = vpop.f32.mrb[0].mxu0
        %v8126 = vadd.f32 0.0, %v8125
        %v8127 = vpop.f32.mrb[0].mxu0
        %v8128 = vpop.f32.mrb[0].mxu0
        %v8129 = vpop.f32.mrb[0].mxu0
        %8130 = vdwg.mxu0
        %v8131 = vadd.f32 %v8023, %v8126
        %s8132 = scalar_lea.vmem %s13, 960
        %v8133 = vld [vmem:[%s8132] sm:$0xf]
        %v8134 = vld [vmem:[%s8132 + $0x4] sm:$0xf]
        %v8135 = vld [vmem:[%s8132 + $0x8] sm:$0xf]
        %v8136 = vld [vmem:[%s8132 + $0xc] sm:$0xf]
        %v8137 = vld [vmem:[%s8132 + $0x10] sm:$0xf]
        %v8138 = vld [vmem:[%s8132 + $0x14] sm:$0xf]
        %v8139 = vld [vmem:[%s8132 + $0x18] sm:$0xf]
        %v8140 = vld [vmem:[%s8132 + $0x1c] sm:$0xf]
        %v8141 = vld [vmem:[%s8132 + $0x20] sm:$0xf]
        %v8142 = vld [vmem:[%s8132 + $0x24] sm:$0xf]
        %v8143 = vld [vmem:[%s8132 + $0x28] sm:$0xf]
        %v8144 = vld [vmem:[%s8132 + $0x2c] sm:$0xf]
        %v8145 = vld [vmem:[%s8132 + $0x30] sm:$0xf]
        %v8146 = vld [vmem:[%s8132 + $0x34] sm:$0xf]
        %v8147 = vld [vmem:[%s8132 + $0x38] sm:$0xf]
        %v8148 = vld [vmem:[%s8132 + $0x3c] sm:$0xf]
        %v8149 = vrot.slane %v7499, 3
        %v8167 = vunpack.c.l.b16 %v8133
        %v8168 = vunpack.c.l.b16 %v8134
        %v8169 = vunpack.c.l.b16 %v8135
        %v8170 = vunpack.c.l.b16 %v8136
        %v8171 = vunpack.c.l.b16 %v8137
        %v8172 = vunpack.c.l.b16 %v8138
        %v8173 = vunpack.c.l.b16 %v8139
        %v8174 = vunpack.c.l.b16 %v8140
        %v8175 = vunpack.c.l.b16 %v8141
        %v8176 = vunpack.c.l.b16 %v8142
        %v8177 = vunpack.c.l.b16 %v8143
        %v8178 = vunpack.c.l.b16 %v8144
        %v8179 = vunpack.c.l.b16 %v8145
        %v8180 = vunpack.c.l.b16 %v8146
        %v8181 = vunpack.c.l.b16 %v8147
        %v8182 = vunpack.c.l.b16 %v8148
        %v8183 = vpack.c.b16 %v8168, %v8167
        %v8184 = vpack.c.b16 %v8170, %v8169
        %v8185 = vpack.c.b16 %v8172, %v8171
        %v8186 = vpack.c.b16 %v8174, %v8173
        %v8187 = vpack.c.b16 %v8176, %v8175
        %v8188 = vpack.c.b16 %v8178, %v8177
        %v8189 = vpack.c.b16 %v8180, %v8179
        %v8190 = vpack.c.b16 %v8182, %v8181
        %8199 = vmatprep.subr.bf16.mxu0 0
        %8200 = vmatpush1.bf16.msra.mxu0 %v8183
        %8201 = vmatprep.subr.bf16.mxu0 0
        %8202 = vmatpush1.bf16.msra.mxu0 %v8184
        %8203 = vmatprep.subr.bf16.mxu0 0
        %8204 = vmatpush1.bf16.msra.mxu0 %v8185
        %8205 = vmatprep.subr.bf16.mxu0 0
        %8206 = vmatpush1.bf16.msra.mxu0 %v8186
        %8207 = vmatprep.subr.bf16.mxu0 0
        %8208 = vmatpush1.bf16.msra.mxu0 %v8187
        %8209 = vmatprep.subr.bf16.mxu0 0
        %8210 = vmatpush1.bf16.msra.mxu0 %v8188
        %8211 = vmatprep.subr.bf16.mxu0 0
        %8212 = vmatpush1.bf16.msra.mxu0 %v8189
        %8213 = vmatprep.subr.bf16.mxu0 0
        %8214 = vmatpush1.bf16.msra.mxu0 %v8190
        %8215 = vmatprep.subr.bf16.mxu0 0
        %8216 = vmatpush1.bf16.msra.mxu0 0
        %8217 = vmatprep.subr.bf16.mxu0 0
        %8218 = vmatpush1.bf16.msra.mxu0 0
        %8219 = vmatprep.subr.bf16.mxu0 0
        %8220 = vmatpush1.bf16.msra.mxu0 0
        %8221 = vmatprep.subr.bf16.mxu0 0
        %8222 = vmatpush1.bf16.msra.mxu0 0
        %8223 = vmatprep.subr.bf16.mxu0 0
        %8224 = vmatpush1.bf16.msra.mxu0 0
        %8225 = vmatprep.subr.bf16.mxu0 0
        %8226 = vmatpush1.bf16.msra.mxu0 0
        %8227 = vmatprep.subr.bf16.mxu0 0
        %8228 = vmatpush1.bf16.msra.mxu0 0
        %8229 = vmatprep.subr.bf16.mxu0 0
        %8230 = vmatpush1.bf16.msra.mxu0 0
        %8231 = vmatprep.mubr.bf16.mxu0 0
        %8232 = vmatmul.mubr.bf16.gmra.mrb[0].mxu0 %v8149
        %v8233 = vpop.f32.mrb[0].mxu0
        %v8234 = vadd.f32 0.0, %v8233
        %v8235 = vpop.f32.mrb[0].mxu0
        %v8236 = vpop.f32.mrb[0].mxu0
        %v8237 = vpop.f32.mrb[0].mxu0
        %8238 = vdwg.mxu0
        %v8239 = vadd.f32 %v8131, %v8234
        %v8240 = vmax.f32 %v8239, 0.0
        %v8241 = vpack.c.bf16 %v8240, %v8240
        %v8242 = vld [vmem:[%s15] sm:$0xf]
        %v8243 = vld [vmem:[%s15 + $0x4] sm:$0xf]
        %v8244 = vld [vmem:[%s15 + $0x8] sm:$0xf]
        %v8245 = vld [vmem:[%s15 + $0xc] sm:$0xf]
        %v8246 = vld [vmem:[%s15 + $0x10] sm:$0xf]
        %v8247 = vld [vmem:[%s15 + $0x14] sm:$0xf]
        %v8248 = vld [vmem:[%s15 + $0x18] sm:$0xf]
        %v8249 = vld [vmem:[%s15 + $0x1c] sm:$0xf]
        %v8250 = vld [vmem:[%s15 + $0x20] sm:$0xf]
        %v8251 = vld [vmem:[%s15 + $0x24] sm:$0xf]
        %v8252 = vld [vmem:[%s15 + $0x28] sm:$0xf]
        %v8253 = vld [vmem:[%s15 + $0x2c] sm:$0xf]
        %v8254 = vld [vmem:[%s15 + $0x30] sm:$0xf]
        %v8255 = vld [vmem:[%s15 + $0x34] sm:$0xf]
        %v8256 = vld [vmem:[%s15 + $0x38] sm:$0xf]
        %v8257 = vld [vmem:[%s15 + $0x3c] sm:$0xf]
        %v8258 = vld [vmem:[%s16] sm:$0x1]
        %v8275 = vunpack.c.l.b16 %v8242
        %v8276 = vunpack.c.l.b16 %v8243
        %v8277 = vunpack.c.l.b16 %v8244
        %v8278 = vunpack.c.l.b16 %v8245
        %v8279 = vunpack.c.l.b16 %v8246
        %v8280 = vunpack.c.l.b16 %v8247
        %v8281 = vunpack.c.l.b16 %v8248
        %v8282 = vunpack.c.l.b16 %v8249
        %v8283 = vunpack.c.l.b16 %v8250
        %v8284 = vunpack.c.l.b16 %v8251
        %v8285 = vunpack.c.l.b16 %v8252
        %v8286 = vunpack.c.l.b16 %v8253
        %v8287 = vunpack.c.l.b16 %v8254
        %v8288 = vunpack.c.l.b16 %v8255
        %v8289 = vunpack.c.l.b16 %v8256
        %v8290 = vunpack.c.l.b16 %v8257
        %v8291 = vpack.c.b16 %v8276, %v8275
        %v8292 = vpack.c.b16 %v8278, %v8277
        %v8293 = vpack.c.b16 %v8280, %v8279
        %v8294 = vpack.c.b16 %v8282, %v8281
        %v8295 = vpack.c.b16 %v8284, %v8283
        %v8296 = vpack.c.b16 %v8286, %v8285
        %v8297 = vpack.c.b16 %v8288, %v8287
        %v8298 = vpack.c.b16 %v8290, %v8289
        %8307 = vmatprep.subr.bf16.mxu0 0
        %8308 = vmatpush1.bf16.msra.mxu0 %v8291
        %8309 = vmatprep.subr.bf16.mxu0 0
        %8310 = vmatpush1.bf16.msra.mxu0 %v8292
        %8311 = vmatprep.subr.bf16.mxu0 0
        %8312 = vmatpush1.bf16.msra.mxu0 %v8293
        %8313 = vmatprep.subr.bf16.mxu0 0
        %8314 = vmatpush1.bf16.msra.mxu0 %v8294
        %8315 = vmatprep.subr.bf16.mxu0 0
        %8316 = vmatpush1.bf16.msra.mxu0 %v8295
        %8317 = vmatprep.subr.bf16.mxu0 0
        %8318 = vmatpush1.bf16.msra.mxu0 %v8296
        %8319 = vmatprep.subr.bf16.mxu0 0
        %8320 = vmatpush1.bf16.msra.mxu0 %v8297
        %8321 = vmatprep.subr.bf16.mxu0 0
        %8322 = vmatpush1.bf16.msra.mxu0 %v8298
        %8323 = vmatprep.subr.bf16.mxu0 0
        %8324 = vmatpush1.bf16.msra.mxu0 0
        %8325 = vmatprep.subr.bf16.mxu0 0
        %8326 = vmatpush1.bf16.msra.mxu0 0
        %8327 = vmatprep.subr.bf16.mxu0 0
        %8328 = vmatpush1.bf16.msra.mxu0 0
        %8329 = vmatprep.subr.bf16.mxu0 0
        %8330 = vmatpush1.bf16.msra.mxu0 0
        %8331 = vmatprep.subr.bf16.mxu0 0
        %8332 = vmatpush1.bf16.msra.mxu0 0
        %8333 = vmatprep.subr.bf16.mxu0 0
        %8334 = vmatpush1.bf16.msra.mxu0 0
        %8335 = vmatprep.subr.bf16.mxu0 0
        %8336 = vmatpush1.bf16.msra.mxu0 0
        %8337 = vmatprep.subr.bf16.mxu0 0
        %8338 = vmatpush1.bf16.msra.mxu0 0
        %8339 = vmatprep.mubr.bf16.mxu0 0
        %8340 = vmatmul.mubr.bf16.gmra.mrb[0].mxu0 %v8241
        %v8341 = vpop.f32.mrb[0].mxu0
        %v8342 = vadd.f32 %v8258, %v8341
        %v8343 = vpop.f32.mrb[0].mxu0
        %v8344 = vpop.f32.mrb[0].mxu0
        %v8345 = vpop.f32.mrb[0].mxu0
        %8346 = vdwg.mxu0
        %8347 = vst [vmem:[%s540] sm:$0x1] %v8342
        %s8348 = sand.u32 %s401, 1
        %s8349 = scalar_lea.sflag [#allocation8], %s8348
        %s8350 = sand.u32 %s401, 1
        %s8351 = scalar_lea.vmem [#allocation7], %s8350
        // Predicated region
        $region103: #{convnet_forward.1} parent=87 // pred_check
          %p8352 = pneg %p411
        $region104: #{convnet_forward.1} parent=87 // pred_check_branch
          %8354 = sbr.rel (%p8352) target = $region106
        $region105: #{convnet_forward.1} parent=87 // pred_region
          %s8356 = ssub.s32 16, 16
          %8357 = vsyncadd %s8349, %s8356
          %s8358 = smul.addr %s31, 16
          %s8359 = scalar_lea.hbm %s17, %s8358
          %s8361 = sshll.u32 %s8351, 4
          %s8362 = int_to_ptr.vmem [resolvable:$true] %s8361
          %8364 = dma.vmem_to_hbm [thread:$0]  %s8362, 16, %s8359, %s8349
        $region106: #{convnet_forward.1} parent=87 // pred_fallthru
          _
      $region88: #{convnet_forward.1} parent=5 // pred_fallthru
        _
      %p8365 = scmp.le.s32.totalorder 2, %s26
      // Predicated region
      $region107: #{convnet_forward.1} parent=5 // pred_check
        %p8366 = pneg %p8365
      $region108: #{convnet_forward.1} parent=5 // pred_check_branch
        %8368 = sbr.rel (%p8366) target = $region110
      $region109: #{convnet_forward.1} parent=5 // pred_region
        %s8369 = ssub.s32 %s26, 2
        // Predicated region
        $region111: #{convnet_forward.1} parent=109 // pred_check
          %p8370 = pneg %p417
        $region112: #{convnet_forward.1} parent=109 // pred_check_branch
          %8372 = sbr.rel (%p8370) target = $region114
        $region113: #{convnet_forward.1} parent=109 // pred_region
          %s8373 = sand.u32 %s402, 1
          %s8374 = scalar_lea.sflag [#allocation8], %s8373
          %s8375 = sand.u32 %s402, 1
          %s8376 = scalar_lea.vmem [#allocation7], %s8375
          %8377 = dma.done %s8374, 16
        $region114: #{convnet_forward.1} parent=109 // pred_fallthru
          _
      $region110: #{convnet_forward.1} parent=5 // pred_fallthru
        _
    $region6: #{convnet_forward.1} parent=1 // loop_footer
      %s30 = sadd.s32 1, %s26
    $region7: #{convnet_forward.1} parent=1 // loop_footer_branch
      %25 = sbr.rel target = $region3
    $region8: #{convnet_forward.1} parent=1 // loop_exit
      _
    %8378 = vsyncpa [#allocation8], 1
    %s8379 = scalar_lea.sflag [#allocation8], 1
    %8380 = vsyncpa %s8379, 1

</llo_original>
